<compile_context>
chip_gen: v6e
topology: v6e:2x2x1
jax: 0.10.0
libtpu: 0.0.40
codegen_flags: <defaults>
</compile_context>

<pallas_src>
import functools
import numpy as np

import jax
import jax.numpy as jnp
from jax.experimental import pallas as pl
from jax.experimental.pallas import tpu as pltpu


# ----------------------------------------------------------------------------- conv
def _conv3x3_relu_kernel(x_ref, w_ref, b_ref, o_ref, *, Wp, H, W):
    """3x3 conv (pad=1, stride=1) + bias + ReLU on one image.

    x_ref:  (1, Pfull, Cin) f32 -- flattened, zero-padded rows (row stride Wp, 8-aligned)
    w_ref:  (3, 3, Cin, Cout) bf16
    o_ref:  (1, H, W, Cout) f32 -- valid columns only
    """
    Lout = H * Wp
    cout = o_ref.shape[-1]
    xx = x_ref[0]                                   # (Pfull, Cin) f32
    acc = jnp.zeros((Lout, cout), jnp.float32)
    for dy in range(3):                             # dy*Wp is a multiple of 8 (aligned)
        for dx in range(3):
            t = dy * Wp + dx
            tap = xx[t:t + Lout, :].astype(jnp.bfloat16)
            acc = acc + jnp.dot(tap, w_ref[dy, dx],
                                preferred_element_type=jnp.float32)
    v = jnp.maximum(acc + b_ref[...], 0.0)          # (Lout, Cout)
    # Layout-preserving split of the row axis (Wp % 8 == 0), then drop pad columns.
    o_ref[0] = v.reshape(H, Wp, cout)[:, :W, :]


def conv3x3_relu(x, w_oihw, b):
    """3x3 conv, padding=1, stride=1, fused bias + ReLU.  x: (N, H, W, Cin) f32."""
    N, H, W, Cin = x.shape
    Cout = w_oihw.shape[0]
    w = jnp.transpose(w_oihw, (2, 3, 1, 0)).astype(jnp.bfloat16)   # (ky, kx, Cin, Cout)
    Wp = ((W + 2 + 7) // 8) * 8                      # padded row stride, 8-aligned
    xp = jnp.pad(x, ((0, 0), (1, 1), (1, Wp - W - 1), (0, 0)))     # (N, H+2, Wp, Cin)
    Pfull = (H + 2) * Wp + 8                         # +8 slack for tap offsets
    xf = jnp.pad(xp.reshape(N, (H + 2) * Wp, Cin), ((0, 0), (0, 8), (0, 0)))
    b2 = b.reshape(1, Cout).astype(jnp.float32)

    flops = 2 * N * H * W * 9 * Cin * Cout
    bytes_accessed = xf.size * 4 + w.size * 2 + N * H * W * Cout * 4 + b2.size * 4

    kern = functools.partial(_conv3x3_relu_kernel, Wp=Wp, H=H, W=W)
    return pl.pallas_call(
        kern,
        out_shape=jax.ShapeDtypeStruct((N, H, W, Cout), jnp.float32),
        grid=(N,),
        in_specs=[pl.BlockSpec((1, Pfull, Cin), lambda n: (n, 0, 0)),
                  pl.BlockSpec((3, 3, Cin, Cout), lambda n: (0, 0, 0, 0)),
                  pl.BlockSpec((1, Cout), lambda n: (0, 0))],
        out_specs=pl.BlockSpec((1, H, W, Cout), lambda n: (n, 0, 0, 0)),
        compiler_params=pltpu.CompilerParams(dimension_semantics=("parallel",)),
        cost_estimate=pl.CostEstimate(flops=flops, transcendentals=0,
                                      bytes_accessed=bytes_accessed),
    )(xf, w, b2)


# -------------------------------------------------------------------------- maxpool
def _maxpool2x2_kernel(x_ref, o_ref):
    x = x_ref[0]                                    # (Ho, 2, Wo, 2, C)
    m = jnp.maximum(
        jnp.maximum(x[:, 0, :, 0:1, :], x[:, 0, :, 1:2, :]),
        jnp.maximum(x[:, 1, :, 0:1, :], x[:, 1, :, 1:2, :]))
    o_ref[0] = m                                    # (Ho, Wo, 1, C)


def maxpool2x2(x):
    """MaxPool2d(kernel_size=2, stride=2).  x: (N, H, W, C)."""
    N, H, W, C = x.shape
    Ho, Wo = H // 2, W // 2
    xr = x.reshape(N, Ho, 2, Wo, 2, C)              # free HBM reshape (glue)
    y = pl.pallas_call(
        _maxpool2x2_kernel,
        out_shape=jax.ShapeDtypeStruct((N, Ho, Wo, 1, C), jnp.float32),
        grid=(N,),
        in_specs=[pl.BlockSpec((1, Ho, 2, Wo, 2, C),
                               lambda n: (n, 0, 0, 0, 0, 0))],
        out_specs=pl.BlockSpec((1, Ho, Wo, 1, C), lambda n: (n, 0, 0, 0, 0)),
        compiler_params=pltpu.CompilerParams(dimension_semantics=("parallel",)),
    )(xr)
    return y.reshape(N, Ho, Wo, C)


# --------------------------------------------------------------------------- linear
def _linear_kernel(x_ref, w_ref, b_ref, o_ref, acc_ref, *, nk, relu):
    k = pl.program_id(1)

    @pl.when(k == 0)
    def _():
        acc_ref[...] = jnp.zeros_like(acc_ref)

    acc_ref[...] += jnp.dot(x_ref[...].astype(jnp.bfloat16), w_ref[...],
                            preferred_element_type=jnp.float32)

    @pl.when(k == nk - 1)
    def _():
        r = acc_ref[...] + b_ref[...]
        if relu:
            r = jnp.maximum(r, 0.0)
        o_ref[...] = r


def _pick_tile(dim, cap):
    """Largest multiple of 128 that divides `dim` and is <= cap; else `dim` itself.

    Falling back to the full dimension only happens for small dims here (e.g. the
    10-class output); large non-divisible dims would need masked tiling instead.
    """
    best = None
    t = 128
    while t <= min(dim, cap):
        if dim % t == 0:
            best = t
        t += 128
    return best if best is not None else dim


def linear(x, w_oi, b, relu):
    """y = x @ w_oi.T + b  (nn.Linear semantics).  x: (M, K), w_oi: (N, K)."""
    M, K = x.shape
    Nf = w_oi.shape[0]
    w = jnp.transpose(w_oi).astype(jnp.bfloat16)    # (K, N), bf16 weight stream
    tk = _pick_tile(K, 2048)                        # bf16 weight tile <= 4 MB/buffer
    tn = _pick_tile(Nf, 1024)                       #   -> safe on v7x's 64 MiB VMEM
    nk = K // tk
    b2 = b.reshape(1, Nf).astype(jnp.float32)

    flops = 2 * M * K * Nf
    bytes_accessed = M * K * 4 + K * Nf * 2 + Nf * 4 + M * Nf * 4

    kern = functools.partial(_linear_kernel, nk=nk, relu=relu)
    return pl.pallas_call(
        kern,
        out_shape=jax.ShapeDtypeStruct((M, Nf), jnp.float32),
        grid=(Nf // tn, nk),
        in_specs=[pl.BlockSpec((M, tk), lambda j, k: (0, k)),
                  pl.BlockSpec((tk, tn), lambda j, k: (k, j)),
                  pl.BlockSpec((1, tn), lambda j, k: (0, j))],
        out_specs=pl.BlockSpec((M, tn), lambda j, k: (0, j)),
        scratch_shapes=[pltpu.VMEM((M, tn), jnp.float32)],
        compiler_params=pltpu.CompilerParams(
            dimension_semantics=("parallel", "arbitrary"),
            vmem_limit_bytes=32 * 1024 * 1024),
        cost_estimate=pl.CostEstimate(flops=flops, transcendentals=0,
                                      bytes_accessed=bytes_accessed),
    )(x.astype(jnp.float32), w, b2)


# --------------------------------------------------------------- adaptive avg pool
def adaptive_avg_pool2d_nhwc(x, out_hw):
    # PyTorch AdaptiveAvgPool2d: window = [floor(i*In/Out), ceil((i+1)*In/Out)).
    # Expressed as two tiny pooling matrices; plain-JAX glue (not a hot path).
    N, H, W, C = x.shape
    OH, OW = out_hw

    def pmat(insz, outsz):
        m = np.zeros((outsz, insz), np.float32)
        for o in range(outsz):
            s = (o * insz) // outsz
            e = -(((-(o + 1)) * insz) // outsz)
            m[o, s:e] = 1.0 / (e - s)
        return jnp.asarray(m)

    Ph, Pw = pmat(H, OH), pmat(W, OW)
    return jnp.einsum('ph,nhwc,qw->npqc', Ph, x, Pw)


# ------------------------------------------------------------------------- network
VGG_CFG = [64, 64, 'M', 128, 128, 'M', 256, 256, 256, 'M',
           512, 512, 512, 'M', 512, 512, 512, 'M']


def init_params(key):
    """Deterministic synthetic parameters with PyTorch-style shapes."""
    params = {'features': [], 'classifier': []}
    cin = 3
    for v in VGG_CFG:
        if v == 'M':
            continue
        key, kw = jax.random.split(key)
        std = (2.0 / (cin * 9)) ** 0.5
        w = jax.random.normal(kw, (v, cin, 3, 3), jnp.float32) * std  # (Cout, Cin, 3, 3)
        b = jnp.zeros((v,), jnp.float32)
        params['features'].append((w, b))
        cin = v
    for fin, fout in [(512 * 7 * 7, 4096), (4096, 4096), (4096, 10)]:
        key, kw = jax.random.split(key)
        std = (2.0 / fin) ** 0.5
        w = jax.random.normal(kw, (fout, fin), jnp.float32) * std     # (out, in)
        b = jnp.zeros((fout,), jnp.float32)
        params['classifier'].append((w, b))
    return params


def vggnet_forward(params, x_nchw):
    x = jnp.transpose(x_nchw, (0, 2, 3, 1)).astype(jnp.float32)  # NCHW -> NHWC
    conv_it = iter(params['features'])
    for v in VGG_CFG:
        if v == 'M':
            x = maxpool2x2(x)
        else:
            w, b = next(conv_it)
            x = conv3x3_relu(x, w, b)
    x = adaptive_avg_pool2d_nhwc(x, (7, 7))                      # (N, 7, 7, 512)
    # torch.flatten(x, 1) on NCHW flattens in (C, H, W) order:
    x = jnp.transpose(x, (0, 3, 1, 2)).reshape(x.shape[0], -1)   # (N, 512*7*7)
    (w1, b1), (w2, b2), (w3, b3) = params['classifier']
    x = linear(x, w1, b1, relu=True)
    # TODO(synk): nn.Dropout() is treated as identity (eval-mode); PyTorch training-mode RNG not reproduced.
    x = linear(x, w2, b2, relu=True)
    x = linear(x, w3, b3, relu=False)
    return x


if __name__ == "__main__":
    key = jax.random.PRNGKey(0)
    kp, kx = jax.random.split(key)
    params = init_params(kp)
    x = jax.random.normal(kx, (2, 3, 32, 32), jnp.float32)       # NCHW, like PyTorch
    out = vggnet_forward(params, x)
    out = jax.block_until_ready(out)
    assert out.shape == (2, 10), out.shape
    assert bool(jnp.all(jnp.isfinite(out)))
    print("KERNEL_OK")
</pallas_src>

<mosaic_0001>
module attributes {stable_mosaic.version = 11 : i64} {
  func.func @_conv3x3_relu_kernel(%arg0: i32, %arg1: memref<1x1368x3xf32, #tpu.memory_space<vmem>>, %arg2: memref<3x3x3x64xbf16, #tpu.memory_space<vmem>>, %arg3: memref<1x64xf32, #tpu.memory_space<vmem>>, %arg4: memref<1x32x32x64xf32, #tpu.memory_space<vmem>>) attributes {dimension_semantics = [#tpu.dimension_semantics<parallel>], iteration_bounds = array<i64: 2>, scalar_prefetch = 0 : i64, scratch_operands = 0 : i64, tpu.core_type = #tpu.core_type<tc>, window_params = [{transform_indices = @transform_0, window_bounds = array<i64: 1, 1368, 3>}, {pipeline_mode = #tpu.pipeline_mode<synchronous>, transform_indices = @transform_1, window_bounds = array<i64: 3, 3, 3, 64>}, {pipeline_mode = #tpu.pipeline_mode<synchronous>, transform_indices = @transform_2, window_bounds = array<i64: 1, 64>}, {transform_indices = @transform_3, window_bounds = array<i64: 1, 32, 32, 64>}]} {
    %c0 = arith.constant 0 : index
    %c0_0 = arith.constant 0 : index
    %c0_1 = arith.constant 0 : index
    %0 = vector.load %arg1[%c0, %c0_0, %c0_1] : memref<1x1368x3xf32, #tpu.memory_space<vmem>>, vector<1x1368x3xf32>
    %1 = vector.shape_cast %0 : vector<1x1368x3xf32> to vector<1368x3xf32>
    %cst = arith.constant 0.000000e+00 : f32
    %2 = vector.broadcast %cst : f32 to vector<1280x64xf32>
    %3 = vector.extract_strided_slice %1 {offsets = [0, 0], sizes = [1280, 3], strides = [1, 1]} : vector<1368x3xf32> to vector<1280x3xf32>
    %4 = arith.truncf %3 : vector<1280x3xf32> to vector<1280x3xbf16>
    %c0_2 = arith.constant 0 : index
    %c0_3 = arith.constant 0 : index
    %c0_4 = arith.constant 0 : index
    %c0_5 = arith.constant 0 : index
    %5 = vector.load %arg2[%c0_2, %c0_3, %c0_4, %c0_5] : memref<3x3x3x64xbf16, #tpu.memory_space<vmem>>, vector<1x1x3x64xbf16>
    %6 = vector.shape_cast %5 : vector<1x1x3x64xbf16> to vector<3x64xbf16>
    %cst_6 = arith.constant dense<0.000000e+00> : vector<1280x64xf32>
    %7 = tpu.matmul %4, %6, %cst_6 {dimension_numbers = #tpu.dot_dimension_numbers<[1], [0], [0], [1], [0, 0, 1, 1], [], []>} : vector<1280x3xbf16>, vector<3x64xbf16>, vector<1280x64xf32> -> vector<1280x64xf32>
    %8 = arith.addf %2, %7 : vector<1280x64xf32>
    %9 = vector.extract_strided_slice %1 {offsets = [1, 0], sizes = [1280, 3], strides = [1, 1]} : vector<1368x3xf32> to vector<1280x3xf32>
    %10 = arith.truncf %9 : vector<1280x3xf32> to vector<1280x3xbf16>
    %c0_7 = arith.constant 0 : index
    %c1 = arith.constant 1 : index
    %c0_8 = arith.constant 0 : index
    %c0_9 = arith.constant 0 : index
    %11 = vector.load %arg2[%c0_7, %c1, %c0_8, %c0_9] : memref<3x3x3x64xbf16, #tpu.memory_space<vmem>>, vector<1x1x3x64xbf16>
    %12 = vector.shape_cast %11 : vector<1x1x3x64xbf16> to vector<3x64xbf16>
    %cst_10 = arith.constant dense<0.000000e+00> : vector<1280x64xf32>
    %13 = tpu.matmul %10, %12, %cst_10 {dimension_numbers = #tpu.dot_dimension_numbers<[1], [0], [0], [1], [0, 0, 1, 1], [], []>} : vector<1280x3xbf16>, vector<3x64xbf16>, vector<1280x64xf32> -> vector<1280x64xf32>
    %14 = arith.addf %8, %13 : vector<1280x64xf32>
    %15 = vector.extract_strided_slice %1 {offsets = [2, 0], sizes = [1280, 3], strides = [1, 1]} : vector<1368x3xf32> to vector<1280x3xf32>
    %16 = arith.truncf %15 : vector<1280x3xf32> to vector<1280x3xbf16>
    %c0_11 = arith.constant 0 : index
    %c2 = arith.constant 2 : index
    %c0_12 = arith.constant 0 : index
    %c0_13 = arith.constant 0 : index
    %17 = vector.load %arg2[%c0_11, %c2, %c0_12, %c0_13] : memref<3x3x3x64xbf16, #tpu.memory_space<vmem>>, vector<1x1x3x64xbf16>
    %18 = vector.shape_cast %17 : vector<1x1x3x64xbf16> to vector<3x64xbf16>
    %cst_14 = arith.constant dense<0.000000e+00> : vector<1280x64xf32>
    %19 = tpu.matmul %16, %18, %cst_14 {dimension_numbers = #tpu.dot_dimension_numbers<[1], [0], [0], [1], [0, 0, 1, 1], [], []>} : vector<1280x3xbf16>, vector<3x64xbf16>, vector<1280x64xf32> -> vector<1280x64xf32>
    %20 = arith.addf %14, %19 : vector<1280x64xf32>
    %21 = vector.extract_strided_slice %1 {offsets = [40, 0], sizes = [1280, 3], strides = [1, 1]} : vector<1368x3xf32> to vector<1280x3xf32>
    %22 = arith.truncf %21 : vector<1280x3xf32> to vector<1280x3xbf16>
    %c1_15 = arith.constant 1 : index
    %c0_16 = arith.constant 0 : index
    %c0_17 = arith.constant 0 : index
    %c0_18 = arith.constant 0 : index
    %23 = vector.load %arg2[%c1_15, %c0_16, %c0_17, %c0_18] : memref<3x3x3x64xbf16, #tpu.memory_space<vmem>>, vector<1x1x3x64xbf16>
    %24 = vector.shape_cast %23 : vector<1x1x3x64xbf16> to vector<3x64xbf16>
    %cst_19 = arith.constant dense<0.000000e+00> : vector<1280x64xf32>
    %25 = tpu.matmul %22, %24, %cst_19 {dimension_numbers = #tpu.dot_dimension_numbers<[1], [0], [0], [1], [0, 0, 1, 1], [], []>} : vector<1280x3xbf16>, vector<3x64xbf16>, vector<1280x64xf32> -> vector<1280x64xf32>
    %26 = arith.addf %20, %25 : vector<1280x64xf32>
    %27 = vector.extract_strided_slice %1 {offsets = [41, 0], sizes = [1280, 3], strides = [1, 1]} : vector<1368x3xf32> to vector<1280x3xf32>
    %28 = arith.truncf %27 : vector<1280x3xf32> to vector<1280x3xbf16>
    %c1_20 = arith.constant 1 : index
    %c1_21 = arith.constant 1 : index
    %c0_22 = arith.constant 0 : index
    %c0_23 = arith.constant 0 : index
    %29 = vector.load %arg2[%c1_20, %c1_21, %c0_22, %c0_23] : memref<3x3x3x64xbf16, #tpu.memory_space<vmem>>, vector<1x1x3x64xbf16>
    %30 = vector.shape_cast %29 : vector<1x1x3x64xbf16> to vector<3x64xbf16>
    %cst_24 = arith.constant dense<0.000000e+00> : vector<1280x64xf32>
    %31 = tpu.matmul %28, %30, %cst_24 {dimension_numbers = #tpu.dot_dimension_numbers<[1], [0], [0], [1], [0, 0, 1, 1], [], []>} : vector<1280x3xbf16>, vector<3x64xbf16>, vector<1280x64xf32> -> vector<1280x64xf32>
    %32 = arith.addf %26, %31 : vector<1280x64xf32>
    %33 = vector.extract_strided_slice %1 {offsets = [42, 0], sizes = [1280, 3], strides = [1, 1]} : vector<1368x3xf32> to vector<1280x3xf32>
    %34 = arith.truncf %33 : vector<1280x3xf32> to vector<1280x3xbf16>
    %c1_25 = arith.constant 1 : index
    %c2_26 = arith.constant 2 : index
    %c0_27 = arith.constant 0 : index
    %c0_28 = arith.constant 0 : index
    %35 = vector.load %arg2[%c1_25, %c2_26, %c0_27, %c0_28] : memref<3x3x3x64xbf16, #tpu.memory_space<vmem>>, vector<1x1x3x64xbf16>
    %36 = vector.shape_cast %35 : vector<1x1x3x64xbf16> to vector<3x64xbf16>
    %cst_29 = arith.constant dense<0.000000e+00> : vector<1280x64xf32>
    %37 = tpu.matmul %34, %36, %cst_29 {dimension_numbers = #tpu.dot_dimension_numbers<[1], [0], [0], [1], [0, 0, 1, 1], [], []>} : vector<1280x3xbf16>, vector<3x64xbf16>, vector<1280x64xf32> -> vector<1280x64xf32>
    %38 = arith.addf %32, %37 : vector<1280x64xf32>
    %39 = vector.extract_strided_slice %1 {offsets = [80, 0], sizes = [1280, 3], strides = [1, 1]} : vector<1368x3xf32> to vector<1280x3xf32>
    %40 = arith.truncf %39 : vector<1280x3xf32> to vector<1280x3xbf16>
    %c2_30 = arith.constant 2 : index
    %c0_31 = arith.constant 0 : index
    %c0_32 = arith.constant 0 : index
    %c0_33 = arith.constant 0 : index
    %41 = vector.load %arg2[%c2_30, %c0_31, %c0_32, %c0_33] : memref<3x3x3x64xbf16, #tpu.memory_space<vmem>>, vector<1x1x3x64xbf16>
    %42 = vector.shape_cast %41 : vector<1x1x3x64xbf16> to vector<3x64xbf16>
    %cst_34 = arith.constant dense<0.000000e+00> : vector<1280x64xf32>
    %43 = tpu.matmul %40, %42, %cst_34 {dimension_numbers = #tpu.dot_dimension_numbers<[1], [0], [0], [1], [0, 0, 1, 1], [], []>} : vector<1280x3xbf16>, vector<3x64xbf16>, vector<1280x64xf32> -> vector<1280x64xf32>
    %44 = arith.addf %38, %43 : vector<1280x64xf32>
    %45 = vector.extract_strided_slice %1 {offsets = [81, 0], sizes = [1280, 3], strides = [1, 1]} : vector<1368x3xf32> to vector<1280x3xf32>
    %46 = arith.truncf %45 : vector<1280x3xf32> to vector<1280x3xbf16>
    %c2_35 = arith.constant 2 : index
    %c1_36 = arith.constant 1 : index
    %c0_37 = arith.constant 0 : index
    %c0_38 = arith.constant 0 : index
    %47 = vector.load %arg2[%c2_35, %c1_36, %c0_37, %c0_38] : memref<3x3x3x64xbf16, #tpu.memory_space<vmem>>, vector<1x1x3x64xbf16>
    %48 = vector.shape_cast %47 : vector<1x1x3x64xbf16> to vector<3x64xbf16>
    %cst_39 = arith.constant dense<0.000000e+00> : vector<1280x64xf32>
    %49 = tpu.matmul %46, %48, %cst_39 {dimension_numbers = #tpu.dot_dimension_numbers<[1], [0], [0], [1], [0, 0, 1, 1], [], []>} : vector<1280x3xbf16>, vector<3x64xbf16>, vector<1280x64xf32> -> vector<1280x64xf32>
    %50 = arith.addf %44, %49 : vector<1280x64xf32>
    %51 = vector.extract_strided_slice %1 {offsets = [82, 0], sizes = [1280, 3], strides = [1, 1]} : vector<1368x3xf32> to vector<1280x3xf32>
    %52 = arith.truncf %51 : vector<1280x3xf32> to vector<1280x3xbf16>
    %c2_40 = arith.constant 2 : index
    %c2_41 = arith.constant 2 : index
    %c0_42 = arith.constant 0 : index
    %c0_43 = arith.constant 0 : index
    %53 = vector.load %arg2[%c2_40, %c2_41, %c0_42, %c0_43] : memref<3x3x3x64xbf16, #tpu.memory_space<vmem>>, vector<1x1x3x64xbf16>
    %54 = vector.shape_cast %53 : vector<1x1x3x64xbf16> to vector<3x64xbf16>
    %cst_44 = arith.constant dense<0.000000e+00> : vector<1280x64xf32>
    %55 = tpu.matmul %52, %54, %cst_44 {dimension_numbers = #tpu.dot_dimension_numbers<[1], [0], [0], [1], [0, 0, 1, 1], [], []>} : vector<1280x3xbf16>, vector<3x64xbf16>, vector<1280x64xf32> -> vector<1280x64xf32>
    %56 = arith.addf %50, %55 : vector<1280x64xf32>
    %c0_45 = arith.constant 0 : index
    %c0_46 = arith.constant 0 : index
    %57 = vector.load %arg3[%c0_45, %c0_46] : memref<1x64xf32, #tpu.memory_space<vmem>>, vector<1x64xf32>
    %58 = vector.broadcast %57 : vector<1x64xf32> to vector<1280x64xf32>
    %59 = arith.addf %56, %58 : vector<1280x64xf32>
    %cst_47 = arith.constant 0.000000e+00 : f32
    %60 = vector.broadcast %cst_47 : f32 to vector<1280x64xf32>
    %61 = arith.maximumf %59, %60 : vector<1280x64xf32>
    %62 = vector.shape_cast %61 : vector<1280x64xf32> to vector<32x40x64xf32>
    %63 = vector.extract_strided_slice %62 {offsets = [0, 0, 0], sizes = [32, 32, 64], strides = [1, 1, 1]} : vector<32x40x64xf32> to vector<32x32x64xf32>
    %c0_48 = arith.constant 0 : index
    %c0_49 = arith.constant 0 : index
    %c0_50 = arith.constant 0 : index
    %c0_51 = arith.constant 0 : index
    %64 = vector.load %arg4[%c0_48, %c0_49, %c0_50, %c0_51] : memref<1x32x32x64xf32, #tpu.memory_space<vmem>>, vector<1x32x32x64xf32>
    %65 = vector.shape_cast %64 : vector<1x32x32x64xf32> to vector<32x32x64xf32>
    %66 = vector.shape_cast %63 : vector<32x32x64xf32> to vector<1x32x32x64xf32>
    tpu.vector_store %arg4[%c0_48, %c0_49, %c0_50, %c0_51], %66 {strides = array<i32>} : memref<1x32x32x64xf32, #tpu.memory_space<vmem>>, vector<1x32x32x64xf32>,
    return
  }
  func.func @transform_0(%arg0: i32) -> (i32, i32, i32) {
    %c0_i32 = arith.constant 0 : i32
    %c0_i32_0 = arith.constant 0 : i32
    %c0_i32_1 = arith.constant 0 : i32
    return %arg0, %c0_i32, %c0_i32_0 : i32, i32, i32
  }
  func.func @transform_1(%arg0: i32) -> (i32, i32, i32, i32) {
    %c0_i32 = arith.constant 0 : i32
    %c0_i32_0 = arith.constant 0 : i32
    %c0_i32_1 = arith.constant 0 : i32
    %c0_i32_2 = arith.constant 0 : i32
    %c0_i32_3 = arith.constant 0 : i32
    return %c0_i32, %c0_i32_0, %c0_i32_1, %c0_i32_2 : i32, i32, i32, i32
  }
  func.func @transform_2(%arg0: i32) -> (i32, i32) {
    %c0_i32 = arith.constant 0 : i32
    %c0_i32_0 = arith.constant 0 : i32
    %c0_i32_1 = arith.constant 0 : i32
    return %c0_i32, %c0_i32_0 : i32, i32
  }
  func.func @transform_3(%arg0: i32) -> (i32, i32, i32, i32) {
    %c0_i32 = arith.constant 0 : i32
    %c0_i32_0 = arith.constant 0 : i32
    %c0_i32_1 = arith.constant 0 : i32
    %c0_i32_2 = arith.constant 0 : i32
    return %arg0, %c0_i32, %c0_i32_0, %c0_i32_1 : i32, i32, i32, i32
  }
}

</mosaic_0001>

<llo_original>
// kernel: tpu_custom_call.1
$region0: #{tpu_custom_call.1}
  #allocation0 [shape = 'u32[]', space=smem, size = 0x4, offset = 0x4, fixed_abs, tag = 'smem constant byte address 0x4 - core index']
  #allocation1 [shape = 'u32[144,128]{1,0:T(1,128)}', space=vmem, size = 0x12000, scoped, tag = 'internal scratch']
  %s0 = inlined_call_operand.vmem [shape: f32[2,1368,3], index: 0, kind: input, shape index: {}]
  %s1 = inlined_call_operand.vmem [shape: bf16[3,3,3,64], index: 1, kind: input, shape index: {}]
  %s2 = inlined_call_operand.vmem [shape: f32[1,64], index: 2, kind: input, shape index: {}]
  %s3 = inlined_call_operand.hbm [shape: f32[2,32,32,64], index: 3, kind: output, shape index: {}]
  %s4 = sld [smem:[#allocation0]]
  $region45: #{tpu_custom_call.1} parent=0
    _
  %s6 = ssub.s32 1, %s4
  %s7 = scalar_select 0, %s6, %s4
  $region1: #{tpu_custom_call.1} parent=0
    #allocation2 [shape = 'u8[1048576]{0}', space=vmem, size = 0x100000, scoped, tag = 'output window, operand 0']
    #allocation3 [shape = 's32[2]{0}', space=sflag, size = 0x8, scoped, tag = 'scoped memory for tpu_custom_call.1']
    %8 = vsyncpa [#allocation3], 0
    %s9 = scalar_lea.sflag [#allocation3], 1
    %10 = vsyncpa %s9, 0
    loop: start=0, step=1, limit=4
    $region2: #{tpu_custom_call.1} parent=1 // loop_pre_header
      _
    $region3: #{tpu_custom_call.1} parent=1 // loop_header
      %s12 = sphi 0, %s16
      %p13 = scmp.ge.s32.totalorder %s12, 4
      %s22 = sphi 0, %s24
      %s25 = sphi 0, %s22
      %s26 = sphi 0, %s25
      %s42 = sphi 0, %s26
      %s46 = sphi 0, %s46
      %s48 = sphi 0, %s46
      %s49 = sphi 0, %s48
      %s63 = sphi 0, %s49
      %s67 = sphi 0, %s67
      %s69 = sphi 0, %s67
      %s70 = sphi 0, %s69
      %s84 = sphi 0, %s70
      %s90 = sphi 0, %s92
      %s93 = sphi 0, %s90
      %s94 = sphi 0, %s93
      %s110 = sphi 0, %s94
    $region4: #{tpu_custom_call.1} parent=1 // loop_header_branch
      %15 = sbr.rel (%p13) target = $region8
    $region5: #{tpu_custom_call.1} parent=1 // loop_body
      %s17 = ssub.s32 %s12, 1
      %s18 = ssub.s32 %s12, 2
      %s19 = sadd.s32 %s12, 1
      %s20 = ssub.s32 %s12, %s19
      %p21 = scmp.eq.s32.totalorder %s20, 0
      %s23 = sadd.s32 %s22, 1
      %s24 = scalar_select %p21, %s22, %s23
      %p27 = pneg %p21
      %p28 = scmp.eq.s32.totalorder %s12, 1
      %p29 = por %p27, %p28
      %p30 = scmp.ne.s32.totalorder %s22, %s25
      %p31 = scmp.eq.s32.totalorder %s12, 0
      %p32 = por %p30, %p31
      %p33 = scmp.ne.s32.totalorder %s22, %s25
      %p34 = scmp.eq.s32.totalorder %s17, 1
      %p35 = por %p33, %p34
      %p36 = scmp.ne.s32.totalorder %s25, %s26
      %p37 = scmp.eq.s32.totalorder %s17, 0
      %p38 = por %p36, %p37
      %p39 = scmp.ne.s32.totalorder %s25, %s26
      %p40 = scmp.eq.s32.totalorder %s18, 1
      %p41 = por %p39, %p40
      %p43 = scmp.ne.s32.totalorder %s26, %s42
      %p44 = scmp.eq.s32.totalorder %s18, 0
      %p45 = por %p43, %p44
      %s47 = sadd.s32 %s46, 1
      %p50 = scmp.eq.s32.totalorder %s12, 1
      %p51 = scmp.ne.s32.totalorder %s46, %s48
      %p52 = scmp.eq.s32.totalorder %s12, 0
      %p53 = por %p51, %p52
      %p54 = scmp.ne.s32.totalorder %s46, %s48
      %p55 = scmp.eq.s32.totalorder %s17, 1
      %p56 = por %p54, %p55
      %p57 = scmp.ne.s32.totalorder %s48, %s49
      %p58 = scmp.eq.s32.totalorder %s17, 0
      %p59 = por %p57, %p58
      %p60 = scmp.ne.s32.totalorder %s48, %s49
      %p61 = scmp.eq.s32.totalorder %s18, 1
      %p62 = por %p60, %p61
      %p64 = scmp.ne.s32.totalorder %s49, %s63
      %p65 = scmp.eq.s32.totalorder %s18, 0
      %p66 = por %p64, %p65
      %s68 = sadd.s32 %s67, 1
      %p71 = scmp.eq.s32.totalorder %s12, 1
      %p72 = scmp.ne.s32.totalorder %s67, %s69
      %p73 = scmp.eq.s32.totalorder %s12, 0
      %p74 = por %p72, %p73
      %p75 = scmp.ne.s32.totalorder %s67, %s69
      %p76 = scmp.eq.s32.totalorder %s17, 1
      %p77 = por %p75, %p76
      %p78 = scmp.ne.s32.totalorder %s69, %s70
      %p79 = scmp.eq.s32.totalorder %s17, 0
      %p80 = por %p78, %p79
      %p81 = scmp.ne.s32.totalorder %s69, %s70
      %p82 = scmp.eq.s32.totalorder %s18, 1
      %p83 = por %p81, %p82
      %p85 = scmp.ne.s32.totalorder %s70, %s84
      %p86 = scmp.eq.s32.totalorder %s18, 0
      %p87 = por %p85, %p86
      %s88 = ssub.s32 %s12, %s19
      %p89 = scmp.eq.s32.totalorder %s88, 0
      %s91 = sadd.s32 %s90, 1
      %s92 = scalar_select %p89, %s90, %s91
      %p95 = pneg %p89
      %p96 = scmp.eq.s32.totalorder %s12, 1
      %p97 = por %p95, %p96
      %p98 = scmp.ne.s32.totalorder %s90, %s93
      %p99 = scmp.eq.s32.totalorder %s12, 0
      %p100 = por %p98, %p99
      %p101 = scmp.ne.s32.totalorder %s90, %s93
      %p102 = scmp.eq.s32.totalorder %s17, 1
      %p103 = por %p101, %p102
      %p104 = scmp.ne.s32.totalorder %s93, %s94
      %p105 = scmp.eq.s32.totalorder %s17, 0
      %p106 = por %p104, %p105
      %p107 = scmp.ne.s32.totalorder %s93, %s94
      %p108 = scmp.eq.s32.totalorder %s18, 1
      %p109 = por %p107, %p108
      %p111 = scmp.ne.s32.totalorder %s94, %s110
      %p112 = scmp.eq.s32.totalorder %s18, 0
      %p113 = por %p111, %p112
      %p114 = scmp.le.s32.totalorder 1, %s12
      %p115 = scmp.lt.s32.totalorder %s12, 3
      %p116 = pnand %p114, %p115
      %p117 = pneg %p116
      // Predicated region
      $region9: #{tpu_custom_call.1} parent=5 // pred_check
        _
      $region10: #{tpu_custom_call.1} parent=5 // pred_check_branch
        %119 = sbr.rel (%p116) target = $region12
      $region11: #{tpu_custom_call.1} parent=5 // pred_region
        %s120 = ssub.s32 %s12, 1
        // Predicated region
        $region13: #{tpu_custom_call.1} parent=11 // pred_check
          %p121 = pneg %p59
        $region14: #{tpu_custom_call.1} parent=11 // pred_check_branch
          %123 = sbr.rel (%p121) target = $region16
        $region15: #{tpu_custom_call.1} parent=11 // pred_region
          _
        $region16: #{tpu_custom_call.1} parent=11 // pred_fallthru
          _
        // Predicated region
        $region17: #{tpu_custom_call.1} parent=11 // pred_check
          %p124 = pneg %p80
        $region18: #{tpu_custom_call.1} parent=11 // pred_check_branch
          %126 = sbr.rel (%p124) target = $region20
        $region19: #{tpu_custom_call.1} parent=11 // pred_region
          _
        $region20: #{tpu_custom_call.1} parent=11 // pred_fallthru
          _
      $region12: #{tpu_custom_call.1} parent=5 // pred_fallthru
        _
      %p127 = scmp.lt.s32.totalorder %s12, 2
      // Predicated region
      $region21: #{tpu_custom_call.1} parent=5 // pred_check
        %p128 = pneg %p127
      $region22: #{tpu_custom_call.1} parent=5 // pred_check_branch
        %130 = sbr.rel (%p128) target = $region24
      $region23: #{tpu_custom_call.1} parent=5 // pred_region
        // Predicated region
        $region25: #{tpu_custom_call.1} parent=23 // pred_check
          %p131 = pneg %p32
        $region26: #{tpu_custom_call.1} parent=23 // pred_check_branch
          %133 = sbr.rel (%p131) target = $region28
        $region27: #{tpu_custom_call.1} parent=23 // pred_region
          %p134 = scmp.lt.s32.totalorder %s12, 1
          %s135 = scalar_select %p134, %s12, 1
          %s136 = smul.addr %s135, 171
          %s137 = smul.addr %s136, 8
          %s138 = scalar_lea.vmem %s0, %s137
        $region28: #{tpu_custom_call.1} parent=23 // pred_fallthru
          _
      $region24: #{tpu_custom_call.1} parent=5 // pred_fallthru
        _
      %p139 = scmp.le.s32.totalorder 1, %s12
      %p140 = scmp.lt.s32.totalorder %s12, 3
      %p141 = pnand %p139, %p140
      %p142 = pneg %p141
      // Predicated region
      $region29: #{tpu_custom_call.1} parent=5 // pred_check
        _
      $region30: #{tpu_custom_call.1} parent=5 // pred_check_branch
        %144 = sbr.rel (%p141) target = $region32
      $region31: #{tpu_custom_call.1} parent=5 // pred_region
        %s145 = ssub.s32 %s12, 1
        %p146 = scmp.lt.s32.totalorder %s17, 1
        %s147 = scalar_select %p146, %s17, 1
        %s148 = smul.addr %s147, 171
        %s149 = smul.addr %s148, 8
        %s150 = scalar_lea.vmem %s0, %s149
        %p151 = pneg %p38
        %p152 = pneg %p35
        %p153 = pneg %p59
        %p154 = pneg %p56
        %p155 = pneg %p80
        %p156 = pneg %p77
        %p157 = pneg %p106
        %p158 = pneg %p103
        %s159 = sand.u32 %s93, 1
        %s160 = scalar_lea.sflag [#allocation3], %s159
        %s161 = sand.u32 %s93, 1
        %s162 = smul.addr %s161, 1024
        %s163 = scalar_lea.vmem [#allocation2], %s162
        %p164 = scmp.lt.s32.totalorder %s17, 1
        %s165 = scalar_select %p164, %s17, 1
        %s166 = smul.addr %s165, 171
        %s167 = smul.addr %s166, 8
        %s168 = scalar_lea.vmem %s0, %s167
        %v170 = vld [vmem:[%s168] sm:$0xff]
        %v171 = vld [vmem:[%s168 + $0x8] sm:$0xff]
        %v172 = vld [vmem:[%s168 + $0x10] sm:$0xff]
        %v173 = vld [vmem:[%s168 + $0x18] sm:$0xff]
        %v174 = vld [vmem:[%s168 + $0x20] sm:$0xff]
        %v175 = vld [vmem:[%s168 + $0x28] sm:$0xff]
        %v176 = vld [vmem:[%s168 + $0x30] sm:$0xff]
        %v177 = vld [vmem:[%s168 + $0x38] sm:$0xff]
        %v178 = vld [vmem:[%s168 + $0x40] sm:$0xff]
        %v179 = vld [vmem:[%s168 + $0x48] sm:$0xff]
        %v180 = vld [vmem:[%s168 + $0x50] sm:$0xff]
        %v181 = vld [vmem:[%s168 + $0x58] sm:$0xff]
        %v182 = vld [vmem:[%s168 + $0x60] sm:$0xff]
        %v183 = vld [vmem:[%s168 + $0x68] sm:$0xff]
        %v184 = vld [vmem:[%s168 + $0x70] sm:$0xff]
        %v185 = vld [vmem:[%s168 + $0x78] sm:$0xff]
        %v186 = vld [vmem:[%s168 + $0x80] sm:$0xff]
        %v187 = vld [vmem:[%s168 + $0x88] sm:$0xff]
        %v188 = vld [vmem:[%s168 + $0x90] sm:$0xff]
        %v189 = vld [vmem:[%s168 + $0x98] sm:$0xff]
        %v190 = vld [vmem:[%s168 + $0xa0] sm:$0xff]
        %v191 = vld [vmem:[%s168 + $0xa8] sm:$0xff]
        %v192 = vld [vmem:[%s168 + $0xb0] sm:$0xff]
        %v193 = vld [vmem:[%s168 + $0xb8] sm:$0xff]
        %v194 = vld [vmem:[%s168 + $0xc0] sm:$0xff]
        %v195 = vld [vmem:[%s168 + $0xc8] sm:$0xff]
        %v196 = vld [vmem:[%s168 + $0xd0] sm:$0xff]
        %v197 = vld [vmem:[%s168 + $0xd8] sm:$0xff]
        %v198 = vld [vmem:[%s168 + $0xe0] sm:$0xff]
        %v199 = vld [vmem:[%s168 + $0xe8] sm:$0xff]
        %v200 = vld [vmem:[%s168 + $0xf0] sm:$0xff]
        %v201 = vld [vmem:[%s168 + $0xf8] sm:$0xff]
        %v202 = vld [vmem:[%s168 + $0x100] sm:$0xff]
        %v203 = vld [vmem:[%s168 + $0x108] sm:$0xff]
        %v204 = vld [vmem:[%s168 + $0x110] sm:$0xff]
        %v205 = vld [vmem:[%s168 + $0x118] sm:$0xff]
        %v206 = vld [vmem:[%s168 + $0x120] sm:$0xff]
        %v207 = vld [vmem:[%s168 + $0x128] sm:$0xff]
        %v208 = vld [vmem:[%s168 + $0x130] sm:$0xff]
        %v209 = vld [vmem:[%s168 + $0x138] sm:$0xff]
        %v210 = vld [vmem:[%s168 + $0x140] sm:$0xff]
        %v211 = vld [vmem:[%s168 + $0x148] sm:$0xff]
        %v212 = vld [vmem:[%s168 + $0x150] sm:$0xff]
        %v213 = vld [vmem:[%s168 + $0x158] sm:$0xff]
        %v214 = vld [vmem:[%s168 + $0x160] sm:$0xff]
        %v215 = vld [vmem:[%s168 + $0x168] sm:$0xff]
        %v216 = vld [vmem:[%s168 + $0x170] sm:$0xff]
        %v217 = vld [vmem:[%s168 + $0x178] sm:$0xff]
        %v218 = vld [vmem:[%s168 + $0x180] sm:$0xff]
        %v219 = vld [vmem:[%s168 + $0x188] sm:$0xff]
        %v220 = vld [vmem:[%s168 + $0x190] sm:$0xff]
        %v221 = vld [vmem:[%s168 + $0x198] sm:$0xff]
        %v222 = vld [vmem:[%s168 + $0x1a0] sm:$0xff]
        %v223 = vld [vmem:[%s168 + $0x1a8] sm:$0xff]
        %v224 = vld [vmem:[%s168 + $0x1b0] sm:$0xff]
        %v225 = vld [vmem:[%s168 + $0x1b8] sm:$0xff]
        %v226 = vld [vmem:[%s168 + $0x1c0] sm:$0xff]
        %v227 = vld [vmem:[%s168 + $0x1c8] sm:$0xff]
        %v228 = vld [vmem:[%s168 + $0x1d0] sm:$0xff]
        %v229 = vld [vmem:[%s168 + $0x1d8] sm:$0xff]
        %v230 = vld [vmem:[%s168 + $0x1e0] sm:$0xff]
        %v231 = vld [vmem:[%s168 + $0x1e8] sm:$0xff]
        %v232 = vld [vmem:[%s168 + $0x1f0] sm:$0xff]
        %v233 = vld [vmem:[%s168 + $0x1f8] sm:$0xff]
        %v234 = vld [vmem:[%s168 + $0x200] sm:$0xff]
        %v235 = vld [vmem:[%s168 + $0x208] sm:$0xff]
        %v236 = vld [vmem:[%s168 + $0x210] sm:$0xff]
        %v237 = vld [vmem:[%s168 + $0x218] sm:$0xff]
        %v238 = vld [vmem:[%s168 + $0x220] sm:$0xff]
        %v239 = vld [vmem:[%s168 + $0x228] sm:$0xff]
        %v240 = vld [vmem:[%s168 + $0x230] sm:$0xff]
        %v241 = vld [vmem:[%s168 + $0x238] sm:$0xff]
        %v242 = vld [vmem:[%s168 + $0x240] sm:$0xff]
        %v243 = vld [vmem:[%s168 + $0x248] sm:$0xff]
        %v244 = vld [vmem:[%s168 + $0x250] sm:$0xff]
        %v245 = vld [vmem:[%s168 + $0x258] sm:$0xff]
        %v246 = vld [vmem:[%s168 + $0x260] sm:$0xff]
        %v247 = vld [vmem:[%s168 + $0x268] sm:$0xff]
        %v248 = vld [vmem:[%s168 + $0x270] sm:$0xff]
        %v249 = vld [vmem:[%s168 + $0x278] sm:$0xff]
        %v250 = vld [vmem:[%s168 + $0x280] sm:$0xff]
        %v251 = vld [vmem:[%s168 + $0x288] sm:$0xff]
        %v252 = vld [vmem:[%s168 + $0x290] sm:$0xff]
        %v253 = vld [vmem:[%s168 + $0x298] sm:$0xff]
        %v254 = vld [vmem:[%s168 + $0x2a0] sm:$0xff]
        %v255 = vld [vmem:[%s168 + $0x2a8] sm:$0xff]
        %v256 = vld [vmem:[%s168 + $0x2b0] sm:$0xff]
        %v257 = vld [vmem:[%s168 + $0x2b8] sm:$0xff]
        %v258 = vld [vmem:[%s168 + $0x2c0] sm:$0xff]
        %v259 = vld [vmem:[%s168 + $0x2c8] sm:$0xff]
        %v260 = vld [vmem:[%s168 + $0x2d0] sm:$0xff]
        %v261 = vld [vmem:[%s168 + $0x2d8] sm:$0xff]
        %v262 = vld [vmem:[%s168 + $0x2e0] sm:$0xff]
        %v263 = vld [vmem:[%s168 + $0x2e8] sm:$0xff]
        %v264 = vld [vmem:[%s168 + $0x2f0] sm:$0xff]
        %v265 = vld [vmem:[%s168 + $0x2f8] sm:$0xff]
        %v266 = vld [vmem:[%s168 + $0x300] sm:$0xff]
        %v267 = vld [vmem:[%s168 + $0x308] sm:$0xff]
        %v268 = vld [vmem:[%s168 + $0x310] sm:$0xff]
        %v269 = vld [vmem:[%s168 + $0x318] sm:$0xff]
        %v270 = vld [vmem:[%s168 + $0x320] sm:$0xff]
        %v271 = vld [vmem:[%s168 + $0x328] sm:$0xff]
        %v272 = vld [vmem:[%s168 + $0x330] sm:$0xff]
        %v273 = vld [vmem:[%s168 + $0x338] sm:$0xff]
        %v274 = vld [vmem:[%s168 + $0x340] sm:$0xff]
        %v275 = vld [vmem:[%s168 + $0x348] sm:$0xff]
        %v276 = vld [vmem:[%s168 + $0x350] sm:$0xff]
        %v277 = vld [vmem:[%s168 + $0x358] sm:$0xff]
        %v278 = vld [vmem:[%s168 + $0x360] sm:$0xff]
        %v279 = vld [vmem:[%s168 + $0x368] sm:$0xff]
        %v280 = vld [vmem:[%s168 + $0x370] sm:$0xff]
        %v281 = vld [vmem:[%s168 + $0x378] sm:$0xff]
        %v282 = vld [vmem:[%s168 + $0x380] sm:$0xff]
        %v283 = vld [vmem:[%s168 + $0x388] sm:$0xff]
        %v284 = vld [vmem:[%s168 + $0x390] sm:$0xff]
        %v285 = vld [vmem:[%s168 + $0x398] sm:$0xff]
        %v286 = vld [vmem:[%s168 + $0x3a0] sm:$0xff]
        %v287 = vld [vmem:[%s168 + $0x3a8] sm:$0xff]
        %v288 = vld [vmem:[%s168 + $0x3b0] sm:$0xff]
        %v289 = vld [vmem:[%s168 + $0x3b8] sm:$0xff]
        %v290 = vld [vmem:[%s168 + $0x3c0] sm:$0xff]
        %v291 = vld [vmem:[%s168 + $0x3c8] sm:$0xff]
        %v292 = vld [vmem:[%s168 + $0x3d0] sm:$0xff]
        %v293 = vld [vmem:[%s168 + $0x3d8] sm:$0xff]
        %v294 = vld [vmem:[%s168 + $0x3e0] sm:$0xff]
        %v295 = vld [vmem:[%s168 + $0x3e8] sm:$0xff]
        %v296 = vld [vmem:[%s168 + $0x3f0] sm:$0xff]
        %v297 = vld [vmem:[%s168 + $0x3f8] sm:$0xff]
        %v298 = vld [vmem:[%s168 + $0x400] sm:$0xff]
        %v299 = vld [vmem:[%s168 + $0x408] sm:$0xff]
        %v300 = vld [vmem:[%s168 + $0x410] sm:$0xff]
        %v301 = vld [vmem:[%s168 + $0x418] sm:$0xff]
        %v302 = vld [vmem:[%s168 + $0x420] sm:$0xff]
        %v303 = vld [vmem:[%s168 + $0x428] sm:$0xff]
        %v304 = vld [vmem:[%s168 + $0x430] sm:$0xff]
        %v305 = vld [vmem:[%s168 + $0x438] sm:$0xff]
        %v306 = vld [vmem:[%s168 + $0x440] sm:$0xff]
        %v307 = vld [vmem:[%s168 + $0x448] sm:$0xff]
        %v308 = vld [vmem:[%s168 + $0x450] sm:$0xff]
        %v309 = vld [vmem:[%s168 + $0x458] sm:$0xff]
        %v310 = vld [vmem:[%s168 + $0x460] sm:$0xff]
        %v311 = vld [vmem:[%s168 + $0x468] sm:$0xff]
        %v312 = vld [vmem:[%s168 + $0x470] sm:$0xff]
        %v313 = vld [vmem:[%s168 + $0x478] sm:$0xff]
        %v314 = vld [vmem:[%s168 + $0x480] sm:$0xff]
        %v315 = vld [vmem:[%s168 + $0x488] sm:$0xff]
        %v316 = vld [vmem:[%s168 + $0x490] sm:$0xff]
        %v317 = vld [vmem:[%s168 + $0x498] sm:$0xff]
        %v318 = vld [vmem:[%s168 + $0x4a0] sm:$0xff]
        %v319 = vld [vmem:[%s168 + $0x4a8] sm:$0xff]
        %v320 = vld [vmem:[%s168 + $0x4b0] sm:$0xff]
        %v321 = vld [vmem:[%s168 + $0x4b8] sm:$0xff]
        %v322 = vld [vmem:[%s168 + $0x4c0] sm:$0xff]
        %v323 = vld [vmem:[%s168 + $0x4c8] sm:$0xff]
        %v324 = vld [vmem:[%s168 + $0x4d0] sm:$0xff]
        %v325 = vld [vmem:[%s168 + $0x4d8] sm:$0xff]
        %v326 = vld [vmem:[%s168 + $0x4e0] sm:$0xff]
        %v327 = vld [vmem:[%s168 + $0x4e8] sm:$0xff]
        %v328 = vld [vmem:[%s168 + $0x4f0] sm:$0xff]
        %v329 = vld [vmem:[%s168 + $0x4f8] sm:$0xff]
        %v330 = vld [vmem:[%s168 + $0x500] sm:$0xff]
        %v331 = vld [vmem:[%s168 + $0x508] sm:$0xff]
        %v332 = vld [vmem:[%s168 + $0x510] sm:$0xff]
        %v333 = vld [vmem:[%s168 + $0x518] sm:$0xff]
        %v334 = vld [vmem:[%s168 + $0x520] sm:$0xff]
        %v335 = vld [vmem:[%s168 + $0x528] sm:$0xff]
        %v336 = vld [vmem:[%s168 + $0x530] sm:$0xff]
        %v337 = vld [vmem:[%s168 + $0x538] sm:$0xff]
        %v338 = vld [vmem:[%s168 + $0x540] sm:$0xff]
        %v339 = vld [vmem:[%s168 + $0x548] sm:$0xff]
        %v340 = vld [vmem:[%s168 + $0x550] sm:$0xff]
        %v341 = vpack.c.bf16 %v171, %v170
        %v342 = vpack.c.bf16 %v173, %v172
        %v343 = vpack.c.bf16 %v175, %v174
        %v344 = vpack.c.bf16 %v177, %v176
        %v345 = vpack.c.bf16 %v179, %v178
        %v346 = vpack.c.bf16 %v181, %v180
        %v347 = vpack.c.bf16 %v183, %v182
        %v348 = vpack.c.bf16 %v185, %v184
        %v349 = vpack.c.bf16 %v187, %v186
        %v350 = vpack.c.bf16 %v189, %v188
        %v351 = vpack.c.bf16 %v191, %v190
        %v352 = vpack.c.bf16 %v193, %v192
        %v353 = vpack.c.bf16 %v195, %v194
        %v354 = vpack.c.bf16 %v197, %v196
        %v355 = vpack.c.bf16 %v199, %v198
        %v356 = vpack.c.bf16 %v201, %v200
        %v357 = vpack.c.bf16 %v203, %v202
        %v358 = vpack.c.bf16 %v205, %v204
        %v359 = vpack.c.bf16 %v207, %v206
        %v360 = vpack.c.bf16 %v209, %v208
        %v361 = vpack.c.bf16 %v211, %v210
        %v362 = vpack.c.bf16 %v213, %v212
        %v363 = vpack.c.bf16 %v215, %v214
        %v364 = vpack.c.bf16 %v217, %v216
        %v365 = vpack.c.bf16 %v219, %v218
        %v366 = vpack.c.bf16 %v221, %v220
        %v367 = vpack.c.bf16 %v223, %v222
        %v368 = vpack.c.bf16 %v225, %v224
        %v369 = vpack.c.bf16 %v227, %v226
        %v370 = vpack.c.bf16 %v229, %v228
        %v371 = vpack.c.bf16 %v231, %v230
        %v372 = vpack.c.bf16 %v233, %v232
        %v373 = vpack.c.bf16 %v235, %v234
        %v374 = vpack.c.bf16 %v237, %v236
        %v375 = vpack.c.bf16 %v239, %v238
        %v376 = vpack.c.bf16 %v241, %v240
        %v377 = vpack.c.bf16 %v243, %v242
        %v378 = vpack.c.bf16 %v245, %v244
        %v379 = vpack.c.bf16 %v247, %v246
        %v380 = vpack.c.bf16 %v249, %v248
        %v381 = vpack.c.bf16 %v251, %v250
        %v382 = vpack.c.bf16 %v253, %v252
        %v383 = vpack.c.bf16 %v255, %v254
        %v384 = vpack.c.bf16 %v257, %v256
        %v385 = vpack.c.bf16 %v259, %v258
        %v386 = vpack.c.bf16 %v261, %v260
        %v387 = vpack.c.bf16 %v263, %v262
        %v388 = vpack.c.bf16 %v265, %v264
        %v389 = vpack.c.bf16 %v267, %v266
        %v390 = vpack.c.bf16 %v269, %v268
        %v391 = vpack.c.bf16 %v271, %v270
        %v392 = vpack.c.bf16 %v273, %v272
        %v393 = vpack.c.bf16 %v275, %v274
        %v394 = vpack.c.bf16 %v277, %v276
        %v395 = vpack.c.bf16 %v279, %v278
        %v396 = vpack.c.bf16 %v281, %v280
        %v397 = vpack.c.bf16 %v283, %v282
        %v398 = vpack.c.bf16 %v285, %v284
        %v399 = vpack.c.bf16 %v287, %v286
        %v400 = vpack.c.bf16 %v289, %v288
        %v401 = vpack.c.bf16 %v291, %v290
        %v402 = vpack.c.bf16 %v293, %v292
        %v403 = vpack.c.bf16 %v295, %v294
        %v404 = vpack.c.bf16 %v297, %v296
        %v405 = vpack.c.bf16 %v299, %v298
        %v406 = vpack.c.bf16 %v301, %v300
        %v407 = vpack.c.bf16 %v303, %v302
        %v408 = vpack.c.bf16 %v305, %v304
        %v409 = vpack.c.bf16 %v307, %v306
        %v410 = vpack.c.bf16 %v309, %v308
        %v411 = vpack.c.bf16 %v311, %v310
        %v412 = vpack.c.bf16 %v313, %v312
        %v413 = vpack.c.bf16 %v315, %v314
        %v414 = vpack.c.bf16 %v317, %v316
        %v415 = vpack.c.bf16 %v319, %v318
        %v416 = vpack.c.bf16 %v321, %v320
        %v417 = vpack.c.bf16 %v323, %v322
        %v418 = vpack.c.bf16 %v325, %v324
        %v419 = vpack.c.bf16 %v327, %v326
        %v420 = vpack.c.bf16 %v329, %v328
        %v421 = vld [vmem:[%s1] sm:$0x3]
        %v422 = vpack.c.bf16 %v330, %v330
        %s423 = scalar_lea.vmem %s1, 2
        %v424 = vld [vmem:[%s423] sm:$0x3]
        %vm425 = vsmask.f32 7424
        %v427 = vshrl.u32 %v341, 16
        %v429 = vshll.u32 %v341, 16
        %v431 = vrot.slane %v429, 1
        %v432 = vor.u32 %v427, %v431
        %v434 = vshll.u32 %v342, 16
        %v436 = vrot.slane %v434, 1
        %v437 = vsel %vm425, %v432, %v436
        %v438 = vshrl.u32 %v342, 16
        %v440 = vor.u32 %v438, %v436
        %v442 = vshll.u32 %v343, 16
        %v444 = vrot.slane %v442, 1
        %v445 = vsel %vm425, %v440, %v444
        %v446 = vshrl.u32 %v343, 16
        %v448 = vor.u32 %v446, %v444
        %v450 = vshll.u32 %v344, 16
        %v452 = vrot.slane %v450, 1
        %v453 = vsel %vm425, %v448, %v452
        %v454 = vshrl.u32 %v344, 16
        %v456 = vor.u32 %v454, %v452
        %v458 = vshll.u32 %v345, 16
        %v460 = vrot.slane %v458, 1
        %v461 = vsel %vm425, %v456, %v460
        %v462 = vshrl.u32 %v345, 16
        %v464 = vor.u32 %v462, %v460
        %v466 = vshll.u32 %v346, 16
        %v468 = vrot.slane %v466, 1
        %v469 = vsel %vm425, %v464, %v468
        %v470 = vshrl.u32 %v346, 16
        %v472 = vor.u32 %v470, %v468
        %v474 = vshll.u32 %v347, 16
        %v476 = vrot.slane %v474, 1
        %v477 = vsel %vm425, %v472, %v476
        %v478 = vshrl.u32 %v347, 16
        %v480 = vor.u32 %v478, %v476
        %v482 = vshll.u32 %v348, 16
        %v484 = vrot.slane %v482, 1
        %v485 = vsel %vm425, %v480, %v484
        %v486 = vshrl.u32 %v348, 16
        %v488 = vor.u32 %v486, %v484
        %v490 = vshll.u32 %v349, 16
        %v492 = vrot.slane %v490, 1
        %v493 = vsel %vm425, %v488, %v492
        %v494 = vshrl.u32 %v349, 16
        %v496 = vor.u32 %v494, %v492
        %v498 = vshll.u32 %v350, 16
        %v500 = vrot.slane %v498, 1
        %v501 = vsel %vm425, %v496, %v500
        %v502 = vshrl.u32 %v350, 16
        %v504 = vor.u32 %v502, %v500
        %v506 = vshll.u32 %v351, 16
        %v508 = vrot.slane %v506, 1
        %v509 = vsel %vm425, %v504, %v508
        %v510 = vshrl.u32 %v351, 16
        %v512 = vor.u32 %v510, %v508
        %v514 = vshll.u32 %v352, 16
        %v516 = vrot.slane %v514, 1
        %v517 = vsel %vm425, %v512, %v516
        %v518 = vshrl.u32 %v352, 16
        %v520 = vor.u32 %v518, %v516
        %v522 = vshll.u32 %v353, 16
        %v524 = vrot.slane %v522, 1
        %v525 = vsel %vm425, %v520, %v524
        %v526 = vshrl.u32 %v353, 16
        %v528 = vor.u32 %v526, %v524
        %v530 = vshll.u32 %v354, 16
        %v532 = vrot.slane %v530, 1
        %v533 = vsel %vm425, %v528, %v532
        %v534 = vshrl.u32 %v354, 16
        %v536 = vor.u32 %v534, %v532
        %v538 = vshll.u32 %v355, 16
        %v540 = vrot.slane %v538, 1
        %v541 = vsel %vm425, %v536, %v540
        %v542 = vshrl.u32 %v355, 16
        %v544 = vor.u32 %v542, %v540
        %v546 = vshll.u32 %v356, 16
        %v548 = vrot.slane %v546, 1
        %v549 = vsel %vm425, %v544, %v548
        %v550 = vshrl.u32 %v356, 16
        %v552 = vor.u32 %v550, %v548
        %v554 = vshll.u32 %v357, 16
        %v556 = vrot.slane %v554, 1
        %v557 = vsel %vm425, %v552, %v556
        %v558 = vshrl.u32 %v357, 16
        %v560 = vor.u32 %v558, %v556
        %v562 = vshll.u32 %v358, 16
        %v564 = vrot.slane %v562, 1
        %v565 = vsel %vm425, %v560, %v564
        %v566 = vshrl.u32 %v358, 16
        %v568 = vor.u32 %v566, %v564
        %v570 = vshll.u32 %v359, 16
        %v572 = vrot.slane %v570, 1
        %v573 = vsel %vm425, %v568, %v572
        %v574 = vshrl.u32 %v359, 16
        %v576 = vor.u32 %v574, %v572
        %v578 = vshll.u32 %v360, 16
        %v580 = vrot.slane %v578, 1
        %v581 = vsel %vm425, %v576, %v580
        %v582 = vshrl.u32 %v360, 16
        %v584 = vor.u32 %v582, %v580
        %v586 = vshll.u32 %v361, 16
        %v588 = vrot.slane %v586, 1
        %v589 = vsel %vm425, %v584, %v588
        %v590 = vshrl.u32 %v361, 16
        %v592 = vor.u32 %v590, %v588
        %v594 = vshll.u32 %v362, 16
        %v596 = vrot.slane %v594, 1
        %v597 = vsel %vm425, %v592, %v596
        %v598 = vshrl.u32 %v362, 16
        %v600 = vor.u32 %v598, %v596
        %v602 = vshll.u32 %v363, 16
        %v604 = vrot.slane %v602, 1
        %v605 = vsel %vm425, %v600, %v604
        %v606 = vshrl.u32 %v363, 16
        %v608 = vor.u32 %v606, %v604
        %v610 = vshll.u32 %v364, 16
        %v612 = vrot.slane %v610, 1
        %v613 = vsel %vm425, %v608, %v612
        %v614 = vshrl.u32 %v364, 16
        %v616 = vor.u32 %v614, %v612
        %v618 = vshll.u32 %v365, 16
        %v620 = vrot.slane %v618, 1
        %v621 = vsel %vm425, %v616, %v620
        %v622 = vshrl.u32 %v365, 16
        %v624 = vor.u32 %v622, %v620
        %v626 = vshll.u32 %v366, 16
        %v628 = vrot.slane %v626, 1
        %v629 = vsel %vm425, %v624, %v628
        %v630 = vshrl.u32 %v366, 16
        %v632 = vor.u32 %v630, %v628
        %v634 = vshll.u32 %v367, 16
        %v636 = vrot.slane %v634, 1
        %v637 = vsel %vm425, %v632, %v636
        %v638 = vshrl.u32 %v367, 16
        %v640 = vor.u32 %v638, %v636
        %v642 = vshll.u32 %v368, 16
        %v644 = vrot.slane %v642, 1
        %v645 = vsel %vm425, %v640, %v644
        %v646 = vshrl.u32 %v368, 16
        %v648 = vor.u32 %v646, %v644
        %v650 = vshll.u32 %v369, 16
        %v652 = vrot.slane %v650, 1
        %v653 = vsel %vm425, %v648, %v652
        %v654 = vshrl.u32 %v369, 16
        %v656 = vor.u32 %v654, %v652
        %v658 = vshll.u32 %v370, 16
        %v660 = vrot.slane %v658, 1
        %v661 = vsel %vm425, %v656, %v660
        %v662 = vshrl.u32 %v370, 16
        %v664 = vor.u32 %v662, %v660
        %v666 = vshll.u32 %v371, 16
        %v668 = vrot.slane %v666, 1
        %v669 = vsel %vm425, %v664, %v668
        %v670 = vshrl.u32 %v371, 16
        %v672 = vor.u32 %v670, %v668
        %v674 = vshll.u32 %v372, 16
        %v676 = vrot.slane %v674, 1
        %v677 = vsel %vm425, %v672, %v676
        %v678 = vshrl.u32 %v372, 16
        %v680 = vor.u32 %v678, %v676
        %v682 = vshll.u32 %v373, 16
        %v684 = vrot.slane %v682, 1
        %v685 = vsel %vm425, %v680, %v684
        %v686 = vshrl.u32 %v373, 16
        %v688 = vor.u32 %v686, %v684
        %v690 = vshll.u32 %v374, 16
        %v692 = vrot.slane %v690, 1
        %v693 = vsel %vm425, %v688, %v692
        %v694 = vshrl.u32 %v374, 16
        %v696 = vor.u32 %v694, %v692
        %v698 = vshll.u32 %v375, 16
        %v700 = vrot.slane %v698, 1
        %v701 = vsel %vm425, %v696, %v700
        %v702 = vshrl.u32 %v375, 16
        %v704 = vor.u32 %v702, %v700
        %v706 = vshll.u32 %v376, 16
        %v708 = vrot.slane %v706, 1
        %v709 = vsel %vm425, %v704, %v708
        %v710 = vshrl.u32 %v376, 16
        %v712 = vor.u32 %v710, %v708
        %v714 = vshll.u32 %v377, 16
        %v716 = vrot.slane %v714, 1
        %v717 = vsel %vm425, %v712, %v716
        %v718 = vshrl.u32 %v377, 16
        %v720 = vor.u32 %v718, %v716
        %v722 = vshll.u32 %v378, 16
        %v724 = vrot.slane %v722, 1
        %v725 = vsel %vm425, %v720, %v724
        %v726 = vshrl.u32 %v378, 16
        %v728 = vor.u32 %v726, %v724
        %v730 = vshll.u32 %v379, 16
        %v732 = vrot.slane %v730, 1
        %v733 = vsel %vm425, %v728, %v732
        %v734 = vshrl.u32 %v379, 16
        %v736 = vor.u32 %v734, %v732
        %v738 = vshll.u32 %v380, 16
        %v740 = vrot.slane %v738, 1
        %v741 = vsel %vm425, %v736, %v740
        %v742 = vshrl.u32 %v380, 16
        %v744 = vor.u32 %v742, %v740
        %v746 = vshll.u32 %v381, 16
        %v748 = vrot.slane %v746, 1
        %v749 = vsel %vm425, %v744, %v748
        %v750 = vshrl.u32 %v381, 16
        %v752 = vor.u32 %v750, %v748
        %v754 = vshll.u32 %v382, 16
        %v756 = vrot.slane %v754, 1
        %v757 = vsel %vm425, %v752, %v756
        %v758 = vshrl.u32 %v382, 16
        %v760 = vor.u32 %v758, %v756
        %v762 = vshll.u32 %v383, 16
        %v764 = vrot.slane %v762, 1
        %v765 = vsel %vm425, %v760, %v764
        %v766 = vshrl.u32 %v383, 16
        %v768 = vor.u32 %v766, %v764
        %v770 = vshll.u32 %v384, 16
        %v772 = vrot.slane %v770, 1
        %v773 = vsel %vm425, %v768, %v772
        %v774 = vshrl.u32 %v384, 16
        %v776 = vor.u32 %v774, %v772
        %v778 = vshll.u32 %v385, 16
        %v780 = vrot.slane %v778, 1
        %v781 = vsel %vm425, %v776, %v780
        %v782 = vshrl.u32 %v385, 16
        %v784 = vor.u32 %v782, %v780
        %v786 = vshll.u32 %v386, 16
        %v788 = vrot.slane %v786, 1
        %v789 = vsel %vm425, %v784, %v788
        %v790 = vshrl.u32 %v386, 16
        %v792 = vor.u32 %v790, %v788
        %v794 = vshll.u32 %v387, 16
        %v796 = vrot.slane %v794, 1
        %v797 = vsel %vm425, %v792, %v796
        %v798 = vshrl.u32 %v387, 16
        %v800 = vor.u32 %v798, %v796
        %v802 = vshll.u32 %v388, 16
        %v804 = vrot.slane %v802, 1
        %v805 = vsel %vm425, %v800, %v804
        %v806 = vshrl.u32 %v388, 16
        %v808 = vor.u32 %v806, %v804
        %v810 = vshll.u32 %v389, 16
        %v812 = vrot.slane %v810, 1
        %v813 = vsel %vm425, %v808, %v812
        %v814 = vshrl.u32 %v389, 16
        %v816 = vor.u32 %v814, %v812
        %v818 = vshll.u32 %v390, 16
        %v820 = vrot.slane %v818, 1
        %v821 = vsel %vm425, %v816, %v820
        %v822 = vshrl.u32 %v390, 16
        %v824 = vor.u32 %v822, %v820
        %v826 = vshll.u32 %v391, 16
        %v828 = vrot.slane %v826, 1
        %v829 = vsel %vm425, %v824, %v828
        %v830 = vshrl.u32 %v391, 16
        %v832 = vor.u32 %v830, %v828
        %v834 = vshll.u32 %v392, 16
        %v836 = vrot.slane %v834, 1
        %v837 = vsel %vm425, %v832, %v836
        %v838 = vshrl.u32 %v392, 16
        %v840 = vor.u32 %v838, %v836
        %v842 = vshll.u32 %v393, 16
        %v844 = vrot.slane %v842, 1
        %v845 = vsel %vm425, %v840, %v844
        %v846 = vshrl.u32 %v393, 16
        %v848 = vor.u32 %v846, %v844
        %v850 = vshll.u32 %v394, 16
        %v852 = vrot.slane %v850, 1
        %v853 = vsel %vm425, %v848, %v852
        %v854 = vshrl.u32 %v394, 16
        %v856 = vor.u32 %v854, %v852
        %v858 = vshll.u32 %v395, 16
        %v860 = vrot.slane %v858, 1
        %v861 = vsel %vm425, %v856, %v860
        %v862 = vshrl.u32 %v395, 16
        %v864 = vor.u32 %v862, %v860
        %v866 = vshll.u32 %v396, 16
        %v868 = vrot.slane %v866, 1
        %v869 = vsel %vm425, %v864, %v868
        %v870 = vshrl.u32 %v396, 16
        %v872 = vor.u32 %v870, %v868
        %v874 = vshll.u32 %v397, 16
        %v876 = vrot.slane %v874, 1
        %v877 = vsel %vm425, %v872, %v876
        %v878 = vshrl.u32 %v397, 16
        %v880 = vor.u32 %v878, %v876
        %v882 = vshll.u32 %v398, 16
        %v884 = vrot.slane %v882, 1
        %v885 = vsel %vm425, %v880, %v884
        %v886 = vshrl.u32 %v398, 16
        %v888 = vor.u32 %v886, %v884
        %v890 = vshll.u32 %v399, 16
        %v892 = vrot.slane %v890, 1
        %v893 = vsel %vm425, %v888, %v892
        %v894 = vshrl.u32 %v399, 16
        %v896 = vor.u32 %v894, %v892
        %v898 = vshll.u32 %v400, 16
        %v900 = vrot.slane %v898, 1
        %v901 = vsel %vm425, %v896, %v900
        %v902 = vshrl.u32 %v400, 16
        %v904 = vor.u32 %v902, %v900
        %v906 = vshll.u32 %v401, 16
        %v908 = vrot.slane %v906, 1
        %v909 = vsel %vm425, %v904, %v908
        %v910 = vshrl.u32 %v401, 16
        %v912 = vor.u32 %v910, %v908
        %v914 = vshll.u32 %v402, 16
        %v916 = vrot.slane %v914, 1
        %v917 = vsel %vm425, %v912, %v916
        %v918 = vshrl.u32 %v402, 16
        %v920 = vor.u32 %v918, %v916
        %v922 = vshll.u32 %v403, 16
        %v924 = vrot.slane %v922, 1
        %v925 = vsel %vm425, %v920, %v924
        %v926 = vshrl.u32 %v403, 16
        %v928 = vor.u32 %v926, %v924
        %v930 = vshll.u32 %v404, 16
        %v932 = vrot.slane %v930, 1
        %v933 = vsel %vm425, %v928, %v932
        %v934 = vshrl.u32 %v404, 16
        %v936 = vor.u32 %v934, %v932
        %v938 = vshll.u32 %v405, 16
        %v940 = vrot.slane %v938, 1
        %v941 = vsel %vm425, %v936, %v940
        %v942 = vshrl.u32 %v405, 16
        %v944 = vor.u32 %v942, %v940
        %v946 = vshll.u32 %v406, 16
        %v948 = vrot.slane %v946, 1
        %v949 = vsel %vm425, %v944, %v948
        %v950 = vshrl.u32 %v406, 16
        %v952 = vor.u32 %v950, %v948
        %v954 = vshll.u32 %v407, 16
        %v956 = vrot.slane %v954, 1
        %v957 = vsel %vm425, %v952, %v956
        %v958 = vshrl.u32 %v407, 16
        %v960 = vor.u32 %v958, %v956
        %v962 = vshll.u32 %v408, 16
        %v964 = vrot.slane %v962, 1
        %v965 = vsel %vm425, %v960, %v964
        %v966 = vshrl.u32 %v408, 16
        %v968 = vor.u32 %v966, %v964
        %v970 = vshll.u32 %v409, 16
        %v972 = vrot.slane %v970, 1
        %v973 = vsel %vm425, %v968, %v972
        %v974 = vshrl.u32 %v409, 16
        %v976 = vor.u32 %v974, %v972
        %v978 = vshll.u32 %v410, 16
        %v980 = vrot.slane %v978, 1
        %v981 = vsel %vm425, %v976, %v980
        %v982 = vshrl.u32 %v410, 16
        %v984 = vor.u32 %v982, %v980
        %v986 = vshll.u32 %v411, 16
        %v988 = vrot.slane %v986, 1
        %v989 = vsel %vm425, %v984, %v988
        %v990 = vshrl.u32 %v411, 16
        %v992 = vor.u32 %v990, %v988
        %v994 = vshll.u32 %v412, 16
        %v996 = vrot.slane %v994, 1
        %v997 = vsel %vm425, %v992, %v996
        %v998 = vshrl.u32 %v412, 16
        %v1000 = vor.u32 %v998, %v996
        %v1002 = vshll.u32 %v413, 16
        %v1004 = vrot.slane %v1002, 1
        %v1005 = vsel %vm425, %v1000, %v1004
        %v1006 = vshrl.u32 %v413, 16
        %v1008 = vor.u32 %v1006, %v1004
        %v1010 = vshll.u32 %v414, 16
        %v1012 = vrot.slane %v1010, 1
        %v1013 = vsel %vm425, %v1008, %v1012
        %v1014 = vshrl.u32 %v414, 16
        %v1016 = vor.u32 %v1014, %v1012
        %v1018 = vshll.u32 %v415, 16
        %v1020 = vrot.slane %v1018, 1
        %v1021 = vsel %vm425, %v1016, %v1020
        %v1022 = vshrl.u32 %v415, 16
        %v1024 = vor.u32 %v1022, %v1020
        %v1026 = vshll.u32 %v416, 16
        %v1028 = vrot.slane %v1026, 1
        %v1029 = vsel %vm425, %v1024, %v1028
        %v1030 = vshrl.u32 %v416, 16
        %v1032 = vor.u32 %v1030, %v1028
        %v1034 = vshll.u32 %v417, 16
        %v1036 = vrot.slane %v1034, 1
        %v1037 = vsel %vm425, %v1032, %v1036
        %v1038 = vshrl.u32 %v417, 16
        %v1040 = vor.u32 %v1038, %v1036
        %v1042 = vshll.u32 %v418, 16
        %v1044 = vrot.slane %v1042, 1
        %v1045 = vsel %vm425, %v1040, %v1044
        %v1046 = vshrl.u32 %v418, 16
        %v1048 = vor.u32 %v1046, %v1044
        %v1050 = vshll.u32 %v419, 16
        %v1052 = vrot.slane %v1050, 1
        %v1053 = vsel %vm425, %v1048, %v1052
        %v1054 = vshrl.u32 %v419, 16
        %v1056 = vor.u32 %v1054, %v1052
        %v1058 = vshll.u32 %v420, 16
        %v1060 = vrot.slane %v1058, 1
        %v1061 = vsel %vm425, %v1056, %v1060
        %v1062 = vshrl.u32 %v420, 16
        %v1064 = vor.u32 %v1062, %v1060
        %v1066 = vshll.u32 %v422, 16
        %v1068 = vrot.slane %v1066, 1
        %v1069 = vsel %vm425, %v1064, %v1068
        %vm1070 = vcmask 23552
        %v1072 = vsel %vm1070, %v437, 0
        %v1075 = vsel %vm1070, %v445, 0
        %v1078 = vsel %vm1070, %v453, 0
        %v1081 = vsel %vm1070, %v461, 0
        %v1084 = vsel %vm1070, %v469, 0
        %v1087 = vsel %vm1070, %v477, 0
        %v1090 = vsel %vm1070, %v485, 0
        %v1093 = vsel %vm1070, %v493, 0
        %v1096 = vsel %vm1070, %v501, 0
        %v1099 = vsel %vm1070, %v509, 0
        %v1102 = vsel %vm1070, %v517, 0
        %v1105 = vsel %vm1070, %v525, 0
        %v1108 = vsel %vm1070, %v533, 0
        %v1111 = vsel %vm1070, %v541, 0
        %v1114 = vsel %vm1070, %v549, 0
        %v1117 = vsel %vm1070, %v557, 0
        %v1120 = vsel %vm1070, %v565, 0
        %v1123 = vsel %vm1070, %v573, 0
        %v1126 = vsel %vm1070, %v581, 0
        %v1129 = vsel %vm1070, %v589, 0
        %v1132 = vsel %vm1070, %v597, 0
        %v1135 = vsel %vm1070, %v605, 0
        %v1138 = vsel %vm1070, %v613, 0
        %v1141 = vsel %vm1070, %v621, 0
        %v1144 = vsel %vm1070, %v629, 0
        %v1147 = vsel %vm1070, %v637, 0
        %v1150 = vsel %vm1070, %v645, 0
        %v1153 = vsel %vm1070, %v653, 0
        %v1156 = vsel %vm1070, %v661, 0
        %v1159 = vsel %vm1070, %v669, 0
        %v1162 = vsel %vm1070, %v677, 0
        %v1165 = vsel %vm1070, %v685, 0
        %v1168 = vsel %vm1070, %v693, 0
        %v1171 = vsel %vm1070, %v701, 0
        %v1174 = vsel %vm1070, %v709, 0
        %v1177 = vsel %vm1070, %v717, 0
        %v1180 = vsel %vm1070, %v725, 0
        %v1183 = vsel %vm1070, %v733, 0
        %v1186 = vsel %vm1070, %v741, 0
        %v1189 = vsel %vm1070, %v749, 0
        %v1192 = vsel %vm1070, %v757, 0
        %v1195 = vsel %vm1070, %v765, 0
        %v1198 = vsel %vm1070, %v773, 0
        %v1201 = vsel %vm1070, %v781, 0
        %v1204 = vsel %vm1070, %v789, 0
        %v1207 = vsel %vm1070, %v797, 0
        %v1210 = vsel %vm1070, %v805, 0
        %v1213 = vsel %vm1070, %v813, 0
        %v1216 = vsel %vm1070, %v821, 0
        %v1219 = vsel %vm1070, %v829, 0
        %v1222 = vsel %vm1070, %v837, 0
        %v1225 = vsel %vm1070, %v845, 0
        %v1228 = vsel %vm1070, %v853, 0
        %v1231 = vsel %vm1070, %v861, 0
        %v1234 = vsel %vm1070, %v869, 0
        %v1237 = vsel %vm1070, %v877, 0
        %v1240 = vsel %vm1070, %v885, 0
        %v1243 = vsel %vm1070, %v893, 0
        %v1246 = vsel %vm1070, %v901, 0
        %v1249 = vsel %vm1070, %v909, 0
        %v1252 = vsel %vm1070, %v917, 0
        %v1255 = vsel %vm1070, %v925, 0
        %v1258 = vsel %vm1070, %v933, 0
        %v1261 = vsel %vm1070, %v941, 0
        %v1264 = vsel %vm1070, %v949, 0
        %v1267 = vsel %vm1070, %v957, 0
        %v1270 = vsel %vm1070, %v965, 0
        %v1273 = vsel %vm1070, %v973, 0
        %v1276 = vsel %vm1070, %v981, 0
        %v1279 = vsel %vm1070, %v989, 0
        %v1282 = vsel %vm1070, %v997, 0
        %v1285 = vsel %vm1070, %v1005, 0
        %v1288 = vsel %vm1070, %v1013, 0
        %v1291 = vsel %vm1070, %v1021, 0
        %v1294 = vsel %vm1070, %v1029, 0
        %v1297 = vsel %vm1070, %v1037, 0
        %v1300 = vsel %vm1070, %v1045, 0
        %v1303 = vsel %vm1070, %v1053, 0
        %v1306 = vsel %vm1070, %v1061, 0
        %v1309 = vsel %vm1070, %v1069, 0
        %vm1311 = vcmask 1040384
        %vm1312 = vcmask 1041408
        %v1313 = vsel %vm1311, 4294967295, 65535
        %v1314 = vsel %vm1312, %v1313, 0
        %v1316 = vand.u32 %v424, %v1314
        %1318 = vmatprep.subr.bf16.mxu0 0
        %1319 = vmatpush1.bf16.msra.mxu0 0
        %1320 = vmatprep.subr.bf16.mxu0 0
        %1321 = vmatpush1.bf16.msra.mxu0 0
        %1322 = vmatprep.subr.bf16.mxu0 0
        %1323 = vmatpush1.bf16.msra.mxu0 0
        %1324 = vmatprep.subr.bf16.mxu0 0
        %1325 = vmatpush1.bf16.msra.mxu0 0
        %1326 = vmatprep.subr.bf16.mxu0 0
        %1327 = vmatpush1.bf16.msra.mxu0 0
        %1328 = vmatprep.subr.bf16.mxu0 0
        %1329 = vmatpush1.bf16.msra.mxu0 0
        %1330 = vmatprep.subr.bf16.mxu0 0
        %1331 = vmatpush1.bf16.msra.mxu0 0
        %1332 = vmatprep.subr.bf16.mxu0 0
        %1333 = vmatpush1.bf16.msra.mxu0 %v1316
        %1334 = vmatprep.subr.bf16.mxu0 0
        %1335 = vmatpush2.bf16.msra.mxu0 0
        %1336 = vmatprep.subr.bf16.mxu0 0
        %1337 = vmatpush2.bf16.msra.mxu0 0
        %1338 = vmatprep.subr.bf16.mxu0 0
        %1339 = vmatpush2.bf16.msra.mxu0 0
        %1340 = vmatprep.subr.bf16.mxu0 0
        %1341 = vmatpush2.bf16.msra.mxu0 0
        %1342 = vmatprep.subr.bf16.mxu0 0
        %1343 = vmatpush2.bf16.msra.mxu0 0
        %1344 = vmatprep.subr.bf16.mxu0 0
        %1345 = vmatpush2.bf16.msra.mxu0 0
        %1346 = vmatprep.subr.bf16.mxu0 0
        %1347 = vmatpush2.bf16.msra.mxu0 0
        %1348 = vmatprep.subr.bf16.mxu0 0
        %1349 = vmatpush2.bf16.msra.mxu0 0
        %1350 = vmatprep.mubr.bf16.mxu0 0
        %1351 = vmatmul.mubr.bf16.gmra.mxu0 %v1072
        %v1352 = vpop.f32.mrf.mxu0
        %v1353 = vadd.f32 0.0, %v1352
        %v1354 = vpop.f32.mrf.mxu0
        %v1355 = vpop.f32.mrf.mxu0
        %v1356 = vadd.f32 0.0, %v1355
        %v1357 = vpop.f32.mrf.mxu0
        %1358 = vmatprep.mubr.bf16.mxu0 0
        %1359 = vmatmul.mubr.bf16.gmra.mxu0 %v1075
        %v1360 = vpop.f32.mrf.mxu0
        %v1361 = vadd.f32 0.0, %v1360
        %v1362 = vpop.f32.mrf.mxu0
        %v1363 = vpop.f32.mrf.mxu0
        %v1364 = vadd.f32 0.0, %v1363
        %v1365 = vpop.f32.mrf.mxu0
        %1366 = vmatprep.mubr.bf16.mxu0 0
        %1367 = vmatmul.mubr.bf16.gmra.mxu0 %v1078
        %v1368 = vpop.f32.mrf.mxu0
        %v1369 = vpop.f32.mrf.mxu0
        %v1370 = vpop.f32.mrf.mxu0
        %v1371 = vadd.f32 0.0, %v1370
        %v1372 = vpop.f32.mrf.mxu0
        %1373 = vmatprep.mubr.bf16.mxu0 0
        %1374 = vmatmul.mubr.bf16.gmra.mxu0 %v1081
        %v1375 = vpop.f32.mrf.mxu0
        %v1376 = vadd.f32 0.0, %v1375
        %v1377 = vpop.f32.mrf.mxu0
        %v1378 = vpop.f32.mrf.mxu0
        %v1379 = vadd.f32 0.0, %v1378
        %v1380 = vpop.f32.mrf.mxu0
        %1381 = vmatprep.mubr.bf16.mxu0 0
        %1382 = vmatmul.mubr.bf16.gmra.mxu0 %v1084
        %v1383 = vpop.f32.mrf.mxu0
        %v1384 = vadd.f32 0.0, %v1383
        %v1385 = vpop.f32.mrf.mxu0
        %v1386 = vpop.f32.mrf.mxu0
        %v1387 = vpop.f32.mrf.mxu0
        %1388 = vmatprep.mubr.bf16.mxu0 0
        %1389 = vmatmul.mubr.bf16.gmra.mxu0 %v1087
        %v1390 = vpop.f32.mrf.mxu0
        %v1391 = vadd.f32 0.0, %v1390
        %v1392 = vpop.f32.mrf.mxu0
        %v1393 = vpop.f32.mrf.mxu0
        %v1394 = vadd.f32 0.0, %v1393
        %v1395 = vpop.f32.mrf.mxu0
        %1396 = vmatprep.mubr.bf16.mxu0 0
        %1397 = vmatmul.mubr.bf16.gmra.mxu0 %v1090
        %v1398 = vpop.f32.mrf.mxu0
        %v1399 = vadd.f32 0.0, %v1398
        %v1400 = vpop.f32.mrf.mxu0
        %v1401 = vpop.f32.mrf.mxu0
        %v1402 = vadd.f32 0.0, %v1401
        %v1403 = vpop.f32.mrf.mxu0
        %1404 = vmatprep.mubr.bf16.mxu0 0
        %1405 = vmatmul.mubr.bf16.gmra.mxu0 %v1093
        %v1406 = vpop.f32.mrf.mxu0
        %v1407 = vpop.f32.mrf.mxu0
        %v1408 = vpop.f32.mrf.mxu0
        %v1409 = vadd.f32 0.0, %v1408
        %v1410 = vpop.f32.mrf.mxu0
        %1411 = vmatprep.mubr.bf16.mxu0 0
        %1412 = vmatmul.mubr.bf16.gmra.mxu0 %v1096
        %v1413 = vpop.f32.mrf.mxu0
        %v1414 = vadd.f32 0.0, %v1413
        %v1415 = vpop.f32.mrf.mxu0
        %v1416 = vpop.f32.mrf.mxu0
        %v1417 = vadd.f32 0.0, %v1416
        %v1418 = vpop.f32.mrf.mxu0
        %1419 = vmatprep.mubr.bf16.mxu0 0
        %1420 = vmatmul.mubr.bf16.gmra.mxu0 %v1099
        %v1421 = vpop.f32.mrf.mxu0
        %v1422 = vadd.f32 0.0, %v1421
        %v1423 = vpop.f32.mrf.mxu0
        %v1424 = vpop.f32.mrf.mxu0
        %v1425 = vpop.f32.mrf.mxu0
        %1426 = vmatprep.mubr.bf16.mxu0 0
        %1427 = vmatmul.mubr.bf16.gmra.mxu0 %v1102
        %v1428 = vpop.f32.mrf.mxu0
        %v1429 = vadd.f32 0.0, %v1428
        %v1430 = vpop.f32.mrf.mxu0
        %v1431 = vpop.f32.mrf.mxu0
        %v1432 = vadd.f32 0.0, %v1431
        %v1433 = vpop.f32.mrf.mxu0
        %1434 = vmatprep.mubr.bf16.mxu0 0
        %1435 = vmatmul.mubr.bf16.gmra.mxu0 %v1105
        %v1436 = vpop.f32.mrf.mxu0
        %v1437 = vadd.f32 0.0, %v1436
        %v1438 = vpop.f32.mrf.mxu0
        %v1439 = vpop.f32.mrf.mxu0
        %v1440 = vadd.f32 0.0, %v1439
        %v1441 = vpop.f32.mrf.mxu0
        %1442 = vmatprep.mubr.bf16.mxu0 0
        %1443 = vmatmul.mubr.bf16.gmra.mxu0 %v1108
        %v1444 = vpop.f32.mrf.mxu0
        %v1445 = vpop.f32.mrf.mxu0
        %v1446 = vpop.f32.mrf.mxu0
        %v1447 = vadd.f32 0.0, %v1446
        %v1448 = vpop.f32.mrf.mxu0
        %1449 = vmatprep.mubr.bf16.mxu0 0
        %1450 = vmatmul.mubr.bf16.gmra.mxu0 %v1111
        %v1451 = vpop.f32.mrf.mxu0
        %v1452 = vadd.f32 0.0, %v1451
        %v1453 = vpop.f32.mrf.mxu0
        %v1454 = vpop.f32.mrf.mxu0
        %v1455 = vadd.f32 0.0, %v1454
        %v1456 = vpop.f32.mrf.mxu0
        %1457 = vmatprep.mubr.bf16.mxu0 0
        %1458 = vmatmul.mubr.bf16.gmra.mxu0 %v1114
        %v1459 = vpop.f32.mrf.mxu0
        %v1460 = vadd.f32 0.0, %v1459
        %v1461 = vpop.f32.mrf.mxu0
        %v1462 = vpop.f32.mrf.mxu0
        %v1463 = vpop.f32.mrf.mxu0
        %1464 = vmatprep.mubr.bf16.mxu0 0
        %1465 = vmatmul.mubr.bf16.gmra.mxu0 %v1117
        %v1466 = vpop.f32.mrf.mxu0
        %v1467 = vadd.f32 0.0, %v1466
        %v1468 = vpop.f32.mrf.mxu0
        %v1469 = vpop.f32.mrf.mxu0
        %v1470 = vadd.f32 0.0, %v1469
        %v1471 = vpop.f32.mrf.mxu0
        %1472 = vmatprep.mubr.bf16.mxu0 0
        %1473 = vmatmul.mubr.bf16.gmra.mxu0 %v1120
        %v1474 = vpop.f32.mrf.mxu0
        %v1475 = vadd.f32 0.0, %v1474
        %v1476 = vpop.f32.mrf.mxu0
        %v1477 = vpop.f32.mrf.mxu0
        %v1478 = vadd.f32 0.0, %v1477
        %v1479 = vpop.f32.mrf.mxu0
        %1480 = vmatprep.mubr.bf16.mxu0 0
        %1481 = vmatmul.mubr.bf16.gmra.mxu0 %v1123
        %v1482 = vpop.f32.mrf.mxu0
        %v1483 = vpop.f32.mrf.mxu0
        %v1484 = vpop.f32.mrf.mxu0
        %v1485 = vadd.f32 0.0, %v1484
        %v1486 = vpop.f32.mrf.mxu0
        %1487 = vmatprep.mubr.bf16.mxu0 0
        %1488 = vmatmul.mubr.bf16.gmra.mxu0 %v1126
        %v1489 = vpop.f32.mrf.mxu0
        %v1490 = vadd.f32 0.0, %v1489
        %v1491 = vpop.f32.mrf.mxu0
        %v1492 = vpop.f32.mrf.mxu0
        %v1493 = vadd.f32 0.0, %v1492
        %v1494 = vpop.f32.mrf.mxu0
        %1495 = vmatprep.mubr.bf16.mxu0 0
        %1496 = vmatmul.mubr.bf16.gmra.mxu0 %v1129
        %v1497 = vpop.f32.mrf.mxu0
        %v1498 = vadd.f32 0.0, %v1497
        %v1499 = vpop.f32.mrf.mxu0
        %v1500 = vpop.f32.mrf.mxu0
        %v1501 = vpop.f32.mrf.mxu0
        %1502 = vmatprep.mubr.bf16.mxu0 0
        %1503 = vmatmul.mubr.bf16.gmra.mxu0 %v1132
        %v1504 = vpop.f32.mrf.mxu0
        %v1505 = vadd.f32 0.0, %v1504
        %v1506 = vpop.f32.mrf.mxu0
        %v1507 = vpop.f32.mrf.mxu0
        %v1508 = vadd.f32 0.0, %v1507
        %v1509 = vpop.f32.mrf.mxu0
        %1510 = vmatprep.mubr.bf16.mxu0 0
        %1511 = vmatmul.mubr.bf16.gmra.mxu0 %v1135
        %v1512 = vpop.f32.mrf.mxu0
        %v1513 = vadd.f32 0.0, %v1512
        %v1514 = vpop.f32.mrf.mxu0
        %v1515 = vpop.f32.mrf.mxu0
        %v1516 = vadd.f32 0.0, %v1515
        %v1517 = vpop.f32.mrf.mxu0
        %1518 = vmatprep.mubr.bf16.mxu0 0
        %1519 = vmatmul.mubr.bf16.gmra.mxu0 %v1138
        %v1520 = vpop.f32.mrf.mxu0
        %v1521 = vpop.f32.mrf.mxu0
        %v1522 = vpop.f32.mrf.mxu0
        %v1523 = vadd.f32 0.0, %v1522
        %v1524 = vpop.f32.mrf.mxu0
        %1525 = vmatprep.mubr.bf16.mxu0 0
        %1526 = vmatmul.mubr.bf16.gmra.mxu0 %v1141
        %v1527 = vpop.f32.mrf.mxu0
        %v1528 = vadd.f32 0.0, %v1527
        %v1529 = vpop.f32.mrf.mxu0
        %v1530 = vpop.f32.mrf.mxu0
        %v1531 = vadd.f32 0.0, %v1530
        %v1532 = vpop.f32.mrf.mxu0
        %1533 = vmatprep.mubr.bf16.mxu0 0
        %1534 = vmatmul.mubr.bf16.gmra.mxu0 %v1144
        %v1535 = vpop.f32.mrf.mxu0
        %v1536 = vadd.f32 0.0, %v1535
        %v1537 = vpop.f32.mrf.mxu0
        %v1538 = vpop.f32.mrf.mxu0
        %v1539 = vpop.f32.mrf.mxu0
        %1540 = vmatprep.mubr.bf16.mxu0 0
        %1541 = vmatmul.mubr.bf16.gmra.mxu0 %v1147
        %v1542 = vpop.f32.mrf.mxu0
        %v1543 = vadd.f32 0.0, %v1542
        %v1544 = vpop.f32.mrf.mxu0
        %v1545 = vpop.f32.mrf.mxu0
        %v1546 = vadd.f32 0.0, %v1545
        %v1547 = vpop.f32.mrf.mxu0
        %1548 = vmatprep.mubr.bf16.mxu0 0
        %1549 = vmatmul.mubr.bf16.gmra.mxu0 %v1150
        %v1550 = vpop.f32.mrf.mxu0
        %v1551 = vadd.f32 0.0, %v1550
        %v1552 = vpop.f32.mrf.mxu0
        %v1553 = vpop.f32.mrf.mxu0
        %v1554 = vadd.f32 0.0, %v1553
        %v1555 = vpop.f32.mrf.mxu0
        %1556 = vmatprep.mubr.bf16.mxu0 0
        %1557 = vmatmul.mubr.bf16.gmra.mxu0 %v1153
        %v1558 = vpop.f32.mrf.mxu0
        %v1559 = vpop.f32.mrf.mxu0
        %v1560 = vpop.f32.mrf.mxu0
        %v1561 = vadd.f32 0.0, %v1560
        %v1562 = vpop.f32.mrf.mxu0
        %1563 = vmatprep.mubr.bf16.mxu0 0
        %1564 = vmatmul.mubr.bf16.gmra.mxu0 %v1156
        %v1565 = vpop.f32.mrf.mxu0
        %v1566 = vadd.f32 0.0, %v1565
        %v1567 = vpop.f32.mrf.mxu0
        %v1568 = vpop.f32.mrf.mxu0
        %v1569 = vadd.f32 0.0, %v1568
        %v1570 = vpop.f32.mrf.mxu0
        %1571 = vmatprep.mubr.bf16.mxu0 0
        %1572 = vmatmul.mubr.bf16.gmra.mxu0 %v1159
        %v1573 = vpop.f32.mrf.mxu0
        %v1574 = vadd.f32 0.0, %v1573
        %v1575 = vpop.f32.mrf.mxu0
        %v1576 = vpop.f32.mrf.mxu0
        %v1577 = vpop.f32.mrf.mxu0
        %1578 = vmatprep.mubr.bf16.mxu0 0
        %1579 = vmatmul.mubr.bf16.gmra.mxu0 %v1162
        %v1580 = vpop.f32.mrf.mxu0
        %v1581 = vadd.f32 0.0, %v1580
        %v1582 = vpop.f32.mrf.mxu0
        %v1583 = vpop.f32.mrf.mxu0
        %v1584 = vadd.f32 0.0, %v1583
        %v1585 = vpop.f32.mrf.mxu0
        %1586 = vmatprep.mubr.bf16.mxu0 0
        %1587 = vmatmul.mubr.bf16.gmra.mxu0 %v1165
        %v1588 = vpop.f32.mrf.mxu0
        %v1589 = vadd.f32 0.0, %v1588
        %v1590 = vpop.f32.mrf.mxu0
        %v1591 = vpop.f32.mrf.mxu0
        %v1592 = vadd.f32 0.0, %v1591
        %v1593 = vpop.f32.mrf.mxu0
        %1594 = vmatprep.mubr.bf16.mxu0 0
        %1595 = vmatmul.mubr.bf16.gmra.mxu0 %v1168
        %v1596 = vpop.f32.mrf.mxu0
        %v1597 = vpop.f32.mrf.mxu0
        %v1598 = vpop.f32.mrf.mxu0
        %v1599 = vadd.f32 0.0, %v1598
        %v1600 = vpop.f32.mrf.mxu0
        %1601 = vmatprep.mubr.bf16.mxu0 0
        %1602 = vmatmul.mubr.bf16.gmra.mxu0 %v1171
        %v1603 = vpop.f32.mrf.mxu0
        %v1604 = vadd.f32 0.0, %v1603
        %v1605 = vpop.f32.mrf.mxu0
        %v1606 = vpop.f32.mrf.mxu0
        %v1607 = vadd.f32 0.0, %v1606
        %v1608 = vpop.f32.mrf.mxu0
        %1609 = vmatprep.mubr.bf16.mxu0 0
        %1610 = vmatmul.mubr.bf16.gmra.mxu0 %v1174
        %v1611 = vpop.f32.mrf.mxu0
        %v1612 = vadd.f32 0.0, %v1611
        %v1613 = vpop.f32.mrf.mxu0
        %v1614 = vpop.f32.mrf.mxu0
        %v1615 = vpop.f32.mrf.mxu0
        %1616 = vmatprep.mubr.bf16.mxu0 0
        %1617 = vmatmul.mubr.bf16.gmra.mxu0 %v1177
        %v1618 = vpop.f32.mrf.mxu0
        %v1619 = vadd.f32 0.0, %v1618
        %v1620 = vpop.f32.mrf.mxu0
        %v1621 = vpop.f32.mrf.mxu0
        %v1622 = vadd.f32 0.0, %v1621
        %v1623 = vpop.f32.mrf.mxu0
        %1624 = vmatprep.mubr.bf16.mxu0 0
        %1625 = vmatmul.mubr.bf16.gmra.mxu0 %v1180
        %v1626 = vpop.f32.mrf.mxu0
        %v1627 = vadd.f32 0.0, %v1626
        %v1628 = vpop.f32.mrf.mxu0
        %v1629 = vpop.f32.mrf.mxu0
        %v1630 = vadd.f32 0.0, %v1629
        %v1631 = vpop.f32.mrf.mxu0
        %1632 = vmatprep.mubr.bf16.mxu0 0
        %1633 = vmatmul.mubr.bf16.gmra.mxu0 %v1183
        %v1634 = vpop.f32.mrf.mxu0
        %v1635 = vpop.f32.mrf.mxu0
        %v1636 = vpop.f32.mrf.mxu0
        %v1637 = vadd.f32 0.0, %v1636
        %v1638 = vpop.f32.mrf.mxu0
        %1639 = vmatprep.mubr.bf16.mxu0 0
        %1640 = vmatmul.mubr.bf16.gmra.mxu0 %v1186
        %v1641 = vpop.f32.mrf.mxu0
        %v1642 = vadd.f32 0.0, %v1641
        %v1643 = vpop.f32.mrf.mxu0
        %v1644 = vpop.f32.mrf.mxu0
        %v1645 = vadd.f32 0.0, %v1644
        %v1646 = vpop.f32.mrf.mxu0
        %1647 = vmatprep.mubr.bf16.mxu0 0
        %1648 = vmatmul.mubr.bf16.gmra.mxu0 %v1189
        %v1649 = vpop.f32.mrf.mxu0
        %v1650 = vadd.f32 0.0, %v1649
        %v1651 = vpop.f32.mrf.mxu0
        %v1652 = vpop.f32.mrf.mxu0
        %v1653 = vpop.f32.mrf.mxu0
        %1654 = vmatprep.mubr.bf16.mxu0 0
        %1655 = vmatmul.mubr.bf16.gmra.mxu0 %v1192
        %v1656 = vpop.f32.mrf.mxu0
        %v1657 = vadd.f32 0.0, %v1656
        %v1658 = vpop.f32.mrf.mxu0
        %v1659 = vpop.f32.mrf.mxu0
        %v1660 = vadd.f32 0.0, %v1659
        %v1661 = vpop.f32.mrf.mxu0
        %1662 = vmatprep.mubr.bf16.mxu0 0
        %1663 = vmatmul.mubr.bf16.gmra.mxu0 %v1195
        %v1664 = vpop.f32.mrf.mxu0
        %v1665 = vadd.f32 0.0, %v1664
        %v1666 = vpop.f32.mrf.mxu0
        %v1667 = vpop.f32.mrf.mxu0
        %v1668 = vadd.f32 0.0, %v1667
        %v1669 = vpop.f32.mrf.mxu0
        %1670 = vmatprep.mubr.bf16.mxu0 0
        %1671 = vmatmul.mubr.bf16.gmra.mxu0 %v1198
        %v1672 = vpop.f32.mrf.mxu0
        %v1673 = vpop.f32.mrf.mxu0
        %v1674 = vpop.f32.mrf.mxu0
        %v1675 = vadd.f32 0.0, %v1674
        %v1676 = vpop.f32.mrf.mxu0
        %1677 = vmatprep.mubr.bf16.mxu0 0
        %1678 = vmatmul.mubr.bf16.gmra.mxu0 %v1201
        %v1679 = vpop.f32.mrf.mxu0
        %v1680 = vadd.f32 0.0, %v1679
        %v1681 = vpop.f32.mrf.mxu0
        %v1682 = vpop.f32.mrf.mxu0
        %v1683 = vadd.f32 0.0, %v1682
        %v1684 = vpop.f32.mrf.mxu0
        %1685 = vmatprep.mubr.bf16.mxu0 0
        %1686 = vmatmul.mubr.bf16.gmra.mxu0 %v1204
        %v1687 = vpop.f32.mrf.mxu0
        %v1688 = vadd.f32 0.0, %v1687
        %v1689 = vpop.f32.mrf.mxu0
        %v1690 = vpop.f32.mrf.mxu0
        %v1691 = vpop.f32.mrf.mxu0
        %1692 = vmatprep.mubr.bf16.mxu0 0
        %1693 = vmatmul.mubr.bf16.gmra.mxu0 %v1207
        %v1694 = vpop.f32.mrf.mxu0
        %v1695 = vadd.f32 0.0, %v1694
        %v1696 = vpop.f32.mrf.mxu0
        %v1697 = vpop.f32.mrf.mxu0
        %v1698 = vadd.f32 0.0, %v1697
        %v1699 = vpop.f32.mrf.mxu0
        %1700 = vmatprep.mubr.bf16.mxu0 0
        %1701 = vmatmul.mubr.bf16.gmra.mxu0 %v1210
        %v1702 = vpop.f32.mrf.mxu0
        %v1703 = vadd.f32 0.0, %v1702
        %v1704 = vpop.f32.mrf.mxu0
        %v1705 = vpop.f32.mrf.mxu0
        %v1706 = vadd.f32 0.0, %v1705
        %v1707 = vpop.f32.mrf.mxu0
        %1708 = vmatprep.mubr.bf16.mxu0 0
        %1709 = vmatmul.mubr.bf16.gmra.mxu0 %v1213
        %v1710 = vpop.f32.mrf.mxu0
        %v1711 = vpop.f32.mrf.mxu0
        %v1712 = vpop.f32.mrf.mxu0
        %v1713 = vadd.f32 0.0, %v1712
        %v1714 = vpop.f32.mrf.mxu0
        %1715 = vmatprep.mubr.bf16.mxu0 0
        %1716 = vmatmul.mubr.bf16.gmra.mxu0 %v1216
        %v1717 = vpop.f32.mrf.mxu0
        %v1718 = vadd.f32 0.0, %v1717
        %v1719 = vpop.f32.mrf.mxu0
        %v1720 = vpop.f32.mrf.mxu0
        %v1721 = vadd.f32 0.0, %v1720
        %v1722 = vpop.f32.mrf.mxu0
        %1723 = vmatprep.mubr.bf16.mxu0 0
        %1724 = vmatmul.mubr.bf16.gmra.mxu0 %v1219
        %v1725 = vpop.f32.mrf.mxu0
        %v1726 = vadd.f32 0.0, %v1725
        %v1727 = vpop.f32.mrf.mxu0
        %v1728 = vpop.f32.mrf.mxu0
        %v1729 = vpop.f32.mrf.mxu0
        %1730 = vmatprep.mubr.bf16.mxu0 0
        %1731 = vmatmul.mubr.bf16.gmra.mxu0 %v1222
        %v1732 = vpop.f32.mrf.mxu0
        %v1733 = vadd.f32 0.0, %v1732
        %v1734 = vpop.f32.mrf.mxu0
        %v1735 = vpop.f32.mrf.mxu0
        %v1736 = vadd.f32 0.0, %v1735
        %v1737 = vpop.f32.mrf.mxu0
        %1738 = vmatprep.mubr.bf16.mxu0 0
        %1739 = vmatmul.mubr.bf16.gmra.mxu0 %v1225
        %v1740 = vpop.f32.mrf.mxu0
        %v1741 = vadd.f32 0.0, %v1740
        %v1742 = vpop.f32.mrf.mxu0
        %v1743 = vpop.f32.mrf.mxu0
        %v1744 = vadd.f32 0.0, %v1743
        %v1745 = vpop.f32.mrf.mxu0
        %1746 = vmatprep.mubr.bf16.mxu0 0
        %1747 = vmatmul.mubr.bf16.gmra.mxu0 %v1228
        %v1748 = vpop.f32.mrf.mxu0
        %v1749 = vpop.f32.mrf.mxu0
        %v1750 = vpop.f32.mrf.mxu0
        %v1751 = vadd.f32 0.0, %v1750
        %v1752 = vpop.f32.mrf.mxu0
        %1753 = vmatprep.mubr.bf16.mxu0 0
        %1754 = vmatmul.mubr.bf16.gmra.mxu0 %v1231
        %v1755 = vpop.f32.mrf.mxu0
        %v1756 = vadd.f32 0.0, %v1755
        %v1757 = vpop.f32.mrf.mxu0
        %v1758 = vpop.f32.mrf.mxu0
        %v1759 = vadd.f32 0.0, %v1758
        %v1760 = vpop.f32.mrf.mxu0
        %1761 = vmatprep.mubr.bf16.mxu0 0
        %1762 = vmatmul.mubr.bf16.gmra.mxu0 %v1234
        %v1763 = vpop.f32.mrf.mxu0
        %v1764 = vadd.f32 0.0, %v1763
        %v1765 = vpop.f32.mrf.mxu0
        %v1766 = vpop.f32.mrf.mxu0
        %v1767 = vpop.f32.mrf.mxu0
        %1768 = vmatprep.mubr.bf16.mxu0 0
        %1769 = vmatmul.mubr.bf16.gmra.mxu0 %v1237
        %v1770 = vpop.f32.mrf.mxu0
        %v1771 = vadd.f32 0.0, %v1770
        %v1772 = vpop.f32.mrf.mxu0
        %v1773 = vpop.f32.mrf.mxu0
        %v1774 = vadd.f32 0.0, %v1773
        %v1775 = vpop.f32.mrf.mxu0
        %1776 = vmatprep.mubr.bf16.mxu0 0
        %1777 = vmatmul.mubr.bf16.gmra.mxu0 %v1240
        %v1778 = vpop.f32.mrf.mxu0
        %v1779 = vadd.f32 0.0, %v1778
        %v1780 = vpop.f32.mrf.mxu0
        %v1781 = vpop.f32.mrf.mxu0
        %v1782 = vadd.f32 0.0, %v1781
        %v1783 = vpop.f32.mrf.mxu0
        %1784 = vmatprep.mubr.bf16.mxu0 0
        %1785 = vmatmul.mubr.bf16.gmra.mxu0 %v1243
        %v1786 = vpop.f32.mrf.mxu0
        %v1787 = vpop.f32.mrf.mxu0
        %v1788 = vpop.f32.mrf.mxu0
        %v1789 = vadd.f32 0.0, %v1788
        %v1790 = vpop.f32.mrf.mxu0
        %1791 = vmatprep.mubr.bf16.mxu0 0
        %1792 = vmatmul.mubr.bf16.gmra.mxu0 %v1246
        %v1793 = vpop.f32.mrf.mxu0
        %v1794 = vadd.f32 0.0, %v1793
        %v1795 = vpop.f32.mrf.mxu0
        %v1796 = vpop.f32.mrf.mxu0
        %v1797 = vadd.f32 0.0, %v1796
        %v1798 = vpop.f32.mrf.mxu0
        %1799 = vmatprep.mubr.bf16.mxu0 0
        %1800 = vmatmul.mubr.bf16.gmra.mxu0 %v1249
        %v1801 = vpop.f32.mrf.mxu0
        %v1802 = vadd.f32 0.0, %v1801
        %v1803 = vpop.f32.mrf.mxu0
        %v1804 = vpop.f32.mrf.mxu0
        %v1805 = vpop.f32.mrf.mxu0
        %1806 = vmatprep.mubr.bf16.mxu0 0
        %1807 = vmatmul.mubr.bf16.gmra.mxu0 %v1252
        %v1808 = vpop.f32.mrf.mxu0
        %v1809 = vadd.f32 0.0, %v1808
        %v1810 = vpop.f32.mrf.mxu0
        %v1811 = vpop.f32.mrf.mxu0
        %v1812 = vadd.f32 0.0, %v1811
        %v1813 = vpop.f32.mrf.mxu0
        %1814 = vmatprep.mubr.bf16.mxu0 0
        %1815 = vmatmul.mubr.bf16.gmra.mxu0 %v1255
        %v1816 = vpop.f32.mrf.mxu0
        %v1817 = vadd.f32 0.0, %v1816
        %v1818 = vpop.f32.mrf.mxu0
        %v1819 = vpop.f32.mrf.mxu0
        %v1820 = vadd.f32 0.0, %v1819
        %v1821 = vpop.f32.mrf.mxu0
        %1822 = vmatprep.mubr.bf16.mxu0 0
        %1823 = vmatmul.mubr.bf16.gmra.mxu0 %v1258
        %v1824 = vpop.f32.mrf.mxu0
        %v1825 = vpop.f32.mrf.mxu0
        %v1826 = vpop.f32.mrf.mxu0
        %v1827 = vadd.f32 0.0, %v1826
        %v1828 = vpop.f32.mrf.mxu0
        %1829 = vmatprep.mubr.bf16.mxu0 0
        %1830 = vmatmul.mubr.bf16.gmra.mxu0 %v1261
        %v1831 = vpop.f32.mrf.mxu0
        %v1832 = vadd.f32 0.0, %v1831
        %v1833 = vpop.f32.mrf.mxu0
        %v1834 = vpop.f32.mrf.mxu0
        %v1835 = vadd.f32 0.0, %v1834
        %v1836 = vpop.f32.mrf.mxu0
        %1837 = vmatprep.mubr.bf16.mxu0 0
        %1838 = vmatmul.mubr.bf16.gmra.mxu0 %v1264
        %v1839 = vpop.f32.mrf.mxu0
        %v1840 = vadd.f32 0.0, %v1839
        %v1841 = vpop.f32.mrf.mxu0
        %v1842 = vpop.f32.mrf.mxu0
        %v1843 = vpop.f32.mrf.mxu0
        %1844 = vmatprep.mubr.bf16.mxu0 0
        %1845 = vmatmul.mubr.bf16.gmra.mxu0 %v1267
        %v1846 = vpop.f32.mrf.mxu0
        %v1847 = vadd.f32 0.0, %v1846
        %v1848 = vpop.f32.mrf.mxu0
        %v1849 = vpop.f32.mrf.mxu0
        %v1850 = vadd.f32 0.0, %v1849
        %v1851 = vpop.f32.mrf.mxu0
        %1852 = vmatprep.mubr.bf16.mxu0 0
        %1853 = vmatmul.mubr.bf16.gmra.mxu0 %v1270
        %v1854 = vpop.f32.mrf.mxu0
        %v1855 = vadd.f32 0.0, %v1854
        %v1856 = vpop.f32.mrf.mxu0
        %v1857 = vpop.f32.mrf.mxu0
        %v1858 = vadd.f32 0.0, %v1857
        %v1859 = vpop.f32.mrf.mxu0
        %1860 = vmatprep.mubr.bf16.mxu0 0
        %1861 = vmatmul.mubr.bf16.gmra.mxu0 %v1273
        %v1862 = vpop.f32.mrf.mxu0
        %v1863 = vpop.f32.mrf.mxu0
        %v1864 = vpop.f32.mrf.mxu0
        %v1865 = vadd.f32 0.0, %v1864
        %v1866 = vpop.f32.mrf.mxu0
        %1867 = vmatprep.mubr.bf16.mxu0 0
        %1868 = vmatmul.mubr.bf16.gmra.mxu0 %v1276
        %v1869 = vpop.f32.mrf.mxu0
        %v1870 = vadd.f32 0.0, %v1869
        %v1871 = vpop.f32.mrf.mxu0
        %v1872 = vpop.f32.mrf.mxu0
        %v1873 = vadd.f32 0.0, %v1872
        %v1874 = vpop.f32.mrf.mxu0
        %1875 = vmatprep.mubr.bf16.mxu0 0
        %1876 = vmatmul.mubr.bf16.gmra.mxu0 %v1279
        %v1877 = vpop.f32.mrf.mxu0
        %v1878 = vadd.f32 0.0, %v1877
        %v1879 = vpop.f32.mrf.mxu0
        %v1880 = vpop.f32.mrf.mxu0
        %v1881 = vpop.f32.mrf.mxu0
        %1882 = vmatprep.mubr.bf16.mxu0 0
        %1883 = vmatmul.mubr.bf16.gmra.mxu0 %v1282
        %v1884 = vpop.f32.mrf.mxu0
        %v1885 = vadd.f32 0.0, %v1884
        %v1886 = vpop.f32.mrf.mxu0
        %v1887 = vpop.f32.mrf.mxu0
        %v1888 = vadd.f32 0.0, %v1887
        %v1889 = vpop.f32.mrf.mxu0
        %1890 = vmatprep.mubr.bf16.mxu0 0
        %1891 = vmatmul.mubr.bf16.gmra.mxu0 %v1285
        %v1892 = vpop.f32.mrf.mxu0
        %v1893 = vadd.f32 0.0, %v1892
        %v1894 = vpop.f32.mrf.mxu0
        %v1895 = vpop.f32.mrf.mxu0
        %v1896 = vadd.f32 0.0, %v1895
        %v1897 = vpop.f32.mrf.mxu0
        %1898 = vmatprep.mubr.bf16.mxu0 0
        %1899 = vmatmul.mubr.bf16.gmra.mxu0 %v1288
        %v1900 = vpop.f32.mrf.mxu0
        %v1901 = vpop.f32.mrf.mxu0
        %v1902 = vpop.f32.mrf.mxu0
        %v1903 = vadd.f32 0.0, %v1902
        %v1904 = vpop.f32.mrf.mxu0
        %1905 = vmatprep.mubr.bf16.mxu0 0
        %1906 = vmatmul.mubr.bf16.gmra.mxu0 %v1291
        %v1907 = vpop.f32.mrf.mxu0
        %v1908 = vadd.f32 0.0, %v1907
        %v1909 = vpop.f32.mrf.mxu0
        %v1910 = vpop.f32.mrf.mxu0
        %v1911 = vadd.f32 0.0, %v1910
        %v1912 = vpop.f32.mrf.mxu0
        %1913 = vmatprep.mubr.bf16.mxu0 0
        %1914 = vmatmul.mubr.bf16.gmra.mxu0 %v1294
        %v1915 = vpop.f32.mrf.mxu0
        %v1916 = vadd.f32 0.0, %v1915
        %v1917 = vpop.f32.mrf.mxu0
        %v1918 = vpop.f32.mrf.mxu0
        %v1919 = vpop.f32.mrf.mxu0
        %1920 = vmatprep.mubr.bf16.mxu0 0
        %1921 = vmatmul.mubr.bf16.gmra.mxu0 %v1297
        %v1922 = vpop.f32.mrf.mxu0
        %v1923 = vadd.f32 0.0, %v1922
        %v1924 = vpop.f32.mrf.mxu0
        %v1925 = vpop.f32.mrf.mxu0
        %v1926 = vadd.f32 0.0, %v1925
        %v1927 = vpop.f32.mrf.mxu0
        %1928 = vmatprep.mubr.bf16.mxu0 0
        %1929 = vmatmul.mubr.bf16.gmra.mxu0 %v1300
        %v1930 = vpop.f32.mrf.mxu0
        %v1931 = vadd.f32 0.0, %v1930
        %v1932 = vpop.f32.mrf.mxu0
        %v1933 = vpop.f32.mrf.mxu0
        %v1934 = vadd.f32 0.0, %v1933
        %v1935 = vpop.f32.mrf.mxu0
        %1936 = vmatprep.mubr.bf16.mxu0 0
        %1937 = vmatmul.mubr.bf16.gmra.mxu0 %v1303
        %v1938 = vpop.f32.mrf.mxu0
        %v1939 = vpop.f32.mrf.mxu0
        %v1940 = vpop.f32.mrf.mxu0
        %v1941 = vadd.f32 0.0, %v1940
        %v1942 = vpop.f32.mrf.mxu0
        %1943 = vmatprep.mubr.bf16.mxu0 0
        %1944 = vmatmul.mubr.bf16.gmra.mxu0 %v1306
        %v1945 = vpop.f32.mrf.mxu0
        %v1946 = vadd.f32 0.0, %v1945
        %v1947 = vpop.f32.mrf.mxu0
        %v1948 = vpop.f32.mrf.mxu0
        %v1949 = vadd.f32 0.0, %v1948
        %v1950 = vpop.f32.mrf.mxu0
        %1951 = vmatprep.mubr.bf16.mxu0 0
        %1952 = vmatmul.mubr.bf16.gmra.mxu0 %v1309
        %v1953 = vpop.f32.mrf.mxu0
        %v1954 = vadd.f32 0.0, %v1953
        %v1955 = vpop.f32.mrf.mxu0
        %v1956 = vpop.f32.mrf.mxu0
        %v1957 = vpop.f32.mrf.mxu0
        %1958 = vdwg.mxu0
        %v1959 = vsel %vm1070, %v341, 0
        %v1961 = vsel %vm1070, %v342, 0
        %v1963 = vsel %vm1070, %v343, 0
        %v1965 = vsel %vm1070, %v344, 0
        %v1967 = vsel %vm1070, %v345, 0
        %v1969 = vsel %vm1070, %v346, 0
        %v1971 = vsel %vm1070, %v347, 0
        %v1973 = vsel %vm1070, %v348, 0
        %v1975 = vsel %vm1070, %v349, 0
        %v1977 = vsel %vm1070, %v350, 0
        %v1979 = vsel %vm1070, %v351, 0
        %v1981 = vsel %vm1070, %v352, 0
        %v1983 = vsel %vm1070, %v353, 0
        %v1985 = vsel %vm1070, %v354, 0
        %v1987 = vsel %vm1070, %v355, 0
        %v1989 = vsel %vm1070, %v356, 0
        %v1991 = vsel %vm1070, %v357, 0
        %v1993 = vsel %vm1070, %v358, 0
        %v1995 = vsel %vm1070, %v359, 0
        %v1997 = vsel %vm1070, %v360, 0
        %v1999 = vsel %vm1070, %v361, 0
        %v2001 = vsel %vm1070, %v362, 0
        %v2003 = vsel %vm1070, %v363, 0
        %v2005 = vsel %vm1070, %v364, 0
        %v2007 = vsel %vm1070, %v365, 0
        %v2009 = vsel %vm1070, %v366, 0
        %v2011 = vsel %vm1070, %v367, 0
        %v2013 = vsel %vm1070, %v368, 0
        %v2015 = vsel %vm1070, %v369, 0
        %v2017 = vsel %vm1070, %v370, 0
        %v2019 = vsel %vm1070, %v371, 0
        %v2021 = vsel %vm1070, %v372, 0
        %v2023 = vsel %vm1070, %v373, 0
        %v2025 = vsel %vm1070, %v374, 0
        %v2027 = vsel %vm1070, %v375, 0
        %v2029 = vsel %vm1070, %v376, 0
        %v2031 = vsel %vm1070, %v377, 0
        %v2033 = vsel %vm1070, %v378, 0
        %v2035 = vsel %vm1070, %v379, 0
        %v2037 = vsel %vm1070, %v380, 0
        %v2039 = vsel %vm1070, %v381, 0
        %v2041 = vsel %vm1070, %v382, 0
        %v2043 = vsel %vm1070, %v383, 0
        %v2045 = vsel %vm1070, %v384, 0
        %v2047 = vsel %vm1070, %v385, 0
        %v2049 = vsel %vm1070, %v386, 0
        %v2051 = vsel %vm1070, %v387, 0
        %v2053 = vsel %vm1070, %v388, 0
        %v2055 = vsel %vm1070, %v389, 0
        %v2057 = vsel %vm1070, %v390, 0
        %v2059 = vsel %vm1070, %v391, 0
        %v2061 = vsel %vm1070, %v392, 0
        %v2063 = vsel %vm1070, %v393, 0
        %v2065 = vsel %vm1070, %v394, 0
        %v2067 = vsel %vm1070, %v395, 0
        %v2069 = vsel %vm1070, %v396, 0
        %v2071 = vsel %vm1070, %v397, 0
        %v2073 = vsel %vm1070, %v398, 0
        %v2075 = vsel %vm1070, %v399, 0
        %v2077 = vsel %vm1070, %v400, 0
        %v2079 = vsel %vm1070, %v401, 0
        %v2081 = vsel %vm1070, %v402, 0
        %v2083 = vsel %vm1070, %v403, 0
        %v2085 = vsel %vm1070, %v404, 0
        %v2087 = vsel %vm1070, %v405, 0
        %v2089 = vsel %vm1070, %v406, 0
        %v2091 = vsel %vm1070, %v407, 0
        %v2093 = vsel %vm1070, %v408, 0
        %v2095 = vsel %vm1070, %v409, 0
        %v2097 = vsel %vm1070, %v410, 0
        %v2099 = vsel %vm1070, %v411, 0
        %v2101 = vsel %vm1070, %v412, 0
        %v2103 = vsel %vm1070, %v413, 0
        %v2105 = vsel %vm1070, %v414, 0
        %v2107 = vsel %vm1070, %v415, 0
        %v2109 = vsel %vm1070, %v416, 0
        %v2111 = vsel %vm1070, %v417, 0
        %v2113 = vsel %vm1070, %v418, 0
        %v2115 = vsel %vm1070, %v419, 0
        %v2117 = vsel %vm1070, %v420, 0
        %v2120 = vand.u32 %v421, %v1314
        %2122 = vmatprep.subr.bf16.mxu0 0
        %2123 = vmatpush1.bf16.msra.mxu0 0
        %2124 = vmatprep.subr.bf16.mxu0 0
        %2125 = vmatpush1.bf16.msra.mxu0 0
        %2126 = vmatprep.subr.bf16.mxu0 0
        %2127 = vmatpush1.bf16.msra.mxu0 0
        %2128 = vmatprep.subr.bf16.mxu0 0
        %2129 = vmatpush1.bf16.msra.mxu0 0
        %2130 = vmatprep.subr.bf16.mxu0 0
        %2131 = vmatpush1.bf16.msra.mxu0 0
        %2132 = vmatprep.subr.bf16.mxu0 0
        %2133 = vmatpush1.bf16.msra.mxu0 0
        %2134 = vmatprep.subr.bf16.mxu0 0
        %2135 = vmatpush1.bf16.msra.mxu0 0
        %2136 = vmatprep.subr.bf16.mxu0 0
        %2137 = vmatpush1.bf16.msra.mxu0 %v2120
        %2138 = vmatprep.subr.bf16.mxu0 0
        %2139 = vmatpush2.bf16.msra.mxu0 0
        %2140 = vmatprep.subr.bf16.mxu0 0
        %2141 = vmatpush2.bf16.msra.mxu0 0
        %2142 = vmatprep.subr.bf16.mxu0 0
        %2143 = vmatpush2.bf16.msra.mxu0 0
        %2144 = vmatprep.subr.bf16.mxu0 0
        %2145 = vmatpush2.bf16.msra.mxu0 0
        %2146 = vmatprep.subr.bf16.mxu0 0
        %2147 = vmatpush2.bf16.msra.mxu0 0
        %2148 = vmatprep.subr.bf16.mxu0 0
        %2149 = vmatpush2.bf16.msra.mxu0 0
        %2150 = vmatprep.subr.bf16.mxu0 0
        %2151 = vmatpush2.bf16.msra.mxu0 0
        %2152 = vmatprep.subr.bf16.mxu0 0
        %2153 = vmatpush2.bf16.msra.mxu0 0
        %2154 = vmatprep.mubr.bf16.mxu0 0
        %2155 = vmatmul.mubr.bf16.gmra.mxu0 %v1959
        %v2156 = vpop.f32.mrf.mxu0
        %v2157 = vadd.f32 %v1353, %v2156
        %v2158 = vpop.f32.mrf.mxu0
        %v2159 = vpop.f32.mrf.mxu0
        %v2160 = vadd.f32 %v1356, %v2159
        %v2161 = vpop.f32.mrf.mxu0
        %2162 = vmatprep.mubr.bf16.mxu0 0
        %2163 = vmatmul.mubr.bf16.gmra.mxu0 %v1961
        %v2164 = vpop.f32.mrf.mxu0
        %v2165 = vadd.f32 %v1361, %v2164
        %v2166 = vpop.f32.mrf.mxu0
        %v2167 = vpop.f32.mrf.mxu0
        %v2168 = vadd.f32 %v1364, %v2167
        %v2169 = vpop.f32.mrf.mxu0
        %2170 = vmatprep.mubr.bf16.mxu0 0
        %2171 = vmatmul.mubr.bf16.gmra.mxu0 %v1963
        %v2172 = vpop.f32.mrf.mxu0
        %v2173 = vpop.f32.mrf.mxu0
        %v2174 = vpop.f32.mrf.mxu0
        %v2175 = vadd.f32 %v1371, %v2174
        %v2176 = vpop.f32.mrf.mxu0
        %2177 = vmatprep.mubr.bf16.mxu0 0
        %2178 = vmatmul.mubr.bf16.gmra.mxu0 %v1965
        %v2179 = vpop.f32.mrf.mxu0
        %v2180 = vadd.f32 %v1376, %v2179
        %v2181 = vpop.f32.mrf.mxu0
        %v2182 = vpop.f32.mrf.mxu0
        %v2183 = vadd.f32 %v1379, %v2182
        %v2184 = vpop.f32.mrf.mxu0
        %2185 = vmatprep.mubr.bf16.mxu0 0
        %2186 = vmatmul.mubr.bf16.gmra.mxu0 %v1967
        %v2187 = vpop.f32.mrf.mxu0
        %v2188 = vadd.f32 %v1384, %v2187
        %v2189 = vpop.f32.mrf.mxu0
        %v2190 = vpop.f32.mrf.mxu0
        %v2191 = vpop.f32.mrf.mxu0
        %2192 = vmatprep.mubr.bf16.mxu0 0
        %2193 = vmatmul.mubr.bf16.gmra.mxu0 %v1969
        %v2194 = vpop.f32.mrf.mxu0
        %v2195 = vadd.f32 %v1391, %v2194
        %v2196 = vpop.f32.mrf.mxu0
        %v2197 = vpop.f32.mrf.mxu0
        %v2198 = vadd.f32 %v1394, %v2197
        %v2199 = vpop.f32.mrf.mxu0
        %2200 = vmatprep.mubr.bf16.mxu0 0
        %2201 = vmatmul.mubr.bf16.gmra.mxu0 %v1971
        %v2202 = vpop.f32.mrf.mxu0
        %v2203 = vadd.f32 %v1399, %v2202
        %v2204 = vpop.f32.mrf.mxu0
        %v2205 = vpop.f32.mrf.mxu0
        %v2206 = vadd.f32 %v1402, %v2205
        %v2207 = vpop.f32.mrf.mxu0
        %2208 = vmatprep.mubr.bf16.mxu0 0
        %2209 = vmatmul.mubr.bf16.gmra.mxu0 %v1973
        %v2210 = vpop.f32.mrf.mxu0
        %v2211 = vpop.f32.mrf.mxu0
        %v2212 = vpop.f32.mrf.mxu0
        %v2213 = vadd.f32 %v1409, %v2212
        %v2214 = vpop.f32.mrf.mxu0
        %2215 = vmatprep.mubr.bf16.mxu0 0
        %2216 = vmatmul.mubr.bf16.gmra.mxu0 %v1975
        %v2217 = vpop.f32.mrf.mxu0
        %v2218 = vadd.f32 %v1414, %v2217
        %v2219 = vpop.f32.mrf.mxu0
        %v2220 = vpop.f32.mrf.mxu0
        %v2221 = vadd.f32 %v1417, %v2220
        %v2222 = vpop.f32.mrf.mxu0
        %2223 = vmatprep.mubr.bf16.mxu0 0
        %2224 = vmatmul.mubr.bf16.gmra.mxu0 %v1977
        %v2225 = vpop.f32.mrf.mxu0
        %v2226 = vadd.f32 %v1422, %v2225
        %v2227 = vpop.f32.mrf.mxu0
        %v2228 = vpop.f32.mrf.mxu0
        %v2229 = vpop.f32.mrf.mxu0
        %2230 = vmatprep.mubr.bf16.mxu0 0
        %2231 = vmatmul.mubr.bf16.gmra.mxu0 %v1979
        %v2232 = vpop.f32.mrf.mxu0
        %v2233 = vadd.f32 %v1429, %v2232
        %v2234 = vpop.f32.mrf.mxu0
        %v2235 = vpop.f32.mrf.mxu0
        %v2236 = vadd.f32 %v1432, %v2235
        %v2237 = vpop.f32.mrf.mxu0
        %2238 = vmatprep.mubr.bf16.mxu0 0
        %2239 = vmatmul.mubr.bf16.gmra.mxu0 %v1981
        %v2240 = vpop.f32.mrf.mxu0
        %v2241 = vadd.f32 %v1437, %v2240
        %v2242 = vpop.f32.mrf.mxu0
        %v2243 = vpop.f32.mrf.mxu0
        %v2244 = vadd.f32 %v1440, %v2243
        %v2245 = vpop.f32.mrf.mxu0
        %2246 = vmatprep.mubr.bf16.mxu0 0
        %2247 = vmatmul.mubr.bf16.gmra.mxu0 %v1983
        %v2248 = vpop.f32.mrf.mxu0
        %v2249 = vpop.f32.mrf.mxu0
        %v2250 = vpop.f32.mrf.mxu0
        %v2251 = vadd.f32 %v1447, %v2250
        %v2252 = vpop.f32.mrf.mxu0
        %2253 = vmatprep.mubr.bf16.mxu0 0
        %2254 = vmatmul.mubr.bf16.gmra.mxu0 %v1985
        %v2255 = vpop.f32.mrf.mxu0
        %v2256 = vadd.f32 %v1452, %v2255
        %v2257 = vpop.f32.mrf.mxu0
        %v2258 = vpop.f32.mrf.mxu0
        %v2259 = vadd.f32 %v1455, %v2258
        %v2260 = vpop.f32.mrf.mxu0
        %2261 = vmatprep.mubr.bf16.mxu0 0
        %2262 = vmatmul.mubr.bf16.gmra.mxu0 %v1987
        %v2263 = vpop.f32.mrf.mxu0
        %v2264 = vadd.f32 %v1460, %v2263
        %v2265 = vpop.f32.mrf.mxu0
        %v2266 = vpop.f32.mrf.mxu0
        %v2267 = vpop.f32.mrf.mxu0
        %2268 = vmatprep.mubr.bf16.mxu0 0
        %2269 = vmatmul.mubr.bf16.gmra.mxu0 %v1989
        %v2270 = vpop.f32.mrf.mxu0
        %v2271 = vadd.f32 %v1467, %v2270
        %v2272 = vpop.f32.mrf.mxu0
        %v2273 = vpop.f32.mrf.mxu0
        %v2274 = vadd.f32 %v1470, %v2273
        %v2275 = vpop.f32.mrf.mxu0
        %2276 = vmatprep.mubr.bf16.mxu0 0
        %2277 = vmatmul.mubr.bf16.gmra.mxu0 %v1991
        %v2278 = vpop.f32.mrf.mxu0
        %v2279 = vadd.f32 %v1475, %v2278
        %v2280 = vpop.f32.mrf.mxu0
        %v2281 = vpop.f32.mrf.mxu0
        %v2282 = vadd.f32 %v1478, %v2281
        %v2283 = vpop.f32.mrf.mxu0
        %2284 = vmatprep.mubr.bf16.mxu0 0
        %2285 = vmatmul.mubr.bf16.gmra.mxu0 %v1993
        %v2286 = vpop.f32.mrf.mxu0
        %v2287 = vpop.f32.mrf.mxu0
        %v2288 = vpop.f32.mrf.mxu0
        %v2289 = vadd.f32 %v1485, %v2288
        %v2290 = vpop.f32.mrf.mxu0
        %2291 = vmatprep.mubr.bf16.mxu0 0
        %2292 = vmatmul.mubr.bf16.gmra.mxu0 %v1995
        %v2293 = vpop.f32.mrf.mxu0
        %v2294 = vadd.f32 %v1490, %v2293
        %v2295 = vpop.f32.mrf.mxu0
        %v2296 = vpop.f32.mrf.mxu0
        %v2297 = vadd.f32 %v1493, %v2296
        %v2298 = vpop.f32.mrf.mxu0
        %2299 = vmatprep.mubr.bf16.mxu0 0
        %2300 = vmatmul.mubr.bf16.gmra.mxu0 %v1997
        %v2301 = vpop.f32.mrf.mxu0
        %v2302 = vadd.f32 %v1498, %v2301
        %v2303 = vpop.f32.mrf.mxu0
        %v2304 = vpop.f32.mrf.mxu0
        %v2305 = vpop.f32.mrf.mxu0
        %2306 = vmatprep.mubr.bf16.mxu0 0
        %2307 = vmatmul.mubr.bf16.gmra.mxu0 %v1999
        %v2308 = vpop.f32.mrf.mxu0
        %v2309 = vadd.f32 %v1505, %v2308
        %v2310 = vpop.f32.mrf.mxu0
        %v2311 = vpop.f32.mrf.mxu0
        %v2312 = vadd.f32 %v1508, %v2311
        %v2313 = vpop.f32.mrf.mxu0
        %2314 = vmatprep.mubr.bf16.mxu0 0
        %2315 = vmatmul.mubr.bf16.gmra.mxu0 %v2001
        %v2316 = vpop.f32.mrf.mxu0
        %v2317 = vadd.f32 %v1513, %v2316
        %v2318 = vpop.f32.mrf.mxu0
        %v2319 = vpop.f32.mrf.mxu0
        %v2320 = vadd.f32 %v1516, %v2319
        %v2321 = vpop.f32.mrf.mxu0
        %2322 = vmatprep.mubr.bf16.mxu0 0
        %2323 = vmatmul.mubr.bf16.gmra.mxu0 %v2003
        %v2324 = vpop.f32.mrf.mxu0
        %v2325 = vpop.f32.mrf.mxu0
        %v2326 = vpop.f32.mrf.mxu0
        %v2327 = vadd.f32 %v1523, %v2326
        %v2328 = vpop.f32.mrf.mxu0
        %2329 = vmatprep.mubr.bf16.mxu0 0
        %2330 = vmatmul.mubr.bf16.gmra.mxu0 %v2005
        %v2331 = vpop.f32.mrf.mxu0
        %v2332 = vadd.f32 %v1528, %v2331
        %v2333 = vpop.f32.mrf.mxu0
        %v2334 = vpop.f32.mrf.mxu0
        %v2335 = vadd.f32 %v1531, %v2334
        %v2336 = vpop.f32.mrf.mxu0
        %2337 = vmatprep.mubr.bf16.mxu0 0
        %2338 = vmatmul.mubr.bf16.gmra.mxu0 %v2007
        %v2339 = vpop.f32.mrf.mxu0
        %v2340 = vadd.f32 %v1536, %v2339
        %v2341 = vpop.f32.mrf.mxu0
        %v2342 = vpop.f32.mrf.mxu0
        %v2343 = vpop.f32.mrf.mxu0
        %2344 = vmatprep.mubr.bf16.mxu0 0
        %2345 = vmatmul.mubr.bf16.gmra.mxu0 %v2009
        %v2346 = vpop.f32.mrf.mxu0
        %v2347 = vadd.f32 %v1543, %v2346
        %v2348 = vpop.f32.mrf.mxu0
        %v2349 = vpop.f32.mrf.mxu0
        %v2350 = vadd.f32 %v1546, %v2349
        %v2351 = vpop.f32.mrf.mxu0
        %2352 = vmatprep.mubr.bf16.mxu0 0
        %2353 = vmatmul.mubr.bf16.gmra.mxu0 %v2011
        %v2354 = vpop.f32.mrf.mxu0
        %v2355 = vadd.f32 %v1551, %v2354
        %v2356 = vpop.f32.mrf.mxu0
        %v2357 = vpop.f32.mrf.mxu0
        %v2358 = vadd.f32 %v1554, %v2357
        %v2359 = vpop.f32.mrf.mxu0
        %2360 = vmatprep.mubr.bf16.mxu0 0
        %2361 = vmatmul.mubr.bf16.gmra.mxu0 %v2013
        %v2362 = vpop.f32.mrf.mxu0
        %v2363 = vpop.f32.mrf.mxu0
        %v2364 = vpop.f32.mrf.mxu0
        %v2365 = vadd.f32 %v1561, %v2364
        %v2366 = vpop.f32.mrf.mxu0
        %2367 = vmatprep.mubr.bf16.mxu0 0
        %2368 = vmatmul.mubr.bf16.gmra.mxu0 %v2015
        %v2369 = vpop.f32.mrf.mxu0
        %v2370 = vadd.f32 %v1566, %v2369
        %v2371 = vpop.f32.mrf.mxu0
        %v2372 = vpop.f32.mrf.mxu0
        %v2373 = vadd.f32 %v1569, %v2372
        %v2374 = vpop.f32.mrf.mxu0
        %2375 = vmatprep.mubr.bf16.mxu0 0
        %2376 = vmatmul.mubr.bf16.gmra.mxu0 %v2017
        %v2377 = vpop.f32.mrf.mxu0
        %v2378 = vadd.f32 %v1574, %v2377
        %v2379 = vpop.f32.mrf.mxu0
        %v2380 = vpop.f32.mrf.mxu0
        %v2381 = vpop.f32.mrf.mxu0
        %2382 = vmatprep.mubr.bf16.mxu0 0
        %2383 = vmatmul.mubr.bf16.gmra.mxu0 %v2019
        %v2384 = vpop.f32.mrf.mxu0
        %v2385 = vadd.f32 %v1581, %v2384
        %v2386 = vpop.f32.mrf.mxu0
        %v2387 = vpop.f32.mrf.mxu0
        %v2388 = vadd.f32 %v1584, %v2387
        %v2389 = vpop.f32.mrf.mxu0
        %2390 = vmatprep.mubr.bf16.mxu0 0
        %2391 = vmatmul.mubr.bf16.gmra.mxu0 %v2021
        %v2392 = vpop.f32.mrf.mxu0
        %v2393 = vadd.f32 %v1589, %v2392
        %v2394 = vpop.f32.mrf.mxu0
        %v2395 = vpop.f32.mrf.mxu0
        %v2396 = vadd.f32 %v1592, %v2395
        %v2397 = vpop.f32.mrf.mxu0
        %2398 = vmatprep.mubr.bf16.mxu0 0
        %2399 = vmatmul.mubr.bf16.gmra.mxu0 %v2023
        %v2400 = vpop.f32.mrf.mxu0
        %v2401 = vpop.f32.mrf.mxu0
        %v2402 = vpop.f32.mrf.mxu0
        %v2403 = vadd.f32 %v1599, %v2402
        %v2404 = vpop.f32.mrf.mxu0
        %2405 = vmatprep.mubr.bf16.mxu0 0
        %2406 = vmatmul.mubr.bf16.gmra.mxu0 %v2025
        %v2407 = vpop.f32.mrf.mxu0
        %v2408 = vadd.f32 %v1604, %v2407
        %v2409 = vpop.f32.mrf.mxu0
        %v2410 = vpop.f32.mrf.mxu0
        %v2411 = vadd.f32 %v1607, %v2410
        %v2412 = vpop.f32.mrf.mxu0
        %2413 = vmatprep.mubr.bf16.mxu0 0
        %2414 = vmatmul.mubr.bf16.gmra.mxu0 %v2027
        %v2415 = vpop.f32.mrf.mxu0
        %v2416 = vadd.f32 %v1612, %v2415
        %v2417 = vpop.f32.mrf.mxu0
        %v2418 = vpop.f32.mrf.mxu0
        %v2419 = vpop.f32.mrf.mxu0
        %2420 = vmatprep.mubr.bf16.mxu0 0
        %2421 = vmatmul.mubr.bf16.gmra.mxu0 %v2029
        %v2422 = vpop.f32.mrf.mxu0
        %v2423 = vadd.f32 %v1619, %v2422
        %v2424 = vpop.f32.mrf.mxu0
        %v2425 = vpop.f32.mrf.mxu0
        %v2426 = vadd.f32 %v1622, %v2425
        %v2427 = vpop.f32.mrf.mxu0
        %2428 = vmatprep.mubr.bf16.mxu0 0
        %2429 = vmatmul.mubr.bf16.gmra.mxu0 %v2031
        %v2430 = vpop.f32.mrf.mxu0
        %v2431 = vadd.f32 %v1627, %v2430
        %v2432 = vpop.f32.mrf.mxu0
        %v2433 = vpop.f32.mrf.mxu0
        %v2434 = vadd.f32 %v1630, %v2433
        %v2435 = vpop.f32.mrf.mxu0
        %2436 = vmatprep.mubr.bf16.mxu0 0
        %2437 = vmatmul.mubr.bf16.gmra.mxu0 %v2033
        %v2438 = vpop.f32.mrf.mxu0
        %v2439 = vpop.f32.mrf.mxu0
        %v2440 = vpop.f32.mrf.mxu0
        %v2441 = vadd.f32 %v1637, %v2440
        %v2442 = vpop.f32.mrf.mxu0
        %2443 = vmatprep.mubr.bf16.mxu0 0
        %2444 = vmatmul.mubr.bf16.gmra.mxu0 %v2035
        %v2445 = vpop.f32.mrf.mxu0
        %v2446 = vadd.f32 %v1642, %v2445
        %v2447 = vpop.f32.mrf.mxu0
        %v2448 = vpop.f32.mrf.mxu0
        %v2449 = vadd.f32 %v1645, %v2448
        %v2450 = vpop.f32.mrf.mxu0
        %2451 = vmatprep.mubr.bf16.mxu0 0
        %2452 = vmatmul.mubr.bf16.gmra.mxu0 %v2037
        %v2453 = vpop.f32.mrf.mxu0
        %v2454 = vadd.f32 %v1650, %v2453
        %v2455 = vpop.f32.mrf.mxu0
        %v2456 = vpop.f32.mrf.mxu0
        %v2457 = vpop.f32.mrf.mxu0
        %2458 = vmatprep.mubr.bf16.mxu0 0
        %2459 = vmatmul.mubr.bf16.gmra.mxu0 %v2039
        %v2460 = vpop.f32.mrf.mxu0
        %v2461 = vadd.f32 %v1657, %v2460
        %v2462 = vpop.f32.mrf.mxu0
        %v2463 = vpop.f32.mrf.mxu0
        %v2464 = vadd.f32 %v1660, %v2463
        %v2465 = vpop.f32.mrf.mxu0
        %2466 = vmatprep.mubr.bf16.mxu0 0
        %2467 = vmatmul.mubr.bf16.gmra.mxu0 %v2041
        %v2468 = vpop.f32.mrf.mxu0
        %v2469 = vadd.f32 %v1665, %v2468
        %v2470 = vpop.f32.mrf.mxu0
        %v2471 = vpop.f32.mrf.mxu0
        %v2472 = vadd.f32 %v1668, %v2471
        %v2473 = vpop.f32.mrf.mxu0
        %2474 = vmatprep.mubr.bf16.mxu0 0
        %2475 = vmatmul.mubr.bf16.gmra.mxu0 %v2043
        %v2476 = vpop.f32.mrf.mxu0
        %v2477 = vpop.f32.mrf.mxu0
        %v2478 = vpop.f32.mrf.mxu0
        %v2479 = vadd.f32 %v1675, %v2478
        %v2480 = vpop.f32.mrf.mxu0
        %2481 = vmatprep.mubr.bf16.mxu0 0
        %2482 = vmatmul.mubr.bf16.gmra.mxu0 %v2045
        %v2483 = vpop.f32.mrf.mxu0
        %v2484 = vadd.f32 %v1680, %v2483
        %v2485 = vpop.f32.mrf.mxu0
        %v2486 = vpop.f32.mrf.mxu0
        %v2487 = vadd.f32 %v1683, %v2486
        %v2488 = vpop.f32.mrf.mxu0
        %2489 = vmatprep.mubr.bf16.mxu0 0
        %2490 = vmatmul.mubr.bf16.gmra.mxu0 %v2047
        %v2491 = vpop.f32.mrf.mxu0
        %v2492 = vadd.f32 %v1688, %v2491
        %v2493 = vpop.f32.mrf.mxu0
        %v2494 = vpop.f32.mrf.mxu0
        %v2495 = vpop.f32.mrf.mxu0
        %2496 = vmatprep.mubr.bf16.mxu0 0
        %2497 = vmatmul.mubr.bf16.gmra.mxu0 %v2049
        %v2498 = vpop.f32.mrf.mxu0
        %v2499 = vadd.f32 %v1695, %v2498
        %v2500 = vpop.f32.mrf.mxu0
        %v2501 = vpop.f32.mrf.mxu0
        %v2502 = vadd.f32 %v1698, %v2501
        %v2503 = vpop.f32.mrf.mxu0
        %2504 = vmatprep.mubr.bf16.mxu0 0
        %2505 = vmatmul.mubr.bf16.gmra.mxu0 %v2051
        %v2506 = vpop.f32.mrf.mxu0
        %v2507 = vadd.f32 %v1703, %v2506
        %v2508 = vpop.f32.mrf.mxu0
        %v2509 = vpop.f32.mrf.mxu0
        %v2510 = vadd.f32 %v1706, %v2509
        %v2511 = vpop.f32.mrf.mxu0
        %2512 = vmatprep.mubr.bf16.mxu0 0
        %2513 = vmatmul.mubr.bf16.gmra.mxu0 %v2053
        %v2514 = vpop.f32.mrf.mxu0
        %v2515 = vpop.f32.mrf.mxu0
        %v2516 = vpop.f32.mrf.mxu0
        %v2517 = vadd.f32 %v1713, %v2516
        %v2518 = vpop.f32.mrf.mxu0
        %2519 = vmatprep.mubr.bf16.mxu0 0
        %2520 = vmatmul.mubr.bf16.gmra.mxu0 %v2055
        %v2521 = vpop.f32.mrf.mxu0
        %v2522 = vadd.f32 %v1718, %v2521
        %v2523 = vpop.f32.mrf.mxu0
        %v2524 = vpop.f32.mrf.mxu0
        %v2525 = vadd.f32 %v1721, %v2524
        %v2526 = vpop.f32.mrf.mxu0
        %2527 = vmatprep.mubr.bf16.mxu0 0
        %2528 = vmatmul.mubr.bf16.gmra.mxu0 %v2057
        %v2529 = vpop.f32.mrf.mxu0
        %v2530 = vadd.f32 %v1726, %v2529
        %v2531 = vpop.f32.mrf.mxu0
        %v2532 = vpop.f32.mrf.mxu0
        %v2533 = vpop.f32.mrf.mxu0
        %2534 = vmatprep.mubr.bf16.mxu0 0
        %2535 = vmatmul.mubr.bf16.gmra.mxu0 %v2059
        %v2536 = vpop.f32.mrf.mxu0
        %v2537 = vadd.f32 %v1733, %v2536
        %v2538 = vpop.f32.mrf.mxu0
        %v2539 = vpop.f32.mrf.mxu0
        %v2540 = vadd.f32 %v1736, %v2539
        %v2541 = vpop.f32.mrf.mxu0
        %2542 = vmatprep.mubr.bf16.mxu0 0
        %2543 = vmatmul.mubr.bf16.gmra.mxu0 %v2061
        %v2544 = vpop.f32.mrf.mxu0
        %v2545 = vadd.f32 %v1741, %v2544
        %v2546 = vpop.f32.mrf.mxu0
        %v2547 = vpop.f32.mrf.mxu0
        %v2548 = vadd.f32 %v1744, %v2547
        %v2549 = vpop.f32.mrf.mxu0
        %2550 = vmatprep.mubr.bf16.mxu0 0
        %2551 = vmatmul.mubr.bf16.gmra.mxu0 %v2063
        %v2552 = vpop.f32.mrf.mxu0
        %v2553 = vpop.f32.mrf.mxu0
        %v2554 = vpop.f32.mrf.mxu0
        %v2555 = vadd.f32 %v1751, %v2554
        %v2556 = vpop.f32.mrf.mxu0
        %2557 = vmatprep.mubr.bf16.mxu0 0
        %2558 = vmatmul.mubr.bf16.gmra.mxu0 %v2065
        %v2559 = vpop.f32.mrf.mxu0
        %v2560 = vadd.f32 %v1756, %v2559
        %v2561 = vpop.f32.mrf.mxu0
        %v2562 = vpop.f32.mrf.mxu0
        %v2563 = vadd.f32 %v1759, %v2562
        %v2564 = vpop.f32.mrf.mxu0
        %2565 = vmatprep.mubr.bf16.mxu0 0
        %2566 = vmatmul.mubr.bf16.gmra.mxu0 %v2067
        %v2567 = vpop.f32.mrf.mxu0
        %v2568 = vadd.f32 %v1764, %v2567
        %v2569 = vpop.f32.mrf.mxu0
        %v2570 = vpop.f32.mrf.mxu0
        %v2571 = vpop.f32.mrf.mxu0
        %2572 = vmatprep.mubr.bf16.mxu0 0
        %2573 = vmatmul.mubr.bf16.gmra.mxu0 %v2069
        %v2574 = vpop.f32.mrf.mxu0
        %v2575 = vadd.f32 %v1771, %v2574
        %v2576 = vpop.f32.mrf.mxu0
        %v2577 = vpop.f32.mrf.mxu0
        %v2578 = vadd.f32 %v1774, %v2577
        %v2579 = vpop.f32.mrf.mxu0
        %2580 = vmatprep.mubr.bf16.mxu0 0
        %2581 = vmatmul.mubr.bf16.gmra.mxu0 %v2071
        %v2582 = vpop.f32.mrf.mxu0
        %v2583 = vadd.f32 %v1779, %v2582
        %v2584 = vpop.f32.mrf.mxu0
        %v2585 = vpop.f32.mrf.mxu0
        %v2586 = vadd.f32 %v1782, %v2585
        %v2587 = vpop.f32.mrf.mxu0
        %2588 = vmatprep.mubr.bf16.mxu0 0
        %2589 = vmatmul.mubr.bf16.gmra.mxu0 %v2073
        %v2590 = vpop.f32.mrf.mxu0
        %v2591 = vpop.f32.mrf.mxu0
        %v2592 = vpop.f32.mrf.mxu0
        %v2593 = vadd.f32 %v1789, %v2592
        %v2594 = vpop.f32.mrf.mxu0
        %2595 = vmatprep.mubr.bf16.mxu0 0
        %2596 = vmatmul.mubr.bf16.gmra.mxu0 %v2075
        %v2597 = vpop.f32.mrf.mxu0
        %v2598 = vadd.f32 %v1794, %v2597
        %v2599 = vpop.f32.mrf.mxu0
        %v2600 = vpop.f32.mrf.mxu0
        %v2601 = vadd.f32 %v1797, %v2600
        %v2602 = vpop.f32.mrf.mxu0
        %2603 = vmatprep.mubr.bf16.mxu0 0
        %2604 = vmatmul.mubr.bf16.gmra.mxu0 %v2077
        %v2605 = vpop.f32.mrf.mxu0
        %v2606 = vadd.f32 %v1802, %v2605
        %v2607 = vpop.f32.mrf.mxu0
        %v2608 = vpop.f32.mrf.mxu0
        %v2609 = vpop.f32.mrf.mxu0
        %2610 = vmatprep.mubr.bf16.mxu0 0
        %2611 = vmatmul.mubr.bf16.gmra.mxu0 %v2079
        %v2612 = vpop.f32.mrf.mxu0
        %v2613 = vadd.f32 %v1809, %v2612
        %v2614 = vpop.f32.mrf.mxu0
        %v2615 = vpop.f32.mrf.mxu0
        %v2616 = vadd.f32 %v1812, %v2615
        %v2617 = vpop.f32.mrf.mxu0
        %2618 = vmatprep.mubr.bf16.mxu0 0
        %2619 = vmatmul.mubr.bf16.gmra.mxu0 %v2081
        %v2620 = vpop.f32.mrf.mxu0
        %v2621 = vadd.f32 %v1817, %v2620
        %v2622 = vpop.f32.mrf.mxu0
        %v2623 = vpop.f32.mrf.mxu0
        %v2624 = vadd.f32 %v1820, %v2623
        %v2625 = vpop.f32.mrf.mxu0
        %2626 = vmatprep.mubr.bf16.mxu0 0
        %2627 = vmatmul.mubr.bf16.gmra.mxu0 %v2083
        %v2628 = vpop.f32.mrf.mxu0
        %v2629 = vpop.f32.mrf.mxu0
        %v2630 = vpop.f32.mrf.mxu0
        %v2631 = vadd.f32 %v1827, %v2630
        %v2632 = vpop.f32.mrf.mxu0
        %2633 = vmatprep.mubr.bf16.mxu0 0
        %2634 = vmatmul.mubr.bf16.gmra.mxu0 %v2085
        %v2635 = vpop.f32.mrf.mxu0
        %v2636 = vadd.f32 %v1832, %v2635
        %v2637 = vpop.f32.mrf.mxu0
        %v2638 = vpop.f32.mrf.mxu0
        %v2639 = vadd.f32 %v1835, %v2638
        %v2640 = vpop.f32.mrf.mxu0
        %2641 = vmatprep.mubr.bf16.mxu0 0
        %2642 = vmatmul.mubr.bf16.gmra.mxu0 %v2087
        %v2643 = vpop.f32.mrf.mxu0
        %v2644 = vadd.f32 %v1840, %v2643
        %v2645 = vpop.f32.mrf.mxu0
        %v2646 = vpop.f32.mrf.mxu0
        %v2647 = vpop.f32.mrf.mxu0
        %2648 = vmatprep.mubr.bf16.mxu0 0
        %2649 = vmatmul.mubr.bf16.gmra.mxu0 %v2089
        %v2650 = vpop.f32.mrf.mxu0
        %v2651 = vadd.f32 %v1847, %v2650
        %v2652 = vpop.f32.mrf.mxu0
        %v2653 = vpop.f32.mrf.mxu0
        %v2654 = vadd.f32 %v1850, %v2653
        %v2655 = vpop.f32.mrf.mxu0
        %2656 = vmatprep.mubr.bf16.mxu0 0
        %2657 = vmatmul.mubr.bf16.gmra.mxu0 %v2091
        %v2658 = vpop.f32.mrf.mxu0
        %v2659 = vadd.f32 %v1855, %v2658
        %v2660 = vpop.f32.mrf.mxu0
        %v2661 = vpop.f32.mrf.mxu0
        %v2662 = vadd.f32 %v1858, %v2661
        %v2663 = vpop.f32.mrf.mxu0
        %2664 = vmatprep.mubr.bf16.mxu0 0
        %2665 = vmatmul.mubr.bf16.gmra.mxu0 %v2093
        %v2666 = vpop.f32.mrf.mxu0
        %v2667 = vpop.f32.mrf.mxu0
        %v2668 = vpop.f32.mrf.mxu0
        %v2669 = vadd.f32 %v1865, %v2668
        %v2670 = vpop.f32.mrf.mxu0
        %2671 = vmatprep.mubr.bf16.mxu0 0
        %2672 = vmatmul.mubr.bf16.gmra.mxu0 %v2095
        %v2673 = vpop.f32.mrf.mxu0
        %v2674 = vadd.f32 %v1870, %v2673
        %v2675 = vpop.f32.mrf.mxu0
        %v2676 = vpop.f32.mrf.mxu0
        %v2677 = vadd.f32 %v1873, %v2676
        %v2678 = vpop.f32.mrf.mxu0
        %2679 = vmatprep.mubr.bf16.mxu0 0
        %2680 = vmatmul.mubr.bf16.gmra.mxu0 %v2097
        %v2681 = vpop.f32.mrf.mxu0
        %v2682 = vadd.f32 %v1878, %v2681
        %v2683 = vpop.f32.mrf.mxu0
        %v2684 = vpop.f32.mrf.mxu0
        %v2685 = vpop.f32.mrf.mxu0
        %2686 = vmatprep.mubr.bf16.mxu0 0
        %2687 = vmatmul.mubr.bf16.gmra.mxu0 %v2099
        %v2688 = vpop.f32.mrf.mxu0
        %v2689 = vadd.f32 %v1885, %v2688
        %v2690 = vpop.f32.mrf.mxu0
        %v2691 = vpop.f32.mrf.mxu0
        %v2692 = vadd.f32 %v1888, %v2691
        %v2693 = vpop.f32.mrf.mxu0
        %2694 = vmatprep.mubr.bf16.mxu0 0
        %2695 = vmatmul.mubr.bf16.gmra.mxu0 %v2101
        %v2696 = vpop.f32.mrf.mxu0
        %v2697 = vadd.f32 %v1893, %v2696
        %v2698 = vpop.f32.mrf.mxu0
        %v2699 = vpop.f32.mrf.mxu0
        %v2700 = vadd.f32 %v1896, %v2699
        %v2701 = vpop.f32.mrf.mxu0
        %2702 = vmatprep.mubr.bf16.mxu0 0
        %2703 = vmatmul.mubr.bf16.gmra.mxu0 %v2103
        %v2704 = vpop.f32.mrf.mxu0
        %v2705 = vpop.f32.mrf.mxu0
        %v2706 = vpop.f32.mrf.mxu0
        %v2707 = vadd.f32 %v1903, %v2706
        %v2708 = vpop.f32.mrf.mxu0
        %2709 = vmatprep.mubr.bf16.mxu0 0
        %2710 = vmatmul.mubr.bf16.gmra.mxu0 %v2105
        %v2711 = vpop.f32.mrf.mxu0
        %v2712 = vadd.f32 %v1908, %v2711
        %v2713 = vpop.f32.mrf.mxu0
        %v2714 = vpop.f32.mrf.mxu0
        %v2715 = vadd.f32 %v1911, %v2714
        %v2716 = vpop.f32.mrf.mxu0
        %2717 = vmatprep.mubr.bf16.mxu0 0
        %2718 = vmatmul.mubr.bf16.gmra.mxu0 %v2107
        %v2719 = vpop.f32.mrf.mxu0
        %v2720 = vadd.f32 %v1916, %v2719
        %v2721 = vpop.f32.mrf.mxu0
        %v2722 = vpop.f32.mrf.mxu0
        %v2723 = vpop.f32.mrf.mxu0
        %2724 = vmatprep.mubr.bf16.mxu0 0
        %2725 = vmatmul.mubr.bf16.gmra.mxu0 %v2109
        %v2726 = vpop.f32.mrf.mxu0
        %v2727 = vadd.f32 %v1923, %v2726
        %v2728 = vpop.f32.mrf.mxu0
        %v2729 = vpop.f32.mrf.mxu0
        %v2730 = vadd.f32 %v1926, %v2729
        %v2731 = vpop.f32.mrf.mxu0
        %2732 = vmatprep.mubr.bf16.mxu0 0
        %2733 = vmatmul.mubr.bf16.gmra.mxu0 %v2111
        %v2734 = vpop.f32.mrf.mxu0
        %v2735 = vadd.f32 %v1931, %v2734
        %v2736 = vpop.f32.mrf.mxu0
        %v2737 = vpop.f32.mrf.mxu0
        %v2738 = vadd.f32 %v1934, %v2737
        %v2739 = vpop.f32.mrf.mxu0
        %2740 = vmatprep.mubr.bf16.mxu0 0
        %2741 = vmatmul.mubr.bf16.gmra.mxu0 %v2113
        %v2742 = vpop.f32.mrf.mxu0
        %v2743 = vpop.f32.mrf.mxu0
        %v2744 = vpop.f32.mrf.mxu0
        %v2745 = vadd.f32 %v1941, %v2744
        %v2746 = vpop.f32.mrf.mxu0
        %2747 = vmatprep.mubr.bf16.mxu0 0
        %2748 = vmatmul.mubr.bf16.gmra.mxu0 %v2115
        %v2749 = vpop.f32.mrf.mxu0
        %v2750 = vadd.f32 %v1946, %v2749
        %v2751 = vpop.f32.mrf.mxu0
        %v2752 = vpop.f32.mrf.mxu0
        %v2753 = vadd.f32 %v1949, %v2752
        %v2754 = vpop.f32.mrf.mxu0
        %2755 = vmatprep.mubr.bf16.mxu0 0
        %2756 = vmatmul.mubr.bf16.gmra.mxu0 %v2117
        %v2757 = vpop.f32.mrf.mxu0
        %v2758 = vadd.f32 %v1954, %v2757
        %v2759 = vpop.f32.mrf.mxu0
        %v2760 = vpop.f32.mrf.mxu0
        %v2761 = vpop.f32.mrf.mxu0
        %2762 = vdwg.mxu0
        %s2763 = scalar_lea.vmem %s1, 4
        %v2764 = vld [vmem:[%s2763] sm:$0x3]
        %vm2846 = vcmask 1046528
        %v2847 = vrot.slane %v341, 1
        %v2848 = vrot.slane %v342, 1
        %v2849 = vsel %vm2846, %v2847, %v2848
        %v2850 = vrot.slane %v343, 1
        %v2851 = vsel %vm2846, %v2848, %v2850
        %v2852 = vrot.slane %v344, 1
        %v2853 = vsel %vm2846, %v2850, %v2852
        %v2854 = vrot.slane %v345, 1
        %v2855 = vsel %vm2846, %v2852, %v2854
        %v2856 = vrot.slane %v346, 1
        %v2857 = vsel %vm2846, %v2854, %v2856
        %v2858 = vrot.slane %v347, 1
        %v2859 = vsel %vm2846, %v2856, %v2858
        %v2860 = vrot.slane %v348, 1
        %v2861 = vsel %vm2846, %v2858, %v2860
        %v2862 = vrot.slane %v349, 1
        %v2863 = vsel %vm2846, %v2860, %v2862
        %v2864 = vrot.slane %v350, 1
        %v2865 = vsel %vm2846, %v2862, %v2864
        %v2866 = vrot.slane %v351, 1
        %v2867 = vsel %vm2846, %v2864, %v2866
        %v2868 = vrot.slane %v352, 1
        %v2869 = vsel %vm2846, %v2866, %v2868
        %v2870 = vrot.slane %v353, 1
        %v2871 = vsel %vm2846, %v2868, %v2870
        %v2872 = vrot.slane %v354, 1
        %v2873 = vsel %vm2846, %v2870, %v2872
        %v2874 = vrot.slane %v355, 1
        %v2875 = vsel %vm2846, %v2872, %v2874
        %v2876 = vrot.slane %v356, 1
        %v2877 = vsel %vm2846, %v2874, %v2876
        %v2878 = vrot.slane %v357, 1
        %v2879 = vsel %vm2846, %v2876, %v2878
        %v2880 = vrot.slane %v358, 1
        %v2881 = vsel %vm2846, %v2878, %v2880
        %v2882 = vrot.slane %v359, 1
        %v2883 = vsel %vm2846, %v2880, %v2882
        %v2884 = vrot.slane %v360, 1
        %v2885 = vsel %vm2846, %v2882, %v2884
        %v2886 = vrot.slane %v361, 1
        %v2887 = vsel %vm2846, %v2884, %v2886
        %v2888 = vrot.slane %v362, 1
        %v2889 = vsel %vm2846, %v2886, %v2888
        %v2890 = vrot.slane %v363, 1
        %v2891 = vsel %vm2846, %v2888, %v2890
        %v2892 = vrot.slane %v364, 1
        %v2893 = vsel %vm2846, %v2890, %v2892
        %v2894 = vrot.slane %v365, 1
        %v2895 = vsel %vm2846, %v2892, %v2894
        %v2896 = vrot.slane %v366, 1
        %v2897 = vsel %vm2846, %v2894, %v2896
        %v2898 = vrot.slane %v367, 1
        %v2899 = vsel %vm2846, %v2896, %v2898
        %v2900 = vrot.slane %v368, 1
        %v2901 = vsel %vm2846, %v2898, %v2900
        %v2902 = vrot.slane %v369, 1
        %v2903 = vsel %vm2846, %v2900, %v2902
        %v2904 = vrot.slane %v370, 1
        %v2905 = vsel %vm2846, %v2902, %v2904
        %v2906 = vrot.slane %v371, 1
        %v2907 = vsel %vm2846, %v2904, %v2906
        %v2908 = vrot.slane %v372, 1
        %v2909 = vsel %vm2846, %v2906, %v2908
        %v2910 = vrot.slane %v373, 1
        %v2911 = vsel %vm2846, %v2908, %v2910
        %v2912 = vrot.slane %v374, 1
        %v2913 = vsel %vm2846, %v2910, %v2912
        %v2914 = vrot.slane %v375, 1
        %v2915 = vsel %vm2846, %v2912, %v2914
        %v2916 = vrot.slane %v376, 1
        %v2917 = vsel %vm2846, %v2914, %v2916
        %v2918 = vrot.slane %v377, 1
        %v2919 = vsel %vm2846, %v2916, %v2918
        %v2920 = vrot.slane %v378, 1
        %v2921 = vsel %vm2846, %v2918, %v2920
        %v2922 = vrot.slane %v379, 1
        %v2923 = vsel %vm2846, %v2920, %v2922
        %v2924 = vrot.slane %v380, 1
        %v2925 = vsel %vm2846, %v2922, %v2924
        %v2926 = vrot.slane %v381, 1
        %v2927 = vsel %vm2846, %v2924, %v2926
        %v2928 = vrot.slane %v382, 1
        %v2929 = vsel %vm2846, %v2926, %v2928
        %v2930 = vrot.slane %v383, 1
        %v2931 = vsel %vm2846, %v2928, %v2930
        %v2932 = vrot.slane %v384, 1
        %v2933 = vsel %vm2846, %v2930, %v2932
        %v2934 = vrot.slane %v385, 1
        %v2935 = vsel %vm2846, %v2932, %v2934
        %v2936 = vrot.slane %v386, 1
        %v2937 = vsel %vm2846, %v2934, %v2936
        %v2938 = vrot.slane %v387, 1
        %v2939 = vsel %vm2846, %v2936, %v2938
        %v2940 = vrot.slane %v388, 1
        %v2941 = vsel %vm2846, %v2938, %v2940
        %v2942 = vrot.slane %v389, 1
        %v2943 = vsel %vm2846, %v2940, %v2942
        %v2944 = vrot.slane %v390, 1
        %v2945 = vsel %vm2846, %v2942, %v2944
        %v2946 = vrot.slane %v391, 1
        %v2947 = vsel %vm2846, %v2944, %v2946
        %v2948 = vrot.slane %v392, 1
        %v2949 = vsel %vm2846, %v2946, %v2948
        %v2950 = vrot.slane %v393, 1
        %v2951 = vsel %vm2846, %v2948, %v2950
        %v2952 = vrot.slane %v394, 1
        %v2953 = vsel %vm2846, %v2950, %v2952
        %v2954 = vrot.slane %v395, 1
        %v2955 = vsel %vm2846, %v2952, %v2954
        %v2956 = vrot.slane %v396, 1
        %v2957 = vsel %vm2846, %v2954, %v2956
        %v2958 = vrot.slane %v397, 1
        %v2959 = vsel %vm2846, %v2956, %v2958
        %v2960 = vrot.slane %v398, 1
        %v2961 = vsel %vm2846, %v2958, %v2960
        %v2962 = vrot.slane %v399, 1
        %v2963 = vsel %vm2846, %v2960, %v2962
        %v2964 = vrot.slane %v400, 1
        %v2965 = vsel %vm2846, %v2962, %v2964
        %v2966 = vrot.slane %v401, 1
        %v2967 = vsel %vm2846, %v2964, %v2966
        %v2968 = vrot.slane %v402, 1
        %v2969 = vsel %vm2846, %v2966, %v2968
        %v2970 = vrot.slane %v403, 1
        %v2971 = vsel %vm2846, %v2968, %v2970
        %v2972 = vrot.slane %v404, 1
        %v2973 = vsel %vm2846, %v2970, %v2972
        %v2974 = vrot.slane %v405, 1
        %v2975 = vsel %vm2846, %v2972, %v2974
        %v2976 = vrot.slane %v406, 1
        %v2977 = vsel %vm2846, %v2974, %v2976
        %v2978 = vrot.slane %v407, 1
        %v2979 = vsel %vm2846, %v2976, %v2978
        %v2980 = vrot.slane %v408, 1
        %v2981 = vsel %vm2846, %v2978, %v2980
        %v2982 = vrot.slane %v409, 1
        %v2983 = vsel %vm2846, %v2980, %v2982
        %v2984 = vrot.slane %v410, 1
        %v2985 = vsel %vm2846, %v2982, %v2984
        %v2986 = vrot.slane %v411, 1
        %v2987 = vsel %vm2846, %v2984, %v2986
        %v2988 = vrot.slane %v412, 1
        %v2989 = vsel %vm2846, %v2986, %v2988
        %v2990 = vrot.slane %v413, 1
        %v2991 = vsel %vm2846, %v2988, %v2990
        %v2992 = vrot.slane %v414, 1
        %v2993 = vsel %vm2846, %v2990, %v2992
        %v2994 = vrot.slane %v415, 1
        %v2995 = vsel %vm2846, %v2992, %v2994
        %v2996 = vrot.slane %v416, 1
        %v2997 = vsel %vm2846, %v2994, %v2996
        %v2998 = vrot.slane %v417, 1
        %v2999 = vsel %vm2846, %v2996, %v2998
        %v3000 = vrot.slane %v418, 1
        %v3001 = vsel %vm2846, %v2998, %v3000
        %v3002 = vrot.slane %v419, 1
        %v3003 = vsel %vm2846, %v3000, %v3002
        %v3004 = vrot.slane %v420, 1
        %v3005 = vsel %vm2846, %v3002, %v3004
        %v3006 = vrot.slane %v422, 1
        %v3007 = vsel %vm2846, %v3004, %v3006
        %v3009 = vsel %vm1070, %v2849, 0
        %v3012 = vsel %vm1070, %v2851, 0
        %v3015 = vsel %vm1070, %v2853, 0
        %v3018 = vsel %vm1070, %v2855, 0
        %v3021 = vsel %vm1070, %v2857, 0
        %v3024 = vsel %vm1070, %v2859, 0
        %v3027 = vsel %vm1070, %v2861, 0
        %v3030 = vsel %vm1070, %v2863, 0
        %v3033 = vsel %vm1070, %v2865, 0
        %v3036 = vsel %vm1070, %v2867, 0
        %v3039 = vsel %vm1070, %v2869, 0
        %v3042 = vsel %vm1070, %v2871, 0
        %v3045 = vsel %vm1070, %v2873, 0
        %v3048 = vsel %vm1070, %v2875, 0
        %v3051 = vsel %vm1070, %v2877, 0
        %v3054 = vsel %vm1070, %v2879, 0
        %v3057 = vsel %vm1070, %v2881, 0
        %v3060 = vsel %vm1070, %v2883, 0
        %v3063 = vsel %vm1070, %v2885, 0
        %v3066 = vsel %vm1070, %v2887, 0
        %v3069 = vsel %vm1070, %v2889, 0
        %v3072 = vsel %vm1070, %v2891, 0
        %v3075 = vsel %vm1070, %v2893, 0
        %v3078 = vsel %vm1070, %v2895, 0
        %v3081 = vsel %vm1070, %v2897, 0
        %v3084 = vsel %vm1070, %v2899, 0
        %v3087 = vsel %vm1070, %v2901, 0
        %v3090 = vsel %vm1070, %v2903, 0
        %v3093 = vsel %vm1070, %v2905, 0
        %v3096 = vsel %vm1070, %v2907, 0
        %v3099 = vsel %vm1070, %v2909, 0
        %v3102 = vsel %vm1070, %v2911, 0
        %v3105 = vsel %vm1070, %v2913, 0
        %v3108 = vsel %vm1070, %v2915, 0
        %v3111 = vsel %vm1070, %v2917, 0
        %v3114 = vsel %vm1070, %v2919, 0
        %v3117 = vsel %vm1070, %v2921, 0
        %v3120 = vsel %vm1070, %v2923, 0
        %v3123 = vsel %vm1070, %v2925, 0
        %v3126 = vsel %vm1070, %v2927, 0
        %v3129 = vsel %vm1070, %v2929, 0
        %v3132 = vsel %vm1070, %v2931, 0
        %v3135 = vsel %vm1070, %v2933, 0
        %v3138 = vsel %vm1070, %v2935, 0
        %v3141 = vsel %vm1070, %v2937, 0
        %v3144 = vsel %vm1070, %v2939, 0
        %v3147 = vsel %vm1070, %v2941, 0
        %v3150 = vsel %vm1070, %v2943, 0
        %v3153 = vsel %vm1070, %v2945, 0
        %v3156 = vsel %vm1070, %v2947, 0
        %v3159 = vsel %vm1070, %v2949, 0
        %v3162 = vsel %vm1070, %v2951, 0
        %v3165 = vsel %vm1070, %v2953, 0
        %v3168 = vsel %vm1070, %v2955, 0
        %v3171 = vsel %vm1070, %v2957, 0
        %v3174 = vsel %vm1070, %v2959, 0
        %v3177 = vsel %vm1070, %v2961, 0
        %v3180 = vsel %vm1070, %v2963, 0
        %v3183 = vsel %vm1070, %v2965, 0
        %v3186 = vsel %vm1070, %v2967, 0
        %v3189 = vsel %vm1070, %v2969, 0
        %v3192 = vsel %vm1070, %v2971, 0
        %v3195 = vsel %vm1070, %v2973, 0
        %v3198 = vsel %vm1070, %v2975, 0
        %v3201 = vsel %vm1070, %v2977, 0
        %v3204 = vsel %vm1070, %v2979, 0
        %v3207 = vsel %vm1070, %v2981, 0
        %v3210 = vsel %vm1070, %v2983, 0
        %v3213 = vsel %vm1070, %v2985, 0
        %v3216 = vsel %vm1070, %v2987, 0
        %v3219 = vsel %vm1070, %v2989, 0
        %v3222 = vsel %vm1070, %v2991, 0
        %v3225 = vsel %vm1070, %v2993, 0
        %v3228 = vsel %vm1070, %v2995, 0
        %v3231 = vsel %vm1070, %v2997, 0
        %v3234 = vsel %vm1070, %v2999, 0
        %v3237 = vsel %vm1070, %v3001, 0
        %v3240 = vsel %vm1070, %v3003, 0
        %v3243 = vsel %vm1070, %v3005, 0
        %v3246 = vsel %vm1070, %v3007, 0
        %v3249 = vand.u32 %v2764, %v1314
        %3251 = vmatprep.subr.bf16.mxu0 0
        %3252 = vmatpush1.bf16.msra.mxu0 0
        %3253 = vmatprep.subr.bf16.mxu0 0
        %3254 = vmatpush1.bf16.msra.mxu0 0
        %3255 = vmatprep.subr.bf16.mxu0 0
        %3256 = vmatpush1.bf16.msra.mxu0 0
        %3257 = vmatprep.subr.bf16.mxu0 0
        %3258 = vmatpush1.bf16.msra.mxu0 0
        %3259 = vmatprep.subr.bf16.mxu0 0
        %3260 = vmatpush1.bf16.msra.mxu0 0
        %3261 = vmatprep.subr.bf16.mxu0 0
        %3262 = vmatpush1.bf16.msra.mxu0 0
        %3263 = vmatprep.subr.bf16.mxu0 0
        %3264 = vmatpush1.bf16.msra.mxu0 0
        %3265 = vmatprep.subr.bf16.mxu0 0
        %3266 = vmatpush1.bf16.msra.mxu0 %v3249
        %3267 = vmatprep.subr.bf16.mxu0 0
        %3268 = vmatpush2.bf16.msra.mxu0 0
        %3269 = vmatprep.subr.bf16.mxu0 0
        %3270 = vmatpush2.bf16.msra.mxu0 0
        %3271 = vmatprep.subr.bf16.mxu0 0
        %3272 = vmatpush2.bf16.msra.mxu0 0
        %3273 = vmatprep.subr.bf16.mxu0 0
        %3274 = vmatpush2.bf16.msra.mxu0 0
        %3275 = vmatprep.subr.bf16.mxu0 0
        %3276 = vmatpush2.bf16.msra.mxu0 0
        %3277 = vmatprep.subr.bf16.mxu0 0
        %3278 = vmatpush2.bf16.msra.mxu0 0
        %3279 = vmatprep.subr.bf16.mxu0 0
        %3280 = vmatpush2.bf16.msra.mxu0 0
        %3281 = vmatprep.subr.bf16.mxu0 0
        %3282 = vmatpush2.bf16.msra.mxu0 0
        %3283 = vmatprep.mubr.bf16.mxu0 0
        %3284 = vmatmul.mubr.bf16.gmra.mxu0 %v3009
        %v3285 = vpop.f32.mrf.mxu0
        %v3286 = vadd.f32 0.0, %v3285
        %v3287 = vpop.f32.mrf.mxu0
        %v3288 = vpop.f32.mrf.mxu0
        %v3289 = vadd.f32 0.0, %v3288
        %v3290 = vpop.f32.mrf.mxu0
        %3291 = vmatprep.mubr.bf16.mxu0 0
        %3292 = vmatmul.mubr.bf16.gmra.mxu0 %v3012
        %v3293 = vpop.f32.mrf.mxu0
        %v3294 = vadd.f32 0.0, %v3293
        %v3295 = vpop.f32.mrf.mxu0
        %v3296 = vpop.f32.mrf.mxu0
        %v3297 = vadd.f32 0.0, %v3296
        %v3298 = vpop.f32.mrf.mxu0
        %3299 = vmatprep.mubr.bf16.mxu0 0
        %3300 = vmatmul.mubr.bf16.gmra.mxu0 %v3015
        %v3301 = vpop.f32.mrf.mxu0
        %v3302 = vpop.f32.mrf.mxu0
        %v3303 = vpop.f32.mrf.mxu0
        %v3304 = vadd.f32 0.0, %v3303
        %v3305 = vpop.f32.mrf.mxu0
        %3306 = vmatprep.mubr.bf16.mxu0 0
        %3307 = vmatmul.mubr.bf16.gmra.mxu0 %v3018
        %v3308 = vpop.f32.mrf.mxu0
        %v3309 = vadd.f32 0.0, %v3308
        %v3310 = vpop.f32.mrf.mxu0
        %v3311 = vpop.f32.mrf.mxu0
        %v3312 = vadd.f32 0.0, %v3311
        %v3313 = vpop.f32.mrf.mxu0
        %3314 = vmatprep.mubr.bf16.mxu0 0
        %3315 = vmatmul.mubr.bf16.gmra.mxu0 %v3021
        %v3316 = vpop.f32.mrf.mxu0
        %v3317 = vadd.f32 0.0, %v3316
        %v3318 = vpop.f32.mrf.mxu0
        %v3319 = vpop.f32.mrf.mxu0
        %v3320 = vpop.f32.mrf.mxu0
        %3321 = vmatprep.mubr.bf16.mxu0 0
        %3322 = vmatmul.mubr.bf16.gmra.mxu0 %v3024
        %v3323 = vpop.f32.mrf.mxu0
        %v3324 = vadd.f32 0.0, %v3323
        %v3325 = vpop.f32.mrf.mxu0
        %v3326 = vpop.f32.mrf.mxu0
        %v3327 = vadd.f32 0.0, %v3326
        %v3328 = vpop.f32.mrf.mxu0
        %3329 = vmatprep.mubr.bf16.mxu0 0
        %3330 = vmatmul.mubr.bf16.gmra.mxu0 %v3027
        %v3331 = vpop.f32.mrf.mxu0
        %v3332 = vadd.f32 0.0, %v3331
        %v3333 = vpop.f32.mrf.mxu0
        %v3334 = vpop.f32.mrf.mxu0
        %v3335 = vadd.f32 0.0, %v3334
        %v3336 = vpop.f32.mrf.mxu0
        %3337 = vmatprep.mubr.bf16.mxu0 0
        %3338 = vmatmul.mubr.bf16.gmra.mxu0 %v3030
        %v3339 = vpop.f32.mrf.mxu0
        %v3340 = vpop.f32.mrf.mxu0
        %v3341 = vpop.f32.mrf.mxu0
        %v3342 = vadd.f32 0.0, %v3341
        %v3343 = vpop.f32.mrf.mxu0
        %3344 = vmatprep.mubr.bf16.mxu0 0
        %3345 = vmatmul.mubr.bf16.gmra.mxu0 %v3033
        %v3346 = vpop.f32.mrf.mxu0
        %v3347 = vadd.f32 0.0, %v3346
        %v3348 = vpop.f32.mrf.mxu0
        %v3349 = vpop.f32.mrf.mxu0
        %v3350 = vadd.f32 0.0, %v3349
        %v3351 = vpop.f32.mrf.mxu0
        %3352 = vmatprep.mubr.bf16.mxu0 0
        %3353 = vmatmul.mubr.bf16.gmra.mxu0 %v3036
        %v3354 = vpop.f32.mrf.mxu0
        %v3355 = vadd.f32 0.0, %v3354
        %v3356 = vpop.f32.mrf.mxu0
        %v3357 = vpop.f32.mrf.mxu0
        %v3358 = vpop.f32.mrf.mxu0
        %3359 = vmatprep.mubr.bf16.mxu0 0
        %3360 = vmatmul.mubr.bf16.gmra.mxu0 %v3039
        %v3361 = vpop.f32.mrf.mxu0
        %v3362 = vadd.f32 0.0, %v3361
        %v3363 = vpop.f32.mrf.mxu0
        %v3364 = vpop.f32.mrf.mxu0
        %v3365 = vadd.f32 0.0, %v3364
        %v3366 = vpop.f32.mrf.mxu0
        %3367 = vmatprep.mubr.bf16.mxu0 0
        %3368 = vmatmul.mubr.bf16.gmra.mxu0 %v3042
        %v3369 = vpop.f32.mrf.mxu0
        %v3370 = vadd.f32 0.0, %v3369
        %v3371 = vpop.f32.mrf.mxu0
        %v3372 = vpop.f32.mrf.mxu0
        %v3373 = vadd.f32 0.0, %v3372
        %v3374 = vpop.f32.mrf.mxu0
        %3375 = vmatprep.mubr.bf16.mxu0 0
        %3376 = vmatmul.mubr.bf16.gmra.mxu0 %v3045
        %v3377 = vpop.f32.mrf.mxu0
        %v3378 = vpop.f32.mrf.mxu0
        %v3379 = vpop.f32.mrf.mxu0
        %v3380 = vadd.f32 0.0, %v3379
        %v3381 = vpop.f32.mrf.mxu0
        %3382 = vmatprep.mubr.bf16.mxu0 0
        %3383 = vmatmul.mubr.bf16.gmra.mxu0 %v3048
        %v3384 = vpop.f32.mrf.mxu0
        %v3385 = vadd.f32 0.0, %v3384
        %v3386 = vpop.f32.mrf.mxu0
        %v3387 = vpop.f32.mrf.mxu0
        %v3388 = vadd.f32 0.0, %v3387
        %v3389 = vpop.f32.mrf.mxu0
        %3390 = vmatprep.mubr.bf16.mxu0 0
        %3391 = vmatmul.mubr.bf16.gmra.mxu0 %v3051
        %v3392 = vpop.f32.mrf.mxu0
        %v3393 = vadd.f32 0.0, %v3392
        %v3394 = vpop.f32.mrf.mxu0
        %v3395 = vpop.f32.mrf.mxu0
        %v3396 = vpop.f32.mrf.mxu0
        %3397 = vmatprep.mubr.bf16.mxu0 0
        %3398 = vmatmul.mubr.bf16.gmra.mxu0 %v3054
        %v3399 = vpop.f32.mrf.mxu0
        %v3400 = vadd.f32 0.0, %v3399
        %v3401 = vpop.f32.mrf.mxu0
        %v3402 = vpop.f32.mrf.mxu0
        %v3403 = vadd.f32 0.0, %v3402
        %v3404 = vpop.f32.mrf.mxu0
        %3405 = vmatprep.mubr.bf16.mxu0 0
        %3406 = vmatmul.mubr.bf16.gmra.mxu0 %v3057
        %v3407 = vpop.f32.mrf.mxu0
        %v3408 = vadd.f32 0.0, %v3407
        %v3409 = vpop.f32.mrf.mxu0
        %v3410 = vpop.f32.mrf.mxu0
        %v3411 = vadd.f32 0.0, %v3410
        %v3412 = vpop.f32.mrf.mxu0
        %3413 = vmatprep.mubr.bf16.mxu0 0
        %3414 = vmatmul.mubr.bf16.gmra.mxu0 %v3060
        %v3415 = vpop.f32.mrf.mxu0
        %v3416 = vpop.f32.mrf.mxu0
        %v3417 = vpop.f32.mrf.mxu0
        %v3418 = vadd.f32 0.0, %v3417
        %v3419 = vpop.f32.mrf.mxu0
        %3420 = vmatprep.mubr.bf16.mxu0 0
        %3421 = vmatmul.mubr.bf16.gmra.mxu0 %v3063
        %v3422 = vpop.f32.mrf.mxu0
        %v3423 = vadd.f32 0.0, %v3422
        %v3424 = vpop.f32.mrf.mxu0
        %v3425 = vpop.f32.mrf.mxu0
        %v3426 = vadd.f32 0.0, %v3425
        %v3427 = vpop.f32.mrf.mxu0
        %3428 = vmatprep.mubr.bf16.mxu0 0
        %3429 = vmatmul.mubr.bf16.gmra.mxu0 %v3066
        %v3430 = vpop.f32.mrf.mxu0
        %v3431 = vadd.f32 0.0, %v3430
        %v3432 = vpop.f32.mrf.mxu0
        %v3433 = vpop.f32.mrf.mxu0
        %v3434 = vpop.f32.mrf.mxu0
        %3435 = vmatprep.mubr.bf16.mxu0 0
        %3436 = vmatmul.mubr.bf16.gmra.mxu0 %v3069
        %v3437 = vpop.f32.mrf.mxu0
        %v3438 = vadd.f32 0.0, %v3437
        %v3439 = vpop.f32.mrf.mxu0
        %v3440 = vpop.f32.mrf.mxu0
        %v3441 = vadd.f32 0.0, %v3440
        %v3442 = vpop.f32.mrf.mxu0
        %3443 = vmatprep.mubr.bf16.mxu0 0
        %3444 = vmatmul.mubr.bf16.gmra.mxu0 %v3072
        %v3445 = vpop.f32.mrf.mxu0
        %v3446 = vadd.f32 0.0, %v3445
        %v3447 = vpop.f32.mrf.mxu0
        %v3448 = vpop.f32.mrf.mxu0
        %v3449 = vadd.f32 0.0, %v3448
        %v3450 = vpop.f32.mrf.mxu0
        %3451 = vmatprep.mubr.bf16.mxu0 0
        %3452 = vmatmul.mubr.bf16.gmra.mxu0 %v3075
        %v3453 = vpop.f32.mrf.mxu0
        %v3454 = vpop.f32.mrf.mxu0
        %v3455 = vpop.f32.mrf.mxu0
        %v3456 = vadd.f32 0.0, %v3455
        %v3457 = vpop.f32.mrf.mxu0
        %3458 = vmatprep.mubr.bf16.mxu0 0
        %3459 = vmatmul.mubr.bf16.gmra.mxu0 %v3078
        %v3460 = vpop.f32.mrf.mxu0
        %v3461 = vadd.f32 0.0, %v3460
        %v3462 = vpop.f32.mrf.mxu0
        %v3463 = vpop.f32.mrf.mxu0
        %v3464 = vadd.f32 0.0, %v3463
        %v3465 = vpop.f32.mrf.mxu0
        %3466 = vmatprep.mubr.bf16.mxu0 0
        %3467 = vmatmul.mubr.bf16.gmra.mxu0 %v3081
        %v3468 = vpop.f32.mrf.mxu0
        %v3469 = vadd.f32 0.0, %v3468
        %v3470 = vpop.f32.mrf.mxu0
        %v3471 = vpop.f32.mrf.mxu0
        %v3472 = vpop.f32.mrf.mxu0
        %3473 = vmatprep.mubr.bf16.mxu0 0
        %3474 = vmatmul.mubr.bf16.gmra.mxu0 %v3084
        %v3475 = vpop.f32.mrf.mxu0
        %v3476 = vadd.f32 0.0, %v3475
        %v3477 = vpop.f32.mrf.mxu0
        %v3478 = vpop.f32.mrf.mxu0
        %v3479 = vadd.f32 0.0, %v3478
        %v3480 = vpop.f32.mrf.mxu0
        %3481 = vmatprep.mubr.bf16.mxu0 0
        %3482 = vmatmul.mubr.bf16.gmra.mxu0 %v3087
        %v3483 = vpop.f32.mrf.mxu0
        %v3484 = vadd.f32 0.0, %v3483
        %v3485 = vpop.f32.mrf.mxu0
        %v3486 = vpop.f32.mrf.mxu0
        %v3487 = vadd.f32 0.0, %v3486
        %v3488 = vpop.f32.mrf.mxu0
        %3489 = vmatprep.mubr.bf16.mxu0 0
        %3490 = vmatmul.mubr.bf16.gmra.mxu0 %v3090
        %v3491 = vpop.f32.mrf.mxu0
        %v3492 = vpop.f32.mrf.mxu0
        %v3493 = vpop.f32.mrf.mxu0
        %v3494 = vadd.f32 0.0, %v3493
        %v3495 = vpop.f32.mrf.mxu0
        %3496 = vmatprep.mubr.bf16.mxu0 0
        %3497 = vmatmul.mubr.bf16.gmra.mxu0 %v3093
        %v3498 = vpop.f32.mrf.mxu0
        %v3499 = vadd.f32 0.0, %v3498
        %v3500 = vpop.f32.mrf.mxu0
        %v3501 = vpop.f32.mrf.mxu0
        %v3502 = vadd.f32 0.0, %v3501
        %v3503 = vpop.f32.mrf.mxu0
        %3504 = vmatprep.mubr.bf16.mxu0 0
        %3505 = vmatmul.mubr.bf16.gmra.mxu0 %v3096
        %v3506 = vpop.f32.mrf.mxu0
        %v3507 = vadd.f32 0.0, %v3506
        %v3508 = vpop.f32.mrf.mxu0
        %v3509 = vpop.f32.mrf.mxu0
        %v3510 = vpop.f32.mrf.mxu0
        %3511 = vmatprep.mubr.bf16.mxu0 0
        %3512 = vmatmul.mubr.bf16.gmra.mxu0 %v3099
        %v3513 = vpop.f32.mrf.mxu0
        %v3514 = vadd.f32 0.0, %v3513
        %v3515 = vpop.f32.mrf.mxu0
        %v3516 = vpop.f32.mrf.mxu0
        %v3517 = vadd.f32 0.0, %v3516
        %v3518 = vpop.f32.mrf.mxu0
        %3519 = vmatprep.mubr.bf16.mxu0 0
        %3520 = vmatmul.mubr.bf16.gmra.mxu0 %v3102
        %v3521 = vpop.f32.mrf.mxu0
        %v3522 = vadd.f32 0.0, %v3521
        %v3523 = vpop.f32.mrf.mxu0
        %v3524 = vpop.f32.mrf.mxu0
        %v3525 = vadd.f32 0.0, %v3524
        %v3526 = vpop.f32.mrf.mxu0
        %3527 = vmatprep.mubr.bf16.mxu0 0
        %3528 = vmatmul.mubr.bf16.gmra.mxu0 %v3105
        %v3529 = vpop.f32.mrf.mxu0
        %v3530 = vpop.f32.mrf.mxu0
        %v3531 = vpop.f32.mrf.mxu0
        %v3532 = vadd.f32 0.0, %v3531
        %v3533 = vpop.f32.mrf.mxu0
        %3534 = vmatprep.mubr.bf16.mxu0 0
        %3535 = vmatmul.mubr.bf16.gmra.mxu0 %v3108
        %v3536 = vpop.f32.mrf.mxu0
        %v3537 = vadd.f32 0.0, %v3536
        %v3538 = vpop.f32.mrf.mxu0
        %v3539 = vpop.f32.mrf.mxu0
        %v3540 = vadd.f32 0.0, %v3539
        %v3541 = vpop.f32.mrf.mxu0
        %3542 = vmatprep.mubr.bf16.mxu0 0
        %3543 = vmatmul.mubr.bf16.gmra.mxu0 %v3111
        %v3544 = vpop.f32.mrf.mxu0
        %v3545 = vadd.f32 0.0, %v3544
        %v3546 = vpop.f32.mrf.mxu0
        %v3547 = vpop.f32.mrf.mxu0
        %v3548 = vpop.f32.mrf.mxu0
        %3549 = vmatprep.mubr.bf16.mxu0 0
        %3550 = vmatmul.mubr.bf16.gmra.mxu0 %v3114
        %v3551 = vpop.f32.mrf.mxu0
        %v3552 = vadd.f32 0.0, %v3551
        %v3553 = vpop.f32.mrf.mxu0
        %v3554 = vpop.f32.mrf.mxu0
        %v3555 = vadd.f32 0.0, %v3554
        %v3556 = vpop.f32.mrf.mxu0
        %3557 = vmatprep.mubr.bf16.mxu0 0
        %3558 = vmatmul.mubr.bf16.gmra.mxu0 %v3117
        %v3559 = vpop.f32.mrf.mxu0
        %v3560 = vadd.f32 0.0, %v3559
        %v3561 = vpop.f32.mrf.mxu0
        %v3562 = vpop.f32.mrf.mxu0
        %v3563 = vadd.f32 0.0, %v3562
        %v3564 = vpop.f32.mrf.mxu0
        %3565 = vmatprep.mubr.bf16.mxu0 0
        %3566 = vmatmul.mubr.bf16.gmra.mxu0 %v3120
        %v3567 = vpop.f32.mrf.mxu0
        %v3568 = vpop.f32.mrf.mxu0
        %v3569 = vpop.f32.mrf.mxu0
        %v3570 = vadd.f32 0.0, %v3569
        %v3571 = vpop.f32.mrf.mxu0
        %3572 = vmatprep.mubr.bf16.mxu0 0
        %3573 = vmatmul.mubr.bf16.gmra.mxu0 %v3123
        %v3574 = vpop.f32.mrf.mxu0
        %v3575 = vadd.f32 0.0, %v3574
        %v3576 = vpop.f32.mrf.mxu0
        %v3577 = vpop.f32.mrf.mxu0
        %v3578 = vadd.f32 0.0, %v3577
        %v3579 = vpop.f32.mrf.mxu0
        %3580 = vmatprep.mubr.bf16.mxu0 0
        %3581 = vmatmul.mubr.bf16.gmra.mxu0 %v3126
        %v3582 = vpop.f32.mrf.mxu0
        %v3583 = vadd.f32 0.0, %v3582
        %v3584 = vpop.f32.mrf.mxu0
        %v3585 = vpop.f32.mrf.mxu0
        %v3586 = vpop.f32.mrf.mxu0
        %3587 = vmatprep.mubr.bf16.mxu0 0
        %3588 = vmatmul.mubr.bf16.gmra.mxu0 %v3129
        %v3589 = vpop.f32.mrf.mxu0
        %v3590 = vadd.f32 0.0, %v3589
        %v3591 = vpop.f32.mrf.mxu0
        %v3592 = vpop.f32.mrf.mxu0
        %v3593 = vadd.f32 0.0, %v3592
        %v3594 = vpop.f32.mrf.mxu0
        %3595 = vmatprep.mubr.bf16.mxu0 0
        %3596 = vmatmul.mubr.bf16.gmra.mxu0 %v3132
        %v3597 = vpop.f32.mrf.mxu0
        %v3598 = vadd.f32 0.0, %v3597
        %v3599 = vpop.f32.mrf.mxu0
        %v3600 = vpop.f32.mrf.mxu0
        %v3601 = vadd.f32 0.0, %v3600
        %v3602 = vpop.f32.mrf.mxu0
        %3603 = vmatprep.mubr.bf16.mxu0 0
        %3604 = vmatmul.mubr.bf16.gmra.mxu0 %v3135
        %v3605 = vpop.f32.mrf.mxu0
        %v3606 = vpop.f32.mrf.mxu0
        %v3607 = vpop.f32.mrf.mxu0
        %v3608 = vadd.f32 0.0, %v3607
        %v3609 = vpop.f32.mrf.mxu0
        %3610 = vmatprep.mubr.bf16.mxu0 0
        %3611 = vmatmul.mubr.bf16.gmra.mxu0 %v3138
        %v3612 = vpop.f32.mrf.mxu0
        %v3613 = vadd.f32 0.0, %v3612
        %v3614 = vpop.f32.mrf.mxu0
        %v3615 = vpop.f32.mrf.mxu0
        %v3616 = vadd.f32 0.0, %v3615
        %v3617 = vpop.f32.mrf.mxu0
        %3618 = vmatprep.mubr.bf16.mxu0 0
        %3619 = vmatmul.mubr.bf16.gmra.mxu0 %v3141
        %v3620 = vpop.f32.mrf.mxu0
        %v3621 = vadd.f32 0.0, %v3620
        %v3622 = vpop.f32.mrf.mxu0
        %v3623 = vpop.f32.mrf.mxu0
        %v3624 = vpop.f32.mrf.mxu0
        %3625 = vmatprep.mubr.bf16.mxu0 0
        %3626 = vmatmul.mubr.bf16.gmra.mxu0 %v3144
        %v3627 = vpop.f32.mrf.mxu0
        %v3628 = vadd.f32 0.0, %v3627
        %v3629 = vpop.f32.mrf.mxu0
        %v3630 = vpop.f32.mrf.mxu0
        %v3631 = vadd.f32 0.0, %v3630
        %v3632 = vpop.f32.mrf.mxu0
        %3633 = vmatprep.mubr.bf16.mxu0 0
        %3634 = vmatmul.mubr.bf16.gmra.mxu0 %v3147
        %v3635 = vpop.f32.mrf.mxu0
        %v3636 = vadd.f32 0.0, %v3635
        %v3637 = vpop.f32.mrf.mxu0
        %v3638 = vpop.f32.mrf.mxu0
        %v3639 = vadd.f32 0.0, %v3638
        %v3640 = vpop.f32.mrf.mxu0
        %3641 = vmatprep.mubr.bf16.mxu0 0
        %3642 = vmatmul.mubr.bf16.gmra.mxu0 %v3150
        %v3643 = vpop.f32.mrf.mxu0
        %v3644 = vpop.f32.mrf.mxu0
        %v3645 = vpop.f32.mrf.mxu0
        %v3646 = vadd.f32 0.0, %v3645
        %v3647 = vpop.f32.mrf.mxu0
        %3648 = vmatprep.mubr.bf16.mxu0 0
        %3649 = vmatmul.mubr.bf16.gmra.mxu0 %v3153
        %v3650 = vpop.f32.mrf.mxu0
        %v3651 = vadd.f32 0.0, %v3650
        %v3652 = vpop.f32.mrf.mxu0
        %v3653 = vpop.f32.mrf.mxu0
        %v3654 = vadd.f32 0.0, %v3653
        %v3655 = vpop.f32.mrf.mxu0
        %3656 = vmatprep.mubr.bf16.mxu0 0
        %3657 = vmatmul.mubr.bf16.gmra.mxu0 %v3156
        %v3658 = vpop.f32.mrf.mxu0
        %v3659 = vadd.f32 0.0, %v3658
        %v3660 = vpop.f32.mrf.mxu0
        %v3661 = vpop.f32.mrf.mxu0
        %v3662 = vpop.f32.mrf.mxu0
        %3663 = vmatprep.mubr.bf16.mxu0 0
        %3664 = vmatmul.mubr.bf16.gmra.mxu0 %v3159
        %v3665 = vpop.f32.mrf.mxu0
        %v3666 = vadd.f32 0.0, %v3665
        %v3667 = vpop.f32.mrf.mxu0
        %v3668 = vpop.f32.mrf.mxu0
        %v3669 = vadd.f32 0.0, %v3668
        %v3670 = vpop.f32.mrf.mxu0
        %3671 = vmatprep.mubr.bf16.mxu0 0
        %3672 = vmatmul.mubr.bf16.gmra.mxu0 %v3162
        %v3673 = vpop.f32.mrf.mxu0
        %v3674 = vadd.f32 0.0, %v3673
        %v3675 = vpop.f32.mrf.mxu0
        %v3676 = vpop.f32.mrf.mxu0
        %v3677 = vadd.f32 0.0, %v3676
        %v3678 = vpop.f32.mrf.mxu0
        %3679 = vmatprep.mubr.bf16.mxu0 0
        %3680 = vmatmul.mubr.bf16.gmra.mxu0 %v3165
        %v3681 = vpop.f32.mrf.mxu0
        %v3682 = vpop.f32.mrf.mxu0
        %v3683 = vpop.f32.mrf.mxu0
        %v3684 = vadd.f32 0.0, %v3683
        %v3685 = vpop.f32.mrf.mxu0
        %3686 = vmatprep.mubr.bf16.mxu0 0
        %3687 = vmatmul.mubr.bf16.gmra.mxu0 %v3168
        %v3688 = vpop.f32.mrf.mxu0
        %v3689 = vadd.f32 0.0, %v3688
        %v3690 = vpop.f32.mrf.mxu0
        %v3691 = vpop.f32.mrf.mxu0
        %v3692 = vadd.f32 0.0, %v3691
        %v3693 = vpop.f32.mrf.mxu0
        %3694 = vmatprep.mubr.bf16.mxu0 0
        %3695 = vmatmul.mubr.bf16.gmra.mxu0 %v3171
        %v3696 = vpop.f32.mrf.mxu0
        %v3697 = vadd.f32 0.0, %v3696
        %v3698 = vpop.f32.mrf.mxu0
        %v3699 = vpop.f32.mrf.mxu0
        %v3700 = vpop.f32.mrf.mxu0
        %3701 = vmatprep.mubr.bf16.mxu0 0
        %3702 = vmatmul.mubr.bf16.gmra.mxu0 %v3174
        %v3703 = vpop.f32.mrf.mxu0
        %v3704 = vadd.f32 0.0, %v3703
        %v3705 = vpop.f32.mrf.mxu0
        %v3706 = vpop.f32.mrf.mxu0
        %v3707 = vadd.f32 0.0, %v3706
        %v3708 = vpop.f32.mrf.mxu0
        %3709 = vmatprep.mubr.bf16.mxu0 0
        %3710 = vmatmul.mubr.bf16.gmra.mxu0 %v3177
        %v3711 = vpop.f32.mrf.mxu0
        %v3712 = vadd.f32 0.0, %v3711
        %v3713 = vpop.f32.mrf.mxu0
        %v3714 = vpop.f32.mrf.mxu0
        %v3715 = vadd.f32 0.0, %v3714
        %v3716 = vpop.f32.mrf.mxu0
        %3717 = vmatprep.mubr.bf16.mxu0 0
        %3718 = vmatmul.mubr.bf16.gmra.mxu0 %v3180
        %v3719 = vpop.f32.mrf.mxu0
        %v3720 = vpop.f32.mrf.mxu0
        %v3721 = vpop.f32.mrf.mxu0
        %v3722 = vadd.f32 0.0, %v3721
        %v3723 = vpop.f32.mrf.mxu0
        %3724 = vmatprep.mubr.bf16.mxu0 0
        %3725 = vmatmul.mubr.bf16.gmra.mxu0 %v3183
        %v3726 = vpop.f32.mrf.mxu0
        %v3727 = vadd.f32 0.0, %v3726
        %v3728 = vpop.f32.mrf.mxu0
        %v3729 = vpop.f32.mrf.mxu0
        %v3730 = vadd.f32 0.0, %v3729
        %v3731 = vpop.f32.mrf.mxu0
        %3732 = vmatprep.mubr.bf16.mxu0 0
        %3733 = vmatmul.mubr.bf16.gmra.mxu0 %v3186
        %v3734 = vpop.f32.mrf.mxu0
        %v3735 = vadd.f32 0.0, %v3734
        %v3736 = vpop.f32.mrf.mxu0
        %v3737 = vpop.f32.mrf.mxu0
        %v3738 = vpop.f32.mrf.mxu0
        %3739 = vmatprep.mubr.bf16.mxu0 0
        %3740 = vmatmul.mubr.bf16.gmra.mxu0 %v3189
        %v3741 = vpop.f32.mrf.mxu0
        %v3742 = vadd.f32 0.0, %v3741
        %v3743 = vpop.f32.mrf.mxu0
        %v3744 = vpop.f32.mrf.mxu0
        %v3745 = vadd.f32 0.0, %v3744
        %v3746 = vpop.f32.mrf.mxu0
        %3747 = vmatprep.mubr.bf16.mxu0 0
        %3748 = vmatmul.mubr.bf16.gmra.mxu0 %v3192
        %v3749 = vpop.f32.mrf.mxu0
        %v3750 = vadd.f32 0.0, %v3749
        %v3751 = vpop.f32.mrf.mxu0
        %v3752 = vpop.f32.mrf.mxu0
        %v3753 = vadd.f32 0.0, %v3752
        %v3754 = vpop.f32.mrf.mxu0
        %3755 = vmatprep.mubr.bf16.mxu0 0
        %3756 = vmatmul.mubr.bf16.gmra.mxu0 %v3195
        %v3757 = vpop.f32.mrf.mxu0
        %v3758 = vpop.f32.mrf.mxu0
        %v3759 = vpop.f32.mrf.mxu0
        %v3760 = vadd.f32 0.0, %v3759
        %v3761 = vpop.f32.mrf.mxu0
        %3762 = vmatprep.mubr.bf16.mxu0 0
        %3763 = vmatmul.mubr.bf16.gmra.mxu0 %v3198
        %v3764 = vpop.f32.mrf.mxu0
        %v3765 = vadd.f32 0.0, %v3764
        %v3766 = vpop.f32.mrf.mxu0
        %v3767 = vpop.f32.mrf.mxu0
        %v3768 = vadd.f32 0.0, %v3767
        %v3769 = vpop.f32.mrf.mxu0
        %3770 = vmatprep.mubr.bf16.mxu0 0
        %3771 = vmatmul.mubr.bf16.gmra.mxu0 %v3201
        %v3772 = vpop.f32.mrf.mxu0
        %v3773 = vadd.f32 0.0, %v3772
        %v3774 = vpop.f32.mrf.mxu0
        %v3775 = vpop.f32.mrf.mxu0
        %v3776 = vpop.f32.mrf.mxu0
        %3777 = vmatprep.mubr.bf16.mxu0 0
        %3778 = vmatmul.mubr.bf16.gmra.mxu0 %v3204
        %v3779 = vpop.f32.mrf.mxu0
        %v3780 = vadd.f32 0.0, %v3779
        %v3781 = vpop.f32.mrf.mxu0
        %v3782 = vpop.f32.mrf.mxu0
        %v3783 = vadd.f32 0.0, %v3782
        %v3784 = vpop.f32.mrf.mxu0
        %3785 = vmatprep.mubr.bf16.mxu0 0
        %3786 = vmatmul.mubr.bf16.gmra.mxu0 %v3207
        %v3787 = vpop.f32.mrf.mxu0
        %v3788 = vadd.f32 0.0, %v3787
        %v3789 = vpop.f32.mrf.mxu0
        %v3790 = vpop.f32.mrf.mxu0
        %v3791 = vadd.f32 0.0, %v3790
        %v3792 = vpop.f32.mrf.mxu0
        %3793 = vmatprep.mubr.bf16.mxu0 0
        %3794 = vmatmul.mubr.bf16.gmra.mxu0 %v3210
        %v3795 = vpop.f32.mrf.mxu0
        %v3796 = vpop.f32.mrf.mxu0
        %v3797 = vpop.f32.mrf.mxu0
        %v3798 = vadd.f32 0.0, %v3797
        %v3799 = vpop.f32.mrf.mxu0
        %3800 = vmatprep.mubr.bf16.mxu0 0
        %3801 = vmatmul.mubr.bf16.gmra.mxu0 %v3213
        %v3802 = vpop.f32.mrf.mxu0
        %v3803 = vadd.f32 0.0, %v3802
        %v3804 = vpop.f32.mrf.mxu0
        %v3805 = vpop.f32.mrf.mxu0
        %v3806 = vadd.f32 0.0, %v3805
        %v3807 = vpop.f32.mrf.mxu0
        %3808 = vmatprep.mubr.bf16.mxu0 0
        %3809 = vmatmul.mubr.bf16.gmra.mxu0 %v3216
        %v3810 = vpop.f32.mrf.mxu0
        %v3811 = vadd.f32 0.0, %v3810
        %v3812 = vpop.f32.mrf.mxu0
        %v3813 = vpop.f32.mrf.mxu0
        %v3814 = vpop.f32.mrf.mxu0
        %3815 = vmatprep.mubr.bf16.mxu0 0
        %3816 = vmatmul.mubr.bf16.gmra.mxu0 %v3219
        %v3817 = vpop.f32.mrf.mxu0
        %v3818 = vadd.f32 0.0, %v3817
        %v3819 = vpop.f32.mrf.mxu0
        %v3820 = vpop.f32.mrf.mxu0
        %v3821 = vadd.f32 0.0, %v3820
        %v3822 = vpop.f32.mrf.mxu0
        %3823 = vmatprep.mubr.bf16.mxu0 0
        %3824 = vmatmul.mubr.bf16.gmra.mxu0 %v3222
        %v3825 = vpop.f32.mrf.mxu0
        %v3826 = vadd.f32 0.0, %v3825
        %v3827 = vpop.f32.mrf.mxu0
        %v3828 = vpop.f32.mrf.mxu0
        %v3829 = vadd.f32 0.0, %v3828
        %v3830 = vpop.f32.mrf.mxu0
        %3831 = vmatprep.mubr.bf16.mxu0 0
        %3832 = vmatmul.mubr.bf16.gmra.mxu0 %v3225
        %v3833 = vpop.f32.mrf.mxu0
        %v3834 = vpop.f32.mrf.mxu0
        %v3835 = vpop.f32.mrf.mxu0
        %v3836 = vadd.f32 0.0, %v3835
        %v3837 = vpop.f32.mrf.mxu0
        %3838 = vmatprep.mubr.bf16.mxu0 0
        %3839 = vmatmul.mubr.bf16.gmra.mxu0 %v3228
        %v3840 = vpop.f32.mrf.mxu0
        %v3841 = vadd.f32 0.0, %v3840
        %v3842 = vpop.f32.mrf.mxu0
        %v3843 = vpop.f32.mrf.mxu0
        %v3844 = vadd.f32 0.0, %v3843
        %v3845 = vpop.f32.mrf.mxu0
        %3846 = vmatprep.mubr.bf16.mxu0 0
        %3847 = vmatmul.mubr.bf16.gmra.mxu0 %v3231
        %v3848 = vpop.f32.mrf.mxu0
        %v3849 = vadd.f32 0.0, %v3848
        %v3850 = vpop.f32.mrf.mxu0
        %v3851 = vpop.f32.mrf.mxu0
        %v3852 = vpop.f32.mrf.mxu0
        %3853 = vmatprep.mubr.bf16.mxu0 0
        %3854 = vmatmul.mubr.bf16.gmra.mxu0 %v3234
        %v3855 = vpop.f32.mrf.mxu0
        %v3856 = vadd.f32 0.0, %v3855
        %v3857 = vpop.f32.mrf.mxu0
        %v3858 = vpop.f32.mrf.mxu0
        %v3859 = vadd.f32 0.0, %v3858
        %v3860 = vpop.f32.mrf.mxu0
        %3861 = vmatprep.mubr.bf16.mxu0 0
        %3862 = vmatmul.mubr.bf16.gmra.mxu0 %v3237
        %v3863 = vpop.f32.mrf.mxu0
        %v3864 = vadd.f32 0.0, %v3863
        %v3865 = vpop.f32.mrf.mxu0
        %v3866 = vpop.f32.mrf.mxu0
        %v3867 = vadd.f32 0.0, %v3866
        %v3868 = vpop.f32.mrf.mxu0
        %3869 = vmatprep.mubr.bf16.mxu0 0
        %3870 = vmatmul.mubr.bf16.gmra.mxu0 %v3240
        %v3871 = vpop.f32.mrf.mxu0
        %v3872 = vpop.f32.mrf.mxu0
        %v3873 = vpop.f32.mrf.mxu0
        %v3874 = vadd.f32 0.0, %v3873
        %v3875 = vpop.f32.mrf.mxu0
        %3876 = vmatprep.mubr.bf16.mxu0 0
        %3877 = vmatmul.mubr.bf16.gmra.mxu0 %v3243
        %v3878 = vpop.f32.mrf.mxu0
        %v3879 = vadd.f32 0.0, %v3878
        %v3880 = vpop.f32.mrf.mxu0
        %v3881 = vpop.f32.mrf.mxu0
        %v3882 = vadd.f32 0.0, %v3881
        %v3883 = vpop.f32.mrf.mxu0
        %3884 = vmatprep.mubr.bf16.mxu0 0
        %3885 = vmatmul.mubr.bf16.gmra.mxu0 %v3246
        %v3886 = vpop.f32.mrf.mxu0
        %v3887 = vadd.f32 0.0, %v3886
        %v3888 = vpop.f32.mrf.mxu0
        %v3889 = vpop.f32.mrf.mxu0
        %v3890 = vpop.f32.mrf.mxu0
        %3891 = vdwg.mxu0
        %v3892 = vadd.f32 %v2157, %v3286
        %v3893 = vadd.f32 %v2160, %v3289
        %v3894 = vadd.f32 %v2165, %v3294
        %v3895 = vadd.f32 %v2168, %v3297
        %v3896 = vadd.f32 %v2175, %v3304
        %v3897 = vadd.f32 %v2180, %v3309
        %v3898 = vadd.f32 %v2183, %v3312
        %v3899 = vadd.f32 %v2188, %v3317
        %v3900 = vadd.f32 %v2195, %v3324
        %v3901 = vadd.f32 %v2198, %v3327
        %v3902 = vadd.f32 %v2203, %v3332
        %v3903 = vadd.f32 %v2206, %v3335
        %v3904 = vadd.f32 %v2213, %v3342
        %v3905 = vadd.f32 %v2218, %v3347
        %v3906 = vadd.f32 %v2221, %v3350
        %v3907 = vadd.f32 %v2226, %v3355
        %v3908 = vadd.f32 %v2233, %v3362
        %v3909 = vadd.f32 %v2236, %v3365
        %v3910 = vadd.f32 %v2241, %v3370
        %v3911 = vadd.f32 %v2244, %v3373
        %v3912 = vadd.f32 %v2251, %v3380
        %v3913 = vadd.f32 %v2256, %v3385
        %v3914 = vadd.f32 %v2259, %v3388
        %v3915 = vadd.f32 %v2264, %v3393
        %v3916 = vadd.f32 %v2271, %v3400
        %v3917 = vadd.f32 %v2274, %v3403
        %v3918 = vadd.f32 %v2279, %v3408
        %v3919 = vadd.f32 %v2282, %v3411
        %v3920 = vadd.f32 %v2289, %v3418
        %v3921 = vadd.f32 %v2294, %v3423
        %v3922 = vadd.f32 %v2297, %v3426
        %v3923 = vadd.f32 %v2302, %v3431
        %v3924 = vadd.f32 %v2309, %v3438
        %v3925 = vadd.f32 %v2312, %v3441
        %v3926 = vadd.f32 %v2317, %v3446
        %v3927 = vadd.f32 %v2320, %v3449
        %v3928 = vadd.f32 %v2327, %v3456
        %v3929 = vadd.f32 %v2332, %v3461
        %v3930 = vadd.f32 %v2335, %v3464
        %v3931 = vadd.f32 %v2340, %v3469
        %v3932 = vadd.f32 %v2347, %v3476
        %v3933 = vadd.f32 %v2350, %v3479
        %v3934 = vadd.f32 %v2355, %v3484
        %v3935 = vadd.f32 %v2358, %v3487
        %v3936 = vadd.f32 %v2365, %v3494
        %v3937 = vadd.f32 %v2370, %v3499
        %v3938 = vadd.f32 %v2373, %v3502
        %v3939 = vadd.f32 %v2378, %v3507
        %v3940 = vadd.f32 %v2385, %v3514
        %v3941 = vadd.f32 %v2388, %v3517
        %v3942 = vadd.f32 %v2393, %v3522
        %v3943 = vadd.f32 %v2396, %v3525
        %v3944 = vadd.f32 %v2403, %v3532
        %v3945 = vadd.f32 %v2408, %v3537
        %v3946 = vadd.f32 %v2411, %v3540
        %v3947 = vadd.f32 %v2416, %v3545
        %v3948 = vadd.f32 %v2423, %v3552
        %v3949 = vadd.f32 %v2426, %v3555
        %v3950 = vadd.f32 %v2431, %v3560
        %v3951 = vadd.f32 %v2434, %v3563
        %v3952 = vadd.f32 %v2441, %v3570
        %v3953 = vadd.f32 %v2446, %v3575
        %v3954 = vadd.f32 %v2449, %v3578
        %v3955 = vadd.f32 %v2454, %v3583
        %v3956 = vadd.f32 %v2461, %v3590
        %v3957 = vadd.f32 %v2464, %v3593
        %v3958 = vadd.f32 %v2469, %v3598
        %v3959 = vadd.f32 %v2472, %v3601
        %v3960 = vadd.f32 %v2479, %v3608
        %v3961 = vadd.f32 %v2484, %v3613
        %v3962 = vadd.f32 %v2487, %v3616
        %v3963 = vadd.f32 %v2492, %v3621
        %v3964 = vadd.f32 %v2499, %v3628
        %v3965 = vadd.f32 %v2502, %v3631
        %v3966 = vadd.f32 %v2507, %v3636
        %v3967 = vadd.f32 %v2510, %v3639
        %v3968 = vadd.f32 %v2517, %v3646
        %v3969 = vadd.f32 %v2522, %v3651
        %v3970 = vadd.f32 %v2525, %v3654
        %v3971 = vadd.f32 %v2530, %v3659
        %v3972 = vadd.f32 %v2537, %v3666
        %v3973 = vadd.f32 %v2540, %v3669
        %v3974 = vadd.f32 %v2545, %v3674
        %v3975 = vadd.f32 %v2548, %v3677
        %v3976 = vadd.f32 %v2555, %v3684
        %v3977 = vadd.f32 %v2560, %v3689
        %v3978 = vadd.f32 %v2563, %v3692
        %v3979 = vadd.f32 %v2568, %v3697
        %v3980 = vadd.f32 %v2575, %v3704
        %v3981 = vadd.f32 %v2578, %v3707
        %v3982 = vadd.f32 %v2583, %v3712
        %v3983 = vadd.f32 %v2586, %v3715
        %v3984 = vadd.f32 %v2593, %v3722
        %v3985 = vadd.f32 %v2598, %v3727
        %v3986 = vadd.f32 %v2601, %v3730
        %v3987 = vadd.f32 %v2606, %v3735
        %v3988 = vadd.f32 %v2613, %v3742
        %v3989 = vadd.f32 %v2616, %v3745
        %v3990 = vadd.f32 %v2621, %v3750
        %v3991 = vadd.f32 %v2624, %v3753
        %v3992 = vadd.f32 %v2631, %v3760
        %v3993 = vadd.f32 %v2636, %v3765
        %v3994 = vadd.f32 %v2639, %v3768
        %v3995 = vadd.f32 %v2644, %v3773
        %v3996 = vadd.f32 %v2651, %v3780
        %v3997 = vadd.f32 %v2654, %v3783
        %v3998 = vadd.f32 %v2659, %v3788
        %v3999 = vadd.f32 %v2662, %v3791
        %v4000 = vadd.f32 %v2669, %v3798
        %v4001 = vadd.f32 %v2674, %v3803
        %v4002 = vadd.f32 %v2677, %v3806
        %v4003 = vadd.f32 %v2682, %v3811
        %v4004 = vadd.f32 %v2689, %v3818
        %v4005 = vadd.f32 %v2692, %v3821
        %v4006 = vadd.f32 %v2697, %v3826
        %v4007 = vadd.f32 %v2700, %v3829
        %v4008 = vadd.f32 %v2707, %v3836
        %v4009 = vadd.f32 %v2712, %v3841
        %v4010 = vadd.f32 %v2715, %v3844
        %v4011 = vadd.f32 %v2720, %v3849
        %v4012 = vadd.f32 %v2727, %v3856
        %v4013 = vadd.f32 %v2730, %v3859
        %v4014 = vadd.f32 %v2735, %v3864
        %v4015 = vadd.f32 %v2738, %v3867
        %v4016 = vadd.f32 %v2745, %v3874
        %v4017 = vadd.f32 %v2750, %v3879
        %v4018 = vadd.f32 %v2753, %v3882
        %v4019 = vadd.f32 %v2758, %v3887
        %v4020 = vpack.c.bf16 %v176, %v175
        %v4021 = vpack.c.bf16 %v178, %v177
        %v4022 = vpack.c.bf16 %v180, %v179
        %v4023 = vpack.c.bf16 %v182, %v181
        %v4024 = vpack.c.bf16 %v184, %v183
        %v4025 = vpack.c.bf16 %v186, %v185
        %v4026 = vpack.c.bf16 %v188, %v187
        %v4027 = vpack.c.bf16 %v190, %v189
        %v4028 = vpack.c.bf16 %v192, %v191
        %v4029 = vpack.c.bf16 %v194, %v193
        %v4030 = vpack.c.bf16 %v196, %v195
        %v4031 = vpack.c.bf16 %v198, %v197
        %v4032 = vpack.c.bf16 %v200, %v199
        %v4033 = vpack.c.bf16 %v202, %v201
        %v4034 = vpack.c.bf16 %v204, %v203
        %v4035 = vpack.c.bf16 %v206, %v205
        %v4036 = vpack.c.bf16 %v208, %v207
        %v4037 = vpack.c.bf16 %v210, %v209
        %v4038 = vpack.c.bf16 %v212, %v211
        %v4039 = vpack.c.bf16 %v214, %v213
        %v4040 = vpack.c.bf16 %v216, %v215
        %v4041 = vpack.c.bf16 %v218, %v217
        %v4042 = vpack.c.bf16 %v220, %v219
        %v4043 = vpack.c.bf16 %v222, %v221
        %v4044 = vpack.c.bf16 %v224, %v223
        %v4045 = vpack.c.bf16 %v226, %v225
        %v4046 = vpack.c.bf16 %v228, %v227
        %v4047 = vpack.c.bf16 %v230, %v229
        %v4048 = vpack.c.bf16 %v232, %v231
        %v4049 = vpack.c.bf16 %v234, %v233
        %v4050 = vpack.c.bf16 %v236, %v235
        %v4051 = vpack.c.bf16 %v238, %v237
        %v4052 = vpack.c.bf16 %v240, %v239
        %v4053 = vpack.c.bf16 %v242, %v241
        %v4054 = vpack.c.bf16 %v244, %v243
        %v4055 = vpack.c.bf16 %v246, %v245
        %v4056 = vpack.c.bf16 %v248, %v247
        %v4057 = vpack.c.bf16 %v250, %v249
        %v4058 = vpack.c.bf16 %v252, %v251
        %v4059 = vpack.c.bf16 %v254, %v253
        %v4060 = vpack.c.bf16 %v256, %v255
        %v4061 = vpack.c.bf16 %v258, %v257
        %v4062 = vpack.c.bf16 %v260, %v259
        %v4063 = vpack.c.bf16 %v262, %v261
        %v4064 = vpack.c.bf16 %v264, %v263
        %v4065 = vpack.c.bf16 %v266, %v265
        %v4066 = vpack.c.bf16 %v268, %v267
        %v4067 = vpack.c.bf16 %v270, %v269
        %v4068 = vpack.c.bf16 %v272, %v271
        %v4069 = vpack.c.bf16 %v274, %v273
        %v4070 = vpack.c.bf16 %v276, %v275
        %v4071 = vpack.c.bf16 %v278, %v277
        %v4072 = vpack.c.bf16 %v280, %v279
        %v4073 = vpack.c.bf16 %v282, %v281
        %v4074 = vpack.c.bf16 %v284, %v283
        %v4075 = vpack.c.bf16 %v286, %v285
        %v4076 = vpack.c.bf16 %v288, %v287
        %v4077 = vpack.c.bf16 %v290, %v289
        %v4078 = vpack.c.bf16 %v292, %v291
        %v4079 = vpack.c.bf16 %v294, %v293
        %v4080 = vpack.c.bf16 %v296, %v295
        %v4081 = vpack.c.bf16 %v298, %v297
        %v4082 = vpack.c.bf16 %v300, %v299
        %v4083 = vpack.c.bf16 %v302, %v301
        %v4084 = vpack.c.bf16 %v304, %v303
        %v4085 = vpack.c.bf16 %v306, %v305
        %v4086 = vpack.c.bf16 %v308, %v307
        %v4087 = vpack.c.bf16 %v310, %v309
        %v4088 = vpack.c.bf16 %v312, %v311
        %v4089 = vpack.c.bf16 %v314, %v313
        %v4090 = vpack.c.bf16 %v316, %v315
        %v4091 = vpack.c.bf16 %v318, %v317
        %v4092 = vpack.c.bf16 %v320, %v319
        %v4093 = vpack.c.bf16 %v322, %v321
        %v4094 = vpack.c.bf16 %v324, %v323
        %v4095 = vpack.c.bf16 %v326, %v325
        %v4096 = vpack.c.bf16 %v328, %v327
        %v4097 = vpack.c.bf16 %v330, %v329
        %v4098 = vpack.c.bf16 %v332, %v331
        %v4099 = vpack.c.bf16 %v334, %v333
        %s4100 = scalar_lea.vmem %s1, 6
        %v4101 = vld [vmem:[%s4100] sm:$0x3]
        %v4103 = vsel %vm1070, %v4020, 0
        %v4106 = vsel %vm1070, %v4021, 0
        %v4109 = vsel %vm1070, %v4022, 0
        %v4112 = vsel %vm1070, %v4023, 0
        %v4115 = vsel %vm1070, %v4024, 0
        %v4118 = vsel %vm1070, %v4025, 0
        %v4121 = vsel %vm1070, %v4026, 0
        %v4124 = vsel %vm1070, %v4027, 0
        %v4127 = vsel %vm1070, %v4028, 0
        %v4130 = vsel %vm1070, %v4029, 0
        %v4133 = vsel %vm1070, %v4030, 0
        %v4136 = vsel %vm1070, %v4031, 0
        %v4139 = vsel %vm1070, %v4032, 0
        %v4142 = vsel %vm1070, %v4033, 0
        %v4145 = vsel %vm1070, %v4034, 0
        %v4148 = vsel %vm1070, %v4035, 0
        %v4151 = vsel %vm1070, %v4036, 0
        %v4154 = vsel %vm1070, %v4037, 0
        %v4157 = vsel %vm1070, %v4038, 0
        %v4160 = vsel %vm1070, %v4039, 0
        %v4163 = vsel %vm1070, %v4040, 0
        %v4166 = vsel %vm1070, %v4041, 0
        %v4169 = vsel %vm1070, %v4042, 0
        %v4172 = vsel %vm1070, %v4043, 0
        %v4175 = vsel %vm1070, %v4044, 0
        %v4178 = vsel %vm1070, %v4045, 0
        %v4181 = vsel %vm1070, %v4046, 0
        %v4184 = vsel %vm1070, %v4047, 0
        %v4187 = vsel %vm1070, %v4048, 0
        %v4190 = vsel %vm1070, %v4049, 0
        %v4193 = vsel %vm1070, %v4050, 0
        %v4196 = vsel %vm1070, %v4051, 0
        %v4199 = vsel %vm1070, %v4052, 0
        %v4202 = vsel %vm1070, %v4053, 0
        %v4205 = vsel %vm1070, %v4054, 0
        %v4208 = vsel %vm1070, %v4055, 0
        %v4211 = vsel %vm1070, %v4056, 0
        %v4214 = vsel %vm1070, %v4057, 0
        %v4217 = vsel %vm1070, %v4058, 0
        %v4220 = vsel %vm1070, %v4059, 0
        %v4223 = vsel %vm1070, %v4060, 0
        %v4226 = vsel %vm1070, %v4061, 0
        %v4229 = vsel %vm1070, %v4062, 0
        %v4232 = vsel %vm1070, %v4063, 0
        %v4235 = vsel %vm1070, %v4064, 0
        %v4238 = vsel %vm1070, %v4065, 0
        %v4241 = vsel %vm1070, %v4066, 0
        %v4244 = vsel %vm1070, %v4067, 0
        %v4247 = vsel %vm1070, %v4068, 0
        %v4250 = vsel %vm1070, %v4069, 0
        %v4253 = vsel %vm1070, %v4070, 0
        %v4256 = vsel %vm1070, %v4071, 0
        %v4259 = vsel %vm1070, %v4072, 0
        %v4262 = vsel %vm1070, %v4073, 0
        %v4265 = vsel %vm1070, %v4074, 0
        %v4268 = vsel %vm1070, %v4075, 0
        %v4271 = vsel %vm1070, %v4076, 0
        %v4274 = vsel %vm1070, %v4077, 0
        %v4277 = vsel %vm1070, %v4078, 0
        %v4280 = vsel %vm1070, %v4079, 0
        %v4283 = vsel %vm1070, %v4080, 0
        %v4286 = vsel %vm1070, %v4081, 0
        %v4289 = vsel %vm1070, %v4082, 0
        %v4292 = vsel %vm1070, %v4083, 0
        %v4295 = vsel %vm1070, %v4084, 0
        %v4298 = vsel %vm1070, %v4085, 0
        %v4301 = vsel %vm1070, %v4086, 0
        %v4304 = vsel %vm1070, %v4087, 0
        %v4307 = vsel %vm1070, %v4088, 0
        %v4310 = vsel %vm1070, %v4089, 0
        %v4313 = vsel %vm1070, %v4090, 0
        %v4316 = vsel %vm1070, %v4091, 0
        %v4319 = vsel %vm1070, %v4092, 0
        %v4322 = vsel %vm1070, %v4093, 0
        %v4325 = vsel %vm1070, %v4094, 0
        %v4328 = vsel %vm1070, %v4095, 0
        %v4331 = vsel %vm1070, %v4096, 0
        %v4334 = vsel %vm1070, %v4097, 0
        %v4337 = vsel %vm1070, %v4098, 0
        %v4340 = vsel %vm1070, %v4099, 0
        %v4343 = vand.u32 %v4101, %v1314
        %4345 = vmatprep.subr.bf16.mxu0 0
        %4346 = vmatpush1.bf16.msra.mxu0 0
        %4347 = vmatprep.subr.bf16.mxu0 0
        %4348 = vmatpush1.bf16.msra.mxu0 0
        %4349 = vmatprep.subr.bf16.mxu0 0
        %4350 = vmatpush1.bf16.msra.mxu0 0
        %4351 = vmatprep.subr.bf16.mxu0 0
        %4352 = vmatpush1.bf16.msra.mxu0 0
        %4353 = vmatprep.subr.bf16.mxu0 0
        %4354 = vmatpush1.bf16.msra.mxu0 0
        %4355 = vmatprep.subr.bf16.mxu0 0
        %4356 = vmatpush1.bf16.msra.mxu0 0
        %4357 = vmatprep.subr.bf16.mxu0 0
        %4358 = vmatpush1.bf16.msra.mxu0 0
        %4359 = vmatprep.subr.bf16.mxu0 0
        %4360 = vmatpush1.bf16.msra.mxu0 %v4343
        %4361 = vmatprep.subr.bf16.mxu0 0
        %4362 = vmatpush2.bf16.msra.mxu0 0
        %4363 = vmatprep.subr.bf16.mxu0 0
        %4364 = vmatpush2.bf16.msra.mxu0 0
        %4365 = vmatprep.subr.bf16.mxu0 0
        %4366 = vmatpush2.bf16.msra.mxu0 0
        %4367 = vmatprep.subr.bf16.mxu0 0
        %4368 = vmatpush2.bf16.msra.mxu0 0
        %4369 = vmatprep.subr.bf16.mxu0 0
        %4370 = vmatpush2.bf16.msra.mxu0 0
        %4371 = vmatprep.subr.bf16.mxu0 0
        %4372 = vmatpush2.bf16.msra.mxu0 0
        %4373 = vmatprep.subr.bf16.mxu0 0
        %4374 = vmatpush2.bf16.msra.mxu0 0
        %4375 = vmatprep.subr.bf16.mxu0 0
        %4376 = vmatpush2.bf16.msra.mxu0 0
        %4377 = vmatprep.mubr.bf16.mxu0 0
        %4378 = vmatmul.mubr.bf16.gmra.mxu0 %v4103
        %v4379 = vpop.f32.mrf.mxu0
        %v4380 = vadd.f32 0.0, %v4379
        %v4381 = vpop.f32.mrf.mxu0
        %v4382 = vpop.f32.mrf.mxu0
        %v4383 = vadd.f32 0.0, %v4382
        %v4384 = vpop.f32.mrf.mxu0
        %4385 = vmatprep.mubr.bf16.mxu0 0
        %4386 = vmatmul.mubr.bf16.gmra.mxu0 %v4106
        %v4387 = vpop.f32.mrf.mxu0
        %v4388 = vadd.f32 0.0, %v4387
        %v4389 = vpop.f32.mrf.mxu0
        %v4390 = vpop.f32.mrf.mxu0
        %v4391 = vadd.f32 0.0, %v4390
        %v4392 = vpop.f32.mrf.mxu0
        %4393 = vmatprep.mubr.bf16.mxu0 0
        %4394 = vmatmul.mubr.bf16.gmra.mxu0 %v4109
        %v4395 = vpop.f32.mrf.mxu0
        %v4396 = vpop.f32.mrf.mxu0
        %v4397 = vpop.f32.mrf.mxu0
        %v4398 = vadd.f32 0.0, %v4397
        %v4399 = vpop.f32.mrf.mxu0
        %4400 = vmatprep.mubr.bf16.mxu0 0
        %4401 = vmatmul.mubr.bf16.gmra.mxu0 %v4112
        %v4402 = vpop.f32.mrf.mxu0
        %v4403 = vadd.f32 0.0, %v4402
        %v4404 = vpop.f32.mrf.mxu0
        %v4405 = vpop.f32.mrf.mxu0
        %v4406 = vadd.f32 0.0, %v4405
        %v4407 = vpop.f32.mrf.mxu0
        %4408 = vmatprep.mubr.bf16.mxu0 0
        %4409 = vmatmul.mubr.bf16.gmra.mxu0 %v4115
        %v4410 = vpop.f32.mrf.mxu0
        %v4411 = vadd.f32 0.0, %v4410
        %v4412 = vpop.f32.mrf.mxu0
        %v4413 = vpop.f32.mrf.mxu0
        %v4414 = vpop.f32.mrf.mxu0
        %4415 = vmatprep.mubr.bf16.mxu0 0
        %4416 = vmatmul.mubr.bf16.gmra.mxu0 %v4118
        %v4417 = vpop.f32.mrf.mxu0
        %v4418 = vadd.f32 0.0, %v4417
        %v4419 = vpop.f32.mrf.mxu0
        %v4420 = vpop.f32.mrf.mxu0
        %v4421 = vadd.f32 0.0, %v4420
        %v4422 = vpop.f32.mrf.mxu0
        %4423 = vmatprep.mubr.bf16.mxu0 0
        %4424 = vmatmul.mubr.bf16.gmra.mxu0 %v4121
        %v4425 = vpop.f32.mrf.mxu0
        %v4426 = vadd.f32 0.0, %v4425
        %v4427 = vpop.f32.mrf.mxu0
        %v4428 = vpop.f32.mrf.mxu0
        %v4429 = vadd.f32 0.0, %v4428
        %v4430 = vpop.f32.mrf.mxu0
        %4431 = vmatprep.mubr.bf16.mxu0 0
        %4432 = vmatmul.mubr.bf16.gmra.mxu0 %v4124
        %v4433 = vpop.f32.mrf.mxu0
        %v4434 = vpop.f32.mrf.mxu0
        %v4435 = vpop.f32.mrf.mxu0
        %v4436 = vadd.f32 0.0, %v4435
        %v4437 = vpop.f32.mrf.mxu0
        %4438 = vmatprep.mubr.bf16.mxu0 0
        %4439 = vmatmul.mubr.bf16.gmra.mxu0 %v4127
        %v4440 = vpop.f32.mrf.mxu0
        %v4441 = vadd.f32 0.0, %v4440
        %v4442 = vpop.f32.mrf.mxu0
        %v4443 = vpop.f32.mrf.mxu0
        %v4444 = vadd.f32 0.0, %v4443
        %v4445 = vpop.f32.mrf.mxu0
        %4446 = vmatprep.mubr.bf16.mxu0 0
        %4447 = vmatmul.mubr.bf16.gmra.mxu0 %v4130
        %v4448 = vpop.f32.mrf.mxu0
        %v4449 = vadd.f32 0.0, %v4448
        %v4450 = vpop.f32.mrf.mxu0
        %v4451 = vpop.f32.mrf.mxu0
        %v4452 = vpop.f32.mrf.mxu0
        %4453 = vmatprep.mubr.bf16.mxu0 0
        %4454 = vmatmul.mubr.bf16.gmra.mxu0 %v4133
        %v4455 = vpop.f32.mrf.mxu0
        %v4456 = vadd.f32 0.0, %v4455
        %v4457 = vpop.f32.mrf.mxu0
        %v4458 = vpop.f32.mrf.mxu0
        %v4459 = vadd.f32 0.0, %v4458
        %v4460 = vpop.f32.mrf.mxu0
        %4461 = vmatprep.mubr.bf16.mxu0 0
        %4462 = vmatmul.mubr.bf16.gmra.mxu0 %v4136
        %v4463 = vpop.f32.mrf.mxu0
        %v4464 = vadd.f32 0.0, %v4463
        %v4465 = vpop.f32.mrf.mxu0
        %v4466 = vpop.f32.mrf.mxu0
        %v4467 = vadd.f32 0.0, %v4466
        %v4468 = vpop.f32.mrf.mxu0
        %4469 = vmatprep.mubr.bf16.mxu0 0
        %4470 = vmatmul.mubr.bf16.gmra.mxu0 %v4139
        %v4471 = vpop.f32.mrf.mxu0
        %v4472 = vpop.f32.mrf.mxu0
        %v4473 = vpop.f32.mrf.mxu0
        %v4474 = vadd.f32 0.0, %v4473
        %v4475 = vpop.f32.mrf.mxu0
        %4476 = vmatprep.mubr.bf16.mxu0 0
        %4477 = vmatmul.mubr.bf16.gmra.mxu0 %v4142
        %v4478 = vpop.f32.mrf.mxu0
        %v4479 = vadd.f32 0.0, %v4478
        %v4480 = vpop.f32.mrf.mxu0
        %v4481 = vpop.f32.mrf.mxu0
        %v4482 = vadd.f32 0.0, %v4481
        %v4483 = vpop.f32.mrf.mxu0
        %4484 = vmatprep.mubr.bf16.mxu0 0
        %4485 = vmatmul.mubr.bf16.gmra.mxu0 %v4145
        %v4486 = vpop.f32.mrf.mxu0
        %v4487 = vadd.f32 0.0, %v4486
        %v4488 = vpop.f32.mrf.mxu0
        %v4489 = vpop.f32.mrf.mxu0
        %v4490 = vpop.f32.mrf.mxu0
        %4491 = vmatprep.mubr.bf16.mxu0 0
        %4492 = vmatmul.mubr.bf16.gmra.mxu0 %v4148
        %v4493 = vpop.f32.mrf.mxu0
        %v4494 = vadd.f32 0.0, %v4493
        %v4495 = vpop.f32.mrf.mxu0
        %v4496 = vpop.f32.mrf.mxu0
        %v4497 = vadd.f32 0.0, %v4496
        %v4498 = vpop.f32.mrf.mxu0
        %4499 = vmatprep.mubr.bf16.mxu0 0
        %4500 = vmatmul.mubr.bf16.gmra.mxu0 %v4151
        %v4501 = vpop.f32.mrf.mxu0
        %v4502 = vadd.f32 0.0, %v4501
        %v4503 = vpop.f32.mrf.mxu0
        %v4504 = vpop.f32.mrf.mxu0
        %v4505 = vadd.f32 0.0, %v4504
        %v4506 = vpop.f32.mrf.mxu0
        %4507 = vmatprep.mubr.bf16.mxu0 0
        %4508 = vmatmul.mubr.bf16.gmra.mxu0 %v4154
        %v4509 = vpop.f32.mrf.mxu0
        %v4510 = vpop.f32.mrf.mxu0
        %v4511 = vpop.f32.mrf.mxu0
        %v4512 = vadd.f32 0.0, %v4511
        %v4513 = vpop.f32.mrf.mxu0
        %4514 = vmatprep.mubr.bf16.mxu0 0
        %4515 = vmatmul.mubr.bf16.gmra.mxu0 %v4157
        %v4516 = vpop.f32.mrf.mxu0
        %v4517 = vadd.f32 0.0, %v4516
        %v4518 = vpop.f32.mrf.mxu0
        %v4519 = vpop.f32.mrf.mxu0
        %v4520 = vadd.f32 0.0, %v4519
        %v4521 = vpop.f32.mrf.mxu0
        %4522 = vmatprep.mubr.bf16.mxu0 0
        %4523 = vmatmul.mubr.bf16.gmra.mxu0 %v4160
        %v4524 = vpop.f32.mrf.mxu0
        %v4525 = vadd.f32 0.0, %v4524
        %v4526 = vpop.f32.mrf.mxu0
        %v4527 = vpop.f32.mrf.mxu0
        %v4528 = vpop.f32.mrf.mxu0
        %4529 = vmatprep.mubr.bf16.mxu0 0
        %4530 = vmatmul.mubr.bf16.gmra.mxu0 %v4163
        %v4531 = vpop.f32.mrf.mxu0
        %v4532 = vadd.f32 0.0, %v4531
        %v4533 = vpop.f32.mrf.mxu0
        %v4534 = vpop.f32.mrf.mxu0
        %v4535 = vadd.f32 0.0, %v4534
        %v4536 = vpop.f32.mrf.mxu0
        %4537 = vmatprep.mubr.bf16.mxu0 0
        %4538 = vmatmul.mubr.bf16.gmra.mxu0 %v4166
        %v4539 = vpop.f32.mrf.mxu0
        %v4540 = vadd.f32 0.0, %v4539
        %v4541 = vpop.f32.mrf.mxu0
        %v4542 = vpop.f32.mrf.mxu0
        %v4543 = vadd.f32 0.0, %v4542
        %v4544 = vpop.f32.mrf.mxu0
        %4545 = vmatprep.mubr.bf16.mxu0 0
        %4546 = vmatmul.mubr.bf16.gmra.mxu0 %v4169
        %v4547 = vpop.f32.mrf.mxu0
        %v4548 = vpop.f32.mrf.mxu0
        %v4549 = vpop.f32.mrf.mxu0
        %v4550 = vadd.f32 0.0, %v4549
        %v4551 = vpop.f32.mrf.mxu0
        %4552 = vmatprep.mubr.bf16.mxu0 0
        %4553 = vmatmul.mubr.bf16.gmra.mxu0 %v4172
        %v4554 = vpop.f32.mrf.mxu0
        %v4555 = vadd.f32 0.0, %v4554
        %v4556 = vpop.f32.mrf.mxu0
        %v4557 = vpop.f32.mrf.mxu0
        %v4558 = vadd.f32 0.0, %v4557
        %v4559 = vpop.f32.mrf.mxu0
        %4560 = vmatprep.mubr.bf16.mxu0 0
        %4561 = vmatmul.mubr.bf16.gmra.mxu0 %v4175
        %v4562 = vpop.f32.mrf.mxu0
        %v4563 = vadd.f32 0.0, %v4562
        %v4564 = vpop.f32.mrf.mxu0
        %v4565 = vpop.f32.mrf.mxu0
        %v4566 = vpop.f32.mrf.mxu0
        %4567 = vmatprep.mubr.bf16.mxu0 0
        %4568 = vmatmul.mubr.bf16.gmra.mxu0 %v4178
        %v4569 = vpop.f32.mrf.mxu0
        %v4570 = vadd.f32 0.0, %v4569
        %v4571 = vpop.f32.mrf.mxu0
        %v4572 = vpop.f32.mrf.mxu0
        %v4573 = vadd.f32 0.0, %v4572
        %v4574 = vpop.f32.mrf.mxu0
        %4575 = vmatprep.mubr.bf16.mxu0 0
        %4576 = vmatmul.mubr.bf16.gmra.mxu0 %v4181
        %v4577 = vpop.f32.mrf.mxu0
        %v4578 = vadd.f32 0.0, %v4577
        %v4579 = vpop.f32.mrf.mxu0
        %v4580 = vpop.f32.mrf.mxu0
        %v4581 = vadd.f32 0.0, %v4580
        %v4582 = vpop.f32.mrf.mxu0
        %4583 = vmatprep.mubr.bf16.mxu0 0
        %4584 = vmatmul.mubr.bf16.gmra.mxu0 %v4184
        %v4585 = vpop.f32.mrf.mxu0
        %v4586 = vpop.f32.mrf.mxu0
        %v4587 = vpop.f32.mrf.mxu0
        %v4588 = vadd.f32 0.0, %v4587
        %v4589 = vpop.f32.mrf.mxu0
        %4590 = vmatprep.mubr.bf16.mxu0 0
        %4591 = vmatmul.mubr.bf16.gmra.mxu0 %v4187
        %v4592 = vpop.f32.mrf.mxu0
        %v4593 = vadd.f32 0.0, %v4592
        %v4594 = vpop.f32.mrf.mxu0
        %v4595 = vpop.f32.mrf.mxu0
        %v4596 = vadd.f32 0.0, %v4595
        %v4597 = vpop.f32.mrf.mxu0
        %4598 = vmatprep.mubr.bf16.mxu0 0
        %4599 = vmatmul.mubr.bf16.gmra.mxu0 %v4190
        %v4600 = vpop.f32.mrf.mxu0
        %v4601 = vadd.f32 0.0, %v4600
        %v4602 = vpop.f32.mrf.mxu0
        %v4603 = vpop.f32.mrf.mxu0
        %v4604 = vpop.f32.mrf.mxu0
        %4605 = vmatprep.mubr.bf16.mxu0 0
        %4606 = vmatmul.mubr.bf16.gmra.mxu0 %v4193
        %v4607 = vpop.f32.mrf.mxu0
        %v4608 = vadd.f32 0.0, %v4607
        %v4609 = vpop.f32.mrf.mxu0
        %v4610 = vpop.f32.mrf.mxu0
        %v4611 = vadd.f32 0.0, %v4610
        %v4612 = vpop.f32.mrf.mxu0
        %4613 = vmatprep.mubr.bf16.mxu0 0
        %4614 = vmatmul.mubr.bf16.gmra.mxu0 %v4196
        %v4615 = vpop.f32.mrf.mxu0
        %v4616 = vadd.f32 0.0, %v4615
        %v4617 = vpop.f32.mrf.mxu0
        %v4618 = vpop.f32.mrf.mxu0
        %v4619 = vadd.f32 0.0, %v4618
        %v4620 = vpop.f32.mrf.mxu0
        %4621 = vmatprep.mubr.bf16.mxu0 0
        %4622 = vmatmul.mubr.bf16.gmra.mxu0 %v4199
        %v4623 = vpop.f32.mrf.mxu0
        %v4624 = vpop.f32.mrf.mxu0
        %v4625 = vpop.f32.mrf.mxu0
        %v4626 = vadd.f32 0.0, %v4625
        %v4627 = vpop.f32.mrf.mxu0
        %4628 = vmatprep.mubr.bf16.mxu0 0
        %4629 = vmatmul.mubr.bf16.gmra.mxu0 %v4202
        %v4630 = vpop.f32.mrf.mxu0
        %v4631 = vadd.f32 0.0, %v4630
        %v4632 = vpop.f32.mrf.mxu0
        %v4633 = vpop.f32.mrf.mxu0
        %v4634 = vadd.f32 0.0, %v4633
        %v4635 = vpop.f32.mrf.mxu0
        %4636 = vmatprep.mubr.bf16.mxu0 0
        %4637 = vmatmul.mubr.bf16.gmra.mxu0 %v4205
        %v4638 = vpop.f32.mrf.mxu0
        %v4639 = vadd.f32 0.0, %v4638
        %v4640 = vpop.f32.mrf.mxu0
        %v4641 = vpop.f32.mrf.mxu0
        %v4642 = vpop.f32.mrf.mxu0
        %4643 = vmatprep.mubr.bf16.mxu0 0
        %4644 = vmatmul.mubr.bf16.gmra.mxu0 %v4208
        %v4645 = vpop.f32.mrf.mxu0
        %v4646 = vadd.f32 0.0, %v4645
        %v4647 = vpop.f32.mrf.mxu0
        %v4648 = vpop.f32.mrf.mxu0
        %v4649 = vadd.f32 0.0, %v4648
        %v4650 = vpop.f32.mrf.mxu0
        %4651 = vmatprep.mubr.bf16.mxu0 0
        %4652 = vmatmul.mubr.bf16.gmra.mxu0 %v4211
        %v4653 = vpop.f32.mrf.mxu0
        %v4654 = vadd.f32 0.0, %v4653
        %v4655 = vpop.f32.mrf.mxu0
        %v4656 = vpop.f32.mrf.mxu0
        %v4657 = vadd.f32 0.0, %v4656
        %v4658 = vpop.f32.mrf.mxu0
        %4659 = vmatprep.mubr.bf16.mxu0 0
        %4660 = vmatmul.mubr.bf16.gmra.mxu0 %v4214
        %v4661 = vpop.f32.mrf.mxu0
        %v4662 = vpop.f32.mrf.mxu0
        %v4663 = vpop.f32.mrf.mxu0
        %v4664 = vadd.f32 0.0, %v4663
        %v4665 = vpop.f32.mrf.mxu0
        %4666 = vmatprep.mubr.bf16.mxu0 0
        %4667 = vmatmul.mubr.bf16.gmra.mxu0 %v4217
        %v4668 = vpop.f32.mrf.mxu0
        %v4669 = vadd.f32 0.0, %v4668
        %v4670 = vpop.f32.mrf.mxu0
        %v4671 = vpop.f32.mrf.mxu0
        %v4672 = vadd.f32 0.0, %v4671
        %v4673 = vpop.f32.mrf.mxu0
        %4674 = vmatprep.mubr.bf16.mxu0 0
        %4675 = vmatmul.mubr.bf16.gmra.mxu0 %v4220
        %v4676 = vpop.f32.mrf.mxu0
        %v4677 = vadd.f32 0.0, %v4676
        %v4678 = vpop.f32.mrf.mxu0
        %v4679 = vpop.f32.mrf.mxu0
        %v4680 = vpop.f32.mrf.mxu0
        %4681 = vmatprep.mubr.bf16.mxu0 0
        %4682 = vmatmul.mubr.bf16.gmra.mxu0 %v4223
        %v4683 = vpop.f32.mrf.mxu0
        %v4684 = vadd.f32 0.0, %v4683
        %v4685 = vpop.f32.mrf.mxu0
        %v4686 = vpop.f32.mrf.mxu0
        %v4687 = vadd.f32 0.0, %v4686
        %v4688 = vpop.f32.mrf.mxu0
        %4689 = vmatprep.mubr.bf16.mxu0 0
        %4690 = vmatmul.mubr.bf16.gmra.mxu0 %v4226
        %v4691 = vpop.f32.mrf.mxu0
        %v4692 = vadd.f32 0.0, %v4691
        %v4693 = vpop.f32.mrf.mxu0
        %v4694 = vpop.f32.mrf.mxu0
        %v4695 = vadd.f32 0.0, %v4694
        %v4696 = vpop.f32.mrf.mxu0
        %4697 = vmatprep.mubr.bf16.mxu0 0
        %4698 = vmatmul.mubr.bf16.gmra.mxu0 %v4229
        %v4699 = vpop.f32.mrf.mxu0
        %v4700 = vpop.f32.mrf.mxu0
        %v4701 = vpop.f32.mrf.mxu0
        %v4702 = vadd.f32 0.0, %v4701
        %v4703 = vpop.f32.mrf.mxu0
        %4704 = vmatprep.mubr.bf16.mxu0 0
        %4705 = vmatmul.mubr.bf16.gmra.mxu0 %v4232
        %v4706 = vpop.f32.mrf.mxu0
        %v4707 = vadd.f32 0.0, %v4706
        %v4708 = vpop.f32.mrf.mxu0
        %v4709 = vpop.f32.mrf.mxu0
        %v4710 = vadd.f32 0.0, %v4709
        %v4711 = vpop.f32.mrf.mxu0
        %4712 = vmatprep.mubr.bf16.mxu0 0
        %4713 = vmatmul.mubr.bf16.gmra.mxu0 %v4235
        %v4714 = vpop.f32.mrf.mxu0
        %v4715 = vadd.f32 0.0, %v4714
        %v4716 = vpop.f32.mrf.mxu0
        %v4717 = vpop.f32.mrf.mxu0
        %v4718 = vpop.f32.mrf.mxu0
        %4719 = vmatprep.mubr.bf16.mxu0 0
        %4720 = vmatmul.mubr.bf16.gmra.mxu0 %v4238
        %v4721 = vpop.f32.mrf.mxu0
        %v4722 = vadd.f32 0.0, %v4721
        %v4723 = vpop.f32.mrf.mxu0
        %v4724 = vpop.f32.mrf.mxu0
        %v4725 = vadd.f32 0.0, %v4724
        %v4726 = vpop.f32.mrf.mxu0
        %4727 = vmatprep.mubr.bf16.mxu0 0
        %4728 = vmatmul.mubr.bf16.gmra.mxu0 %v4241
        %v4729 = vpop.f32.mrf.mxu0
        %v4730 = vadd.f32 0.0, %v4729
        %v4731 = vpop.f32.mrf.mxu0
        %v4732 = vpop.f32.mrf.mxu0
        %v4733 = vadd.f32 0.0, %v4732
        %v4734 = vpop.f32.mrf.mxu0
        %4735 = vmatprep.mubr.bf16.mxu0 0
        %4736 = vmatmul.mubr.bf16.gmra.mxu0 %v4244
        %v4737 = vpop.f32.mrf.mxu0
        %v4738 = vpop.f32.mrf.mxu0
        %v4739 = vpop.f32.mrf.mxu0
        %v4740 = vadd.f32 0.0, %v4739
        %v4741 = vpop.f32.mrf.mxu0
        %4742 = vmatprep.mubr.bf16.mxu0 0
        %4743 = vmatmul.mubr.bf16.gmra.mxu0 %v4247
        %v4744 = vpop.f32.mrf.mxu0
        %v4745 = vadd.f32 0.0, %v4744
        %v4746 = vpop.f32.mrf.mxu0
        %v4747 = vpop.f32.mrf.mxu0
        %v4748 = vadd.f32 0.0, %v4747
        %v4749 = vpop.f32.mrf.mxu0
        %4750 = vmatprep.mubr.bf16.mxu0 0
        %4751 = vmatmul.mubr.bf16.gmra.mxu0 %v4250
        %v4752 = vpop.f32.mrf.mxu0
        %v4753 = vadd.f32 0.0, %v4752
        %v4754 = vpop.f32.mrf.mxu0
        %v4755 = vpop.f32.mrf.mxu0
        %v4756 = vpop.f32.mrf.mxu0
        %4757 = vmatprep.mubr.bf16.mxu0 0
        %4758 = vmatmul.mubr.bf16.gmra.mxu0 %v4253
        %v4759 = vpop.f32.mrf.mxu0
        %v4760 = vadd.f32 0.0, %v4759
        %v4761 = vpop.f32.mrf.mxu0
        %v4762 = vpop.f32.mrf.mxu0
        %v4763 = vadd.f32 0.0, %v4762
        %v4764 = vpop.f32.mrf.mxu0
        %4765 = vmatprep.mubr.bf16.mxu0 0
        %4766 = vmatmul.mubr.bf16.gmra.mxu0 %v4256
        %v4767 = vpop.f32.mrf.mxu0
        %v4768 = vadd.f32 0.0, %v4767
        %v4769 = vpop.f32.mrf.mxu0
        %v4770 = vpop.f32.mrf.mxu0
        %v4771 = vadd.f32 0.0, %v4770
        %v4772 = vpop.f32.mrf.mxu0
        %4773 = vmatprep.mubr.bf16.mxu0 0
        %4774 = vmatmul.mubr.bf16.gmra.mxu0 %v4259
        %v4775 = vpop.f32.mrf.mxu0
        %v4776 = vpop.f32.mrf.mxu0
        %v4777 = vpop.f32.mrf.mxu0
        %v4778 = vadd.f32 0.0, %v4777
        %v4779 = vpop.f32.mrf.mxu0
        %4780 = vmatprep.mubr.bf16.mxu0 0
        %4781 = vmatmul.mubr.bf16.gmra.mxu0 %v4262
        %v4782 = vpop.f32.mrf.mxu0
        %v4783 = vadd.f32 0.0, %v4782
        %v4784 = vpop.f32.mrf.mxu0
        %v4785 = vpop.f32.mrf.mxu0
        %v4786 = vadd.f32 0.0, %v4785
        %v4787 = vpop.f32.mrf.mxu0
        %4788 = vmatprep.mubr.bf16.mxu0 0
        %4789 = vmatmul.mubr.bf16.gmra.mxu0 %v4265
        %v4790 = vpop.f32.mrf.mxu0
        %v4791 = vadd.f32 0.0, %v4790
        %v4792 = vpop.f32.mrf.mxu0
        %v4793 = vpop.f32.mrf.mxu0
        %v4794 = vpop.f32.mrf.mxu0
        %4795 = vmatprep.mubr.bf16.mxu0 0
        %4796 = vmatmul.mubr.bf16.gmra.mxu0 %v4268
        %v4797 = vpop.f32.mrf.mxu0
        %v4798 = vadd.f32 0.0, %v4797
        %v4799 = vpop.f32.mrf.mxu0
        %v4800 = vpop.f32.mrf.mxu0
        %v4801 = vadd.f32 0.0, %v4800
        %v4802 = vpop.f32.mrf.mxu0
        %4803 = vmatprep.mubr.bf16.mxu0 0
        %4804 = vmatmul.mubr.bf16.gmra.mxu0 %v4271
        %v4805 = vpop.f32.mrf.mxu0
        %v4806 = vadd.f32 0.0, %v4805
        %v4807 = vpop.f32.mrf.mxu0
        %v4808 = vpop.f32.mrf.mxu0
        %v4809 = vadd.f32 0.0, %v4808
        %v4810 = vpop.f32.mrf.mxu0
        %4811 = vmatprep.mubr.bf16.mxu0 0
        %4812 = vmatmul.mubr.bf16.gmra.mxu0 %v4274
        %v4813 = vpop.f32.mrf.mxu0
        %v4814 = vpop.f32.mrf.mxu0
        %v4815 = vpop.f32.mrf.mxu0
        %v4816 = vadd.f32 0.0, %v4815
        %v4817 = vpop.f32.mrf.mxu0
        %4818 = vmatprep.mubr.bf16.mxu0 0
        %4819 = vmatmul.mubr.bf16.gmra.mxu0 %v4277
        %v4820 = vpop.f32.mrf.mxu0
        %v4821 = vadd.f32 0.0, %v4820
        %v4822 = vpop.f32.mrf.mxu0
        %v4823 = vpop.f32.mrf.mxu0
        %v4824 = vadd.f32 0.0, %v4823
        %v4825 = vpop.f32.mrf.mxu0
        %4826 = vmatprep.mubr.bf16.mxu0 0
        %4827 = vmatmul.mubr.bf16.gmra.mxu0 %v4280
        %v4828 = vpop.f32.mrf.mxu0
        %v4829 = vadd.f32 0.0, %v4828
        %v4830 = vpop.f32.mrf.mxu0
        %v4831 = vpop.f32.mrf.mxu0
        %v4832 = vpop.f32.mrf.mxu0
        %4833 = vmatprep.mubr.bf16.mxu0 0
        %4834 = vmatmul.mubr.bf16.gmra.mxu0 %v4283
        %v4835 = vpop.f32.mrf.mxu0
        %v4836 = vadd.f32 0.0, %v4835
        %v4837 = vpop.f32.mrf.mxu0
        %v4838 = vpop.f32.mrf.mxu0
        %v4839 = vadd.f32 0.0, %v4838
        %v4840 = vpop.f32.mrf.mxu0
        %4841 = vmatprep.mubr.bf16.mxu0 0
        %4842 = vmatmul.mubr.bf16.gmra.mxu0 %v4286
        %v4843 = vpop.f32.mrf.mxu0
        %v4844 = vadd.f32 0.0, %v4843
        %v4845 = vpop.f32.mrf.mxu0
        %v4846 = vpop.f32.mrf.mxu0
        %v4847 = vadd.f32 0.0, %v4846
        %v4848 = vpop.f32.mrf.mxu0
        %4849 = vmatprep.mubr.bf16.mxu0 0
        %4850 = vmatmul.mubr.bf16.gmra.mxu0 %v4289
        %v4851 = vpop.f32.mrf.mxu0
        %v4852 = vpop.f32.mrf.mxu0
        %v4853 = vpop.f32.mrf.mxu0
        %v4854 = vadd.f32 0.0, %v4853
        %v4855 = vpop.f32.mrf.mxu0
        %4856 = vmatprep.mubr.bf16.mxu0 0
        %4857 = vmatmul.mubr.bf16.gmra.mxu0 %v4292
        %v4858 = vpop.f32.mrf.mxu0
        %v4859 = vadd.f32 0.0, %v4858
        %v4860 = vpop.f32.mrf.mxu0
        %v4861 = vpop.f32.mrf.mxu0
        %v4862 = vadd.f32 0.0, %v4861
        %v4863 = vpop.f32.mrf.mxu0
        %4864 = vmatprep.mubr.bf16.mxu0 0
        %4865 = vmatmul.mubr.bf16.gmra.mxu0 %v4295
        %v4866 = vpop.f32.mrf.mxu0
        %v4867 = vadd.f32 0.0, %v4866
        %v4868 = vpop.f32.mrf.mxu0
        %v4869 = vpop.f32.mrf.mxu0
        %v4870 = vpop.f32.mrf.mxu0
        %4871 = vmatprep.mubr.bf16.mxu0 0
        %4872 = vmatmul.mubr.bf16.gmra.mxu0 %v4298
        %v4873 = vpop.f32.mrf.mxu0
        %v4874 = vadd.f32 0.0, %v4873
        %v4875 = vpop.f32.mrf.mxu0
        %v4876 = vpop.f32.mrf.mxu0
        %v4877 = vadd.f32 0.0, %v4876
        %v4878 = vpop.f32.mrf.mxu0
        %4879 = vmatprep.mubr.bf16.mxu0 0
        %4880 = vmatmul.mubr.bf16.gmra.mxu0 %v4301
        %v4881 = vpop.f32.mrf.mxu0
        %v4882 = vadd.f32 0.0, %v4881
        %v4883 = vpop.f32.mrf.mxu0
        %v4884 = vpop.f32.mrf.mxu0
        %v4885 = vadd.f32 0.0, %v4884
        %v4886 = vpop.f32.mrf.mxu0
        %4887 = vmatprep.mubr.bf16.mxu0 0
        %4888 = vmatmul.mubr.bf16.gmra.mxu0 %v4304
        %v4889 = vpop.f32.mrf.mxu0
        %v4890 = vpop.f32.mrf.mxu0
        %v4891 = vpop.f32.mrf.mxu0
        %v4892 = vadd.f32 0.0, %v4891
        %v4893 = vpop.f32.mrf.mxu0
        %4894 = vmatprep.mubr.bf16.mxu0 0
        %4895 = vmatmul.mubr.bf16.gmra.mxu0 %v4307
        %v4896 = vpop.f32.mrf.mxu0
        %v4897 = vadd.f32 0.0, %v4896
        %v4898 = vpop.f32.mrf.mxu0
        %v4899 = vpop.f32.mrf.mxu0
        %v4900 = vadd.f32 0.0, %v4899
        %v4901 = vpop.f32.mrf.mxu0
        %4902 = vmatprep.mubr.bf16.mxu0 0
        %4903 = vmatmul.mubr.bf16.gmra.mxu0 %v4310
        %v4904 = vpop.f32.mrf.mxu0
        %v4905 = vadd.f32 0.0, %v4904
        %v4906 = vpop.f32.mrf.mxu0
        %v4907 = vpop.f32.mrf.mxu0
        %v4908 = vpop.f32.mrf.mxu0
        %4909 = vmatprep.mubr.bf16.mxu0 0
        %4910 = vmatmul.mubr.bf16.gmra.mxu0 %v4313
        %v4911 = vpop.f32.mrf.mxu0
        %v4912 = vadd.f32 0.0, %v4911
        %v4913 = vpop.f32.mrf.mxu0
        %v4914 = vpop.f32.mrf.mxu0
        %v4915 = vadd.f32 0.0, %v4914
        %v4916 = vpop.f32.mrf.mxu0
        %4917 = vmatprep.mubr.bf16.mxu0 0
        %4918 = vmatmul.mubr.bf16.gmra.mxu0 %v4316
        %v4919 = vpop.f32.mrf.mxu0
        %v4920 = vadd.f32 0.0, %v4919
        %v4921 = vpop.f32.mrf.mxu0
        %v4922 = vpop.f32.mrf.mxu0
        %v4923 = vadd.f32 0.0, %v4922
        %v4924 = vpop.f32.mrf.mxu0
        %4925 = vmatprep.mubr.bf16.mxu0 0
        %4926 = vmatmul.mubr.bf16.gmra.mxu0 %v4319
        %v4927 = vpop.f32.mrf.mxu0
        %v4928 = vpop.f32.mrf.mxu0
        %v4929 = vpop.f32.mrf.mxu0
        %v4930 = vadd.f32 0.0, %v4929
        %v4931 = vpop.f32.mrf.mxu0
        %4932 = vmatprep.mubr.bf16.mxu0 0
        %4933 = vmatmul.mubr.bf16.gmra.mxu0 %v4322
        %v4934 = vpop.f32.mrf.mxu0
        %v4935 = vadd.f32 0.0, %v4934
        %v4936 = vpop.f32.mrf.mxu0
        %v4937 = vpop.f32.mrf.mxu0
        %v4938 = vadd.f32 0.0, %v4937
        %v4939 = vpop.f32.mrf.mxu0
        %4940 = vmatprep.mubr.bf16.mxu0 0
        %4941 = vmatmul.mubr.bf16.gmra.mxu0 %v4325
        %v4942 = vpop.f32.mrf.mxu0
        %v4943 = vadd.f32 0.0, %v4942
        %v4944 = vpop.f32.mrf.mxu0
        %v4945 = vpop.f32.mrf.mxu0
        %v4946 = vpop.f32.mrf.mxu0
        %4947 = vmatprep.mubr.bf16.mxu0 0
        %4948 = vmatmul.mubr.bf16.gmra.mxu0 %v4328
        %v4949 = vpop.f32.mrf.mxu0
        %v4950 = vadd.f32 0.0, %v4949
        %v4951 = vpop.f32.mrf.mxu0
        %v4952 = vpop.f32.mrf.mxu0
        %v4953 = vadd.f32 0.0, %v4952
        %v4954 = vpop.f32.mrf.mxu0
        %4955 = vmatprep.mubr.bf16.mxu0 0
        %4956 = vmatmul.mubr.bf16.gmra.mxu0 %v4331
        %v4957 = vpop.f32.mrf.mxu0
        %v4958 = vadd.f32 0.0, %v4957
        %v4959 = vpop.f32.mrf.mxu0
        %v4960 = vpop.f32.mrf.mxu0
        %v4961 = vadd.f32 0.0, %v4960
        %v4962 = vpop.f32.mrf.mxu0
        %4963 = vmatprep.mubr.bf16.mxu0 0
        %4964 = vmatmul.mubr.bf16.gmra.mxu0 %v4334
        %v4965 = vpop.f32.mrf.mxu0
        %v4966 = vpop.f32.mrf.mxu0
        %v4967 = vpop.f32.mrf.mxu0
        %v4968 = vadd.f32 0.0, %v4967
        %v4969 = vpop.f32.mrf.mxu0
        %4970 = vmatprep.mubr.bf16.mxu0 0
        %4971 = vmatmul.mubr.bf16.gmra.mxu0 %v4337
        %v4972 = vpop.f32.mrf.mxu0
        %v4973 = vadd.f32 0.0, %v4972
        %v4974 = vpop.f32.mrf.mxu0
        %v4975 = vpop.f32.mrf.mxu0
        %v4976 = vadd.f32 0.0, %v4975
        %v4977 = vpop.f32.mrf.mxu0
        %4978 = vmatprep.mubr.bf16.mxu0 0
        %4979 = vmatmul.mubr.bf16.gmra.mxu0 %v4340
        %v4980 = vpop.f32.mrf.mxu0
        %v4981 = vadd.f32 0.0, %v4980
        %v4982 = vpop.f32.mrf.mxu0
        %v4983 = vpop.f32.mrf.mxu0
        %v4984 = vpop.f32.mrf.mxu0
        %4985 = vdwg.mxu0
        %v4986 = vadd.f32 %v3892, %v4380
        %v4987 = vadd.f32 %v3893, %v4383
        %v4988 = vadd.f32 %v3894, %v4388
        %v4989 = vadd.f32 %v3895, %v4391
        %v4990 = vadd.f32 %v3896, %v4398
        %v4991 = vadd.f32 %v3897, %v4403
        %v4992 = vadd.f32 %v3898, %v4406
        %v4993 = vadd.f32 %v3899, %v4411
        %v4994 = vadd.f32 %v3900, %v4418
        %v4995 = vadd.f32 %v3901, %v4421
        %v4996 = vadd.f32 %v3902, %v4426
        %v4997 = vadd.f32 %v3903, %v4429
        %v4998 = vadd.f32 %v3904, %v4436
        %v4999 = vadd.f32 %v3905, %v4441
        %v5000 = vadd.f32 %v3906, %v4444
        %v5001 = vadd.f32 %v3907, %v4449
        %v5002 = vadd.f32 %v3908, %v4456
        %v5003 = vadd.f32 %v3909, %v4459
        %v5004 = vadd.f32 %v3910, %v4464
        %v5005 = vadd.f32 %v3911, %v4467
        %v5006 = vadd.f32 %v3912, %v4474
        %v5007 = vadd.f32 %v3913, %v4479
        %v5008 = vadd.f32 %v3914, %v4482
        %v5009 = vadd.f32 %v3915, %v4487
        %v5010 = vadd.f32 %v3916, %v4494
        %v5011 = vadd.f32 %v3917, %v4497
        %v5012 = vadd.f32 %v3918, %v4502
        %v5013 = vadd.f32 %v3919, %v4505
        %v5014 = vadd.f32 %v3920, %v4512
        %v5015 = vadd.f32 %v3921, %v4517
        %v5016 = vadd.f32 %v3922, %v4520
        %v5017 = vadd.f32 %v3923, %v4525
        %v5018 = vadd.f32 %v3924, %v4532
        %v5019 = vadd.f32 %v3925, %v4535
        %v5020 = vadd.f32 %v3926, %v4540
        %v5021 = vadd.f32 %v3927, %v4543
        %v5022 = vadd.f32 %v3928, %v4550
        %v5023 = vadd.f32 %v3929, %v4555
        %v5024 = vadd.f32 %v3930, %v4558
        %v5025 = vadd.f32 %v3931, %v4563
        %v5026 = vadd.f32 %v3932, %v4570
        %v5027 = vadd.f32 %v3933, %v4573
        %v5028 = vadd.f32 %v3934, %v4578
        %v5029 = vadd.f32 %v3935, %v4581
        %v5030 = vadd.f32 %v3936, %v4588
        %v5031 = vadd.f32 %v3937, %v4593
        %v5032 = vadd.f32 %v3938, %v4596
        %v5033 = vadd.f32 %v3939, %v4601
        %v5034 = vadd.f32 %v3940, %v4608
        %v5035 = vadd.f32 %v3941, %v4611
        %v5036 = vadd.f32 %v3942, %v4616
        %v5037 = vadd.f32 %v3943, %v4619
        %v5038 = vadd.f32 %v3944, %v4626
        %v5039 = vadd.f32 %v3945, %v4631
        %v5040 = vadd.f32 %v3946, %v4634
        %v5041 = vadd.f32 %v3947, %v4639
        %v5042 = vadd.f32 %v3948, %v4646
        %v5043 = vadd.f32 %v3949, %v4649
        %v5044 = vadd.f32 %v3950, %v4654
        %v5045 = vadd.f32 %v3951, %v4657
        %v5046 = vadd.f32 %v3952, %v4664
        %v5047 = vadd.f32 %v3953, %v4669
        %v5048 = vadd.f32 %v3954, %v4672
        %v5049 = vadd.f32 %v3955, %v4677
        %v5050 = vadd.f32 %v3956, %v4684
        %v5051 = vadd.f32 %v3957, %v4687
        %v5052 = vadd.f32 %v3958, %v4692
        %v5053 = vadd.f32 %v3959, %v4695
        %v5054 = vadd.f32 %v3960, %v4702
        %v5055 = vadd.f32 %v3961, %v4707
        %v5056 = vadd.f32 %v3962, %v4710
        %v5057 = vadd.f32 %v3963, %v4715
        %v5058 = vadd.f32 %v3964, %v4722
        %v5059 = vadd.f32 %v3965, %v4725
        %v5060 = vadd.f32 %v3966, %v4730
        %v5061 = vadd.f32 %v3967, %v4733
        %v5062 = vadd.f32 %v3968, %v4740
        %v5063 = vadd.f32 %v3969, %v4745
        %v5064 = vadd.f32 %v3970, %v4748
        %v5065 = vadd.f32 %v3971, %v4753
        %v5066 = vadd.f32 %v3972, %v4760
        %v5067 = vadd.f32 %v3973, %v4763
        %v5068 = vadd.f32 %v3974, %v4768
        %v5069 = vadd.f32 %v3975, %v4771
        %v5070 = vadd.f32 %v3976, %v4778
        %v5071 = vadd.f32 %v3977, %v4783
        %v5072 = vadd.f32 %v3978, %v4786
        %v5073 = vadd.f32 %v3979, %v4791
        %v5074 = vadd.f32 %v3980, %v4798
        %v5075 = vadd.f32 %v3981, %v4801
        %v5076 = vadd.f32 %v3982, %v4806
        %v5077 = vadd.f32 %v3983, %v4809
        %v5078 = vadd.f32 %v3984, %v4816
        %v5079 = vadd.f32 %v3985, %v4821
        %v5080 = vadd.f32 %v3986, %v4824
        %v5081 = vadd.f32 %v3987, %v4829
        %v5082 = vadd.f32 %v3988, %v4836
        %v5083 = vadd.f32 %v3989, %v4839
        %v5084 = vadd.f32 %v3990, %v4844
        %v5085 = vadd.f32 %v3991, %v4847
        %v5086 = vadd.f32 %v3992, %v4854
        %v5087 = vadd.f32 %v3993, %v4859
        %v5088 = vadd.f32 %v3994, %v4862
        %v5089 = vadd.f32 %v3995, %v4867
        %v5090 = vadd.f32 %v3996, %v4874
        %v5091 = vadd.f32 %v3997, %v4877
        %v5092 = vadd.f32 %v3998, %v4882
        %v5093 = vadd.f32 %v3999, %v4885
        %v5094 = vadd.f32 %v4000, %v4892
        %v5095 = vadd.f32 %v4001, %v4897
        %v5096 = vadd.f32 %v4002, %v4900
        %v5097 = vadd.f32 %v4003, %v4905
        %v5098 = vadd.f32 %v4004, %v4912
        %v5099 = vadd.f32 %v4005, %v4915
        %v5100 = vadd.f32 %v4006, %v4920
        %v5101 = vadd.f32 %v4007, %v4923
        %v5102 = vadd.f32 %v4008, %v4930
        %v5103 = vadd.f32 %v4009, %v4935
        %v5104 = vadd.f32 %v4010, %v4938
        %v5105 = vadd.f32 %v4011, %v4943
        %v5106 = vadd.f32 %v4012, %v4950
        %v5107 = vadd.f32 %v4013, %v4953
        %v5108 = vadd.f32 %v4014, %v4958
        %v5109 = vadd.f32 %v4015, %v4961
        %v5110 = vadd.f32 %v4016, %v4968
        %v5111 = vadd.f32 %v4017, %v4973
        %v5112 = vadd.f32 %v4018, %v4976
        %v5113 = vadd.f32 %v4019, %v4981
        %v5114 = vpack.c.bf16 %v335, %v335
        %s5115 = scalar_lea.vmem %s1, 8
        %v5116 = vld [vmem:[%s5115] sm:$0x3]
        %v5117 = vshrl.u32 %v4020, 16
        %v5119 = vshll.u32 %v4020, 16
        %v5121 = vrot.slane %v5119, 1
        %v5122 = vor.u32 %v5117, %v5121
        %v5123 = vshll.u32 %v4021, 16
        %v5125 = vrot.slane %v5123, 1
        %v5126 = vsel %vm425, %v5122, %v5125
        %v5127 = vshrl.u32 %v4021, 16
        %v5129 = vor.u32 %v5127, %v5125
        %v5130 = vshll.u32 %v4022, 16
        %v5132 = vrot.slane %v5130, 1
        %v5133 = vsel %vm425, %v5129, %v5132
        %v5134 = vshrl.u32 %v4022, 16
        %v5136 = vor.u32 %v5134, %v5132
        %v5137 = vshll.u32 %v4023, 16
        %v5139 = vrot.slane %v5137, 1
        %v5140 = vsel %vm425, %v5136, %v5139
        %v5141 = vshrl.u32 %v4023, 16
        %v5143 = vor.u32 %v5141, %v5139
        %v5144 = vshll.u32 %v4024, 16
        %v5146 = vrot.slane %v5144, 1
        %v5147 = vsel %vm425, %v5143, %v5146
        %v5148 = vshrl.u32 %v4024, 16
        %v5150 = vor.u32 %v5148, %v5146
        %v5151 = vshll.u32 %v4025, 16
        %v5153 = vrot.slane %v5151, 1
        %v5154 = vsel %vm425, %v5150, %v5153
        %v5155 = vshrl.u32 %v4025, 16
        %v5157 = vor.u32 %v5155, %v5153
        %v5158 = vshll.u32 %v4026, 16
        %v5160 = vrot.slane %v5158, 1
        %v5161 = vsel %vm425, %v5157, %v5160
        %v5162 = vshrl.u32 %v4026, 16
        %v5164 = vor.u32 %v5162, %v5160
        %v5165 = vshll.u32 %v4027, 16
        %v5167 = vrot.slane %v5165, 1
        %v5168 = vsel %vm425, %v5164, %v5167
        %v5169 = vshrl.u32 %v4027, 16
        %v5171 = vor.u32 %v5169, %v5167
        %v5172 = vshll.u32 %v4028, 16
        %v5174 = vrot.slane %v5172, 1
        %v5175 = vsel %vm425, %v5171, %v5174
        %v5176 = vshrl.u32 %v4028, 16
        %v5178 = vor.u32 %v5176, %v5174
        %v5179 = vshll.u32 %v4029, 16
        %v5181 = vrot.slane %v5179, 1
        %v5182 = vsel %vm425, %v5178, %v5181
        %v5183 = vshrl.u32 %v4029, 16
        %v5185 = vor.u32 %v5183, %v5181
        %v5186 = vshll.u32 %v4030, 16
        %v5188 = vrot.slane %v5186, 1
        %v5189 = vsel %vm425, %v5185, %v5188
        %v5190 = vshrl.u32 %v4030, 16
        %v5192 = vor.u32 %v5190, %v5188
        %v5193 = vshll.u32 %v4031, 16
        %v5195 = vrot.slane %v5193, 1
        %v5196 = vsel %vm425, %v5192, %v5195
        %v5197 = vshrl.u32 %v4031, 16
        %v5199 = vor.u32 %v5197, %v5195
        %v5200 = vshll.u32 %v4032, 16
        %v5202 = vrot.slane %v5200, 1
        %v5203 = vsel %vm425, %v5199, %v5202
        %v5204 = vshrl.u32 %v4032, 16
        %v5206 = vor.u32 %v5204, %v5202
        %v5207 = vshll.u32 %v4033, 16
        %v5209 = vrot.slane %v5207, 1
        %v5210 = vsel %vm425, %v5206, %v5209
        %v5211 = vshrl.u32 %v4033, 16
        %v5213 = vor.u32 %v5211, %v5209
        %v5214 = vshll.u32 %v4034, 16
        %v5216 = vrot.slane %v5214, 1
        %v5217 = vsel %vm425, %v5213, %v5216
        %v5218 = vshrl.u32 %v4034, 16
        %v5220 = vor.u32 %v5218, %v5216
        %v5221 = vshll.u32 %v4035, 16
        %v5223 = vrot.slane %v5221, 1
        %v5224 = vsel %vm425, %v5220, %v5223
        %v5225 = vshrl.u32 %v4035, 16
        %v5227 = vor.u32 %v5225, %v5223
        %v5228 = vshll.u32 %v4036, 16
        %v5230 = vrot.slane %v5228, 1
        %v5231 = vsel %vm425, %v5227, %v5230
        %v5232 = vshrl.u32 %v4036, 16
        %v5234 = vor.u32 %v5232, %v5230
        %v5235 = vshll.u32 %v4037, 16
        %v5237 = vrot.slane %v5235, 1
        %v5238 = vsel %vm425, %v5234, %v5237
        %v5239 = vshrl.u32 %v4037, 16
        %v5241 = vor.u32 %v5239, %v5237
        %v5242 = vshll.u32 %v4038, 16
        %v5244 = vrot.slane %v5242, 1
        %v5245 = vsel %vm425, %v5241, %v5244
        %v5246 = vshrl.u32 %v4038, 16
        %v5248 = vor.u32 %v5246, %v5244
        %v5249 = vshll.u32 %v4039, 16
        %v5251 = vrot.slane %v5249, 1
        %v5252 = vsel %vm425, %v5248, %v5251
        %v5253 = vshrl.u32 %v4039, 16
        %v5255 = vor.u32 %v5253, %v5251
        %v5256 = vshll.u32 %v4040, 16
        %v5258 = vrot.slane %v5256, 1
        %v5259 = vsel %vm425, %v5255, %v5258
        %v5260 = vshrl.u32 %v4040, 16
        %v5262 = vor.u32 %v5260, %v5258
        %v5263 = vshll.u32 %v4041, 16
        %v5265 = vrot.slane %v5263, 1
        %v5266 = vsel %vm425, %v5262, %v5265
        %v5267 = vshrl.u32 %v4041, 16
        %v5269 = vor.u32 %v5267, %v5265
        %v5270 = vshll.u32 %v4042, 16
        %v5272 = vrot.slane %v5270, 1
        %v5273 = vsel %vm425, %v5269, %v5272
        %v5274 = vshrl.u32 %v4042, 16
        %v5276 = vor.u32 %v5274, %v5272
        %v5277 = vshll.u32 %v4043, 16
        %v5279 = vrot.slane %v5277, 1
        %v5280 = vsel %vm425, %v5276, %v5279
        %v5281 = vshrl.u32 %v4043, 16
        %v5283 = vor.u32 %v5281, %v5279
        %v5284 = vshll.u32 %v4044, 16
        %v5286 = vrot.slane %v5284, 1
        %v5287 = vsel %vm425, %v5283, %v5286
        %v5288 = vshrl.u32 %v4044, 16
        %v5290 = vor.u32 %v5288, %v5286
        %v5291 = vshll.u32 %v4045, 16
        %v5293 = vrot.slane %v5291, 1
        %v5294 = vsel %vm425, %v5290, %v5293
        %v5295 = vshrl.u32 %v4045, 16
        %v5297 = vor.u32 %v5295, %v5293
        %v5298 = vshll.u32 %v4046, 16
        %v5300 = vrot.slane %v5298, 1
        %v5301 = vsel %vm425, %v5297, %v5300
        %v5302 = vshrl.u32 %v4046, 16
        %v5304 = vor.u32 %v5302, %v5300
        %v5305 = vshll.u32 %v4047, 16
        %v5307 = vrot.slane %v5305, 1
        %v5308 = vsel %vm425, %v5304, %v5307
        %v5309 = vshrl.u32 %v4047, 16
        %v5311 = vor.u32 %v5309, %v5307
        %v5312 = vshll.u32 %v4048, 16
        %v5314 = vrot.slane %v5312, 1
        %v5315 = vsel %vm425, %v5311, %v5314
        %v5316 = vshrl.u32 %v4048, 16
        %v5318 = vor.u32 %v5316, %v5314
        %v5319 = vshll.u32 %v4049, 16
        %v5321 = vrot.slane %v5319, 1
        %v5322 = vsel %vm425, %v5318, %v5321
        %v5323 = vshrl.u32 %v4049, 16
        %v5325 = vor.u32 %v5323, %v5321
        %v5326 = vshll.u32 %v4050, 16
        %v5328 = vrot.slane %v5326, 1
        %v5329 = vsel %vm425, %v5325, %v5328
        %v5330 = vshrl.u32 %v4050, 16
        %v5332 = vor.u32 %v5330, %v5328
        %v5333 = vshll.u32 %v4051, 16
        %v5335 = vrot.slane %v5333, 1
        %v5336 = vsel %vm425, %v5332, %v5335
        %v5337 = vshrl.u32 %v4051, 16
        %v5339 = vor.u32 %v5337, %v5335
        %v5340 = vshll.u32 %v4052, 16
        %v5342 = vrot.slane %v5340, 1
        %v5343 = vsel %vm425, %v5339, %v5342
        %v5344 = vshrl.u32 %v4052, 16
        %v5346 = vor.u32 %v5344, %v5342
        %v5347 = vshll.u32 %v4053, 16
        %v5349 = vrot.slane %v5347, 1
        %v5350 = vsel %vm425, %v5346, %v5349
        %v5351 = vshrl.u32 %v4053, 16
        %v5353 = vor.u32 %v5351, %v5349
        %v5354 = vshll.u32 %v4054, 16
        %v5356 = vrot.slane %v5354, 1
        %v5357 = vsel %vm425, %v5353, %v5356
        %v5358 = vshrl.u32 %v4054, 16
        %v5360 = vor.u32 %v5358, %v5356
        %v5361 = vshll.u32 %v4055, 16
        %v5363 = vrot.slane %v5361, 1
        %v5364 = vsel %vm425, %v5360, %v5363
        %v5365 = vshrl.u32 %v4055, 16
        %v5367 = vor.u32 %v5365, %v5363
        %v5368 = vshll.u32 %v4056, 16
        %v5370 = vrot.slane %v5368, 1
        %v5371 = vsel %vm425, %v5367, %v5370
        %v5372 = vshrl.u32 %v4056, 16
        %v5374 = vor.u32 %v5372, %v5370
        %v5375 = vshll.u32 %v4057, 16
        %v5377 = vrot.slane %v5375, 1
        %v5378 = vsel %vm425, %v5374, %v5377
        %v5379 = vshrl.u32 %v4057, 16
        %v5381 = vor.u32 %v5379, %v5377
        %v5382 = vshll.u32 %v4058, 16
        %v5384 = vrot.slane %v5382, 1
        %v5385 = vsel %vm425, %v5381, %v5384
        %v5386 = vshrl.u32 %v4058, 16
        %v5388 = vor.u32 %v5386, %v5384
        %v5389 = vshll.u32 %v4059, 16
        %v5391 = vrot.slane %v5389, 1
        %v5392 = vsel %vm425, %v5388, %v5391
        %v5393 = vshrl.u32 %v4059, 16
        %v5395 = vor.u32 %v5393, %v5391
        %v5396 = vshll.u32 %v4060, 16
        %v5398 = vrot.slane %v5396, 1
        %v5399 = vsel %vm425, %v5395, %v5398
        %v5400 = vshrl.u32 %v4060, 16
        %v5402 = vor.u32 %v5400, %v5398
        %v5403 = vshll.u32 %v4061, 16
        %v5405 = vrot.slane %v5403, 1
        %v5406 = vsel %vm425, %v5402, %v5405
        %v5407 = vshrl.u32 %v4061, 16
        %v5409 = vor.u32 %v5407, %v5405
        %v5410 = vshll.u32 %v4062, 16
        %v5412 = vrot.slane %v5410, 1
        %v5413 = vsel %vm425, %v5409, %v5412
        %v5414 = vshrl.u32 %v4062, 16
        %v5416 = vor.u32 %v5414, %v5412
        %v5417 = vshll.u32 %v4063, 16
        %v5419 = vrot.slane %v5417, 1
        %v5420 = vsel %vm425, %v5416, %v5419
        %v5421 = vshrl.u32 %v4063, 16
        %v5423 = vor.u32 %v5421, %v5419
        %v5424 = vshll.u32 %v4064, 16
        %v5426 = vrot.slane %v5424, 1
        %v5427 = vsel %vm425, %v5423, %v5426
        %v5428 = vshrl.u32 %v4064, 16
        %v5430 = vor.u32 %v5428, %v5426
        %v5431 = vshll.u32 %v4065, 16
        %v5433 = vrot.slane %v5431, 1
        %v5434 = vsel %vm425, %v5430, %v5433
        %v5435 = vshrl.u32 %v4065, 16
        %v5437 = vor.u32 %v5435, %v5433
        %v5438 = vshll.u32 %v4066, 16
        %v5440 = vrot.slane %v5438, 1
        %v5441 = vsel %vm425, %v5437, %v5440
        %v5442 = vshrl.u32 %v4066, 16
        %v5444 = vor.u32 %v5442, %v5440
        %v5445 = vshll.u32 %v4067, 16
        %v5447 = vrot.slane %v5445, 1
        %v5448 = vsel %vm425, %v5444, %v5447
        %v5449 = vshrl.u32 %v4067, 16
        %v5451 = vor.u32 %v5449, %v5447
        %v5452 = vshll.u32 %v4068, 16
        %v5454 = vrot.slane %v5452, 1
        %v5455 = vsel %vm425, %v5451, %v5454
        %v5456 = vshrl.u32 %v4068, 16
        %v5458 = vor.u32 %v5456, %v5454
        %v5459 = vshll.u32 %v4069, 16
        %v5461 = vrot.slane %v5459, 1
        %v5462 = vsel %vm425, %v5458, %v5461
        %v5463 = vshrl.u32 %v4069, 16
        %v5465 = vor.u32 %v5463, %v5461
        %v5466 = vshll.u32 %v4070, 16
        %v5468 = vrot.slane %v5466, 1
        %v5469 = vsel %vm425, %v5465, %v5468
        %v5470 = vshrl.u32 %v4070, 16
        %v5472 = vor.u32 %v5470, %v5468
        %v5473 = vshll.u32 %v4071, 16
        %v5475 = vrot.slane %v5473, 1
        %v5476 = vsel %vm425, %v5472, %v5475
        %v5477 = vshrl.u32 %v4071, 16
        %v5479 = vor.u32 %v5477, %v5475
        %v5480 = vshll.u32 %v4072, 16
        %v5482 = vrot.slane %v5480, 1
        %v5483 = vsel %vm425, %v5479, %v5482
        %v5484 = vshrl.u32 %v4072, 16
        %v5486 = vor.u32 %v5484, %v5482
        %v5487 = vshll.u32 %v4073, 16
        %v5489 = vrot.slane %v5487, 1
        %v5490 = vsel %vm425, %v5486, %v5489
        %v5491 = vshrl.u32 %v4073, 16
        %v5493 = vor.u32 %v5491, %v5489
        %v5494 = vshll.u32 %v4074, 16
        %v5496 = vrot.slane %v5494, 1
        %v5497 = vsel %vm425, %v5493, %v5496
        %v5498 = vshrl.u32 %v4074, 16
        %v5500 = vor.u32 %v5498, %v5496
        %v5501 = vshll.u32 %v4075, 16
        %v5503 = vrot.slane %v5501, 1
        %v5504 = vsel %vm425, %v5500, %v5503
        %v5505 = vshrl.u32 %v4075, 16
        %v5507 = vor.u32 %v5505, %v5503
        %v5508 = vshll.u32 %v4076, 16
        %v5510 = vrot.slane %v5508, 1
        %v5511 = vsel %vm425, %v5507, %v5510
        %v5512 = vshrl.u32 %v4076, 16
        %v5514 = vor.u32 %v5512, %v5510
        %v5515 = vshll.u32 %v4077, 16
        %v5517 = vrot.slane %v5515, 1
        %v5518 = vsel %vm425, %v5514, %v5517
        %v5519 = vshrl.u32 %v4077, 16
        %v5521 = vor.u32 %v5519, %v5517
        %v5522 = vshll.u32 %v4078, 16
        %v5524 = vrot.slane %v5522, 1
        %v5525 = vsel %vm425, %v5521, %v5524
        %v5526 = vshrl.u32 %v4078, 16
        %v5528 = vor.u32 %v5526, %v5524
        %v5529 = vshll.u32 %v4079, 16
        %v5531 = vrot.slane %v5529, 1
        %v5532 = vsel %vm425, %v5528, %v5531
        %v5533 = vshrl.u32 %v4079, 16
        %v5535 = vor.u32 %v5533, %v5531
        %v5536 = vshll.u32 %v4080, 16
        %v5538 = vrot.slane %v5536, 1
        %v5539 = vsel %vm425, %v5535, %v5538
        %v5540 = vshrl.u32 %v4080, 16
        %v5542 = vor.u32 %v5540, %v5538
        %v5543 = vshll.u32 %v4081, 16
        %v5545 = vrot.slane %v5543, 1
        %v5546 = vsel %vm425, %v5542, %v5545
        %v5547 = vshrl.u32 %v4081, 16
        %v5549 = vor.u32 %v5547, %v5545
        %v5550 = vshll.u32 %v4082, 16
        %v5552 = vrot.slane %v5550, 1
        %v5553 = vsel %vm425, %v5549, %v5552
        %v5554 = vshrl.u32 %v4082, 16
        %v5556 = vor.u32 %v5554, %v5552
        %v5557 = vshll.u32 %v4083, 16
        %v5559 = vrot.slane %v5557, 1
        %v5560 = vsel %vm425, %v5556, %v5559
        %v5561 = vshrl.u32 %v4083, 16
        %v5563 = vor.u32 %v5561, %v5559
        %v5564 = vshll.u32 %v4084, 16
        %v5566 = vrot.slane %v5564, 1
        %v5567 = vsel %vm425, %v5563, %v5566
        %v5568 = vshrl.u32 %v4084, 16
        %v5570 = vor.u32 %v5568, %v5566
        %v5571 = vshll.u32 %v4085, 16
        %v5573 = vrot.slane %v5571, 1
        %v5574 = vsel %vm425, %v5570, %v5573
        %v5575 = vshrl.u32 %v4085, 16
        %v5577 = vor.u32 %v5575, %v5573
        %v5578 = vshll.u32 %v4086, 16
        %v5580 = vrot.slane %v5578, 1
        %v5581 = vsel %vm425, %v5577, %v5580
        %v5582 = vshrl.u32 %v4086, 16
        %v5584 = vor.u32 %v5582, %v5580
        %v5585 = vshll.u32 %v4087, 16
        %v5587 = vrot.slane %v5585, 1
        %v5588 = vsel %vm425, %v5584, %v5587
        %v5589 = vshrl.u32 %v4087, 16
        %v5591 = vor.u32 %v5589, %v5587
        %v5592 = vshll.u32 %v4088, 16
        %v5594 = vrot.slane %v5592, 1
        %v5595 = vsel %vm425, %v5591, %v5594
        %v5596 = vshrl.u32 %v4088, 16
        %v5598 = vor.u32 %v5596, %v5594
        %v5599 = vshll.u32 %v4089, 16
        %v5601 = vrot.slane %v5599, 1
        %v5602 = vsel %vm425, %v5598, %v5601
        %v5603 = vshrl.u32 %v4089, 16
        %v5605 = vor.u32 %v5603, %v5601
        %v5606 = vshll.u32 %v4090, 16
        %v5608 = vrot.slane %v5606, 1
        %v5609 = vsel %vm425, %v5605, %v5608
        %v5610 = vshrl.u32 %v4090, 16
        %v5612 = vor.u32 %v5610, %v5608
        %v5613 = vshll.u32 %v4091, 16
        %v5615 = vrot.slane %v5613, 1
        %v5616 = vsel %vm425, %v5612, %v5615
        %v5617 = vshrl.u32 %v4091, 16
        %v5619 = vor.u32 %v5617, %v5615
        %v5620 = vshll.u32 %v4092, 16
        %v5622 = vrot.slane %v5620, 1
        %v5623 = vsel %vm425, %v5619, %v5622
        %v5624 = vshrl.u32 %v4092, 16
        %v5626 = vor.u32 %v5624, %v5622
        %v5627 = vshll.u32 %v4093, 16
        %v5629 = vrot.slane %v5627, 1
        %v5630 = vsel %vm425, %v5626, %v5629
        %v5631 = vshrl.u32 %v4093, 16
        %v5633 = vor.u32 %v5631, %v5629
        %v5634 = vshll.u32 %v4094, 16
        %v5636 = vrot.slane %v5634, 1
        %v5637 = vsel %vm425, %v5633, %v5636
        %v5638 = vshrl.u32 %v4094, 16
        %v5640 = vor.u32 %v5638, %v5636
        %v5641 = vshll.u32 %v4095, 16
        %v5643 = vrot.slane %v5641, 1
        %v5644 = vsel %vm425, %v5640, %v5643
        %v5645 = vshrl.u32 %v4095, 16
        %v5647 = vor.u32 %v5645, %v5643
        %v5648 = vshll.u32 %v4096, 16
        %v5650 = vrot.slane %v5648, 1
        %v5651 = vsel %vm425, %v5647, %v5650
        %v5652 = vshrl.u32 %v4096, 16
        %v5654 = vor.u32 %v5652, %v5650
        %v5655 = vshll.u32 %v4097, 16
        %v5657 = vrot.slane %v5655, 1
        %v5658 = vsel %vm425, %v5654, %v5657
        %v5659 = vshrl.u32 %v4097, 16
        %v5661 = vor.u32 %v5659, %v5657
        %v5662 = vshll.u32 %v4098, 16
        %v5664 = vrot.slane %v5662, 1
        %v5665 = vsel %vm425, %v5661, %v5664
        %v5666 = vshrl.u32 %v4098, 16
        %v5668 = vor.u32 %v5666, %v5664
        %v5669 = vshll.u32 %v4099, 16
        %v5671 = vrot.slane %v5669, 1
        %v5672 = vsel %vm425, %v5668, %v5671
        %v5673 = vshrl.u32 %v4099, 16
        %v5675 = vor.u32 %v5673, %v5671
        %v5677 = vshll.u32 %v5114, 16
        %v5679 = vrot.slane %v5677, 1
        %v5680 = vsel %vm425, %v5675, %v5679
        %v5682 = vsel %vm1070, %v5126, 0
        %v5685 = vsel %vm1070, %v5133, 0
        %v5688 = vsel %vm1070, %v5140, 0
        %v5691 = vsel %vm1070, %v5147, 0
        %v5694 = vsel %vm1070, %v5154, 0
        %v5697 = vsel %vm1070, %v5161, 0
        %v5700 = vsel %vm1070, %v5168, 0
        %v5703 = vsel %vm1070, %v5175, 0
        %v5706 = vsel %vm1070, %v5182, 0
        %v5709 = vsel %vm1070, %v5189, 0
        %v5712 = vsel %vm1070, %v5196, 0
        %v5715 = vsel %vm1070, %v5203, 0
        %v5718 = vsel %vm1070, %v5210, 0
        %v5721 = vsel %vm1070, %v5217, 0
        %v5724 = vsel %vm1070, %v5224, 0
        %v5727 = vsel %vm1070, %v5231, 0
        %v5730 = vsel %vm1070, %v5238, 0
        %v5733 = vsel %vm1070, %v5245, 0
        %v5736 = vsel %vm1070, %v5252, 0
        %v5739 = vsel %vm1070, %v5259, 0
        %v5742 = vsel %vm1070, %v5266, 0
        %v5745 = vsel %vm1070, %v5273, 0
        %v5748 = vsel %vm1070, %v5280, 0
        %v5751 = vsel %vm1070, %v5287, 0
        %v5754 = vsel %vm1070, %v5294, 0
        %v5757 = vsel %vm1070, %v5301, 0
        %v5760 = vsel %vm1070, %v5308, 0
        %v5763 = vsel %vm1070, %v5315, 0
        %v5766 = vsel %vm1070, %v5322, 0
        %v5769 = vsel %vm1070, %v5329, 0
        %v5772 = vsel %vm1070, %v5336, 0
        %v5775 = vsel %vm1070, %v5343, 0
        %v5778 = vsel %vm1070, %v5350, 0
        %v5781 = vsel %vm1070, %v5357, 0
        %v5784 = vsel %vm1070, %v5364, 0
        %v5787 = vsel %vm1070, %v5371, 0
        %v5790 = vsel %vm1070, %v5378, 0
        %v5793 = vsel %vm1070, %v5385, 0
        %v5796 = vsel %vm1070, %v5392, 0
        %v5799 = vsel %vm1070, %v5399, 0
        %v5802 = vsel %vm1070, %v5406, 0
        %v5805 = vsel %vm1070, %v5413, 0
        %v5808 = vsel %vm1070, %v5420, 0
        %v5811 = vsel %vm1070, %v5427, 0
        %v5814 = vsel %vm1070, %v5434, 0
        %v5817 = vsel %vm1070, %v5441, 0
        %v5820 = vsel %vm1070, %v5448, 0
        %v5823 = vsel %vm1070, %v5455, 0
        %v5826 = vsel %vm1070, %v5462, 0
        %v5829 = vsel %vm1070, %v5469, 0
        %v5832 = vsel %vm1070, %v5476, 0
        %v5835 = vsel %vm1070, %v5483, 0
        %v5838 = vsel %vm1070, %v5490, 0
        %v5841 = vsel %vm1070, %v5497, 0
        %v5844 = vsel %vm1070, %v5504, 0
        %v5847 = vsel %vm1070, %v5511, 0
        %v5850 = vsel %vm1070, %v5518, 0
        %v5853 = vsel %vm1070, %v5525, 0
        %v5856 = vsel %vm1070, %v5532, 0
        %v5859 = vsel %vm1070, %v5539, 0
        %v5862 = vsel %vm1070, %v5546, 0
        %v5865 = vsel %vm1070, %v5553, 0
        %v5868 = vsel %vm1070, %v5560, 0
        %v5871 = vsel %vm1070, %v5567, 0
        %v5874 = vsel %vm1070, %v5574, 0
        %v5877 = vsel %vm1070, %v5581, 0
        %v5880 = vsel %vm1070, %v5588, 0
        %v5883 = vsel %vm1070, %v5595, 0
        %v5886 = vsel %vm1070, %v5602, 0
        %v5889 = vsel %vm1070, %v5609, 0
        %v5892 = vsel %vm1070, %v5616, 0
        %v5895 = vsel %vm1070, %v5623, 0
        %v5898 = vsel %vm1070, %v5630, 0
        %v5901 = vsel %vm1070, %v5637, 0
        %v5904 = vsel %vm1070, %v5644, 0
        %v5907 = vsel %vm1070, %v5651, 0
        %v5910 = vsel %vm1070, %v5658, 0
        %v5913 = vsel %vm1070, %v5665, 0
        %v5916 = vsel %vm1070, %v5672, 0
        %v5919 = vsel %vm1070, %v5680, 0
        %v5922 = vand.u32 %v5116, %v1314
        %5924 = vmatprep.subr.bf16.mxu0 0
        %5925 = vmatpush1.bf16.msra.mxu0 0
        %5926 = vmatprep.subr.bf16.mxu0 0
        %5927 = vmatpush1.bf16.msra.mxu0 0
        %5928 = vmatprep.subr.bf16.mxu0 0
        %5929 = vmatpush1.bf16.msra.mxu0 0
        %5930 = vmatprep.subr.bf16.mxu0 0
        %5931 = vmatpush1.bf16.msra.mxu0 0
        %5932 = vmatprep.subr.bf16.mxu0 0
        %5933 = vmatpush1.bf16.msra.mxu0 0
        %5934 = vmatprep.subr.bf16.mxu0 0
        %5935 = vmatpush1.bf16.msra.mxu0 0
        %5936 = vmatprep.subr.bf16.mxu0 0
        %5937 = vmatpush1.bf16.msra.mxu0 0
        %5938 = vmatprep.subr.bf16.mxu0 0
        %5939 = vmatpush1.bf16.msra.mxu0 %v5922
        %5940 = vmatprep.subr.bf16.mxu0 0
        %5941 = vmatpush2.bf16.msra.mxu0 0
        %5942 = vmatprep.subr.bf16.mxu0 0
        %5943 = vmatpush2.bf16.msra.mxu0 0
        %5944 = vmatprep.subr.bf16.mxu0 0
        %5945 = vmatpush2.bf16.msra.mxu0 0
        %5946 = vmatprep.subr.bf16.mxu0 0
        %5947 = vmatpush2.bf16.msra.mxu0 0
        %5948 = vmatprep.subr.bf16.mxu0 0
        %5949 = vmatpush2.bf16.msra.mxu0 0
        %5950 = vmatprep.subr.bf16.mxu0 0
        %5951 = vmatpush2.bf16.msra.mxu0 0
        %5952 = vmatprep.subr.bf16.mxu0 0
        %5953 = vmatpush2.bf16.msra.mxu0 0
        %5954 = vmatprep.subr.bf16.mxu0 0
        %5955 = vmatpush2.bf16.msra.mxu0 0
        %5956 = vmatprep.mubr.bf16.mxu0 0
        %5957 = vmatmul.mubr.bf16.gmra.mxu0 %v5682
        %v5958 = vpop.f32.mrf.mxu0
        %v5959 = vadd.f32 0.0, %v5958
        %v5960 = vpop.f32.mrf.mxu0
        %v5961 = vpop.f32.mrf.mxu0
        %v5962 = vadd.f32 0.0, %v5961
        %v5963 = vpop.f32.mrf.mxu0
        %5964 = vmatprep.mubr.bf16.mxu0 0
        %5965 = vmatmul.mubr.bf16.gmra.mxu0 %v5685
        %v5966 = vpop.f32.mrf.mxu0
        %v5967 = vadd.f32 0.0, %v5966
        %v5968 = vpop.f32.mrf.mxu0
        %v5969 = vpop.f32.mrf.mxu0
        %v5970 = vadd.f32 0.0, %v5969
        %v5971 = vpop.f32.mrf.mxu0
        %5972 = vmatprep.mubr.bf16.mxu0 0
        %5973 = vmatmul.mubr.bf16.gmra.mxu0 %v5688
        %v5974 = vpop.f32.mrf.mxu0
        %v5975 = vpop.f32.mrf.mxu0
        %v5976 = vpop.f32.mrf.mxu0
        %v5977 = vadd.f32 0.0, %v5976
        %v5978 = vpop.f32.mrf.mxu0
        %5979 = vmatprep.mubr.bf16.mxu0 0
        %5980 = vmatmul.mubr.bf16.gmra.mxu0 %v5691
        %v5981 = vpop.f32.mrf.mxu0
        %v5982 = vadd.f32 0.0, %v5981
        %v5983 = vpop.f32.mrf.mxu0
        %v5984 = vpop.f32.mrf.mxu0
        %v5985 = vadd.f32 0.0, %v5984
        %v5986 = vpop.f32.mrf.mxu0
        %5987 = vmatprep.mubr.bf16.mxu0 0
        %5988 = vmatmul.mubr.bf16.gmra.mxu0 %v5694
        %v5989 = vpop.f32.mrf.mxu0
        %v5990 = vadd.f32 0.0, %v5989
        %v5991 = vpop.f32.mrf.mxu0
        %v5992 = vpop.f32.mrf.mxu0
        %v5993 = vpop.f32.mrf.mxu0
        %5994 = vmatprep.mubr.bf16.mxu0 0
        %5995 = vmatmul.mubr.bf16.gmra.mxu0 %v5697
        %v5996 = vpop.f32.mrf.mxu0
        %v5997 = vadd.f32 0.0, %v5996
        %v5998 = vpop.f32.mrf.mxu0
        %v5999 = vpop.f32.mrf.mxu0
        %v6000 = vadd.f32 0.0, %v5999
        %v6001 = vpop.f32.mrf.mxu0
        %6002 = vmatprep.mubr.bf16.mxu0 0
        %6003 = vmatmul.mubr.bf16.gmra.mxu0 %v5700
        %v6004 = vpop.f32.mrf.mxu0
        %v6005 = vadd.f32 0.0, %v6004
        %v6006 = vpop.f32.mrf.mxu0
        %v6007 = vpop.f32.mrf.mxu0
        %v6008 = vadd.f32 0.0, %v6007
        %v6009 = vpop.f32.mrf.mxu0
        %6010 = vmatprep.mubr.bf16.mxu0 0
        %6011 = vmatmul.mubr.bf16.gmra.mxu0 %v5703
        %v6012 = vpop.f32.mrf.mxu0
        %v6013 = vpop.f32.mrf.mxu0
        %v6014 = vpop.f32.mrf.mxu0
        %v6015 = vadd.f32 0.0, %v6014
        %v6016 = vpop.f32.mrf.mxu0
        %6017 = vmatprep.mubr.bf16.mxu0 0
        %6018 = vmatmul.mubr.bf16.gmra.mxu0 %v5706
        %v6019 = vpop.f32.mrf.mxu0
        %v6020 = vadd.f32 0.0, %v6019
        %v6021 = vpop.f32.mrf.mxu0
        %v6022 = vpop.f32.mrf.mxu0
        %v6023 = vadd.f32 0.0, %v6022
        %v6024 = vpop.f32.mrf.mxu0
        %6025 = vmatprep.mubr.bf16.mxu0 0
        %6026 = vmatmul.mubr.bf16.gmra.mxu0 %v5709
        %v6027 = vpop.f32.mrf.mxu0
        %v6028 = vadd.f32 0.0, %v6027
        %v6029 = vpop.f32.mrf.mxu0
        %v6030 = vpop.f32.mrf.mxu0
        %v6031 = vpop.f32.mrf.mxu0
        %6032 = vmatprep.mubr.bf16.mxu0 0
        %6033 = vmatmul.mubr.bf16.gmra.mxu0 %v5712
        %v6034 = vpop.f32.mrf.mxu0
        %v6035 = vadd.f32 0.0, %v6034
        %v6036 = vpop.f32.mrf.mxu0
        %v6037 = vpop.f32.mrf.mxu0
        %v6038 = vadd.f32 0.0, %v6037
        %v6039 = vpop.f32.mrf.mxu0
        %6040 = vmatprep.mubr.bf16.mxu0 0
        %6041 = vmatmul.mubr.bf16.gmra.mxu0 %v5715
        %v6042 = vpop.f32.mrf.mxu0
        %v6043 = vadd.f32 0.0, %v6042
        %v6044 = vpop.f32.mrf.mxu0
        %v6045 = vpop.f32.mrf.mxu0
        %v6046 = vadd.f32 0.0, %v6045
        %v6047 = vpop.f32.mrf.mxu0
        %6048 = vmatprep.mubr.bf16.mxu0 0
        %6049 = vmatmul.mubr.bf16.gmra.mxu0 %v5718
        %v6050 = vpop.f32.mrf.mxu0
        %v6051 = vpop.f32.mrf.mxu0
        %v6052 = vpop.f32.mrf.mxu0
        %v6053 = vadd.f32 0.0, %v6052
        %v6054 = vpop.f32.mrf.mxu0
        %6055 = vmatprep.mubr.bf16.mxu0 0
        %6056 = vmatmul.mubr.bf16.gmra.mxu0 %v5721
        %v6057 = vpop.f32.mrf.mxu0
        %v6058 = vadd.f32 0.0, %v6057
        %v6059 = vpop.f32.mrf.mxu0
        %v6060 = vpop.f32.mrf.mxu0
        %v6061 = vadd.f32 0.0, %v6060
        %v6062 = vpop.f32.mrf.mxu0
        %6063 = vmatprep.mubr.bf16.mxu0 0
        %6064 = vmatmul.mubr.bf16.gmra.mxu0 %v5724
        %v6065 = vpop.f32.mrf.mxu0
        %v6066 = vadd.f32 0.0, %v6065
        %v6067 = vpop.f32.mrf.mxu0
        %v6068 = vpop.f32.mrf.mxu0
        %v6069 = vpop.f32.mrf.mxu0
        %6070 = vmatprep.mubr.bf16.mxu0 0
        %6071 = vmatmul.mubr.bf16.gmra.mxu0 %v5727
        %v6072 = vpop.f32.mrf.mxu0
        %v6073 = vadd.f32 0.0, %v6072
        %v6074 = vpop.f32.mrf.mxu0
        %v6075 = vpop.f32.mrf.mxu0
        %v6076 = vadd.f32 0.0, %v6075
        %v6077 = vpop.f32.mrf.mxu0
        %6078 = vmatprep.mubr.bf16.mxu0 0
        %6079 = vmatmul.mubr.bf16.gmra.mxu0 %v5730
        %v6080 = vpop.f32.mrf.mxu0
        %v6081 = vadd.f32 0.0, %v6080
        %v6082 = vpop.f32.mrf.mxu0
        %v6083 = vpop.f32.mrf.mxu0
        %v6084 = vadd.f32 0.0, %v6083
        %v6085 = vpop.f32.mrf.mxu0
        %6086 = vmatprep.mubr.bf16.mxu0 0
        %6087 = vmatmul.mubr.bf16.gmra.mxu0 %v5733
        %v6088 = vpop.f32.mrf.mxu0
        %v6089 = vpop.f32.mrf.mxu0
        %v6090 = vpop.f32.mrf.mxu0
        %v6091 = vadd.f32 0.0, %v6090
        %v6092 = vpop.f32.mrf.mxu0
        %6093 = vmatprep.mubr.bf16.mxu0 0
        %6094 = vmatmul.mubr.bf16.gmra.mxu0 %v5736
        %v6095 = vpop.f32.mrf.mxu0
        %v6096 = vadd.f32 0.0, %v6095
        %v6097 = vpop.f32.mrf.mxu0
        %v6098 = vpop.f32.mrf.mxu0
        %v6099 = vadd.f32 0.0, %v6098
        %v6100 = vpop.f32.mrf.mxu0
        %6101 = vmatprep.mubr.bf16.mxu0 0
        %6102 = vmatmul.mubr.bf16.gmra.mxu0 %v5739
        %v6103 = vpop.f32.mrf.mxu0
        %v6104 = vadd.f32 0.0, %v6103
        %v6105 = vpop.f32.mrf.mxu0
        %v6106 = vpop.f32.mrf.mxu0
        %v6107 = vpop.f32.mrf.mxu0
        %6108 = vmatprep.mubr.bf16.mxu0 0
        %6109 = vmatmul.mubr.bf16.gmra.mxu0 %v5742
        %v6110 = vpop.f32.mrf.mxu0
        %v6111 = vadd.f32 0.0, %v6110
        %v6112 = vpop.f32.mrf.mxu0
        %v6113 = vpop.f32.mrf.mxu0
        %v6114 = vadd.f32 0.0, %v6113
        %v6115 = vpop.f32.mrf.mxu0
        %6116 = vmatprep.mubr.bf16.mxu0 0
        %6117 = vmatmul.mubr.bf16.gmra.mxu0 %v5745
        %v6118 = vpop.f32.mrf.mxu0
        %v6119 = vadd.f32 0.0, %v6118
        %v6120 = vpop.f32.mrf.mxu0
        %v6121 = vpop.f32.mrf.mxu0
        %v6122 = vadd.f32 0.0, %v6121
        %v6123 = vpop.f32.mrf.mxu0
        %6124 = vmatprep.mubr.bf16.mxu0 0
        %6125 = vmatmul.mubr.bf16.gmra.mxu0 %v5748
        %v6126 = vpop.f32.mrf.mxu0
        %v6127 = vpop.f32.mrf.mxu0
        %v6128 = vpop.f32.mrf.mxu0
        %v6129 = vadd.f32 0.0, %v6128
        %v6130 = vpop.f32.mrf.mxu0
        %6131 = vmatprep.mubr.bf16.mxu0 0
        %6132 = vmatmul.mubr.bf16.gmra.mxu0 %v5751
        %v6133 = vpop.f32.mrf.mxu0
        %v6134 = vadd.f32 0.0, %v6133
        %v6135 = vpop.f32.mrf.mxu0
        %v6136 = vpop.f32.mrf.mxu0
        %v6137 = vadd.f32 0.0, %v6136
        %v6138 = vpop.f32.mrf.mxu0
        %6139 = vmatprep.mubr.bf16.mxu0 0
        %6140 = vmatmul.mubr.bf16.gmra.mxu0 %v5754
        %v6141 = vpop.f32.mrf.mxu0
        %v6142 = vadd.f32 0.0, %v6141
        %v6143 = vpop.f32.mrf.mxu0
        %v6144 = vpop.f32.mrf.mxu0
        %v6145 = vpop.f32.mrf.mxu0
        %6146 = vmatprep.mubr.bf16.mxu0 0
        %6147 = vmatmul.mubr.bf16.gmra.mxu0 %v5757
        %v6148 = vpop.f32.mrf.mxu0
        %v6149 = vadd.f32 0.0, %v6148
        %v6150 = vpop.f32.mrf.mxu0
        %v6151 = vpop.f32.mrf.mxu0
        %v6152 = vadd.f32 0.0, %v6151
        %v6153 = vpop.f32.mrf.mxu0
        %6154 = vmatprep.mubr.bf16.mxu0 0
        %6155 = vmatmul.mubr.bf16.gmra.mxu0 %v5760
        %v6156 = vpop.f32.mrf.mxu0
        %v6157 = vadd.f32 0.0, %v6156
        %v6158 = vpop.f32.mrf.mxu0
        %v6159 = vpop.f32.mrf.mxu0
        %v6160 = vadd.f32 0.0, %v6159
        %v6161 = vpop.f32.mrf.mxu0
        %6162 = vmatprep.mubr.bf16.mxu0 0
        %6163 = vmatmul.mubr.bf16.gmra.mxu0 %v5763
        %v6164 = vpop.f32.mrf.mxu0
        %v6165 = vpop.f32.mrf.mxu0
        %v6166 = vpop.f32.mrf.mxu0
        %v6167 = vadd.f32 0.0, %v6166
        %v6168 = vpop.f32.mrf.mxu0
        %6169 = vmatprep.mubr.bf16.mxu0 0
        %6170 = vmatmul.mubr.bf16.gmra.mxu0 %v5766
        %v6171 = vpop.f32.mrf.mxu0
        %v6172 = vadd.f32 0.0, %v6171
        %v6173 = vpop.f32.mrf.mxu0
        %v6174 = vpop.f32.mrf.mxu0
        %v6175 = vadd.f32 0.0, %v6174
        %v6176 = vpop.f32.mrf.mxu0
        %6177 = vmatprep.mubr.bf16.mxu0 0
        %6178 = vmatmul.mubr.bf16.gmra.mxu0 %v5769
        %v6179 = vpop.f32.mrf.mxu0
        %v6180 = vadd.f32 0.0, %v6179
        %v6181 = vpop.f32.mrf.mxu0
        %v6182 = vpop.f32.mrf.mxu0
        %v6183 = vpop.f32.mrf.mxu0
        %6184 = vmatprep.mubr.bf16.mxu0 0
        %6185 = vmatmul.mubr.bf16.gmra.mxu0 %v5772
        %v6186 = vpop.f32.mrf.mxu0
        %v6187 = vadd.f32 0.0, %v6186
        %v6188 = vpop.f32.mrf.mxu0
        %v6189 = vpop.f32.mrf.mxu0
        %v6190 = vadd.f32 0.0, %v6189
        %v6191 = vpop.f32.mrf.mxu0
        %6192 = vmatprep.mubr.bf16.mxu0 0
        %6193 = vmatmul.mubr.bf16.gmra.mxu0 %v5775
        %v6194 = vpop.f32.mrf.mxu0
        %v6195 = vadd.f32 0.0, %v6194
        %v6196 = vpop.f32.mrf.mxu0
        %v6197 = vpop.f32.mrf.mxu0
        %v6198 = vadd.f32 0.0, %v6197
        %v6199 = vpop.f32.mrf.mxu0
        %6200 = vmatprep.mubr.bf16.mxu0 0
        %6201 = vmatmul.mubr.bf16.gmra.mxu0 %v5778
        %v6202 = vpop.f32.mrf.mxu0
        %v6203 = vpop.f32.mrf.mxu0
        %v6204 = vpop.f32.mrf.mxu0
        %v6205 = vadd.f32 0.0, %v6204
        %v6206 = vpop.f32.mrf.mxu0
        %6207 = vmatprep.mubr.bf16.mxu0 0
        %6208 = vmatmul.mubr.bf16.gmra.mxu0 %v5781
        %v6209 = vpop.f32.mrf.mxu0
        %v6210 = vadd.f32 0.0, %v6209
        %v6211 = vpop.f32.mrf.mxu0
        %v6212 = vpop.f32.mrf.mxu0
        %v6213 = vadd.f32 0.0, %v6212
        %v6214 = vpop.f32.mrf.mxu0
        %6215 = vmatprep.mubr.bf16.mxu0 0
        %6216 = vmatmul.mubr.bf16.gmra.mxu0 %v5784
        %v6217 = vpop.f32.mrf.mxu0
        %v6218 = vadd.f32 0.0, %v6217
        %v6219 = vpop.f32.mrf.mxu0
        %v6220 = vpop.f32.mrf.mxu0
        %v6221 = vpop.f32.mrf.mxu0
        %6222 = vmatprep.mubr.bf16.mxu0 0
        %6223 = vmatmul.mubr.bf16.gmra.mxu0 %v5787
        %v6224 = vpop.f32.mrf.mxu0
        %v6225 = vadd.f32 0.0, %v6224
        %v6226 = vpop.f32.mrf.mxu0
        %v6227 = vpop.f32.mrf.mxu0
        %v6228 = vadd.f32 0.0, %v6227
        %v6229 = vpop.f32.mrf.mxu0
        %6230 = vmatprep.mubr.bf16.mxu0 0
        %6231 = vmatmul.mubr.bf16.gmra.mxu0 %v5790
        %v6232 = vpop.f32.mrf.mxu0
        %v6233 = vadd.f32 0.0, %v6232
        %v6234 = vpop.f32.mrf.mxu0
        %v6235 = vpop.f32.mrf.mxu0
        %v6236 = vadd.f32 0.0, %v6235
        %v6237 = vpop.f32.mrf.mxu0
        %6238 = vmatprep.mubr.bf16.mxu0 0
        %6239 = vmatmul.mubr.bf16.gmra.mxu0 %v5793
        %v6240 = vpop.f32.mrf.mxu0
        %v6241 = vpop.f32.mrf.mxu0
        %v6242 = vpop.f32.mrf.mxu0
        %v6243 = vadd.f32 0.0, %v6242
        %v6244 = vpop.f32.mrf.mxu0
        %6245 = vmatprep.mubr.bf16.mxu0 0
        %6246 = vmatmul.mubr.bf16.gmra.mxu0 %v5796
        %v6247 = vpop.f32.mrf.mxu0
        %v6248 = vadd.f32 0.0, %v6247
        %v6249 = vpop.f32.mrf.mxu0
        %v6250 = vpop.f32.mrf.mxu0
        %v6251 = vadd.f32 0.0, %v6250
        %v6252 = vpop.f32.mrf.mxu0
        %6253 = vmatprep.mubr.bf16.mxu0 0
        %6254 = vmatmul.mubr.bf16.gmra.mxu0 %v5799
        %v6255 = vpop.f32.mrf.mxu0
        %v6256 = vadd.f32 0.0, %v6255
        %v6257 = vpop.f32.mrf.mxu0
        %v6258 = vpop.f32.mrf.mxu0
        %v6259 = vpop.f32.mrf.mxu0
        %6260 = vmatprep.mubr.bf16.mxu0 0
        %6261 = vmatmul.mubr.bf16.gmra.mxu0 %v5802
        %v6262 = vpop.f32.mrf.mxu0
        %v6263 = vadd.f32 0.0, %v6262
        %v6264 = vpop.f32.mrf.mxu0
        %v6265 = vpop.f32.mrf.mxu0
        %v6266 = vadd.f32 0.0, %v6265
        %v6267 = vpop.f32.mrf.mxu0
        %6268 = vmatprep.mubr.bf16.mxu0 0
        %6269 = vmatmul.mubr.bf16.gmra.mxu0 %v5805
        %v6270 = vpop.f32.mrf.mxu0
        %v6271 = vadd.f32 0.0, %v6270
        %v6272 = vpop.f32.mrf.mxu0
        %v6273 = vpop.f32.mrf.mxu0
        %v6274 = vadd.f32 0.0, %v6273
        %v6275 = vpop.f32.mrf.mxu0
        %6276 = vmatprep.mubr.bf16.mxu0 0
        %6277 = vmatmul.mubr.bf16.gmra.mxu0 %v5808
        %v6278 = vpop.f32.mrf.mxu0
        %v6279 = vpop.f32.mrf.mxu0
        %v6280 = vpop.f32.mrf.mxu0
        %v6281 = vadd.f32 0.0, %v6280
        %v6282 = vpop.f32.mrf.mxu0
        %6283 = vmatprep.mubr.bf16.mxu0 0
        %6284 = vmatmul.mubr.bf16.gmra.mxu0 %v5811
        %v6285 = vpop.f32.mrf.mxu0
        %v6286 = vadd.f32 0.0, %v6285
        %v6287 = vpop.f32.mrf.mxu0
        %v6288 = vpop.f32.mrf.mxu0
        %v6289 = vadd.f32 0.0, %v6288
        %v6290 = vpop.f32.mrf.mxu0
        %6291 = vmatprep.mubr.bf16.mxu0 0
        %6292 = vmatmul.mubr.bf16.gmra.mxu0 %v5814
        %v6293 = vpop.f32.mrf.mxu0
        %v6294 = vadd.f32 0.0, %v6293
        %v6295 = vpop.f32.mrf.mxu0
        %v6296 = vpop.f32.mrf.mxu0
        %v6297 = vpop.f32.mrf.mxu0
        %6298 = vmatprep.mubr.bf16.mxu0 0
        %6299 = vmatmul.mubr.bf16.gmra.mxu0 %v5817
        %v6300 = vpop.f32.mrf.mxu0
        %v6301 = vadd.f32 0.0, %v6300
        %v6302 = vpop.f32.mrf.mxu0
        %v6303 = vpop.f32.mrf.mxu0
        %v6304 = vadd.f32 0.0, %v6303
        %v6305 = vpop.f32.mrf.mxu0
        %6306 = vmatprep.mubr.bf16.mxu0 0
        %6307 = vmatmul.mubr.bf16.gmra.mxu0 %v5820
        %v6308 = vpop.f32.mrf.mxu0
        %v6309 = vadd.f32 0.0, %v6308
        %v6310 = vpop.f32.mrf.mxu0
        %v6311 = vpop.f32.mrf.mxu0
        %v6312 = vadd.f32 0.0, %v6311
        %v6313 = vpop.f32.mrf.mxu0
        %6314 = vmatprep.mubr.bf16.mxu0 0
        %6315 = vmatmul.mubr.bf16.gmra.mxu0 %v5823
        %v6316 = vpop.f32.mrf.mxu0
        %v6317 = vpop.f32.mrf.mxu0
        %v6318 = vpop.f32.mrf.mxu0
        %v6319 = vadd.f32 0.0, %v6318
        %v6320 = vpop.f32.mrf.mxu0
        %6321 = vmatprep.mubr.bf16.mxu0 0
        %6322 = vmatmul.mubr.bf16.gmra.mxu0 %v5826
        %v6323 = vpop.f32.mrf.mxu0
        %v6324 = vadd.f32 0.0, %v6323
        %v6325 = vpop.f32.mrf.mxu0
        %v6326 = vpop.f32.mrf.mxu0
        %v6327 = vadd.f32 0.0, %v6326
        %v6328 = vpop.f32.mrf.mxu0
        %6329 = vmatprep.mubr.bf16.mxu0 0
        %6330 = vmatmul.mubr.bf16.gmra.mxu0 %v5829
        %v6331 = vpop.f32.mrf.mxu0
        %v6332 = vadd.f32 0.0, %v6331
        %v6333 = vpop.f32.mrf.mxu0
        %v6334 = vpop.f32.mrf.mxu0
        %v6335 = vpop.f32.mrf.mxu0
        %6336 = vmatprep.mubr.bf16.mxu0 0
        %6337 = vmatmul.mubr.bf16.gmra.mxu0 %v5832
        %v6338 = vpop.f32.mrf.mxu0
        %v6339 = vadd.f32 0.0, %v6338
        %v6340 = vpop.f32.mrf.mxu0
        %v6341 = vpop.f32.mrf.mxu0
        %v6342 = vadd.f32 0.0, %v6341
        %v6343 = vpop.f32.mrf.mxu0
        %6344 = vmatprep.mubr.bf16.mxu0 0
        %6345 = vmatmul.mubr.bf16.gmra.mxu0 %v5835
        %v6346 = vpop.f32.mrf.mxu0
        %v6347 = vadd.f32 0.0, %v6346
        %v6348 = vpop.f32.mrf.mxu0
        %v6349 = vpop.f32.mrf.mxu0
        %v6350 = vadd.f32 0.0, %v6349
        %v6351 = vpop.f32.mrf.mxu0
        %6352 = vmatprep.mubr.bf16.mxu0 0
        %6353 = vmatmul.mubr.bf16.gmra.mxu0 %v5838
        %v6354 = vpop.f32.mrf.mxu0
        %v6355 = vpop.f32.mrf.mxu0
        %v6356 = vpop.f32.mrf.mxu0
        %v6357 = vadd.f32 0.0, %v6356
        %v6358 = vpop.f32.mrf.mxu0
        %6359 = vmatprep.mubr.bf16.mxu0 0
        %6360 = vmatmul.mubr.bf16.gmra.mxu0 %v5841
        %v6361 = vpop.f32.mrf.mxu0
        %v6362 = vadd.f32 0.0, %v6361
        %v6363 = vpop.f32.mrf.mxu0
        %v6364 = vpop.f32.mrf.mxu0
        %v6365 = vadd.f32 0.0, %v6364
        %v6366 = vpop.f32.mrf.mxu0
        %6367 = vmatprep.mubr.bf16.mxu0 0
        %6368 = vmatmul.mubr.bf16.gmra.mxu0 %v5844
        %v6369 = vpop.f32.mrf.mxu0
        %v6370 = vadd.f32 0.0, %v6369
        %v6371 = vpop.f32.mrf.mxu0
        %v6372 = vpop.f32.mrf.mxu0
        %v6373 = vpop.f32.mrf.mxu0
        %6374 = vmatprep.mubr.bf16.mxu0 0
        %6375 = vmatmul.mubr.bf16.gmra.mxu0 %v5847
        %v6376 = vpop.f32.mrf.mxu0
        %v6377 = vadd.f32 0.0, %v6376
        %v6378 = vpop.f32.mrf.mxu0
        %v6379 = vpop.f32.mrf.mxu0
        %v6380 = vadd.f32 0.0, %v6379
        %v6381 = vpop.f32.mrf.mxu0
        %6382 = vmatprep.mubr.bf16.mxu0 0
        %6383 = vmatmul.mubr.bf16.gmra.mxu0 %v5850
        %v6384 = vpop.f32.mrf.mxu0
        %v6385 = vadd.f32 0.0, %v6384
        %v6386 = vpop.f32.mrf.mxu0
        %v6387 = vpop.f32.mrf.mxu0
        %v6388 = vadd.f32 0.0, %v6387
        %v6389 = vpop.f32.mrf.mxu0
        %6390 = vmatprep.mubr.bf16.mxu0 0
        %6391 = vmatmul.mubr.bf16.gmra.mxu0 %v5853
        %v6392 = vpop.f32.mrf.mxu0
        %v6393 = vpop.f32.mrf.mxu0
        %v6394 = vpop.f32.mrf.mxu0
        %v6395 = vadd.f32 0.0, %v6394
        %v6396 = vpop.f32.mrf.mxu0
        %6397 = vmatprep.mubr.bf16.mxu0 0
        %6398 = vmatmul.mubr.bf16.gmra.mxu0 %v5856
        %v6399 = vpop.f32.mrf.mxu0
        %v6400 = vadd.f32 0.0, %v6399
        %v6401 = vpop.f32.mrf.mxu0
        %v6402 = vpop.f32.mrf.mxu0
        %v6403 = vadd.f32 0.0, %v6402
        %v6404 = vpop.f32.mrf.mxu0
        %6405 = vmatprep.mubr.bf16.mxu0 0
        %6406 = vmatmul.mubr.bf16.gmra.mxu0 %v5859
        %v6407 = vpop.f32.mrf.mxu0
        %v6408 = vadd.f32 0.0, %v6407
        %v6409 = vpop.f32.mrf.mxu0
        %v6410 = vpop.f32.mrf.mxu0
        %v6411 = vpop.f32.mrf.mxu0
        %6412 = vmatprep.mubr.bf16.mxu0 0
        %6413 = vmatmul.mubr.bf16.gmra.mxu0 %v5862
        %v6414 = vpop.f32.mrf.mxu0
        %v6415 = vadd.f32 0.0, %v6414
        %v6416 = vpop.f32.mrf.mxu0
        %v6417 = vpop.f32.mrf.mxu0
        %v6418 = vadd.f32 0.0, %v6417
        %v6419 = vpop.f32.mrf.mxu0
        %6420 = vmatprep.mubr.bf16.mxu0 0
        %6421 = vmatmul.mubr.bf16.gmra.mxu0 %v5865
        %v6422 = vpop.f32.mrf.mxu0
        %v6423 = vadd.f32 0.0, %v6422
        %v6424 = vpop.f32.mrf.mxu0
        %v6425 = vpop.f32.mrf.mxu0
        %v6426 = vadd.f32 0.0, %v6425
        %v6427 = vpop.f32.mrf.mxu0
        %6428 = vmatprep.mubr.bf16.mxu0 0
        %6429 = vmatmul.mubr.bf16.gmra.mxu0 %v5868
        %v6430 = vpop.f32.mrf.mxu0
        %v6431 = vpop.f32.mrf.mxu0
        %v6432 = vpop.f32.mrf.mxu0
        %v6433 = vadd.f32 0.0, %v6432
        %v6434 = vpop.f32.mrf.mxu0
        %6435 = vmatprep.mubr.bf16.mxu0 0
        %6436 = vmatmul.mubr.bf16.gmra.mxu0 %v5871
        %v6437 = vpop.f32.mrf.mxu0
        %v6438 = vadd.f32 0.0, %v6437
        %v6439 = vpop.f32.mrf.mxu0
        %v6440 = vpop.f32.mrf.mxu0
        %v6441 = vadd.f32 0.0, %v6440
        %v6442 = vpop.f32.mrf.mxu0
        %6443 = vmatprep.mubr.bf16.mxu0 0
        %6444 = vmatmul.mubr.bf16.gmra.mxu0 %v5874
        %v6445 = vpop.f32.mrf.mxu0
        %v6446 = vadd.f32 0.0, %v6445
        %v6447 = vpop.f32.mrf.mxu0
        %v6448 = vpop.f32.mrf.mxu0
        %v6449 = vpop.f32.mrf.mxu0
        %6450 = vmatprep.mubr.bf16.mxu0 0
        %6451 = vmatmul.mubr.bf16.gmra.mxu0 %v5877
        %v6452 = vpop.f32.mrf.mxu0
        %v6453 = vadd.f32 0.0, %v6452
        %v6454 = vpop.f32.mrf.mxu0
        %v6455 = vpop.f32.mrf.mxu0
        %v6456 = vadd.f32 0.0, %v6455
        %v6457 = vpop.f32.mrf.mxu0
        %6458 = vmatprep.mubr.bf16.mxu0 0
        %6459 = vmatmul.mubr.bf16.gmra.mxu0 %v5880
        %v6460 = vpop.f32.mrf.mxu0
        %v6461 = vadd.f32 0.0, %v6460
        %v6462 = vpop.f32.mrf.mxu0
        %v6463 = vpop.f32.mrf.mxu0
        %v6464 = vadd.f32 0.0, %v6463
        %v6465 = vpop.f32.mrf.mxu0
        %6466 = vmatprep.mubr.bf16.mxu0 0
        %6467 = vmatmul.mubr.bf16.gmra.mxu0 %v5883
        %v6468 = vpop.f32.mrf.mxu0
        %v6469 = vpop.f32.mrf.mxu0
        %v6470 = vpop.f32.mrf.mxu0
        %v6471 = vadd.f32 0.0, %v6470
        %v6472 = vpop.f32.mrf.mxu0
        %6473 = vmatprep.mubr.bf16.mxu0 0
        %6474 = vmatmul.mubr.bf16.gmra.mxu0 %v5886
        %v6475 = vpop.f32.mrf.mxu0
        %v6476 = vadd.f32 0.0, %v6475
        %v6477 = vpop.f32.mrf.mxu0
        %v6478 = vpop.f32.mrf.mxu0
        %v6479 = vadd.f32 0.0, %v6478
        %v6480 = vpop.f32.mrf.mxu0
        %6481 = vmatprep.mubr.bf16.mxu0 0
        %6482 = vmatmul.mubr.bf16.gmra.mxu0 %v5889
        %v6483 = vpop.f32.mrf.mxu0
        %v6484 = vadd.f32 0.0, %v6483
        %v6485 = vpop.f32.mrf.mxu0
        %v6486 = vpop.f32.mrf.mxu0
        %v6487 = vpop.f32.mrf.mxu0
        %6488 = vmatprep.mubr.bf16.mxu0 0
        %6489 = vmatmul.mubr.bf16.gmra.mxu0 %v5892
        %v6490 = vpop.f32.mrf.mxu0
        %v6491 = vadd.f32 0.0, %v6490
        %v6492 = vpop.f32.mrf.mxu0
        %v6493 = vpop.f32.mrf.mxu0
        %v6494 = vadd.f32 0.0, %v6493
        %v6495 = vpop.f32.mrf.mxu0
        %6496 = vmatprep.mubr.bf16.mxu0 0
        %6497 = vmatmul.mubr.bf16.gmra.mxu0 %v5895
        %v6498 = vpop.f32.mrf.mxu0
        %v6499 = vadd.f32 0.0, %v6498
        %v6500 = vpop.f32.mrf.mxu0
        %v6501 = vpop.f32.mrf.mxu0
        %v6502 = vadd.f32 0.0, %v6501
        %v6503 = vpop.f32.mrf.mxu0
        %6504 = vmatprep.mubr.bf16.mxu0 0
        %6505 = vmatmul.mubr.bf16.gmra.mxu0 %v5898
        %v6506 = vpop.f32.mrf.mxu0
        %v6507 = vpop.f32.mrf.mxu0
        %v6508 = vpop.f32.mrf.mxu0
        %v6509 = vadd.f32 0.0, %v6508
        %v6510 = vpop.f32.mrf.mxu0
        %6511 = vmatprep.mubr.bf16.mxu0 0
        %6512 = vmatmul.mubr.bf16.gmra.mxu0 %v5901
        %v6513 = vpop.f32.mrf.mxu0
        %v6514 = vadd.f32 0.0, %v6513
        %v6515 = vpop.f32.mrf.mxu0
        %v6516 = vpop.f32.mrf.mxu0
        %v6517 = vadd.f32 0.0, %v6516
        %v6518 = vpop.f32.mrf.mxu0
        %6519 = vmatprep.mubr.bf16.mxu0 0
        %6520 = vmatmul.mubr.bf16.gmra.mxu0 %v5904
        %v6521 = vpop.f32.mrf.mxu0
        %v6522 = vadd.f32 0.0, %v6521
        %v6523 = vpop.f32.mrf.mxu0
        %v6524 = vpop.f32.mrf.mxu0
        %v6525 = vpop.f32.mrf.mxu0
        %6526 = vmatprep.mubr.bf16.mxu0 0
        %6527 = vmatmul.mubr.bf16.gmra.mxu0 %v5907
        %v6528 = vpop.f32.mrf.mxu0
        %v6529 = vadd.f32 0.0, %v6528
        %v6530 = vpop.f32.mrf.mxu0
        %v6531 = vpop.f32.mrf.mxu0
        %v6532 = vadd.f32 0.0, %v6531
        %v6533 = vpop.f32.mrf.mxu0
        %6534 = vmatprep.mubr.bf16.mxu0 0
        %6535 = vmatmul.mubr.bf16.gmra.mxu0 %v5910
        %v6536 = vpop.f32.mrf.mxu0
        %v6537 = vadd.f32 0.0, %v6536
        %v6538 = vpop.f32.mrf.mxu0
        %v6539 = vpop.f32.mrf.mxu0
        %v6540 = vadd.f32 0.0, %v6539
        %v6541 = vpop.f32.mrf.mxu0
        %6542 = vmatprep.mubr.bf16.mxu0 0
        %6543 = vmatmul.mubr.bf16.gmra.mxu0 %v5913
        %v6544 = vpop.f32.mrf.mxu0
        %v6545 = vpop.f32.mrf.mxu0
        %v6546 = vpop.f32.mrf.mxu0
        %v6547 = vadd.f32 0.0, %v6546
        %v6548 = vpop.f32.mrf.mxu0
        %6549 = vmatprep.mubr.bf16.mxu0 0
        %6550 = vmatmul.mubr.bf16.gmra.mxu0 %v5916
        %v6551 = vpop.f32.mrf.mxu0
        %v6552 = vadd.f32 0.0, %v6551
        %v6553 = vpop.f32.mrf.mxu0
        %v6554 = vpop.f32.mrf.mxu0
        %v6555 = vadd.f32 0.0, %v6554
        %v6556 = vpop.f32.mrf.mxu0
        %6557 = vmatprep.mubr.bf16.mxu0 0
        %6558 = vmatmul.mubr.bf16.gmra.mxu0 %v5919
        %v6559 = vpop.f32.mrf.mxu0
        %v6560 = vadd.f32 0.0, %v6559
        %v6561 = vpop.f32.mrf.mxu0
        %v6562 = vpop.f32.mrf.mxu0
        %v6563 = vpop.f32.mrf.mxu0
        %6564 = vdwg.mxu0
        %v6565 = vadd.f32 %v4986, %v5959
        %v6566 = vadd.f32 %v4987, %v5962
        %v6567 = vadd.f32 %v4988, %v5967
        %v6568 = vadd.f32 %v4989, %v5970
        %v6569 = vadd.f32 %v4990, %v5977
        %v6570 = vadd.f32 %v4991, %v5982
        %v6571 = vadd.f32 %v4992, %v5985
        %v6572 = vadd.f32 %v4993, %v5990
        %v6573 = vadd.f32 %v4994, %v5997
        %v6574 = vadd.f32 %v4995, %v6000
        %v6575 = vadd.f32 %v4996, %v6005
        %v6576 = vadd.f32 %v4997, %v6008
        %v6577 = vadd.f32 %v4998, %v6015
        %v6578 = vadd.f32 %v4999, %v6020
        %v6579 = vadd.f32 %v5000, %v6023
        %v6580 = vadd.f32 %v5001, %v6028
        %v6581 = vadd.f32 %v5002, %v6035
        %v6582 = vadd.f32 %v5003, %v6038
        %v6583 = vadd.f32 %v5004, %v6043
        %v6584 = vadd.f32 %v5005, %v6046
        %v6585 = vadd.f32 %v5006, %v6053
        %v6586 = vadd.f32 %v5007, %v6058
        %v6587 = vadd.f32 %v5008, %v6061
        %v6588 = vadd.f32 %v5009, %v6066
        %v6589 = vadd.f32 %v5010, %v6073
        %v6590 = vadd.f32 %v5011, %v6076
        %v6591 = vadd.f32 %v5012, %v6081
        %v6592 = vadd.f32 %v5013, %v6084
        %v6593 = vadd.f32 %v5014, %v6091
        %v6594 = vadd.f32 %v5015, %v6096
        %v6595 = vadd.f32 %v5016, %v6099
        %v6596 = vadd.f32 %v5017, %v6104
        %v6597 = vadd.f32 %v5018, %v6111
        %v6598 = vadd.f32 %v5019, %v6114
        %v6599 = vadd.f32 %v5020, %v6119
        %v6600 = vadd.f32 %v5021, %v6122
        %v6601 = vadd.f32 %v5022, %v6129
        %v6602 = vadd.f32 %v5023, %v6134
        %v6603 = vadd.f32 %v5024, %v6137
        %v6604 = vadd.f32 %v5025, %v6142
        %v6605 = vadd.f32 %v5026, %v6149
        %v6606 = vadd.f32 %v5027, %v6152
        %v6607 = vadd.f32 %v5028, %v6157
        %v6608 = vadd.f32 %v5029, %v6160
        %v6609 = vadd.f32 %v5030, %v6167
        %v6610 = vadd.f32 %v5031, %v6172
        %v6611 = vadd.f32 %v5032, %v6175
        %v6612 = vadd.f32 %v5033, %v6180
        %v6613 = vadd.f32 %v5034, %v6187
        %v6614 = vadd.f32 %v5035, %v6190
        %v6615 = vadd.f32 %v5036, %v6195
        %v6616 = vadd.f32 %v5037, %v6198
        %v6617 = vadd.f32 %v5038, %v6205
        %v6618 = vadd.f32 %v5039, %v6210
        %v6619 = vadd.f32 %v5040, %v6213
        %v6620 = vadd.f32 %v5041, %v6218
        %v6621 = vadd.f32 %v5042, %v6225
        %v6622 = vadd.f32 %v5043, %v6228
        %v6623 = vadd.f32 %v5044, %v6233
        %v6624 = vadd.f32 %v5045, %v6236
        %v6625 = vadd.f32 %v5046, %v6243
        %v6626 = vadd.f32 %v5047, %v6248
        %v6627 = vadd.f32 %v5048, %v6251
        %v6628 = vadd.f32 %v5049, %v6256
        %v6629 = vadd.f32 %v5050, %v6263
        %v6630 = vadd.f32 %v5051, %v6266
        %v6631 = vadd.f32 %v5052, %v6271
        %v6632 = vadd.f32 %v5053, %v6274
        %v6633 = vadd.f32 %v5054, %v6281
        %v6634 = vadd.f32 %v5055, %v6286
        %v6635 = vadd.f32 %v5056, %v6289
        %v6636 = vadd.f32 %v5057, %v6294
        %v6637 = vadd.f32 %v5058, %v6301
        %v6638 = vadd.f32 %v5059, %v6304
        %v6639 = vadd.f32 %v5060, %v6309
        %v6640 = vadd.f32 %v5061, %v6312
        %v6641 = vadd.f32 %v5062, %v6319
        %v6642 = vadd.f32 %v5063, %v6324
        %v6643 = vadd.f32 %v5064, %v6327
        %v6644 = vadd.f32 %v5065, %v6332
        %v6645 = vadd.f32 %v5066, %v6339
        %v6646 = vadd.f32 %v5067, %v6342
        %v6647 = vadd.f32 %v5068, %v6347
        %v6648 = vadd.f32 %v5069, %v6350
        %v6649 = vadd.f32 %v5070, %v6357
        %v6650 = vadd.f32 %v5071, %v6362
        %v6651 = vadd.f32 %v5072, %v6365
        %v6652 = vadd.f32 %v5073, %v6370
        %v6653 = vadd.f32 %v5074, %v6377
        %v6654 = vadd.f32 %v5075, %v6380
        %v6655 = vadd.f32 %v5076, %v6385
        %v6656 = vadd.f32 %v5077, %v6388
        %v6657 = vadd.f32 %v5078, %v6395
        %v6658 = vadd.f32 %v5079, %v6400
        %v6659 = vadd.f32 %v5080, %v6403
        %v6660 = vadd.f32 %v5081, %v6408
        %v6661 = vadd.f32 %v5082, %v6415
        %v6662 = vadd.f32 %v5083, %v6418
        %v6663 = vadd.f32 %v5084, %v6423
        %v6664 = vadd.f32 %v5085, %v6426
        %v6665 = vadd.f32 %v5086, %v6433
        %v6666 = vadd.f32 %v5087, %v6438
        %v6667 = vadd.f32 %v5088, %v6441
        %v6668 = vadd.f32 %v5089, %v6446
        %v6669 = vadd.f32 %v5090, %v6453
        %v6670 = vadd.f32 %v5091, %v6456
        %v6671 = vadd.f32 %v5092, %v6461
        %v6672 = vadd.f32 %v5093, %v6464
        %v6673 = vadd.f32 %v5094, %v6471
        %v6674 = vadd.f32 %v5095, %v6476
        %v6675 = vadd.f32 %v5096, %v6479
        %v6676 = vadd.f32 %v5097, %v6484
        %v6677 = vadd.f32 %v5098, %v6491
        %v6678 = vadd.f32 %v5099, %v6494
        %v6679 = vadd.f32 %v5100, %v6499
        %v6680 = vadd.f32 %v5101, %v6502
        %v6681 = vadd.f32 %v5102, %v6509
        %v6682 = vadd.f32 %v5103, %v6514
        %v6683 = vadd.f32 %v5104, %v6517
        %v6684 = vadd.f32 %v5105, %v6522
        %v6685 = vadd.f32 %v5106, %v6529
        %v6686 = vadd.f32 %v5107, %v6532
        %v6687 = vadd.f32 %v5108, %v6537
        %v6688 = vadd.f32 %v5109, %v6540
        %v6689 = vadd.f32 %v5110, %v6547
        %v6690 = vadd.f32 %v5111, %v6552
        %v6691 = vadd.f32 %v5112, %v6555
        %v6692 = vadd.f32 %v5113, %v6560
        %s6693 = scalar_lea.vmem %s1, 10
        %v6694 = vld [vmem:[%s6693] sm:$0x3]
        %v6776 = vrot.slane %v4020, 1
        %v6777 = vrot.slane %v4021, 1
        %v6778 = vsel %vm2846, %v6776, %v6777
        %v6779 = vrot.slane %v4022, 1
        %v6780 = vsel %vm2846, %v6777, %v6779
        %v6781 = vrot.slane %v4023, 1
        %v6782 = vsel %vm2846, %v6779, %v6781
        %v6783 = vrot.slane %v4024, 1
        %v6784 = vsel %vm2846, %v6781, %v6783
        %v6785 = vrot.slane %v4025, 1
        %v6786 = vsel %vm2846, %v6783, %v6785
        %v6787 = vrot.slane %v4026, 1
        %v6788 = vsel %vm2846, %v6785, %v6787
        %v6789 = vrot.slane %v4027, 1
        %v6790 = vsel %vm2846, %v6787, %v6789
        %v6791 = vrot.slane %v4028, 1
        %v6792 = vsel %vm2846, %v6789, %v6791
        %v6793 = vrot.slane %v4029, 1
        %v6794 = vsel %vm2846, %v6791, %v6793
        %v6795 = vrot.slane %v4030, 1
        %v6796 = vsel %vm2846, %v6793, %v6795
        %v6797 = vrot.slane %v4031, 1
        %v6798 = vsel %vm2846, %v6795, %v6797
        %v6799 = vrot.slane %v4032, 1
        %v6800 = vsel %vm2846, %v6797, %v6799
        %v6801 = vrot.slane %v4033, 1
        %v6802 = vsel %vm2846, %v6799, %v6801
        %v6803 = vrot.slane %v4034, 1
        %v6804 = vsel %vm2846, %v6801, %v6803
        %v6805 = vrot.slane %v4035, 1
        %v6806 = vsel %vm2846, %v6803, %v6805
        %v6807 = vrot.slane %v4036, 1
        %v6808 = vsel %vm2846, %v6805, %v6807
        %v6809 = vrot.slane %v4037, 1
        %v6810 = vsel %vm2846, %v6807, %v6809
        %v6811 = vrot.slane %v4038, 1
        %v6812 = vsel %vm2846, %v6809, %v6811
        %v6813 = vrot.slane %v4039, 1
        %v6814 = vsel %vm2846, %v6811, %v6813
        %v6815 = vrot.slane %v4040, 1
        %v6816 = vsel %vm2846, %v6813, %v6815
        %v6817 = vrot.slane %v4041, 1
        %v6818 = vsel %vm2846, %v6815, %v6817
        %v6819 = vrot.slane %v4042, 1
        %v6820 = vsel %vm2846, %v6817, %v6819
        %v6821 = vrot.slane %v4043, 1
        %v6822 = vsel %vm2846, %v6819, %v6821
        %v6823 = vrot.slane %v4044, 1
        %v6824 = vsel %vm2846, %v6821, %v6823
        %v6825 = vrot.slane %v4045, 1
        %v6826 = vsel %vm2846, %v6823, %v6825
        %v6827 = vrot.slane %v4046, 1
        %v6828 = vsel %vm2846, %v6825, %v6827
        %v6829 = vrot.slane %v4047, 1
        %v6830 = vsel %vm2846, %v6827, %v6829
        %v6831 = vrot.slane %v4048, 1
        %v6832 = vsel %vm2846, %v6829, %v6831
        %v6833 = vrot.slane %v4049, 1
        %v6834 = vsel %vm2846, %v6831, %v6833
        %v6835 = vrot.slane %v4050, 1
        %v6836 = vsel %vm2846, %v6833, %v6835
        %v6837 = vrot.slane %v4051, 1
        %v6838 = vsel %vm2846, %v6835, %v6837
        %v6839 = vrot.slane %v4052, 1
        %v6840 = vsel %vm2846, %v6837, %v6839
        %v6841 = vrot.slane %v4053, 1
        %v6842 = vsel %vm2846, %v6839, %v6841
        %v6843 = vrot.slane %v4054, 1
        %v6844 = vsel %vm2846, %v6841, %v6843
        %v6845 = vrot.slane %v4055, 1
        %v6846 = vsel %vm2846, %v6843, %v6845
        %v6847 = vrot.slane %v4056, 1
        %v6848 = vsel %vm2846, %v6845, %v6847
        %v6849 = vrot.slane %v4057, 1
        %v6850 = vsel %vm2846, %v6847, %v6849
        %v6851 = vrot.slane %v4058, 1
        %v6852 = vsel %vm2846, %v6849, %v6851
        %v6853 = vrot.slane %v4059, 1
        %v6854 = vsel %vm2846, %v6851, %v6853
        %v6855 = vrot.slane %v4060, 1
        %v6856 = vsel %vm2846, %v6853, %v6855
        %v6857 = vrot.slane %v4061, 1
        %v6858 = vsel %vm2846, %v6855, %v6857
        %v6859 = vrot.slane %v4062, 1
        %v6860 = vsel %vm2846, %v6857, %v6859
        %v6861 = vrot.slane %v4063, 1
        %v6862 = vsel %vm2846, %v6859, %v6861
        %v6863 = vrot.slane %v4064, 1
        %v6864 = vsel %vm2846, %v6861, %v6863
        %v6865 = vrot.slane %v4065, 1
        %v6866 = vsel %vm2846, %v6863, %v6865
        %v6867 = vrot.slane %v4066, 1
        %v6868 = vsel %vm2846, %v6865, %v6867
        %v6869 = vrot.slane %v4067, 1
        %v6870 = vsel %vm2846, %v6867, %v6869
        %v6871 = vrot.slane %v4068, 1
        %v6872 = vsel %vm2846, %v6869, %v6871
        %v6873 = vrot.slane %v4069, 1
        %v6874 = vsel %vm2846, %v6871, %v6873
        %v6875 = vrot.slane %v4070, 1
        %v6876 = vsel %vm2846, %v6873, %v6875
        %v6877 = vrot.slane %v4071, 1
        %v6878 = vsel %vm2846, %v6875, %v6877
        %v6879 = vrot.slane %v4072, 1
        %v6880 = vsel %vm2846, %v6877, %v6879
        %v6881 = vrot.slane %v4073, 1
        %v6882 = vsel %vm2846, %v6879, %v6881
        %v6883 = vrot.slane %v4074, 1
        %v6884 = vsel %vm2846, %v6881, %v6883
        %v6885 = vrot.slane %v4075, 1
        %v6886 = vsel %vm2846, %v6883, %v6885
        %v6887 = vrot.slane %v4076, 1
        %v6888 = vsel %vm2846, %v6885, %v6887
        %v6889 = vrot.slane %v4077, 1
        %v6890 = vsel %vm2846, %v6887, %v6889
        %v6891 = vrot.slane %v4078, 1
        %v6892 = vsel %vm2846, %v6889, %v6891
        %v6893 = vrot.slane %v4079, 1
        %v6894 = vsel %vm2846, %v6891, %v6893
        %v6895 = vrot.slane %v4080, 1
        %v6896 = vsel %vm2846, %v6893, %v6895
        %v6897 = vrot.slane %v4081, 1
        %v6898 = vsel %vm2846, %v6895, %v6897
        %v6899 = vrot.slane %v4082, 1
        %v6900 = vsel %vm2846, %v6897, %v6899
        %v6901 = vrot.slane %v4083, 1
        %v6902 = vsel %vm2846, %v6899, %v6901
        %v6903 = vrot.slane %v4084, 1
        %v6904 = vsel %vm2846, %v6901, %v6903
        %v6905 = vrot.slane %v4085, 1
        %v6906 = vsel %vm2846, %v6903, %v6905
        %v6907 = vrot.slane %v4086, 1
        %v6908 = vsel %vm2846, %v6905, %v6907
        %v6909 = vrot.slane %v4087, 1
        %v6910 = vsel %vm2846, %v6907, %v6909
        %v6911 = vrot.slane %v4088, 1
        %v6912 = vsel %vm2846, %v6909, %v6911
        %v6913 = vrot.slane %v4089, 1
        %v6914 = vsel %vm2846, %v6911, %v6913
        %v6915 = vrot.slane %v4090, 1
        %v6916 = vsel %vm2846, %v6913, %v6915
        %v6917 = vrot.slane %v4091, 1
        %v6918 = vsel %vm2846, %v6915, %v6917
        %v6919 = vrot.slane %v4092, 1
        %v6920 = vsel %vm2846, %v6917, %v6919
        %v6921 = vrot.slane %v4093, 1
        %v6922 = vsel %vm2846, %v6919, %v6921
        %v6923 = vrot.slane %v4094, 1
        %v6924 = vsel %vm2846, %v6921, %v6923
        %v6925 = vrot.slane %v4095, 1
        %v6926 = vsel %vm2846, %v6923, %v6925
        %v6927 = vrot.slane %v4096, 1
        %v6928 = vsel %vm2846, %v6925, %v6927
        %v6929 = vrot.slane %v4097, 1
        %v6930 = vsel %vm2846, %v6927, %v6929
        %v6931 = vrot.slane %v4098, 1
        %v6932 = vsel %vm2846, %v6929, %v6931
        %v6933 = vrot.slane %v4099, 1
        %v6934 = vsel %vm2846, %v6931, %v6933
        %v6935 = vrot.slane %v5114, 1
        %v6936 = vsel %vm2846, %v6933, %v6935
        %v6938 = vsel %vm1070, %v6778, 0
        %v6941 = vsel %vm1070, %v6780, 0
        %v6944 = vsel %vm1070, %v6782, 0
        %v6947 = vsel %vm1070, %v6784, 0
        %v6950 = vsel %vm1070, %v6786, 0
        %v6953 = vsel %vm1070, %v6788, 0
        %v6956 = vsel %vm1070, %v6790, 0
        %v6959 = vsel %vm1070, %v6792, 0
        %v6962 = vsel %vm1070, %v6794, 0
        %v6965 = vsel %vm1070, %v6796, 0
        %v6968 = vsel %vm1070, %v6798, 0
        %v6971 = vsel %vm1070, %v6800, 0
        %v6974 = vsel %vm1070, %v6802, 0
        %v6977 = vsel %vm1070, %v6804, 0
        %v6980 = vsel %vm1070, %v6806, 0
        %v6983 = vsel %vm1070, %v6808, 0
        %v6986 = vsel %vm1070, %v6810, 0
        %v6989 = vsel %vm1070, %v6812, 0
        %v6992 = vsel %vm1070, %v6814, 0
        %v6995 = vsel %vm1070, %v6816, 0
        %v6998 = vsel %vm1070, %v6818, 0
        %v7001 = vsel %vm1070, %v6820, 0
        %v7004 = vsel %vm1070, %v6822, 0
        %v7007 = vsel %vm1070, %v6824, 0
        %v7010 = vsel %vm1070, %v6826, 0
        %v7013 = vsel %vm1070, %v6828, 0
        %v7016 = vsel %vm1070, %v6830, 0
        %v7019 = vsel %vm1070, %v6832, 0
        %v7022 = vsel %vm1070, %v6834, 0
        %v7025 = vsel %vm1070, %v6836, 0
        %v7028 = vsel %vm1070, %v6838, 0
        %v7031 = vsel %vm1070, %v6840, 0
        %v7034 = vsel %vm1070, %v6842, 0
        %v7037 = vsel %vm1070, %v6844, 0
        %v7040 = vsel %vm1070, %v6846, 0
        %v7043 = vsel %vm1070, %v6848, 0
        %v7046 = vsel %vm1070, %v6850, 0
        %v7049 = vsel %vm1070, %v6852, 0
        %v7052 = vsel %vm1070, %v6854, 0
        %v7055 = vsel %vm1070, %v6856, 0
        %v7058 = vsel %vm1070, %v6858, 0
        %v7061 = vsel %vm1070, %v6860, 0
        %v7064 = vsel %vm1070, %v6862, 0
        %v7067 = vsel %vm1070, %v6864, 0
        %v7070 = vsel %vm1070, %v6866, 0
        %v7073 = vsel %vm1070, %v6868, 0
        %v7076 = vsel %vm1070, %v6870, 0
        %v7079 = vsel %vm1070, %v6872, 0
        %v7082 = vsel %vm1070, %v6874, 0
        %v7085 = vsel %vm1070, %v6876, 0
        %v7088 = vsel %vm1070, %v6878, 0
        %v7091 = vsel %vm1070, %v6880, 0
        %v7094 = vsel %vm1070, %v6882, 0
        %v7097 = vsel %vm1070, %v6884, 0
        %v7100 = vsel %vm1070, %v6886, 0
        %v7103 = vsel %vm1070, %v6888, 0
        %v7106 = vsel %vm1070, %v6890, 0
        %v7109 = vsel %vm1070, %v6892, 0
        %v7112 = vsel %vm1070, %v6894, 0
        %v7115 = vsel %vm1070, %v6896, 0
        %v7118 = vsel %vm1070, %v6898, 0
        %v7121 = vsel %vm1070, %v6900, 0
        %v7124 = vsel %vm1070, %v6902, 0
        %v7127 = vsel %vm1070, %v6904, 0
        %v7130 = vsel %vm1070, %v6906, 0
        %v7133 = vsel %vm1070, %v6908, 0
        %v7136 = vsel %vm1070, %v6910, 0
        %v7139 = vsel %vm1070, %v6912, 0
        %v7142 = vsel %vm1070, %v6914, 0
        %v7145 = vsel %vm1070, %v6916, 0
        %v7148 = vsel %vm1070, %v6918, 0
        %v7151 = vsel %vm1070, %v6920, 0
        %v7154 = vsel %vm1070, %v6922, 0
        %v7157 = vsel %vm1070, %v6924, 0
        %v7160 = vsel %vm1070, %v6926, 0
        %v7163 = vsel %vm1070, %v6928, 0
        %v7166 = vsel %vm1070, %v6930, 0
        %v7169 = vsel %vm1070, %v6932, 0
        %v7172 = vsel %vm1070, %v6934, 0
        %v7175 = vsel %vm1070, %v6936, 0
        %v7178 = vand.u32 %v6694, %v1314
        %7180 = vmatprep.subr.bf16.mxu0 0
        %7181 = vmatpush1.bf16.msra.mxu0 0
        %7182 = vmatprep.subr.bf16.mxu0 0
        %7183 = vmatpush1.bf16.msra.mxu0 0
        %7184 = vmatprep.subr.bf16.mxu0 0
        %7185 = vmatpush1.bf16.msra.mxu0 0
        %7186 = vmatprep.subr.bf16.mxu0 0
        %7187 = vmatpush1.bf16.msra.mxu0 0
        %7188 = vmatprep.subr.bf16.mxu0 0
        %7189 = vmatpush1.bf16.msra.mxu0 0
        %7190 = vmatprep.subr.bf16.mxu0 0
        %7191 = vmatpush1.bf16.msra.mxu0 0
        %7192 = vmatprep.subr.bf16.mxu0 0
        %7193 = vmatpush1.bf16.msra.mxu0 0
        %7194 = vmatprep.subr.bf16.mxu0 0
        %7195 = vmatpush1.bf16.msra.mxu0 %v7178
        %7196 = vmatprep.subr.bf16.mxu0 0
        %7197 = vmatpush2.bf16.msra.mxu0 0
        %7198 = vmatprep.subr.bf16.mxu0 0
        %7199 = vmatpush2.bf16.msra.mxu0 0
        %7200 = vmatprep.subr.bf16.mxu0 0
        %7201 = vmatpush2.bf16.msra.mxu0 0
        %7202 = vmatprep.subr.bf16.mxu0 0
        %7203 = vmatpush2.bf16.msra.mxu0 0
        %7204 = vmatprep.subr.bf16.mxu0 0
        %7205 = vmatpush2.bf16.msra.mxu0 0
        %7206 = vmatprep.subr.bf16.mxu0 0
        %7207 = vmatpush2.bf16.msra.mxu0 0
        %7208 = vmatprep.subr.bf16.mxu0 0
        %7209 = vmatpush2.bf16.msra.mxu0 0
        %7210 = vmatprep.subr.bf16.mxu0 0
        %7211 = vmatpush2.bf16.msra.mxu0 0
        %7212 = vmatprep.mubr.bf16.mxu0 0
        %7213 = vmatmul.mubr.bf16.gmra.mxu0 %v6938
        %v7214 = vpop.f32.mrf.mxu0
        %v7215 = vadd.f32 0.0, %v7214
        %v7216 = vpop.f32.mrf.mxu0
        %v7217 = vpop.f32.mrf.mxu0
        %v7218 = vadd.f32 0.0, %v7217
        %v7219 = vpop.f32.mrf.mxu0
        %7220 = vmatprep.mubr.bf16.mxu0 0
        %7221 = vmatmul.mubr.bf16.gmra.mxu0 %v6941
        %v7222 = vpop.f32.mrf.mxu0
        %v7223 = vadd.f32 0.0, %v7222
        %v7224 = vpop.f32.mrf.mxu0
        %v7225 = vpop.f32.mrf.mxu0
        %v7226 = vadd.f32 0.0, %v7225
        %v7227 = vpop.f32.mrf.mxu0
        %7228 = vmatprep.mubr.bf16.mxu0 0
        %7229 = vmatmul.mubr.bf16.gmra.mxu0 %v6944
        %v7230 = vpop.f32.mrf.mxu0
        %v7231 = vpop.f32.mrf.mxu0
        %v7232 = vpop.f32.mrf.mxu0
        %v7233 = vadd.f32 0.0, %v7232
        %v7234 = vpop.f32.mrf.mxu0
        %7235 = vmatprep.mubr.bf16.mxu0 0
        %7236 = vmatmul.mubr.bf16.gmra.mxu0 %v6947
        %v7237 = vpop.f32.mrf.mxu0
        %v7238 = vadd.f32 0.0, %v7237
        %v7239 = vpop.f32.mrf.mxu0
        %v7240 = vpop.f32.mrf.mxu0
        %v7241 = vadd.f32 0.0, %v7240
        %v7242 = vpop.f32.mrf.mxu0
        %7243 = vmatprep.mubr.bf16.mxu0 0
        %7244 = vmatmul.mubr.bf16.gmra.mxu0 %v6950
        %v7245 = vpop.f32.mrf.mxu0
        %v7246 = vadd.f32 0.0, %v7245
        %v7247 = vpop.f32.mrf.mxu0
        %v7248 = vpop.f32.mrf.mxu0
        %v7249 = vpop.f32.mrf.mxu0
        %7250 = vmatprep.mubr.bf16.mxu0 0
        %7251 = vmatmul.mubr.bf16.gmra.mxu0 %v6953
        %v7252 = vpop.f32.mrf.mxu0
        %v7253 = vadd.f32 0.0, %v7252
        %v7254 = vpop.f32.mrf.mxu0
        %v7255 = vpop.f32.mrf.mxu0
        %v7256 = vadd.f32 0.0, %v7255
        %v7257 = vpop.f32.mrf.mxu0
        %7258 = vmatprep.mubr.bf16.mxu0 0
        %7259 = vmatmul.mubr.bf16.gmra.mxu0 %v6956
        %v7260 = vpop.f32.mrf.mxu0
        %v7261 = vadd.f32 0.0, %v7260
        %v7262 = vpop.f32.mrf.mxu0
        %v7263 = vpop.f32.mrf.mxu0
        %v7264 = vadd.f32 0.0, %v7263
        %v7265 = vpop.f32.mrf.mxu0
        %7266 = vmatprep.mubr.bf16.mxu0 0
        %7267 = vmatmul.mubr.bf16.gmra.mxu0 %v6959
        %v7268 = vpop.f32.mrf.mxu0
        %v7269 = vpop.f32.mrf.mxu0
        %v7270 = vpop.f32.mrf.mxu0
        %v7271 = vadd.f32 0.0, %v7270
        %v7272 = vpop.f32.mrf.mxu0
        %7273 = vmatprep.mubr.bf16.mxu0 0
        %7274 = vmatmul.mubr.bf16.gmra.mxu0 %v6962
        %v7275 = vpop.f32.mrf.mxu0
        %v7276 = vadd.f32 0.0, %v7275
        %v7277 = vpop.f32.mrf.mxu0
        %v7278 = vpop.f32.mrf.mxu0
        %v7279 = vadd.f32 0.0, %v7278
        %v7280 = vpop.f32.mrf.mxu0
        %7281 = vmatprep.mubr.bf16.mxu0 0
        %7282 = vmatmul.mubr.bf16.gmra.mxu0 %v6965
        %v7283 = vpop.f32.mrf.mxu0
        %v7284 = vadd.f32 0.0, %v7283
        %v7285 = vpop.f32.mrf.mxu0
        %v7286 = vpop.f32.mrf.mxu0
        %v7287 = vpop.f32.mrf.mxu0
        %7288 = vmatprep.mubr.bf16.mxu0 0
        %7289 = vmatmul.mubr.bf16.gmra.mxu0 %v6968
        %v7290 = vpop.f32.mrf.mxu0
        %v7291 = vadd.f32 0.0, %v7290
        %v7292 = vpop.f32.mrf.mxu0
        %v7293 = vpop.f32.mrf.mxu0
        %v7294 = vadd.f32 0.0, %v7293
        %v7295 = vpop.f32.mrf.mxu0
        %7296 = vmatprep.mubr.bf16.mxu0 0
        %7297 = vmatmul.mubr.bf16.gmra.mxu0 %v6971
        %v7298 = vpop.f32.mrf.mxu0
        %v7299 = vadd.f32 0.0, %v7298
        %v7300 = vpop.f32.mrf.mxu0
        %v7301 = vpop.f32.mrf.mxu0
        %v7302 = vadd.f32 0.0, %v7301
        %v7303 = vpop.f32.mrf.mxu0
        %7304 = vmatprep.mubr.bf16.mxu0 0
        %7305 = vmatmul.mubr.bf16.gmra.mxu0 %v6974
        %v7306 = vpop.f32.mrf.mxu0
        %v7307 = vpop.f32.mrf.mxu0
        %v7308 = vpop.f32.mrf.mxu0
        %v7309 = vadd.f32 0.0, %v7308
        %v7310 = vpop.f32.mrf.mxu0
        %7311 = vmatprep.mubr.bf16.mxu0 0
        %7312 = vmatmul.mubr.bf16.gmra.mxu0 %v6977
        %v7313 = vpop.f32.mrf.mxu0
        %v7314 = vadd.f32 0.0, %v7313
        %v7315 = vpop.f32.mrf.mxu0
        %v7316 = vpop.f32.mrf.mxu0
        %v7317 = vadd.f32 0.0, %v7316
        %v7318 = vpop.f32.mrf.mxu0
        %7319 = vmatprep.mubr.bf16.mxu0 0
        %7320 = vmatmul.mubr.bf16.gmra.mxu0 %v6980
        %v7321 = vpop.f32.mrf.mxu0
        %v7322 = vadd.f32 0.0, %v7321
        %v7323 = vpop.f32.mrf.mxu0
        %v7324 = vpop.f32.mrf.mxu0
        %v7325 = vpop.f32.mrf.mxu0
        %7326 = vmatprep.mubr.bf16.mxu0 0
        %7327 = vmatmul.mubr.bf16.gmra.mxu0 %v6983
        %v7328 = vpop.f32.mrf.mxu0
        %v7329 = vadd.f32 0.0, %v7328
        %v7330 = vpop.f32.mrf.mxu0
        %v7331 = vpop.f32.mrf.mxu0
        %v7332 = vadd.f32 0.0, %v7331
        %v7333 = vpop.f32.mrf.mxu0
        %7334 = vmatprep.mubr.bf16.mxu0 0
        %7335 = vmatmul.mubr.bf16.gmra.mxu0 %v6986
        %v7336 = vpop.f32.mrf.mxu0
        %v7337 = vadd.f32 0.0, %v7336
        %v7338 = vpop.f32.mrf.mxu0
        %v7339 = vpop.f32.mrf.mxu0
        %v7340 = vadd.f32 0.0, %v7339
        %v7341 = vpop.f32.mrf.mxu0
        %7342 = vmatprep.mubr.bf16.mxu0 0
        %7343 = vmatmul.mubr.bf16.gmra.mxu0 %v6989
        %v7344 = vpop.f32.mrf.mxu0
        %v7345 = vpop.f32.mrf.mxu0
        %v7346 = vpop.f32.mrf.mxu0
        %v7347 = vadd.f32 0.0, %v7346
        %v7348 = vpop.f32.mrf.mxu0
        %7349 = vmatprep.mubr.bf16.mxu0 0
        %7350 = vmatmul.mubr.bf16.gmra.mxu0 %v6992
        %v7351 = vpop.f32.mrf.mxu0
        %v7352 = vadd.f32 0.0, %v7351
        %v7353 = vpop.f32.mrf.mxu0
        %v7354 = vpop.f32.mrf.mxu0
        %v7355 = vadd.f32 0.0, %v7354
        %v7356 = vpop.f32.mrf.mxu0
        %7357 = vmatprep.mubr.bf16.mxu0 0
        %7358 = vmatmul.mubr.bf16.gmra.mxu0 %v6995
        %v7359 = vpop.f32.mrf.mxu0
        %v7360 = vadd.f32 0.0, %v7359
        %v7361 = vpop.f32.mrf.mxu0
        %v7362 = vpop.f32.mrf.mxu0
        %v7363 = vpop.f32.mrf.mxu0
        %7364 = vmatprep.mubr.bf16.mxu0 0
        %7365 = vmatmul.mubr.bf16.gmra.mxu0 %v6998
        %v7366 = vpop.f32.mrf.mxu0
        %v7367 = vadd.f32 0.0, %v7366
        %v7368 = vpop.f32.mrf.mxu0
        %v7369 = vpop.f32.mrf.mxu0
        %v7370 = vadd.f32 0.0, %v7369
        %v7371 = vpop.f32.mrf.mxu0
        %7372 = vmatprep.mubr.bf16.mxu0 0
        %7373 = vmatmul.mubr.bf16.gmra.mxu0 %v7001
        %v7374 = vpop.f32.mrf.mxu0
        %v7375 = vadd.f32 0.0, %v7374
        %v7376 = vpop.f32.mrf.mxu0
        %v7377 = vpop.f32.mrf.mxu0
        %v7378 = vadd.f32 0.0, %v7377
        %v7379 = vpop.f32.mrf.mxu0
        %7380 = vmatprep.mubr.bf16.mxu0 0
        %7381 = vmatmul.mubr.bf16.gmra.mxu0 %v7004
        %v7382 = vpop.f32.mrf.mxu0
        %v7383 = vpop.f32.mrf.mxu0
        %v7384 = vpop.f32.mrf.mxu0
        %v7385 = vadd.f32 0.0, %v7384
        %v7386 = vpop.f32.mrf.mxu0
        %7387 = vmatprep.mubr.bf16.mxu0 0
        %7388 = vmatmul.mubr.bf16.gmra.mxu0 %v7007
        %v7389 = vpop.f32.mrf.mxu0
        %v7390 = vadd.f32 0.0, %v7389
        %v7391 = vpop.f32.mrf.mxu0
        %v7392 = vpop.f32.mrf.mxu0
        %v7393 = vadd.f32 0.0, %v7392
        %v7394 = vpop.f32.mrf.mxu0
        %7395 = vmatprep.mubr.bf16.mxu0 0
        %7396 = vmatmul.mubr.bf16.gmra.mxu0 %v7010
        %v7397 = vpop.f32.mrf.mxu0
        %v7398 = vadd.f32 0.0, %v7397
        %v7399 = vpop.f32.mrf.mxu0
        %v7400 = vpop.f32.mrf.mxu0
        %v7401 = vpop.f32.mrf.mxu0
        %7402 = vmatprep.mubr.bf16.mxu0 0
        %7403 = vmatmul.mubr.bf16.gmra.mxu0 %v7013
        %v7404 = vpop.f32.mrf.mxu0
        %v7405 = vadd.f32 0.0, %v7404
        %v7406 = vpop.f32.mrf.mxu0
        %v7407 = vpop.f32.mrf.mxu0
        %v7408 = vadd.f32 0.0, %v7407
        %v7409 = vpop.f32.mrf.mxu0
        %7410 = vmatprep.mubr.bf16.mxu0 0
        %7411 = vmatmul.mubr.bf16.gmra.mxu0 %v7016
        %v7412 = vpop.f32.mrf.mxu0
        %v7413 = vadd.f32 0.0, %v7412
        %v7414 = vpop.f32.mrf.mxu0
        %v7415 = vpop.f32.mrf.mxu0
        %v7416 = vadd.f32 0.0, %v7415
        %v7417 = vpop.f32.mrf.mxu0
        %7418 = vmatprep.mubr.bf16.mxu0 0
        %7419 = vmatmul.mubr.bf16.gmra.mxu0 %v7019
        %v7420 = vpop.f32.mrf.mxu0
        %v7421 = vpop.f32.mrf.mxu0
        %v7422 = vpop.f32.mrf.mxu0
        %v7423 = vadd.f32 0.0, %v7422
        %v7424 = vpop.f32.mrf.mxu0
        %7425 = vmatprep.mubr.bf16.mxu0 0
        %7426 = vmatmul.mubr.bf16.gmra.mxu0 %v7022
        %v7427 = vpop.f32.mrf.mxu0
        %v7428 = vadd.f32 0.0, %v7427
        %v7429 = vpop.f32.mrf.mxu0
        %v7430 = vpop.f32.mrf.mxu0
        %v7431 = vadd.f32 0.0, %v7430
        %v7432 = vpop.f32.mrf.mxu0
        %7433 = vmatprep.mubr.bf16.mxu0 0
        %7434 = vmatmul.mubr.bf16.gmra.mxu0 %v7025
        %v7435 = vpop.f32.mrf.mxu0
        %v7436 = vadd.f32 0.0, %v7435
        %v7437 = vpop.f32.mrf.mxu0
        %v7438 = vpop.f32.mrf.mxu0
        %v7439 = vpop.f32.mrf.mxu0
        %7440 = vmatprep.mubr.bf16.mxu0 0
        %7441 = vmatmul.mubr.bf16.gmra.mxu0 %v7028
        %v7442 = vpop.f32.mrf.mxu0
        %v7443 = vadd.f32 0.0, %v7442
        %v7444 = vpop.f32.mrf.mxu0
        %v7445 = vpop.f32.mrf.mxu0
        %v7446 = vadd.f32 0.0, %v7445
        %v7447 = vpop.f32.mrf.mxu0
        %7448 = vmatprep.mubr.bf16.mxu0 0
        %7449 = vmatmul.mubr.bf16.gmra.mxu0 %v7031
        %v7450 = vpop.f32.mrf.mxu0
        %v7451 = vadd.f32 0.0, %v7450
        %v7452 = vpop.f32.mrf.mxu0
        %v7453 = vpop.f32.mrf.mxu0
        %v7454 = vadd.f32 0.0, %v7453
        %v7455 = vpop.f32.mrf.mxu0
        %7456 = vmatprep.mubr.bf16.mxu0 0
        %7457 = vmatmul.mubr.bf16.gmra.mxu0 %v7034
        %v7458 = vpop.f32.mrf.mxu0
        %v7459 = vpop.f32.mrf.mxu0
        %v7460 = vpop.f32.mrf.mxu0
        %v7461 = vadd.f32 0.0, %v7460
        %v7462 = vpop.f32.mrf.mxu0
        %7463 = vmatprep.mubr.bf16.mxu0 0
        %7464 = vmatmul.mubr.bf16.gmra.mxu0 %v7037
        %v7465 = vpop.f32.mrf.mxu0
        %v7466 = vadd.f32 0.0, %v7465
        %v7467 = vpop.f32.mrf.mxu0
        %v7468 = vpop.f32.mrf.mxu0
        %v7469 = vadd.f32 0.0, %v7468
        %v7470 = vpop.f32.mrf.mxu0
        %7471 = vmatprep.mubr.bf16.mxu0 0
        %7472 = vmatmul.mubr.bf16.gmra.mxu0 %v7040
        %v7473 = vpop.f32.mrf.mxu0
        %v7474 = vadd.f32 0.0, %v7473
        %v7475 = vpop.f32.mrf.mxu0
        %v7476 = vpop.f32.mrf.mxu0
        %v7477 = vpop.f32.mrf.mxu0
        %7478 = vmatprep.mubr.bf16.mxu0 0
        %7479 = vmatmul.mubr.bf16.gmra.mxu0 %v7043
        %v7480 = vpop.f32.mrf.mxu0
        %v7481 = vadd.f32 0.0, %v7480
        %v7482 = vpop.f32.mrf.mxu0
        %v7483 = vpop.f32.mrf.mxu0
        %v7484 = vadd.f32 0.0, %v7483
        %v7485 = vpop.f32.mrf.mxu0
        %7486 = vmatprep.mubr.bf16.mxu0 0
        %7487 = vmatmul.mubr.bf16.gmra.mxu0 %v7046
        %v7488 = vpop.f32.mrf.mxu0
        %v7489 = vadd.f32 0.0, %v7488
        %v7490 = vpop.f32.mrf.mxu0
        %v7491 = vpop.f32.mrf.mxu0
        %v7492 = vadd.f32 0.0, %v7491
        %v7493 = vpop.f32.mrf.mxu0
        %7494 = vmatprep.mubr.bf16.mxu0 0
        %7495 = vmatmul.mubr.bf16.gmra.mxu0 %v7049
        %v7496 = vpop.f32.mrf.mxu0
        %v7497 = vpop.f32.mrf.mxu0
        %v7498 = vpop.f32.mrf.mxu0
        %v7499 = vadd.f32 0.0, %v7498
        %v7500 = vpop.f32.mrf.mxu0
        %7501 = vmatprep.mubr.bf16.mxu0 0
        %7502 = vmatmul.mubr.bf16.gmra.mxu0 %v7052
        %v7503 = vpop.f32.mrf.mxu0
        %v7504 = vadd.f32 0.0, %v7503
        %v7505 = vpop.f32.mrf.mxu0
        %v7506 = vpop.f32.mrf.mxu0
        %v7507 = vadd.f32 0.0, %v7506
        %v7508 = vpop.f32.mrf.mxu0
        %7509 = vmatprep.mubr.bf16.mxu0 0
        %7510 = vmatmul.mubr.bf16.gmra.mxu0 %v7055
        %v7511 = vpop.f32.mrf.mxu0
        %v7512 = vadd.f32 0.0, %v7511
        %v7513 = vpop.f32.mrf.mxu0
        %v7514 = vpop.f32.mrf.mxu0
        %v7515 = vpop.f32.mrf.mxu0
        %7516 = vmatprep.mubr.bf16.mxu0 0
        %7517 = vmatmul.mubr.bf16.gmra.mxu0 %v7058
        %v7518 = vpop.f32.mrf.mxu0
        %v7519 = vadd.f32 0.0, %v7518
        %v7520 = vpop.f32.mrf.mxu0
        %v7521 = vpop.f32.mrf.mxu0
        %v7522 = vadd.f32 0.0, %v7521
        %v7523 = vpop.f32.mrf.mxu0
        %7524 = vmatprep.mubr.bf16.mxu0 0
        %7525 = vmatmul.mubr.bf16.gmra.mxu0 %v7061
        %v7526 = vpop.f32.mrf.mxu0
        %v7527 = vadd.f32 0.0, %v7526
        %v7528 = vpop.f32.mrf.mxu0
        %v7529 = vpop.f32.mrf.mxu0
        %v7530 = vadd.f32 0.0, %v7529
        %v7531 = vpop.f32.mrf.mxu0
        %7532 = vmatprep.mubr.bf16.mxu0 0
        %7533 = vmatmul.mubr.bf16.gmra.mxu0 %v7064
        %v7534 = vpop.f32.mrf.mxu0
        %v7535 = vpop.f32.mrf.mxu0
        %v7536 = vpop.f32.mrf.mxu0
        %v7537 = vadd.f32 0.0, %v7536
        %v7538 = vpop.f32.mrf.mxu0
        %7539 = vmatprep.mubr.bf16.mxu0 0
        %7540 = vmatmul.mubr.bf16.gmra.mxu0 %v7067
        %v7541 = vpop.f32.mrf.mxu0
        %v7542 = vadd.f32 0.0, %v7541
        %v7543 = vpop.f32.mrf.mxu0
        %v7544 = vpop.f32.mrf.mxu0
        %v7545 = vadd.f32 0.0, %v7544
        %v7546 = vpop.f32.mrf.mxu0
        %7547 = vmatprep.mubr.bf16.mxu0 0
        %7548 = vmatmul.mubr.bf16.gmra.mxu0 %v7070
        %v7549 = vpop.f32.mrf.mxu0
        %v7550 = vadd.f32 0.0, %v7549
        %v7551 = vpop.f32.mrf.mxu0
        %v7552 = vpop.f32.mrf.mxu0
        %v7553 = vpop.f32.mrf.mxu0
        %7554 = vmatprep.mubr.bf16.mxu0 0
        %7555 = vmatmul.mubr.bf16.gmra.mxu0 %v7073
        %v7556 = vpop.f32.mrf.mxu0
        %v7557 = vadd.f32 0.0, %v7556
        %v7558 = vpop.f32.mrf.mxu0
        %v7559 = vpop.f32.mrf.mxu0
        %v7560 = vadd.f32 0.0, %v7559
        %v7561 = vpop.f32.mrf.mxu0
        %7562 = vmatprep.mubr.bf16.mxu0 0
        %7563 = vmatmul.mubr.bf16.gmra.mxu0 %v7076
        %v7564 = vpop.f32.mrf.mxu0
        %v7565 = vadd.f32 0.0, %v7564
        %v7566 = vpop.f32.mrf.mxu0
        %v7567 = vpop.f32.mrf.mxu0
        %v7568 = vadd.f32 0.0, %v7567
        %v7569 = vpop.f32.mrf.mxu0
        %7570 = vmatprep.mubr.bf16.mxu0 0
        %7571 = vmatmul.mubr.bf16.gmra.mxu0 %v7079
        %v7572 = vpop.f32.mrf.mxu0
        %v7573 = vpop.f32.mrf.mxu0
        %v7574 = vpop.f32.mrf.mxu0
        %v7575 = vadd.f32 0.0, %v7574
        %v7576 = vpop.f32.mrf.mxu0
        %7577 = vmatprep.mubr.bf16.mxu0 0
        %7578 = vmatmul.mubr.bf16.gmra.mxu0 %v7082
        %v7579 = vpop.f32.mrf.mxu0
        %v7580 = vadd.f32 0.0, %v7579
        %v7581 = vpop.f32.mrf.mxu0
        %v7582 = vpop.f32.mrf.mxu0
        %v7583 = vadd.f32 0.0, %v7582
        %v7584 = vpop.f32.mrf.mxu0
        %7585 = vmatprep.mubr.bf16.mxu0 0
        %7586 = vmatmul.mubr.bf16.gmra.mxu0 %v7085
        %v7587 = vpop.f32.mrf.mxu0
        %v7588 = vadd.f32 0.0, %v7587
        %v7589 = vpop.f32.mrf.mxu0
        %v7590 = vpop.f32.mrf.mxu0
        %v7591 = vpop.f32.mrf.mxu0
        %7592 = vmatprep.mubr.bf16.mxu0 0
        %7593 = vmatmul.mubr.bf16.gmra.mxu0 %v7088
        %v7594 = vpop.f32.mrf.mxu0
        %v7595 = vadd.f32 0.0, %v7594
        %v7596 = vpop.f32.mrf.mxu0
        %v7597 = vpop.f32.mrf.mxu0
        %v7598 = vadd.f32 0.0, %v7597
        %v7599 = vpop.f32.mrf.mxu0
        %7600 = vmatprep.mubr.bf16.mxu0 0
        %7601 = vmatmul.mubr.bf16.gmra.mxu0 %v7091
        %v7602 = vpop.f32.mrf.mxu0
        %v7603 = vadd.f32 0.0, %v7602
        %v7604 = vpop.f32.mrf.mxu0
        %v7605 = vpop.f32.mrf.mxu0
        %v7606 = vadd.f32 0.0, %v7605
        %v7607 = vpop.f32.mrf.mxu0
        %7608 = vmatprep.mubr.bf16.mxu0 0
        %7609 = vmatmul.mubr.bf16.gmra.mxu0 %v7094
        %v7610 = vpop.f32.mrf.mxu0
        %v7611 = vpop.f32.mrf.mxu0
        %v7612 = vpop.f32.mrf.mxu0
        %v7613 = vadd.f32 0.0, %v7612
        %v7614 = vpop.f32.mrf.mxu0
        %7615 = vmatprep.mubr.bf16.mxu0 0
        %7616 = vmatmul.mubr.bf16.gmra.mxu0 %v7097
        %v7617 = vpop.f32.mrf.mxu0
        %v7618 = vadd.f32 0.0, %v7617
        %v7619 = vpop.f32.mrf.mxu0
        %v7620 = vpop.f32.mrf.mxu0
        %v7621 = vadd.f32 0.0, %v7620
        %v7622 = vpop.f32.mrf.mxu0
        %7623 = vmatprep.mubr.bf16.mxu0 0
        %7624 = vmatmul.mubr.bf16.gmra.mxu0 %v7100
        %v7625 = vpop.f32.mrf.mxu0
        %v7626 = vadd.f32 0.0, %v7625
        %v7627 = vpop.f32.mrf.mxu0
        %v7628 = vpop.f32.mrf.mxu0
        %v7629 = vpop.f32.mrf.mxu0
        %7630 = vmatprep.mubr.bf16.mxu0 0
        %7631 = vmatmul.mubr.bf16.gmra.mxu0 %v7103
        %v7632 = vpop.f32.mrf.mxu0
        %v7633 = vadd.f32 0.0, %v7632
        %v7634 = vpop.f32.mrf.mxu0
        %v7635 = vpop.f32.mrf.mxu0
        %v7636 = vadd.f32 0.0, %v7635
        %v7637 = vpop.f32.mrf.mxu0
        %7638 = vmatprep.mubr.bf16.mxu0 0
        %7639 = vmatmul.mubr.bf16.gmra.mxu0 %v7106
        %v7640 = vpop.f32.mrf.mxu0
        %v7641 = vadd.f32 0.0, %v7640
        %v7642 = vpop.f32.mrf.mxu0
        %v7643 = vpop.f32.mrf.mxu0
        %v7644 = vadd.f32 0.0, %v7643
        %v7645 = vpop.f32.mrf.mxu0
        %7646 = vmatprep.mubr.bf16.mxu0 0
        %7647 = vmatmul.mubr.bf16.gmra.mxu0 %v7109
        %v7648 = vpop.f32.mrf.mxu0
        %v7649 = vpop.f32.mrf.mxu0
        %v7650 = vpop.f32.mrf.mxu0
        %v7651 = vadd.f32 0.0, %v7650
        %v7652 = vpop.f32.mrf.mxu0
        %7653 = vmatprep.mubr.bf16.mxu0 0
        %7654 = vmatmul.mubr.bf16.gmra.mxu0 %v7112
        %v7655 = vpop.f32.mrf.mxu0
        %v7656 = vadd.f32 0.0, %v7655
        %v7657 = vpop.f32.mrf.mxu0
        %v7658 = vpop.f32.mrf.mxu0
        %v7659 = vadd.f32 0.0, %v7658
        %v7660 = vpop.f32.mrf.mxu0
        %7661 = vmatprep.mubr.bf16.mxu0 0
        %7662 = vmatmul.mubr.bf16.gmra.mxu0 %v7115
        %v7663 = vpop.f32.mrf.mxu0
        %v7664 = vadd.f32 0.0, %v7663
        %v7665 = vpop.f32.mrf.mxu0
        %v7666 = vpop.f32.mrf.mxu0
        %v7667 = vpop.f32.mrf.mxu0
        %7668 = vmatprep.mubr.bf16.mxu0 0
        %7669 = vmatmul.mubr.bf16.gmra.mxu0 %v7118
        %v7670 = vpop.f32.mrf.mxu0
        %v7671 = vadd.f32 0.0, %v7670
        %v7672 = vpop.f32.mrf.mxu0
        %v7673 = vpop.f32.mrf.mxu0
        %v7674 = vadd.f32 0.0, %v7673
        %v7675 = vpop.f32.mrf.mxu0
        %7676 = vmatprep.mubr.bf16.mxu0 0
        %7677 = vmatmul.mubr.bf16.gmra.mxu0 %v7121
        %v7678 = vpop.f32.mrf.mxu0
        %v7679 = vadd.f32 0.0, %v7678
        %v7680 = vpop.f32.mrf.mxu0
        %v7681 = vpop.f32.mrf.mxu0
        %v7682 = vadd.f32 0.0, %v7681
        %v7683 = vpop.f32.mrf.mxu0
        %7684 = vmatprep.mubr.bf16.mxu0 0
        %7685 = vmatmul.mubr.bf16.gmra.mxu0 %v7124
        %v7686 = vpop.f32.mrf.mxu0
        %v7687 = vpop.f32.mrf.mxu0
        %v7688 = vpop.f32.mrf.mxu0
        %v7689 = vadd.f32 0.0, %v7688
        %v7690 = vpop.f32.mrf.mxu0
        %7691 = vmatprep.mubr.bf16.mxu0 0
        %7692 = vmatmul.mubr.bf16.gmra.mxu0 %v7127
        %v7693 = vpop.f32.mrf.mxu0
        %v7694 = vadd.f32 0.0, %v7693
        %v7695 = vpop.f32.mrf.mxu0
        %v7696 = vpop.f32.mrf.mxu0
        %v7697 = vadd.f32 0.0, %v7696
        %v7698 = vpop.f32.mrf.mxu0
        %7699 = vmatprep.mubr.bf16.mxu0 0
        %7700 = vmatmul.mubr.bf16.gmra.mxu0 %v7130
        %v7701 = vpop.f32.mrf.mxu0
        %v7702 = vadd.f32 0.0, %v7701
        %v7703 = vpop.f32.mrf.mxu0
        %v7704 = vpop.f32.mrf.mxu0
        %v7705 = vpop.f32.mrf.mxu0
        %7706 = vmatprep.mubr.bf16.mxu0 0
        %7707 = vmatmul.mubr.bf16.gmra.mxu0 %v7133
        %v7708 = vpop.f32.mrf.mxu0
        %v7709 = vadd.f32 0.0, %v7708
        %v7710 = vpop.f32.mrf.mxu0
        %v7711 = vpop.f32.mrf.mxu0
        %v7712 = vadd.f32 0.0, %v7711
        %v7713 = vpop.f32.mrf.mxu0
        %7714 = vmatprep.mubr.bf16.mxu0 0
        %7715 = vmatmul.mubr.bf16.gmra.mxu0 %v7136
        %v7716 = vpop.f32.mrf.mxu0
        %v7717 = vadd.f32 0.0, %v7716
        %v7718 = vpop.f32.mrf.mxu0
        %v7719 = vpop.f32.mrf.mxu0
        %v7720 = vadd.f32 0.0, %v7719
        %v7721 = vpop.f32.mrf.mxu0
        %7722 = vmatprep.mubr.bf16.mxu0 0
        %7723 = vmatmul.mubr.bf16.gmra.mxu0 %v7139
        %v7724 = vpop.f32.mrf.mxu0
        %v7725 = vpop.f32.mrf.mxu0
        %v7726 = vpop.f32.mrf.mxu0
        %v7727 = vadd.f32 0.0, %v7726
        %v7728 = vpop.f32.mrf.mxu0
        %7729 = vmatprep.mubr.bf16.mxu0 0
        %7730 = vmatmul.mubr.bf16.gmra.mxu0 %v7142
        %v7731 = vpop.f32.mrf.mxu0
        %v7732 = vadd.f32 0.0, %v7731
        %v7733 = vpop.f32.mrf.mxu0
        %v7734 = vpop.f32.mrf.mxu0
        %v7735 = vadd.f32 0.0, %v7734
        %v7736 = vpop.f32.mrf.mxu0
        %7737 = vmatprep.mubr.bf16.mxu0 0
        %7738 = vmatmul.mubr.bf16.gmra.mxu0 %v7145
        %v7739 = vpop.f32.mrf.mxu0
        %v7740 = vadd.f32 0.0, %v7739
        %v7741 = vpop.f32.mrf.mxu0
        %v7742 = vpop.f32.mrf.mxu0
        %v7743 = vpop.f32.mrf.mxu0
        %7744 = vmatprep.mubr.bf16.mxu0 0
        %7745 = vmatmul.mubr.bf16.gmra.mxu0 %v7148
        %v7746 = vpop.f32.mrf.mxu0
        %v7747 = vadd.f32 0.0, %v7746
        %v7748 = vpop.f32.mrf.mxu0
        %v7749 = vpop.f32.mrf.mxu0
        %v7750 = vadd.f32 0.0, %v7749
        %v7751 = vpop.f32.mrf.mxu0
        %7752 = vmatprep.mubr.bf16.mxu0 0
        %7753 = vmatmul.mubr.bf16.gmra.mxu0 %v7151
        %v7754 = vpop.f32.mrf.mxu0
        %v7755 = vadd.f32 0.0, %v7754
        %v7756 = vpop.f32.mrf.mxu0
        %v7757 = vpop.f32.mrf.mxu0
        %v7758 = vadd.f32 0.0, %v7757
        %v7759 = vpop.f32.mrf.mxu0
        %7760 = vmatprep.mubr.bf16.mxu0 0
        %7761 = vmatmul.mubr.bf16.gmra.mxu0 %v7154
        %v7762 = vpop.f32.mrf.mxu0
        %v7763 = vpop.f32.mrf.mxu0
        %v7764 = vpop.f32.mrf.mxu0
        %v7765 = vadd.f32 0.0, %v7764
        %v7766 = vpop.f32.mrf.mxu0
        %7767 = vmatprep.mubr.bf16.mxu0 0
        %7768 = vmatmul.mubr.bf16.gmra.mxu0 %v7157
        %v7769 = vpop.f32.mrf.mxu0
        %v7770 = vadd.f32 0.0, %v7769
        %v7771 = vpop.f32.mrf.mxu0
        %v7772 = vpop.f32.mrf.mxu0
        %v7773 = vadd.f32 0.0, %v7772
        %v7774 = vpop.f32.mrf.mxu0
        %7775 = vmatprep.mubr.bf16.mxu0 0
        %7776 = vmatmul.mubr.bf16.gmra.mxu0 %v7160
        %v7777 = vpop.f32.mrf.mxu0
        %v7778 = vadd.f32 0.0, %v7777
        %v7779 = vpop.f32.mrf.mxu0
        %v7780 = vpop.f32.mrf.mxu0
        %v7781 = vpop.f32.mrf.mxu0
        %7782 = vmatprep.mubr.bf16.mxu0 0
        %7783 = vmatmul.mubr.bf16.gmra.mxu0 %v7163
        %v7784 = vpop.f32.mrf.mxu0
        %v7785 = vadd.f32 0.0, %v7784
        %v7786 = vpop.f32.mrf.mxu0
        %v7787 = vpop.f32.mrf.mxu0
        %v7788 = vadd.f32 0.0, %v7787
        %v7789 = vpop.f32.mrf.mxu0
        %7790 = vmatprep.mubr.bf16.mxu0 0
        %7791 = vmatmul.mubr.bf16.gmra.mxu0 %v7166
        %v7792 = vpop.f32.mrf.mxu0
        %v7793 = vadd.f32 0.0, %v7792
        %v7794 = vpop.f32.mrf.mxu0
        %v7795 = vpop.f32.mrf.mxu0
        %v7796 = vadd.f32 0.0, %v7795
        %v7797 = vpop.f32.mrf.mxu0
        %7798 = vmatprep.mubr.bf16.mxu0 0
        %7799 = vmatmul.mubr.bf16.gmra.mxu0 %v7169
        %v7800 = vpop.f32.mrf.mxu0
        %v7801 = vpop.f32.mrf.mxu0
        %v7802 = vpop.f32.mrf.mxu0
        %v7803 = vadd.f32 0.0, %v7802
        %v7804 = vpop.f32.mrf.mxu0
        %7805 = vmatprep.mubr.bf16.mxu0 0
        %7806 = vmatmul.mubr.bf16.gmra.mxu0 %v7172
        %v7807 = vpop.f32.mrf.mxu0
        %v7808 = vadd.f32 0.0, %v7807
        %v7809 = vpop.f32.mrf.mxu0
        %v7810 = vpop.f32.mrf.mxu0
        %v7811 = vadd.f32 0.0, %v7810
        %v7812 = vpop.f32.mrf.mxu0
        %7813 = vmatprep.mubr.bf16.mxu0 0
        %7814 = vmatmul.mubr.bf16.gmra.mxu0 %v7175
        %v7815 = vpop.f32.mrf.mxu0
        %v7816 = vadd.f32 0.0, %v7815
        %v7817 = vpop.f32.mrf.mxu0
        %v7818 = vpop.f32.mrf.mxu0
        %v7819 = vpop.f32.mrf.mxu0
        %7820 = vdwg.mxu0
        %v7821 = vadd.f32 %v6565, %v7215
        %v7822 = vadd.f32 %v6566, %v7218
        %v7823 = vadd.f32 %v6567, %v7223
        %v7824 = vadd.f32 %v6568, %v7226
        %v7825 = vadd.f32 %v6569, %v7233
        %v7826 = vadd.f32 %v6570, %v7238
        %v7827 = vadd.f32 %v6571, %v7241
        %v7828 = vadd.f32 %v6572, %v7246
        %v7829 = vadd.f32 %v6573, %v7253
        %v7830 = vadd.f32 %v6574, %v7256
        %v7831 = vadd.f32 %v6575, %v7261
        %v7832 = vadd.f32 %v6576, %v7264
        %v7833 = vadd.f32 %v6577, %v7271
        %v7834 = vadd.f32 %v6578, %v7276
        %v7835 = vadd.f32 %v6579, %v7279
        %v7836 = vadd.f32 %v6580, %v7284
        %v7837 = vadd.f32 %v6581, %v7291
        %v7838 = vadd.f32 %v6582, %v7294
        %v7839 = vadd.f32 %v6583, %v7299
        %v7840 = vadd.f32 %v6584, %v7302
        %v7841 = vadd.f32 %v6585, %v7309
        %v7842 = vadd.f32 %v6586, %v7314
        %v7843 = vadd.f32 %v6587, %v7317
        %v7844 = vadd.f32 %v6588, %v7322
        %v7845 = vadd.f32 %v6589, %v7329
        %v7846 = vadd.f32 %v6590, %v7332
        %v7847 = vadd.f32 %v6591, %v7337
        %v7848 = vadd.f32 %v6592, %v7340
        %v7849 = vadd.f32 %v6593, %v7347
        %v7850 = vadd.f32 %v6594, %v7352
        %v7851 = vadd.f32 %v6595, %v7355
        %v7852 = vadd.f32 %v6596, %v7360
        %v7853 = vadd.f32 %v6597, %v7367
        %v7854 = vadd.f32 %v6598, %v7370
        %v7855 = vadd.f32 %v6599, %v7375
        %v7856 = vadd.f32 %v6600, %v7378
        %v7857 = vadd.f32 %v6601, %v7385
        %v7858 = vadd.f32 %v6602, %v7390
        %v7859 = vadd.f32 %v6603, %v7393
        %v7860 = vadd.f32 %v6604, %v7398
        %v7861 = vadd.f32 %v6605, %v7405
        %v7862 = vadd.f32 %v6606, %v7408
        %v7863 = vadd.f32 %v6607, %v7413
        %v7864 = vadd.f32 %v6608, %v7416
        %v7865 = vadd.f32 %v6609, %v7423
        %v7866 = vadd.f32 %v6610, %v7428
        %v7867 = vadd.f32 %v6611, %v7431
        %v7868 = vadd.f32 %v6612, %v7436
        %v7869 = vadd.f32 %v6613, %v7443
        %v7870 = vadd.f32 %v6614, %v7446
        %v7871 = vadd.f32 %v6615, %v7451
        %v7872 = vadd.f32 %v6616, %v7454
        %v7873 = vadd.f32 %v6617, %v7461
        %v7874 = vadd.f32 %v6618, %v7466
        %v7875 = vadd.f32 %v6619, %v7469
        %v7876 = vadd.f32 %v6620, %v7474
        %v7877 = vadd.f32 %v6621, %v7481
        %v7878 = vadd.f32 %v6622, %v7484
        %v7879 = vadd.f32 %v6623, %v7489
        %v7880 = vadd.f32 %v6624, %v7492
        %v7881 = vadd.f32 %v6625, %v7499
        %v7882 = vadd.f32 %v6626, %v7504
        %v7883 = vadd.f32 %v6627, %v7507
        %v7884 = vadd.f32 %v6628, %v7512
        %v7885 = vadd.f32 %v6629, %v7519
        %v7886 = vadd.f32 %v6630, %v7522
        %v7887 = vadd.f32 %v6631, %v7527
        %v7888 = vadd.f32 %v6632, %v7530
        %v7889 = vadd.f32 %v6633, %v7537
        %v7890 = vadd.f32 %v6634, %v7542
        %v7891 = vadd.f32 %v6635, %v7545
        %v7892 = vadd.f32 %v6636, %v7550
        %v7893 = vadd.f32 %v6637, %v7557
        %v7894 = vadd.f32 %v6638, %v7560
        %v7895 = vadd.f32 %v6639, %v7565
        %v7896 = vadd.f32 %v6640, %v7568
        %v7897 = vadd.f32 %v6641, %v7575
        %v7898 = vadd.f32 %v6642, %v7580
        %v7899 = vadd.f32 %v6643, %v7583
        %v7900 = vadd.f32 %v6644, %v7588
        %v7901 = vadd.f32 %v6645, %v7595
        %v7902 = vadd.f32 %v6646, %v7598
        %v7903 = vadd.f32 %v6647, %v7603
        %v7904 = vadd.f32 %v6648, %v7606
        %v7905 = vadd.f32 %v6649, %v7613
        %v7906 = vadd.f32 %v6650, %v7618
        %v7907 = vadd.f32 %v6651, %v7621
        %v7908 = vadd.f32 %v6652, %v7626
        %v7909 = vadd.f32 %v6653, %v7633
        %v7910 = vadd.f32 %v6654, %v7636
        %v7911 = vadd.f32 %v6655, %v7641
        %v7912 = vadd.f32 %v6656, %v7644
        %v7913 = vadd.f32 %v6657, %v7651
        %v7914 = vadd.f32 %v6658, %v7656
        %v7915 = vadd.f32 %v6659, %v7659
        %v7916 = vadd.f32 %v6660, %v7664
        %v7917 = vadd.f32 %v6661, %v7671
        %v7918 = vadd.f32 %v6662, %v7674
        %v7919 = vadd.f32 %v6663, %v7679
        %v7920 = vadd.f32 %v6664, %v7682
        %v7921 = vadd.f32 %v6665, %v7689
        %v7922 = vadd.f32 %v6666, %v7694
        %v7923 = vadd.f32 %v6667, %v7697
        %v7924 = vadd.f32 %v6668, %v7702
        %v7925 = vadd.f32 %v6669, %v7709
        %v7926 = vadd.f32 %v6670, %v7712
        %v7927 = vadd.f32 %v6671, %v7717
        %v7928 = vadd.f32 %v6672, %v7720
        %v7929 = vadd.f32 %v6673, %v7727
        %v7930 = vadd.f32 %v6674, %v7732
        %v7931 = vadd.f32 %v6675, %v7735
        %v7932 = vadd.f32 %v6676, %v7740
        %v7933 = vadd.f32 %v6677, %v7747
        %v7934 = vadd.f32 %v6678, %v7750
        %v7935 = vadd.f32 %v6679, %v7755
        %v7936 = vadd.f32 %v6680, %v7758
        %v7937 = vadd.f32 %v6681, %v7765
        %v7938 = vadd.f32 %v6682, %v7770
        %v7939 = vadd.f32 %v6683, %v7773
        %v7940 = vadd.f32 %v6684, %v7778
        %v7941 = vadd.f32 %v6685, %v7785
        %v7942 = vadd.f32 %v6686, %v7788
        %v7943 = vadd.f32 %v6687, %v7793
        %v7944 = vadd.f32 %v6688, %v7796
        %v7945 = vadd.f32 %v6689, %v7803
        %v7946 = vadd.f32 %v6690, %v7808
        %v7947 = vadd.f32 %v6691, %v7811
        %v7948 = vadd.f32 %v6692, %v7816
        %v7949 = vpack.c.bf16 %v331, %v330
        %v7950 = vpack.c.bf16 %v333, %v332
        %v7951 = vpack.c.bf16 %v335, %v334
        %v7952 = vpack.c.bf16 %v337, %v336
        %v7953 = vpack.c.bf16 %v339, %v338
        %s7954 = scalar_lea.vmem %s1, 12
        %v7955 = vld [vmem:[%s7954] sm:$0x3]
        %v7957 = vsel %vm1070, %v7949, 0
        %v7960 = vsel %vm1070, %v7950, 0
        %v7963 = vsel %vm1070, %v7951, 0
        %v7966 = vsel %vm1070, %v7952, 0
        %v7969 = vsel %vm1070, %v7953, 0
        %v7972 = vand.u32 %v7955, %v1314
        %7974 = vmatprep.subr.bf16.mxu0 0
        %7975 = vmatpush1.bf16.msra.mxu0 0
        %7976 = vmatprep.subr.bf16.mxu0 0
        %7977 = vmatpush1.bf16.msra.mxu0 0
        %7978 = vmatprep.subr.bf16.mxu0 0
        %7979 = vmatpush1.bf16.msra.mxu0 0
        %7980 = vmatprep.subr.bf16.mxu0 0
        %7981 = vmatpush1.bf16.msra.mxu0 0
        %7982 = vmatprep.subr.bf16.mxu0 0
        %7983 = vmatpush1.bf16.msra.mxu0 0
        %7984 = vmatprep.subr.bf16.mxu0 0
        %7985 = vmatpush1.bf16.msra.mxu0 0
        %7986 = vmatprep.subr.bf16.mxu0 0
        %7987 = vmatpush1.bf16.msra.mxu0 0
        %7988 = vmatprep.subr.bf16.mxu0 0
        %7989 = vmatpush1.bf16.msra.mxu0 %v7972
        %7990 = vmatprep.subr.bf16.mxu0 0
        %7991 = vmatpush2.bf16.msra.mxu0 0
        %7992 = vmatprep.subr.bf16.mxu0 0
        %7993 = vmatpush2.bf16.msra.mxu0 0
        %7994 = vmatprep.subr.bf16.mxu0 0
        %7995 = vmatpush2.bf16.msra.mxu0 0
        %7996 = vmatprep.subr.bf16.mxu0 0
        %7997 = vmatpush2.bf16.msra.mxu0 0
        %7998 = vmatprep.subr.bf16.mxu0 0
        %7999 = vmatpush2.bf16.msra.mxu0 0
        %8000 = vmatprep.subr.bf16.mxu0 0
        %8001 = vmatpush2.bf16.msra.mxu0 0
        %8002 = vmatprep.subr.bf16.mxu0 0
        %8003 = vmatpush2.bf16.msra.mxu0 0
        %8004 = vmatprep.subr.bf16.mxu0 0
        %8005 = vmatpush2.bf16.msra.mxu0 0
        %8006 = vmatprep.mubr.bf16.mxu0 0
        %8007 = vmatmul.mubr.bf16.gmra.mxu0 %v1969
        %v8008 = vpop.f32.mrf.mxu0
        %v8009 = vadd.f32 0.0, %v8008
        %v8010 = vpop.f32.mrf.mxu0
        %v8011 = vpop.f32.mrf.mxu0
        %v8012 = vadd.f32 0.0, %v8011
        %v8013 = vpop.f32.mrf.mxu0
        %8014 = vmatprep.mubr.bf16.mxu0 0
        %8015 = vmatmul.mubr.bf16.gmra.mxu0 %v1971
        %v8016 = vpop.f32.mrf.mxu0
        %v8017 = vadd.f32 0.0, %v8016
        %v8018 = vpop.f32.mrf.mxu0
        %v8019 = vpop.f32.mrf.mxu0
        %v8020 = vadd.f32 0.0, %v8019
        %v8021 = vpop.f32.mrf.mxu0
        %8022 = vmatprep.mubr.bf16.mxu0 0
        %8023 = vmatmul.mubr.bf16.gmra.mxu0 %v1973
        %v8024 = vpop.f32.mrf.mxu0
        %v8025 = vpop.f32.mrf.mxu0
        %v8026 = vpop.f32.mrf.mxu0
        %v8027 = vadd.f32 0.0, %v8026
        %v8028 = vpop.f32.mrf.mxu0
        %8029 = vmatprep.mubr.bf16.mxu0 0
        %8030 = vmatmul.mubr.bf16.gmra.mxu0 %v1975
        %v8031 = vpop.f32.mrf.mxu0
        %v8032 = vadd.f32 0.0, %v8031
        %v8033 = vpop.f32.mrf.mxu0
        %v8034 = vpop.f32.mrf.mxu0
        %v8035 = vadd.f32 0.0, %v8034
        %v8036 = vpop.f32.mrf.mxu0
        %8037 = vmatprep.mubr.bf16.mxu0 0
        %8038 = vmatmul.mubr.bf16.gmra.mxu0 %v1977
        %v8039 = vpop.f32.mrf.mxu0
        %v8040 = vadd.f32 0.0, %v8039
        %v8041 = vpop.f32.mrf.mxu0
        %v8042 = vpop.f32.mrf.mxu0
        %v8043 = vpop.f32.mrf.mxu0
        %8044 = vmatprep.mubr.bf16.mxu0 0
        %8045 = vmatmul.mubr.bf16.gmra.mxu0 %v1979
        %v8046 = vpop.f32.mrf.mxu0
        %v8047 = vadd.f32 0.0, %v8046
        %v8048 = vpop.f32.mrf.mxu0
        %v8049 = vpop.f32.mrf.mxu0
        %v8050 = vadd.f32 0.0, %v8049
        %v8051 = vpop.f32.mrf.mxu0
        %8052 = vmatprep.mubr.bf16.mxu0 0
        %8053 = vmatmul.mubr.bf16.gmra.mxu0 %v1981
        %v8054 = vpop.f32.mrf.mxu0
        %v8055 = vadd.f32 0.0, %v8054
        %v8056 = vpop.f32.mrf.mxu0
        %v8057 = vpop.f32.mrf.mxu0
        %v8058 = vadd.f32 0.0, %v8057
        %v8059 = vpop.f32.mrf.mxu0
        %8060 = vmatprep.mubr.bf16.mxu0 0
        %8061 = vmatmul.mubr.bf16.gmra.mxu0 %v1983
        %v8062 = vpop.f32.mrf.mxu0
        %v8063 = vpop.f32.mrf.mxu0
        %v8064 = vpop.f32.mrf.mxu0
        %v8065 = vadd.f32 0.0, %v8064
        %v8066 = vpop.f32.mrf.mxu0
        %8067 = vmatprep.mubr.bf16.mxu0 0
        %8068 = vmatmul.mubr.bf16.gmra.mxu0 %v1985
        %v8069 = vpop.f32.mrf.mxu0
        %v8070 = vadd.f32 0.0, %v8069
        %v8071 = vpop.f32.mrf.mxu0
        %v8072 = vpop.f32.mrf.mxu0
        %v8073 = vadd.f32 0.0, %v8072
        %v8074 = vpop.f32.mrf.mxu0
        %8075 = vmatprep.mubr.bf16.mxu0 0
        %8076 = vmatmul.mubr.bf16.gmra.mxu0 %v1987
        %v8077 = vpop.f32.mrf.mxu0
        %v8078 = vadd.f32 0.0, %v8077
        %v8079 = vpop.f32.mrf.mxu0
        %v8080 = vpop.f32.mrf.mxu0
        %v8081 = vpop.f32.mrf.mxu0
        %8082 = vmatprep.mubr.bf16.mxu0 0
        %8083 = vmatmul.mubr.bf16.gmra.mxu0 %v1989
        %v8084 = vpop.f32.mrf.mxu0
        %v8085 = vadd.f32 0.0, %v8084
        %v8086 = vpop.f32.mrf.mxu0
        %v8087 = vpop.f32.mrf.mxu0
        %v8088 = vadd.f32 0.0, %v8087
        %v8089 = vpop.f32.mrf.mxu0
        %8090 = vmatprep.mubr.bf16.mxu0 0
        %8091 = vmatmul.mubr.bf16.gmra.mxu0 %v1991
        %v8092 = vpop.f32.mrf.mxu0
        %v8093 = vadd.f32 0.0, %v8092
        %v8094 = vpop.f32.mrf.mxu0
        %v8095 = vpop.f32.mrf.mxu0
        %v8096 = vadd.f32 0.0, %v8095
        %v8097 = vpop.f32.mrf.mxu0
        %8098 = vmatprep.mubr.bf16.mxu0 0
        %8099 = vmatmul.mubr.bf16.gmra.mxu0 %v1993
        %v8100 = vpop.f32.mrf.mxu0
        %v8101 = vpop.f32.mrf.mxu0
        %v8102 = vpop.f32.mrf.mxu0
        %v8103 = vadd.f32 0.0, %v8102
        %v8104 = vpop.f32.mrf.mxu0
        %8105 = vmatprep.mubr.bf16.mxu0 0
        %8106 = vmatmul.mubr.bf16.gmra.mxu0 %v1995
        %v8107 = vpop.f32.mrf.mxu0
        %v8108 = vadd.f32 0.0, %v8107
        %v8109 = vpop.f32.mrf.mxu0
        %v8110 = vpop.f32.mrf.mxu0
        %v8111 = vadd.f32 0.0, %v8110
        %v8112 = vpop.f32.mrf.mxu0
        %8113 = vmatprep.mubr.bf16.mxu0 0
        %8114 = vmatmul.mubr.bf16.gmra.mxu0 %v1997
        %v8115 = vpop.f32.mrf.mxu0
        %v8116 = vadd.f32 0.0, %v8115
        %v8117 = vpop.f32.mrf.mxu0
        %v8118 = vpop.f32.mrf.mxu0
        %v8119 = vpop.f32.mrf.mxu0
        %8120 = vmatprep.mubr.bf16.mxu0 0
        %8121 = vmatmul.mubr.bf16.gmra.mxu0 %v1999
        %v8122 = vpop.f32.mrf.mxu0
        %v8123 = vadd.f32 0.0, %v8122
        %v8124 = vpop.f32.mrf.mxu0
        %v8125 = vpop.f32.mrf.mxu0
        %v8126 = vadd.f32 0.0, %v8125
        %v8127 = vpop.f32.mrf.mxu0
        %8128 = vmatprep.mubr.bf16.mxu0 0
        %8129 = vmatmul.mubr.bf16.gmra.mxu0 %v2001
        %v8130 = vpop.f32.mrf.mxu0
        %v8131 = vadd.f32 0.0, %v8130
        %v8132 = vpop.f32.mrf.mxu0
        %v8133 = vpop.f32.mrf.mxu0
        %v8134 = vadd.f32 0.0, %v8133
        %v8135 = vpop.f32.mrf.mxu0
        %8136 = vmatprep.mubr.bf16.mxu0 0
        %8137 = vmatmul.mubr.bf16.gmra.mxu0 %v2003
        %v8138 = vpop.f32.mrf.mxu0
        %v8139 = vpop.f32.mrf.mxu0
        %v8140 = vpop.f32.mrf.mxu0
        %v8141 = vadd.f32 0.0, %v8140
        %v8142 = vpop.f32.mrf.mxu0
        %8143 = vmatprep.mubr.bf16.mxu0 0
        %8144 = vmatmul.mubr.bf16.gmra.mxu0 %v2005
        %v8145 = vpop.f32.mrf.mxu0
        %v8146 = vadd.f32 0.0, %v8145
        %v8147 = vpop.f32.mrf.mxu0
        %v8148 = vpop.f32.mrf.mxu0
        %v8149 = vadd.f32 0.0, %v8148
        %v8150 = vpop.f32.mrf.mxu0
        %8151 = vmatprep.mubr.bf16.mxu0 0
        %8152 = vmatmul.mubr.bf16.gmra.mxu0 %v2007
        %v8153 = vpop.f32.mrf.mxu0
        %v8154 = vadd.f32 0.0, %v8153
        %v8155 = vpop.f32.mrf.mxu0
        %v8156 = vpop.f32.mrf.mxu0
        %v8157 = vpop.f32.mrf.mxu0
        %8158 = vmatprep.mubr.bf16.mxu0 0
        %8159 = vmatmul.mubr.bf16.gmra.mxu0 %v2009
        %v8160 = vpop.f32.mrf.mxu0
        %v8161 = vadd.f32 0.0, %v8160
        %v8162 = vpop.f32.mrf.mxu0
        %v8163 = vpop.f32.mrf.mxu0
        %v8164 = vadd.f32 0.0, %v8163
        %v8165 = vpop.f32.mrf.mxu0
        %8166 = vmatprep.mubr.bf16.mxu0 0
        %8167 = vmatmul.mubr.bf16.gmra.mxu0 %v2011
        %v8168 = vpop.f32.mrf.mxu0
        %v8169 = vadd.f32 0.0, %v8168
        %v8170 = vpop.f32.mrf.mxu0
        %v8171 = vpop.f32.mrf.mxu0
        %v8172 = vadd.f32 0.0, %v8171
        %v8173 = vpop.f32.mrf.mxu0
        %8174 = vmatprep.mubr.bf16.mxu0 0
        %8175 = vmatmul.mubr.bf16.gmra.mxu0 %v2013
        %v8176 = vpop.f32.mrf.mxu0
        %v8177 = vpop.f32.mrf.mxu0
        %v8178 = vpop.f32.mrf.mxu0
        %v8179 = vadd.f32 0.0, %v8178
        %v8180 = vpop.f32.mrf.mxu0
        %8181 = vmatprep.mubr.bf16.mxu0 0
        %8182 = vmatmul.mubr.bf16.gmra.mxu0 %v2015
        %v8183 = vpop.f32.mrf.mxu0
        %v8184 = vadd.f32 0.0, %v8183
        %v8185 = vpop.f32.mrf.mxu0
        %v8186 = vpop.f32.mrf.mxu0
        %v8187 = vadd.f32 0.0, %v8186
        %v8188 = vpop.f32.mrf.mxu0
        %8189 = vmatprep.mubr.bf16.mxu0 0
        %8190 = vmatmul.mubr.bf16.gmra.mxu0 %v2017
        %v8191 = vpop.f32.mrf.mxu0
        %v8192 = vadd.f32 0.0, %v8191
        %v8193 = vpop.f32.mrf.mxu0
        %v8194 = vpop.f32.mrf.mxu0
        %v8195 = vpop.f32.mrf.mxu0
        %8196 = vmatprep.mubr.bf16.mxu0 0
        %8197 = vmatmul.mubr.bf16.gmra.mxu0 %v2019
        %v8198 = vpop.f32.mrf.mxu0
        %v8199 = vadd.f32 0.0, %v8198
        %v8200 = vpop.f32.mrf.mxu0
        %v8201 = vpop.f32.mrf.mxu0
        %v8202 = vadd.f32 0.0, %v8201
        %v8203 = vpop.f32.mrf.mxu0
        %8204 = vmatprep.mubr.bf16.mxu0 0
        %8205 = vmatmul.mubr.bf16.gmra.mxu0 %v2021
        %v8206 = vpop.f32.mrf.mxu0
        %v8207 = vadd.f32 0.0, %v8206
        %v8208 = vpop.f32.mrf.mxu0
        %v8209 = vpop.f32.mrf.mxu0
        %v8210 = vadd.f32 0.0, %v8209
        %v8211 = vpop.f32.mrf.mxu0
        %8212 = vmatprep.mubr.bf16.mxu0 0
        %8213 = vmatmul.mubr.bf16.gmra.mxu0 %v2023
        %v8214 = vpop.f32.mrf.mxu0
        %v8215 = vpop.f32.mrf.mxu0
        %v8216 = vpop.f32.mrf.mxu0
        %v8217 = vadd.f32 0.0, %v8216
        %v8218 = vpop.f32.mrf.mxu0
        %8219 = vmatprep.mubr.bf16.mxu0 0
        %8220 = vmatmul.mubr.bf16.gmra.mxu0 %v2025
        %v8221 = vpop.f32.mrf.mxu0
        %v8222 = vadd.f32 0.0, %v8221
        %v8223 = vpop.f32.mrf.mxu0
        %v8224 = vpop.f32.mrf.mxu0
        %v8225 = vadd.f32 0.0, %v8224
        %v8226 = vpop.f32.mrf.mxu0
        %8227 = vmatprep.mubr.bf16.mxu0 0
        %8228 = vmatmul.mubr.bf16.gmra.mxu0 %v2027
        %v8229 = vpop.f32.mrf.mxu0
        %v8230 = vadd.f32 0.0, %v8229
        %v8231 = vpop.f32.mrf.mxu0
        %v8232 = vpop.f32.mrf.mxu0
        %v8233 = vpop.f32.mrf.mxu0
        %8234 = vmatprep.mubr.bf16.mxu0 0
        %8235 = vmatmul.mubr.bf16.gmra.mxu0 %v2029
        %v8236 = vpop.f32.mrf.mxu0
        %v8237 = vadd.f32 0.0, %v8236
        %v8238 = vpop.f32.mrf.mxu0
        %v8239 = vpop.f32.mrf.mxu0
        %v8240 = vadd.f32 0.0, %v8239
        %v8241 = vpop.f32.mrf.mxu0
        %8242 = vmatprep.mubr.bf16.mxu0 0
        %8243 = vmatmul.mubr.bf16.gmra.mxu0 %v2031
        %v8244 = vpop.f32.mrf.mxu0
        %v8245 = vadd.f32 0.0, %v8244
        %v8246 = vpop.f32.mrf.mxu0
        %v8247 = vpop.f32.mrf.mxu0
        %v8248 = vadd.f32 0.0, %v8247
        %v8249 = vpop.f32.mrf.mxu0
        %8250 = vmatprep.mubr.bf16.mxu0 0
        %8251 = vmatmul.mubr.bf16.gmra.mxu0 %v2033
        %v8252 = vpop.f32.mrf.mxu0
        %v8253 = vpop.f32.mrf.mxu0
        %v8254 = vpop.f32.mrf.mxu0
        %v8255 = vadd.f32 0.0, %v8254
        %v8256 = vpop.f32.mrf.mxu0
        %8257 = vmatprep.mubr.bf16.mxu0 0
        %8258 = vmatmul.mubr.bf16.gmra.mxu0 %v2035
        %v8259 = vpop.f32.mrf.mxu0
        %v8260 = vadd.f32 0.0, %v8259
        %v8261 = vpop.f32.mrf.mxu0
        %v8262 = vpop.f32.mrf.mxu0
        %v8263 = vadd.f32 0.0, %v8262
        %v8264 = vpop.f32.mrf.mxu0
        %8265 = vmatprep.mubr.bf16.mxu0 0
        %8266 = vmatmul.mubr.bf16.gmra.mxu0 %v2037
        %v8267 = vpop.f32.mrf.mxu0
        %v8268 = vadd.f32 0.0, %v8267
        %v8269 = vpop.f32.mrf.mxu0
        %v8270 = vpop.f32.mrf.mxu0
        %v8271 = vpop.f32.mrf.mxu0
        %8272 = vmatprep.mubr.bf16.mxu0 0
        %8273 = vmatmul.mubr.bf16.gmra.mxu0 %v2039
        %v8274 = vpop.f32.mrf.mxu0
        %v8275 = vadd.f32 0.0, %v8274
        %v8276 = vpop.f32.mrf.mxu0
        %v8277 = vpop.f32.mrf.mxu0
        %v8278 = vadd.f32 0.0, %v8277
        %v8279 = vpop.f32.mrf.mxu0
        %8280 = vmatprep.mubr.bf16.mxu0 0
        %8281 = vmatmul.mubr.bf16.gmra.mxu0 %v2041
        %v8282 = vpop.f32.mrf.mxu0
        %v8283 = vadd.f32 0.0, %v8282
        %v8284 = vpop.f32.mrf.mxu0
        %v8285 = vpop.f32.mrf.mxu0
        %v8286 = vadd.f32 0.0, %v8285
        %v8287 = vpop.f32.mrf.mxu0
        %8288 = vmatprep.mubr.bf16.mxu0 0
        %8289 = vmatmul.mubr.bf16.gmra.mxu0 %v2043
        %v8290 = vpop.f32.mrf.mxu0
        %v8291 = vpop.f32.mrf.mxu0
        %v8292 = vpop.f32.mrf.mxu0
        %v8293 = vadd.f32 0.0, %v8292
        %v8294 = vpop.f32.mrf.mxu0
        %8295 = vmatprep.mubr.bf16.mxu0 0
        %8296 = vmatmul.mubr.bf16.gmra.mxu0 %v2045
        %v8297 = vpop.f32.mrf.mxu0
        %v8298 = vadd.f32 0.0, %v8297
        %v8299 = vpop.f32.mrf.mxu0
        %v8300 = vpop.f32.mrf.mxu0
        %v8301 = vadd.f32 0.0, %v8300
        %v8302 = vpop.f32.mrf.mxu0
        %8303 = vmatprep.mubr.bf16.mxu0 0
        %8304 = vmatmul.mubr.bf16.gmra.mxu0 %v2047
        %v8305 = vpop.f32.mrf.mxu0
        %v8306 = vadd.f32 0.0, %v8305
        %v8307 = vpop.f32.mrf.mxu0
        %v8308 = vpop.f32.mrf.mxu0
        %v8309 = vpop.f32.mrf.mxu0
        %8310 = vmatprep.mubr.bf16.mxu0 0
        %8311 = vmatmul.mubr.bf16.gmra.mxu0 %v2049
        %v8312 = vpop.f32.mrf.mxu0
        %v8313 = vadd.f32 0.0, %v8312
        %v8314 = vpop.f32.mrf.mxu0
        %v8315 = vpop.f32.mrf.mxu0
        %v8316 = vadd.f32 0.0, %v8315
        %v8317 = vpop.f32.mrf.mxu0
        %8318 = vmatprep.mubr.bf16.mxu0 0
        %8319 = vmatmul.mubr.bf16.gmra.mxu0 %v2051
        %v8320 = vpop.f32.mrf.mxu0
        %v8321 = vadd.f32 0.0, %v8320
        %v8322 = vpop.f32.mrf.mxu0
        %v8323 = vpop.f32.mrf.mxu0
        %v8324 = vadd.f32 0.0, %v8323
        %v8325 = vpop.f32.mrf.mxu0
        %8326 = vmatprep.mubr.bf16.mxu0 0
        %8327 = vmatmul.mubr.bf16.gmra.mxu0 %v2053
        %v8328 = vpop.f32.mrf.mxu0
        %v8329 = vpop.f32.mrf.mxu0
        %v8330 = vpop.f32.mrf.mxu0
        %v8331 = vadd.f32 0.0, %v8330
        %v8332 = vpop.f32.mrf.mxu0
        %8333 = vmatprep.mubr.bf16.mxu0 0
        %8334 = vmatmul.mubr.bf16.gmra.mxu0 %v2055
        %v8335 = vpop.f32.mrf.mxu0
        %v8336 = vadd.f32 0.0, %v8335
        %v8337 = vpop.f32.mrf.mxu0
        %v8338 = vpop.f32.mrf.mxu0
        %v8339 = vadd.f32 0.0, %v8338
        %v8340 = vpop.f32.mrf.mxu0
        %8341 = vmatprep.mubr.bf16.mxu0 0
        %8342 = vmatmul.mubr.bf16.gmra.mxu0 %v2057
        %v8343 = vpop.f32.mrf.mxu0
        %v8344 = vadd.f32 0.0, %v8343
        %v8345 = vpop.f32.mrf.mxu0
        %v8346 = vpop.f32.mrf.mxu0
        %v8347 = vpop.f32.mrf.mxu0
        %8348 = vmatprep.mubr.bf16.mxu0 0
        %8349 = vmatmul.mubr.bf16.gmra.mxu0 %v2059
        %v8350 = vpop.f32.mrf.mxu0
        %v8351 = vadd.f32 0.0, %v8350
        %v8352 = vpop.f32.mrf.mxu0
        %v8353 = vpop.f32.mrf.mxu0
        %v8354 = vadd.f32 0.0, %v8353
        %v8355 = vpop.f32.mrf.mxu0
        %8356 = vmatprep.mubr.bf16.mxu0 0
        %8357 = vmatmul.mubr.bf16.gmra.mxu0 %v2061
        %v8358 = vpop.f32.mrf.mxu0
        %v8359 = vadd.f32 0.0, %v8358
        %v8360 = vpop.f32.mrf.mxu0
        %v8361 = vpop.f32.mrf.mxu0
        %v8362 = vadd.f32 0.0, %v8361
        %v8363 = vpop.f32.mrf.mxu0
        %8364 = vmatprep.mubr.bf16.mxu0 0
        %8365 = vmatmul.mubr.bf16.gmra.mxu0 %v2063
        %v8366 = vpop.f32.mrf.mxu0
        %v8367 = vpop.f32.mrf.mxu0
        %v8368 = vpop.f32.mrf.mxu0
        %v8369 = vadd.f32 0.0, %v8368
        %v8370 = vpop.f32.mrf.mxu0
        %8371 = vmatprep.mubr.bf16.mxu0 0
        %8372 = vmatmul.mubr.bf16.gmra.mxu0 %v2065
        %v8373 = vpop.f32.mrf.mxu0
        %v8374 = vadd.f32 0.0, %v8373
        %v8375 = vpop.f32.mrf.mxu0
        %v8376 = vpop.f32.mrf.mxu0
        %v8377 = vadd.f32 0.0, %v8376
        %v8378 = vpop.f32.mrf.mxu0
        %8379 = vmatprep.mubr.bf16.mxu0 0
        %8380 = vmatmul.mubr.bf16.gmra.mxu0 %v2067
        %v8381 = vpop.f32.mrf.mxu0
        %v8382 = vadd.f32 0.0, %v8381
        %v8383 = vpop.f32.mrf.mxu0
        %v8384 = vpop.f32.mrf.mxu0
        %v8385 = vpop.f32.mrf.mxu0
        %8386 = vmatprep.mubr.bf16.mxu0 0
        %8387 = vmatmul.mubr.bf16.gmra.mxu0 %v2069
        %v8388 = vpop.f32.mrf.mxu0
        %v8389 = vadd.f32 0.0, %v8388
        %v8390 = vpop.f32.mrf.mxu0
        %v8391 = vpop.f32.mrf.mxu0
        %v8392 = vadd.f32 0.0, %v8391
        %v8393 = vpop.f32.mrf.mxu0
        %8394 = vmatprep.mubr.bf16.mxu0 0
        %8395 = vmatmul.mubr.bf16.gmra.mxu0 %v2071
        %v8396 = vpop.f32.mrf.mxu0
        %v8397 = vadd.f32 0.0, %v8396
        %v8398 = vpop.f32.mrf.mxu0
        %v8399 = vpop.f32.mrf.mxu0
        %v8400 = vadd.f32 0.0, %v8399
        %v8401 = vpop.f32.mrf.mxu0
        %8402 = vmatprep.mubr.bf16.mxu0 0
        %8403 = vmatmul.mubr.bf16.gmra.mxu0 %v2073
        %v8404 = vpop.f32.mrf.mxu0
        %v8405 = vpop.f32.mrf.mxu0
        %v8406 = vpop.f32.mrf.mxu0
        %v8407 = vadd.f32 0.0, %v8406
        %v8408 = vpop.f32.mrf.mxu0
        %8409 = vmatprep.mubr.bf16.mxu0 0
        %8410 = vmatmul.mubr.bf16.gmra.mxu0 %v2075
        %v8411 = vpop.f32.mrf.mxu0
        %v8412 = vadd.f32 0.0, %v8411
        %v8413 = vpop.f32.mrf.mxu0
        %v8414 = vpop.f32.mrf.mxu0
        %v8415 = vadd.f32 0.0, %v8414
        %v8416 = vpop.f32.mrf.mxu0
        %8417 = vmatprep.mubr.bf16.mxu0 0
        %8418 = vmatmul.mubr.bf16.gmra.mxu0 %v2077
        %v8419 = vpop.f32.mrf.mxu0
        %v8420 = vadd.f32 0.0, %v8419
        %v8421 = vpop.f32.mrf.mxu0
        %v8422 = vpop.f32.mrf.mxu0
        %v8423 = vpop.f32.mrf.mxu0
        %8424 = vmatprep.mubr.bf16.mxu0 0
        %8425 = vmatmul.mubr.bf16.gmra.mxu0 %v2079
        %v8426 = vpop.f32.mrf.mxu0
        %v8427 = vadd.f32 0.0, %v8426
        %v8428 = vpop.f32.mrf.mxu0
        %v8429 = vpop.f32.mrf.mxu0
        %v8430 = vadd.f32 0.0, %v8429
        %v8431 = vpop.f32.mrf.mxu0
        %8432 = vmatprep.mubr.bf16.mxu0 0
        %8433 = vmatmul.mubr.bf16.gmra.mxu0 %v2081
        %v8434 = vpop.f32.mrf.mxu0
        %v8435 = vadd.f32 0.0, %v8434
        %v8436 = vpop.f32.mrf.mxu0
        %v8437 = vpop.f32.mrf.mxu0
        %v8438 = vadd.f32 0.0, %v8437
        %v8439 = vpop.f32.mrf.mxu0
        %8440 = vmatprep.mubr.bf16.mxu0 0
        %8441 = vmatmul.mubr.bf16.gmra.mxu0 %v2083
        %v8442 = vpop.f32.mrf.mxu0
        %v8443 = vpop.f32.mrf.mxu0
        %v8444 = vpop.f32.mrf.mxu0
        %v8445 = vadd.f32 0.0, %v8444
        %v8446 = vpop.f32.mrf.mxu0
        %8447 = vmatprep.mubr.bf16.mxu0 0
        %8448 = vmatmul.mubr.bf16.gmra.mxu0 %v2085
        %v8449 = vpop.f32.mrf.mxu0
        %v8450 = vadd.f32 0.0, %v8449
        %v8451 = vpop.f32.mrf.mxu0
        %v8452 = vpop.f32.mrf.mxu0
        %v8453 = vadd.f32 0.0, %v8452
        %v8454 = vpop.f32.mrf.mxu0
        %8455 = vmatprep.mubr.bf16.mxu0 0
        %8456 = vmatmul.mubr.bf16.gmra.mxu0 %v2087
        %v8457 = vpop.f32.mrf.mxu0
        %v8458 = vadd.f32 0.0, %v8457
        %v8459 = vpop.f32.mrf.mxu0
        %v8460 = vpop.f32.mrf.mxu0
        %v8461 = vpop.f32.mrf.mxu0
        %8462 = vmatprep.mubr.bf16.mxu0 0
        %8463 = vmatmul.mubr.bf16.gmra.mxu0 %v2089
        %v8464 = vpop.f32.mrf.mxu0
        %v8465 = vadd.f32 0.0, %v8464
        %v8466 = vpop.f32.mrf.mxu0
        %v8467 = vpop.f32.mrf.mxu0
        %v8468 = vadd.f32 0.0, %v8467
        %v8469 = vpop.f32.mrf.mxu0
        %8470 = vmatprep.mubr.bf16.mxu0 0
        %8471 = vmatmul.mubr.bf16.gmra.mxu0 %v2091
        %v8472 = vpop.f32.mrf.mxu0
        %v8473 = vadd.f32 0.0, %v8472
        %v8474 = vpop.f32.mrf.mxu0
        %v8475 = vpop.f32.mrf.mxu0
        %v8476 = vadd.f32 0.0, %v8475
        %v8477 = vpop.f32.mrf.mxu0
        %8478 = vmatprep.mubr.bf16.mxu0 0
        %8479 = vmatmul.mubr.bf16.gmra.mxu0 %v2093
        %v8480 = vpop.f32.mrf.mxu0
        %v8481 = vpop.f32.mrf.mxu0
        %v8482 = vpop.f32.mrf.mxu0
        %v8483 = vadd.f32 0.0, %v8482
        %v8484 = vpop.f32.mrf.mxu0
        %8485 = vmatprep.mubr.bf16.mxu0 0
        %8486 = vmatmul.mubr.bf16.gmra.mxu0 %v2095
        %v8487 = vpop.f32.mrf.mxu0
        %v8488 = vadd.f32 0.0, %v8487
        %v8489 = vpop.f32.mrf.mxu0
        %v8490 = vpop.f32.mrf.mxu0
        %v8491 = vadd.f32 0.0, %v8490
        %v8492 = vpop.f32.mrf.mxu0
        %8493 = vmatprep.mubr.bf16.mxu0 0
        %8494 = vmatmul.mubr.bf16.gmra.mxu0 %v2097
        %v8495 = vpop.f32.mrf.mxu0
        %v8496 = vadd.f32 0.0, %v8495
        %v8497 = vpop.f32.mrf.mxu0
        %v8498 = vpop.f32.mrf.mxu0
        %v8499 = vpop.f32.mrf.mxu0
        %8500 = vmatprep.mubr.bf16.mxu0 0
        %8501 = vmatmul.mubr.bf16.gmra.mxu0 %v2099
        %v8502 = vpop.f32.mrf.mxu0
        %v8503 = vadd.f32 0.0, %v8502
        %v8504 = vpop.f32.mrf.mxu0
        %v8505 = vpop.f32.mrf.mxu0
        %v8506 = vadd.f32 0.0, %v8505
        %v8507 = vpop.f32.mrf.mxu0
        %8508 = vmatprep.mubr.bf16.mxu0 0
        %8509 = vmatmul.mubr.bf16.gmra.mxu0 %v2101
        %v8510 = vpop.f32.mrf.mxu0
        %v8511 = vadd.f32 0.0, %v8510
        %v8512 = vpop.f32.mrf.mxu0
        %v8513 = vpop.f32.mrf.mxu0
        %v8514 = vadd.f32 0.0, %v8513
        %v8515 = vpop.f32.mrf.mxu0
        %8516 = vmatprep.mubr.bf16.mxu0 0
        %8517 = vmatmul.mubr.bf16.gmra.mxu0 %v2103
        %v8518 = vpop.f32.mrf.mxu0
        %v8519 = vpop.f32.mrf.mxu0
        %v8520 = vpop.f32.mrf.mxu0
        %v8521 = vadd.f32 0.0, %v8520
        %v8522 = vpop.f32.mrf.mxu0
        %8523 = vmatprep.mubr.bf16.mxu0 0
        %8524 = vmatmul.mubr.bf16.gmra.mxu0 %v2105
        %v8525 = vpop.f32.mrf.mxu0
        %v8526 = vadd.f32 0.0, %v8525
        %v8527 = vpop.f32.mrf.mxu0
        %v8528 = vpop.f32.mrf.mxu0
        %v8529 = vadd.f32 0.0, %v8528
        %v8530 = vpop.f32.mrf.mxu0
        %8531 = vmatprep.mubr.bf16.mxu0 0
        %8532 = vmatmul.mubr.bf16.gmra.mxu0 %v2107
        %v8533 = vpop.f32.mrf.mxu0
        %v8534 = vadd.f32 0.0, %v8533
        %v8535 = vpop.f32.mrf.mxu0
        %v8536 = vpop.f32.mrf.mxu0
        %v8537 = vpop.f32.mrf.mxu0
        %8538 = vmatprep.mubr.bf16.mxu0 0
        %8539 = vmatmul.mubr.bf16.gmra.mxu0 %v2109
        %v8540 = vpop.f32.mrf.mxu0
        %v8541 = vadd.f32 0.0, %v8540
        %v8542 = vpop.f32.mrf.mxu0
        %v8543 = vpop.f32.mrf.mxu0
        %v8544 = vadd.f32 0.0, %v8543
        %v8545 = vpop.f32.mrf.mxu0
        %8546 = vmatprep.mubr.bf16.mxu0 0
        %8547 = vmatmul.mubr.bf16.gmra.mxu0 %v2111
        %v8548 = vpop.f32.mrf.mxu0
        %v8549 = vadd.f32 0.0, %v8548
        %v8550 = vpop.f32.mrf.mxu0
        %v8551 = vpop.f32.mrf.mxu0
        %v8552 = vadd.f32 0.0, %v8551
        %v8553 = vpop.f32.mrf.mxu0
        %8554 = vmatprep.mubr.bf16.mxu0 0
        %8555 = vmatmul.mubr.bf16.gmra.mxu0 %v2113
        %v8556 = vpop.f32.mrf.mxu0
        %v8557 = vpop.f32.mrf.mxu0
        %v8558 = vpop.f32.mrf.mxu0
        %v8559 = vadd.f32 0.0, %v8558
        %v8560 = vpop.f32.mrf.mxu0
        %8561 = vmatprep.mubr.bf16.mxu0 0
        %8562 = vmatmul.mubr.bf16.gmra.mxu0 %v2115
        %v8563 = vpop.f32.mrf.mxu0
        %v8564 = vadd.f32 0.0, %v8563
        %v8565 = vpop.f32.mrf.mxu0
        %v8566 = vpop.f32.mrf.mxu0
        %v8567 = vadd.f32 0.0, %v8566
        %v8568 = vpop.f32.mrf.mxu0
        %8569 = vmatprep.mubr.bf16.mxu0 0
        %8570 = vmatmul.mubr.bf16.gmra.mxu0 %v2117
        %v8571 = vpop.f32.mrf.mxu0
        %v8572 = vadd.f32 0.0, %v8571
        %v8573 = vpop.f32.mrf.mxu0
        %v8574 = vpop.f32.mrf.mxu0
        %v8575 = vpop.f32.mrf.mxu0
        %8576 = vmatprep.mubr.bf16.mxu0 0
        %8577 = vmatmul.mubr.bf16.gmra.mxu0 %v7957
        %v8578 = vpop.f32.mrf.mxu0
        %v8579 = vadd.f32 0.0, %v8578
        %v8580 = vpop.f32.mrf.mxu0
        %v8581 = vpop.f32.mrf.mxu0
        %v8582 = vadd.f32 0.0, %v8581
        %v8583 = vpop.f32.mrf.mxu0
        %8584 = vmatprep.mubr.bf16.mxu0 0
        %8585 = vmatmul.mubr.bf16.gmra.mxu0 %v7960
        %v8586 = vpop.f32.mrf.mxu0
        %v8587 = vadd.f32 0.0, %v8586
        %v8588 = vpop.f32.mrf.mxu0
        %v8589 = vpop.f32.mrf.mxu0
        %v8590 = vadd.f32 0.0, %v8589
        %v8591 = vpop.f32.mrf.mxu0
        %8592 = vmatprep.mubr.bf16.mxu0 0
        %8593 = vmatmul.mubr.bf16.gmra.mxu0 %v7963
        %v8594 = vpop.f32.mrf.mxu0
        %v8595 = vpop.f32.mrf.mxu0
        %v8596 = vpop.f32.mrf.mxu0
        %v8597 = vadd.f32 0.0, %v8596
        %v8598 = vpop.f32.mrf.mxu0
        %8599 = vmatprep.mubr.bf16.mxu0 0
        %8600 = vmatmul.mubr.bf16.gmra.mxu0 %v7966
        %v8601 = vpop.f32.mrf.mxu0
        %v8602 = vadd.f32 0.0, %v8601
        %v8603 = vpop.f32.mrf.mxu0
        %v8604 = vpop.f32.mrf.mxu0
        %v8605 = vadd.f32 0.0, %v8604
        %v8606 = vpop.f32.mrf.mxu0
        %8607 = vmatprep.mubr.bf16.mxu0 0
        %8608 = vmatmul.mubr.bf16.gmra.mxu0 %v7969
        %v8609 = vpop.f32.mrf.mxu0
        %v8610 = vadd.f32 0.0, %v8609
        %v8611 = vpop.f32.mrf.mxu0
        %v8612 = vpop.f32.mrf.mxu0
        %v8613 = vpop.f32.mrf.mxu0
        %8614 = vdwg.mxu0
        %v8615 = vadd.f32 %v7821, %v8009
        %v8616 = vadd.f32 %v7822, %v8012
        %v8617 = vadd.f32 %v7823, %v8017
        %v8618 = vadd.f32 %v7824, %v8020
        %v8619 = vadd.f32 %v7825, %v8027
        %v8620 = vadd.f32 %v7826, %v8032
        %v8621 = vadd.f32 %v7827, %v8035
        %v8622 = vadd.f32 %v7828, %v8040
        %v8623 = vadd.f32 %v7829, %v8047
        %v8624 = vadd.f32 %v7830, %v8050
        %v8625 = vadd.f32 %v7831, %v8055
        %v8626 = vadd.f32 %v7832, %v8058
        %v8627 = vadd.f32 %v7833, %v8065
        %v8628 = vadd.f32 %v7834, %v8070
        %v8629 = vadd.f32 %v7835, %v8073
        %v8630 = vadd.f32 %v7836, %v8078
        %v8631 = vadd.f32 %v7837, %v8085
        %v8632 = vadd.f32 %v7838, %v8088
        %v8633 = vadd.f32 %v7839, %v8093
        %v8634 = vadd.f32 %v7840, %v8096
        %v8635 = vadd.f32 %v7841, %v8103
        %v8636 = vadd.f32 %v7842, %v8108
        %v8637 = vadd.f32 %v7843, %v8111
        %v8638 = vadd.f32 %v7844, %v8116
        %v8639 = vadd.f32 %v7845, %v8123
        %v8640 = vadd.f32 %v7846, %v8126
        %v8641 = vadd.f32 %v7847, %v8131
        %v8642 = vadd.f32 %v7848, %v8134
        %v8643 = vadd.f32 %v7849, %v8141
        %v8644 = vadd.f32 %v7850, %v8146
        %v8645 = vadd.f32 %v7851, %v8149
        %v8646 = vadd.f32 %v7852, %v8154
        %v8647 = vadd.f32 %v7853, %v8161
        %v8648 = vadd.f32 %v7854, %v8164
        %v8649 = vadd.f32 %v7855, %v8169
        %v8650 = vadd.f32 %v7856, %v8172
        %v8651 = vadd.f32 %v7857, %v8179
        %v8652 = vadd.f32 %v7858, %v8184
        %v8653 = vadd.f32 %v7859, %v8187
        %v8654 = vadd.f32 %v7860, %v8192
        %v8655 = vadd.f32 %v7861, %v8199
        %v8656 = vadd.f32 %v7862, %v8202
        %v8657 = vadd.f32 %v7863, %v8207
        %v8658 = vadd.f32 %v7864, %v8210
        %v8659 = vadd.f32 %v7865, %v8217
        %v8660 = vadd.f32 %v7866, %v8222
        %v8661 = vadd.f32 %v7867, %v8225
        %v8662 = vadd.f32 %v7868, %v8230
        %v8663 = vadd.f32 %v7869, %v8237
        %v8664 = vadd.f32 %v7870, %v8240
        %v8665 = vadd.f32 %v7871, %v8245
        %v8666 = vadd.f32 %v7872, %v8248
        %v8667 = vadd.f32 %v7873, %v8255
        %v8668 = vadd.f32 %v7874, %v8260
        %v8669 = vadd.f32 %v7875, %v8263
        %v8670 = vadd.f32 %v7876, %v8268
        %v8671 = vadd.f32 %v7877, %v8275
        %v8672 = vadd.f32 %v7878, %v8278
        %v8673 = vadd.f32 %v7879, %v8283
        %v8674 = vadd.f32 %v7880, %v8286
        %v8675 = vadd.f32 %v7881, %v8293
        %v8676 = vadd.f32 %v7882, %v8298
        %v8677 = vadd.f32 %v7883, %v8301
        %v8678 = vadd.f32 %v7884, %v8306
        %v8679 = vadd.f32 %v7885, %v8313
        %v8680 = vadd.f32 %v7886, %v8316
        %v8681 = vadd.f32 %v7887, %v8321
        %v8682 = vadd.f32 %v7888, %v8324
        %v8683 = vadd.f32 %v7889, %v8331
        %v8684 = vadd.f32 %v7890, %v8336
        %v8685 = vadd.f32 %v7891, %v8339
        %v8686 = vadd.f32 %v7892, %v8344
        %v8687 = vadd.f32 %v7893, %v8351
        %v8688 = vadd.f32 %v7894, %v8354
        %v8689 = vadd.f32 %v7895, %v8359
        %v8690 = vadd.f32 %v7896, %v8362
        %v8691 = vadd.f32 %v7897, %v8369
        %v8692 = vadd.f32 %v7898, %v8374
        %v8693 = vadd.f32 %v7899, %v8377
        %v8694 = vadd.f32 %v7900, %v8382
        %v8695 = vadd.f32 %v7901, %v8389
        %v8696 = vadd.f32 %v7902, %v8392
        %v8697 = vadd.f32 %v7903, %v8397
        %v8698 = vadd.f32 %v7904, %v8400
        %v8699 = vadd.f32 %v7905, %v8407
        %v8700 = vadd.f32 %v7906, %v8412
        %v8701 = vadd.f32 %v7907, %v8415
        %v8702 = vadd.f32 %v7908, %v8420
        %v8703 = vadd.f32 %v7909, %v8427
        %v8704 = vadd.f32 %v7910, %v8430
        %v8705 = vadd.f32 %v7911, %v8435
        %v8706 = vadd.f32 %v7912, %v8438
        %v8707 = vadd.f32 %v7913, %v8445
        %v8708 = vadd.f32 %v7914, %v8450
        %v8709 = vadd.f32 %v7915, %v8453
        %v8710 = vadd.f32 %v7916, %v8458
        %v8711 = vadd.f32 %v7917, %v8465
        %v8712 = vadd.f32 %v7918, %v8468
        %v8713 = vadd.f32 %v7919, %v8473
        %v8714 = vadd.f32 %v7920, %v8476
        %v8715 = vadd.f32 %v7921, %v8483
        %v8716 = vadd.f32 %v7922, %v8488
        %v8717 = vadd.f32 %v7923, %v8491
        %v8718 = vadd.f32 %v7924, %v8496
        %v8719 = vadd.f32 %v7925, %v8503
        %v8720 = vadd.f32 %v7926, %v8506
        %v8721 = vadd.f32 %v7927, %v8511
        %v8722 = vadd.f32 %v7928, %v8514
        %v8723 = vadd.f32 %v7929, %v8521
        %v8724 = vadd.f32 %v7930, %v8526
        %v8725 = vadd.f32 %v7931, %v8529
        %v8726 = vadd.f32 %v7932, %v8534
        %v8727 = vadd.f32 %v7933, %v8541
        %v8728 = vadd.f32 %v7934, %v8544
        %v8729 = vadd.f32 %v7935, %v8549
        %v8730 = vadd.f32 %v7936, %v8552
        %v8731 = vadd.f32 %v7937, %v8559
        %v8732 = vadd.f32 %v7938, %v8564
        %v8733 = vadd.f32 %v7939, %v8567
        %v8734 = vadd.f32 %v7940, %v8572
        %v8735 = vadd.f32 %v7941, %v8579
        %v8736 = vadd.f32 %v7942, %v8582
        %v8737 = vadd.f32 %v7943, %v8587
        %v8738 = vadd.f32 %v7944, %v8590
        %v8739 = vadd.f32 %v7945, %v8597
        %v8740 = vadd.f32 %v7946, %v8602
        %v8741 = vadd.f32 %v7947, %v8605
        %v8742 = vadd.f32 %v7948, %v8610
        %v8743 = vpack.c.bf16 %v340, %v340
        %s8744 = scalar_lea.vmem %s1, 14
        %v8745 = vld [vmem:[%s8744] sm:$0x3]
        %v8746 = vshll.u32 %v7949, 16
        %v8748 = vrot.slane %v8746, 1
        %v8749 = vsel %vm425, %v1064, %v8748
        %v8750 = vshrl.u32 %v7949, 16
        %v8752 = vor.u32 %v8750, %v8748
        %v8753 = vshll.u32 %v7950, 16
        %v8755 = vrot.slane %v8753, 1
        %v8756 = vsel %vm425, %v8752, %v8755
        %v8757 = vshrl.u32 %v7950, 16
        %v8759 = vor.u32 %v8757, %v8755
        %v8760 = vshll.u32 %v7951, 16
        %v8762 = vrot.slane %v8760, 1
        %v8763 = vsel %vm425, %v8759, %v8762
        %v8764 = vshrl.u32 %v7951, 16
        %v8766 = vor.u32 %v8764, %v8762
        %v8767 = vshll.u32 %v7952, 16
        %v8769 = vrot.slane %v8767, 1
        %v8770 = vsel %vm425, %v8766, %v8769
        %v8771 = vshrl.u32 %v7952, 16
        %v8773 = vor.u32 %v8771, %v8769
        %v8774 = vshll.u32 %v7953, 16
        %v8776 = vrot.slane %v8774, 1
        %v8777 = vsel %vm425, %v8773, %v8776
        %v8778 = vshrl.u32 %v7953, 16
        %v8780 = vor.u32 %v8778, %v8776
        %v8782 = vshll.u32 %v8743, 16
        %v8784 = vrot.slane %v8782, 1
        %v8785 = vsel %vm425, %v8780, %v8784
        %v8787 = vsel %vm1070, %v8749, 0
        %v8790 = vsel %vm1070, %v8756, 0
        %v8793 = vsel %vm1070, %v8763, 0
        %v8796 = vsel %vm1070, %v8770, 0
        %v8799 = vsel %vm1070, %v8777, 0
        %v8802 = vsel %vm1070, %v8785, 0
        %v8805 = vand.u32 %v8745, %v1314
        %8807 = vmatprep.subr.bf16.mxu0 0
        %8808 = vmatpush1.bf16.msra.mxu0 0
        %8809 = vmatprep.subr.bf16.mxu0 0
        %8810 = vmatpush1.bf16.msra.mxu0 0
        %8811 = vmatprep.subr.bf16.mxu0 0
        %8812 = vmatpush1.bf16.msra.mxu0 0
        %8813 = vmatprep.subr.bf16.mxu0 0
        %8814 = vmatpush1.bf16.msra.mxu0 0
        %8815 = vmatprep.subr.bf16.mxu0 0
        %8816 = vmatpush1.bf16.msra.mxu0 0
        %8817 = vmatprep.subr.bf16.mxu0 0
        %8818 = vmatpush1.bf16.msra.mxu0 0
        %8819 = vmatprep.subr.bf16.mxu0 0
        %8820 = vmatpush1.bf16.msra.mxu0 0
        %8821 = vmatprep.subr.bf16.mxu0 0
        %8822 = vmatpush1.bf16.msra.mxu0 %v8805
        %8823 = vmatprep.subr.bf16.mxu0 0
        %8824 = vmatpush2.bf16.msra.mxu0 0
        %8825 = vmatprep.subr.bf16.mxu0 0
        %8826 = vmatpush2.bf16.msra.mxu0 0
        %8827 = vmatprep.subr.bf16.mxu0 0
        %8828 = vmatpush2.bf16.msra.mxu0 0
        %8829 = vmatprep.subr.bf16.mxu0 0
        %8830 = vmatpush2.bf16.msra.mxu0 0
        %8831 = vmatprep.subr.bf16.mxu0 0
        %8832 = vmatpush2.bf16.msra.mxu0 0
        %8833 = vmatprep.subr.bf16.mxu0 0
        %8834 = vmatpush2.bf16.msra.mxu0 0
        %8835 = vmatprep.subr.bf16.mxu0 0
        %8836 = vmatpush2.bf16.msra.mxu0 0
        %8837 = vmatprep.subr.bf16.mxu0 0
        %8838 = vmatpush2.bf16.msra.mxu0 0
        %8839 = vmatprep.mubr.bf16.mxu0 0
        %8840 = vmatmul.mubr.bf16.gmra.mxu0 %v1087
        %v8841 = vpop.f32.mrf.mxu0
        %v8842 = vadd.f32 0.0, %v8841
        %v8843 = vpop.f32.mrf.mxu0
        %v8844 = vpop.f32.mrf.mxu0
        %v8845 = vadd.f32 0.0, %v8844
        %v8846 = vpop.f32.mrf.mxu0
        %8847 = vmatprep.mubr.bf16.mxu0 0
        %8848 = vmatmul.mubr.bf16.gmra.mxu0 %v1090
        %v8849 = vpop.f32.mrf.mxu0
        %v8850 = vadd.f32 0.0, %v8849
        %v8851 = vpop.f32.mrf.mxu0
        %v8852 = vpop.f32.mrf.mxu0
        %v8853 = vadd.f32 0.0, %v8852
        %v8854 = vpop.f32.mrf.mxu0
        %8855 = vmatprep.mubr.bf16.mxu0 0
        %8856 = vmatmul.mubr.bf16.gmra.mxu0 %v1093
        %v8857 = vpop.f32.mrf.mxu0
        %v8858 = vpop.f32.mrf.mxu0
        %v8859 = vpop.f32.mrf.mxu0
        %v8860 = vadd.f32 0.0, %v8859
        %v8861 = vpop.f32.mrf.mxu0
        %8862 = vmatprep.mubr.bf16.mxu0 0
        %8863 = vmatmul.mubr.bf16.gmra.mxu0 %v1096
        %v8864 = vpop.f32.mrf.mxu0
        %v8865 = vadd.f32 0.0, %v8864
        %v8866 = vpop.f32.mrf.mxu0
        %v8867 = vpop.f32.mrf.mxu0
        %v8868 = vadd.f32 0.0, %v8867
        %v8869 = vpop.f32.mrf.mxu0
        %8870 = vmatprep.mubr.bf16.mxu0 0
        %8871 = vmatmul.mubr.bf16.gmra.mxu0 %v1099
        %v8872 = vpop.f32.mrf.mxu0
        %v8873 = vadd.f32 0.0, %v8872
        %v8874 = vpop.f32.mrf.mxu0
        %v8875 = vpop.f32.mrf.mxu0
        %v8876 = vpop.f32.mrf.mxu0
        %8877 = vmatprep.mubr.bf16.mxu0 0
        %8878 = vmatmul.mubr.bf16.gmra.mxu0 %v1102
        %v8879 = vpop.f32.mrf.mxu0
        %v8880 = vadd.f32 0.0, %v8879
        %v8881 = vpop.f32.mrf.mxu0
        %v8882 = vpop.f32.mrf.mxu0
        %v8883 = vadd.f32 0.0, %v8882
        %v8884 = vpop.f32.mrf.mxu0
        %8885 = vmatprep.mubr.bf16.mxu0 0
        %8886 = vmatmul.mubr.bf16.gmra.mxu0 %v1105
        %v8887 = vpop.f32.mrf.mxu0
        %v8888 = vadd.f32 0.0, %v8887
        %v8889 = vpop.f32.mrf.mxu0
        %v8890 = vpop.f32.mrf.mxu0
        %v8891 = vadd.f32 0.0, %v8890
        %v8892 = vpop.f32.mrf.mxu0
        %8893 = vmatprep.mubr.bf16.mxu0 0
        %8894 = vmatmul.mubr.bf16.gmra.mxu0 %v1108
        %v8895 = vpop.f32.mrf.mxu0
        %v8896 = vpop.f32.mrf.mxu0
        %v8897 = vpop.f32.mrf.mxu0
        %v8898 = vadd.f32 0.0, %v8897
        %v8899 = vpop.f32.mrf.mxu0
        %8900 = vmatprep.mubr.bf16.mxu0 0
        %8901 = vmatmul.mubr.bf16.gmra.mxu0 %v1111
        %v8902 = vpop.f32.mrf.mxu0
        %v8903 = vadd.f32 0.0, %v8902
        %v8904 = vpop.f32.mrf.mxu0
        %v8905 = vpop.f32.mrf.mxu0
        %v8906 = vadd.f32 0.0, %v8905
        %v8907 = vpop.f32.mrf.mxu0
        %8908 = vmatprep.mubr.bf16.mxu0 0
        %8909 = vmatmul.mubr.bf16.gmra.mxu0 %v1114
        %v8910 = vpop.f32.mrf.mxu0
        %v8911 = vadd.f32 0.0, %v8910
        %v8912 = vpop.f32.mrf.mxu0
        %v8913 = vpop.f32.mrf.mxu0
        %v8914 = vpop.f32.mrf.mxu0
        %8915 = vmatprep.mubr.bf16.mxu0 0
        %8916 = vmatmul.mubr.bf16.gmra.mxu0 %v1117
        %v8917 = vpop.f32.mrf.mxu0
        %v8918 = vadd.f32 0.0, %v8917
        %v8919 = vpop.f32.mrf.mxu0
        %v8920 = vpop.f32.mrf.mxu0
        %v8921 = vadd.f32 0.0, %v8920
        %v8922 = vpop.f32.mrf.mxu0
        %8923 = vmatprep.mubr.bf16.mxu0 0
        %8924 = vmatmul.mubr.bf16.gmra.mxu0 %v1120
        %v8925 = vpop.f32.mrf.mxu0
        %v8926 = vadd.f32 0.0, %v8925
        %v8927 = vpop.f32.mrf.mxu0
        %v8928 = vpop.f32.mrf.mxu0
        %v8929 = vadd.f32 0.0, %v8928
        %v8930 = vpop.f32.mrf.mxu0
        %8931 = vmatprep.mubr.bf16.mxu0 0
        %8932 = vmatmul.mubr.bf16.gmra.mxu0 %v1123
        %v8933 = vpop.f32.mrf.mxu0
        %v8934 = vpop.f32.mrf.mxu0
        %v8935 = vpop.f32.mrf.mxu0
        %v8936 = vadd.f32 0.0, %v8935
        %v8937 = vpop.f32.mrf.mxu0
        %8938 = vmatprep.mubr.bf16.mxu0 0
        %8939 = vmatmul.mubr.bf16.gmra.mxu0 %v1126
        %v8940 = vpop.f32.mrf.mxu0
        %v8941 = vadd.f32 0.0, %v8940
        %v8942 = vpop.f32.mrf.mxu0
        %v8943 = vpop.f32.mrf.mxu0
        %v8944 = vadd.f32 0.0, %v8943
        %v8945 = vpop.f32.mrf.mxu0
        %8946 = vmatprep.mubr.bf16.mxu0 0
        %8947 = vmatmul.mubr.bf16.gmra.mxu0 %v1129
        %v8948 = vpop.f32.mrf.mxu0
        %v8949 = vadd.f32 0.0, %v8948
        %v8950 = vpop.f32.mrf.mxu0
        %v8951 = vpop.f32.mrf.mxu0
        %v8952 = vpop.f32.mrf.mxu0
        %8953 = vmatprep.mubr.bf16.mxu0 0
        %8954 = vmatmul.mubr.bf16.gmra.mxu0 %v1132
        %v8955 = vpop.f32.mrf.mxu0
        %v8956 = vadd.f32 0.0, %v8955
        %v8957 = vpop.f32.mrf.mxu0
        %v8958 = vpop.f32.mrf.mxu0
        %v8959 = vadd.f32 0.0, %v8958
        %v8960 = vpop.f32.mrf.mxu0
        %8961 = vmatprep.mubr.bf16.mxu0 0
        %8962 = vmatmul.mubr.bf16.gmra.mxu0 %v1135
        %v8963 = vpop.f32.mrf.mxu0
        %v8964 = vadd.f32 0.0, %v8963
        %v8965 = vpop.f32.mrf.mxu0
        %v8966 = vpop.f32.mrf.mxu0
        %v8967 = vadd.f32 0.0, %v8966
        %v8968 = vpop.f32.mrf.mxu0
        %8969 = vmatprep.mubr.bf16.mxu0 0
        %8970 = vmatmul.mubr.bf16.gmra.mxu0 %v1138
        %v8971 = vpop.f32.mrf.mxu0
        %v8972 = vpop.f32.mrf.mxu0
        %v8973 = vpop.f32.mrf.mxu0
        %v8974 = vadd.f32 0.0, %v8973
        %v8975 = vpop.f32.mrf.mxu0
        %8976 = vmatprep.mubr.bf16.mxu0 0
        %8977 = vmatmul.mubr.bf16.gmra.mxu0 %v1141
        %v8978 = vpop.f32.mrf.mxu0
        %v8979 = vadd.f32 0.0, %v8978
        %v8980 = vpop.f32.mrf.mxu0
        %v8981 = vpop.f32.mrf.mxu0
        %v8982 = vadd.f32 0.0, %v8981
        %v8983 = vpop.f32.mrf.mxu0
        %8984 = vmatprep.mubr.bf16.mxu0 0
        %8985 = vmatmul.mubr.bf16.gmra.mxu0 %v1144
        %v8986 = vpop.f32.mrf.mxu0
        %v8987 = vadd.f32 0.0, %v8986
        %v8988 = vpop.f32.mrf.mxu0
        %v8989 = vpop.f32.mrf.mxu0
        %v8990 = vpop.f32.mrf.mxu0
        %8991 = vmatprep.mubr.bf16.mxu0 0
        %8992 = vmatmul.mubr.bf16.gmra.mxu0 %v1147
        %v8993 = vpop.f32.mrf.mxu0
        %v8994 = vadd.f32 0.0, %v8993
        %v8995 = vpop.f32.mrf.mxu0
        %v8996 = vpop.f32.mrf.mxu0
        %v8997 = vadd.f32 0.0, %v8996
        %v8998 = vpop.f32.mrf.mxu0
        %8999 = vmatprep.mubr.bf16.mxu0 0
        %9000 = vmatmul.mubr.bf16.gmra.mxu0 %v1150
        %v9001 = vpop.f32.mrf.mxu0
        %v9002 = vadd.f32 0.0, %v9001
        %v9003 = vpop.f32.mrf.mxu0
        %v9004 = vpop.f32.mrf.mxu0
        %v9005 = vadd.f32 0.0, %v9004
        %v9006 = vpop.f32.mrf.mxu0
        %9007 = vmatprep.mubr.bf16.mxu0 0
        %9008 = vmatmul.mubr.bf16.gmra.mxu0 %v1153
        %v9009 = vpop.f32.mrf.mxu0
        %v9010 = vpop.f32.mrf.mxu0
        %v9011 = vpop.f32.mrf.mxu0
        %v9012 = vadd.f32 0.0, %v9011
        %v9013 = vpop.f32.mrf.mxu0
        %9014 = vmatprep.mubr.bf16.mxu0 0
        %9015 = vmatmul.mubr.bf16.gmra.mxu0 %v1156
        %v9016 = vpop.f32.mrf.mxu0
        %v9017 = vadd.f32 0.0, %v9016
        %v9018 = vpop.f32.mrf.mxu0
        %v9019 = vpop.f32.mrf.mxu0
        %v9020 = vadd.f32 0.0, %v9019
        %v9021 = vpop.f32.mrf.mxu0
        %9022 = vmatprep.mubr.bf16.mxu0 0
        %9023 = vmatmul.mubr.bf16.gmra.mxu0 %v1159
        %v9024 = vpop.f32.mrf.mxu0
        %v9025 = vadd.f32 0.0, %v9024
        %v9026 = vpop.f32.mrf.mxu0
        %v9027 = vpop.f32.mrf.mxu0
        %v9028 = vpop.f32.mrf.mxu0
        %9029 = vmatprep.mubr.bf16.mxu0 0
        %9030 = vmatmul.mubr.bf16.gmra.mxu0 %v1162
        %v9031 = vpop.f32.mrf.mxu0
        %v9032 = vadd.f32 0.0, %v9031
        %v9033 = vpop.f32.mrf.mxu0
        %v9034 = vpop.f32.mrf.mxu0
        %v9035 = vadd.f32 0.0, %v9034
        %v9036 = vpop.f32.mrf.mxu0
        %9037 = vmatprep.mubr.bf16.mxu0 0
        %9038 = vmatmul.mubr.bf16.gmra.mxu0 %v1165
        %v9039 = vpop.f32.mrf.mxu0
        %v9040 = vadd.f32 0.0, %v9039
        %v9041 = vpop.f32.mrf.mxu0
        %v9042 = vpop.f32.mrf.mxu0
        %v9043 = vadd.f32 0.0, %v9042
        %v9044 = vpop.f32.mrf.mxu0
        %9045 = vmatprep.mubr.bf16.mxu0 0
        %9046 = vmatmul.mubr.bf16.gmra.mxu0 %v1168
        %v9047 = vpop.f32.mrf.mxu0
        %v9048 = vpop.f32.mrf.mxu0
        %v9049 = vpop.f32.mrf.mxu0
        %v9050 = vadd.f32 0.0, %v9049
        %v9051 = vpop.f32.mrf.mxu0
        %9052 = vmatprep.mubr.bf16.mxu0 0
        %9053 = vmatmul.mubr.bf16.gmra.mxu0 %v1171
        %v9054 = vpop.f32.mrf.mxu0
        %v9055 = vadd.f32 0.0, %v9054
        %v9056 = vpop.f32.mrf.mxu0
        %v9057 = vpop.f32.mrf.mxu0
        %v9058 = vadd.f32 0.0, %v9057
        %v9059 = vpop.f32.mrf.mxu0
        %9060 = vmatprep.mubr.bf16.mxu0 0
        %9061 = vmatmul.mubr.bf16.gmra.mxu0 %v1174
        %v9062 = vpop.f32.mrf.mxu0
        %v9063 = vadd.f32 0.0, %v9062
        %v9064 = vpop.f32.mrf.mxu0
        %v9065 = vpop.f32.mrf.mxu0
        %v9066 = vpop.f32.mrf.mxu0
        %9067 = vmatprep.mubr.bf16.mxu0 0
        %9068 = vmatmul.mubr.bf16.gmra.mxu0 %v1177
        %v9069 = vpop.f32.mrf.mxu0
        %v9070 = vadd.f32 0.0, %v9069
        %v9071 = vpop.f32.mrf.mxu0
        %v9072 = vpop.f32.mrf.mxu0
        %v9073 = vadd.f32 0.0, %v9072
        %v9074 = vpop.f32.mrf.mxu0
        %9075 = vmatprep.mubr.bf16.mxu0 0
        %9076 = vmatmul.mubr.bf16.gmra.mxu0 %v1180
        %v9077 = vpop.f32.mrf.mxu0
        %v9078 = vadd.f32 0.0, %v9077
        %v9079 = vpop.f32.mrf.mxu0
        %v9080 = vpop.f32.mrf.mxu0
        %v9081 = vadd.f32 0.0, %v9080
        %v9082 = vpop.f32.mrf.mxu0
        %9083 = vmatprep.mubr.bf16.mxu0 0
        %9084 = vmatmul.mubr.bf16.gmra.mxu0 %v1183
        %v9085 = vpop.f32.mrf.mxu0
        %v9086 = vpop.f32.mrf.mxu0
        %v9087 = vpop.f32.mrf.mxu0
        %v9088 = vadd.f32 0.0, %v9087
        %v9089 = vpop.f32.mrf.mxu0
        %9090 = vmatprep.mubr.bf16.mxu0 0
        %9091 = vmatmul.mubr.bf16.gmra.mxu0 %v1186
        %v9092 = vpop.f32.mrf.mxu0
        %v9093 = vadd.f32 0.0, %v9092
        %v9094 = vpop.f32.mrf.mxu0
        %v9095 = vpop.f32.mrf.mxu0
        %v9096 = vadd.f32 0.0, %v9095
        %v9097 = vpop.f32.mrf.mxu0
        %9098 = vmatprep.mubr.bf16.mxu0 0
        %9099 = vmatmul.mubr.bf16.gmra.mxu0 %v1189
        %v9100 = vpop.f32.mrf.mxu0
        %v9101 = vadd.f32 0.0, %v9100
        %v9102 = vpop.f32.mrf.mxu0
        %v9103 = vpop.f32.mrf.mxu0
        %v9104 = vpop.f32.mrf.mxu0
        %9105 = vmatprep.mubr.bf16.mxu0 0
        %9106 = vmatmul.mubr.bf16.gmra.mxu0 %v1192
        %v9107 = vpop.f32.mrf.mxu0
        %v9108 = vadd.f32 0.0, %v9107
        %v9109 = vpop.f32.mrf.mxu0
        %v9110 = vpop.f32.mrf.mxu0
        %v9111 = vadd.f32 0.0, %v9110
        %v9112 = vpop.f32.mrf.mxu0
        %9113 = vmatprep.mubr.bf16.mxu0 0
        %9114 = vmatmul.mubr.bf16.gmra.mxu0 %v1195
        %v9115 = vpop.f32.mrf.mxu0
        %v9116 = vadd.f32 0.0, %v9115
        %v9117 = vpop.f32.mrf.mxu0
        %v9118 = vpop.f32.mrf.mxu0
        %v9119 = vadd.f32 0.0, %v9118
        %v9120 = vpop.f32.mrf.mxu0
        %9121 = vmatprep.mubr.bf16.mxu0 0
        %9122 = vmatmul.mubr.bf16.gmra.mxu0 %v1198
        %v9123 = vpop.f32.mrf.mxu0
        %v9124 = vpop.f32.mrf.mxu0
        %v9125 = vpop.f32.mrf.mxu0
        %v9126 = vadd.f32 0.0, %v9125
        %v9127 = vpop.f32.mrf.mxu0
        %9128 = vmatprep.mubr.bf16.mxu0 0
        %9129 = vmatmul.mubr.bf16.gmra.mxu0 %v1201
        %v9130 = vpop.f32.mrf.mxu0
        %v9131 = vadd.f32 0.0, %v9130
        %v9132 = vpop.f32.mrf.mxu0
        %v9133 = vpop.f32.mrf.mxu0
        %v9134 = vadd.f32 0.0, %v9133
        %v9135 = vpop.f32.mrf.mxu0
        %9136 = vmatprep.mubr.bf16.mxu0 0
        %9137 = vmatmul.mubr.bf16.gmra.mxu0 %v1204
        %v9138 = vpop.f32.mrf.mxu0
        %v9139 = vadd.f32 0.0, %v9138
        %v9140 = vpop.f32.mrf.mxu0
        %v9141 = vpop.f32.mrf.mxu0
        %v9142 = vpop.f32.mrf.mxu0
        %9143 = vmatprep.mubr.bf16.mxu0 0
        %9144 = vmatmul.mubr.bf16.gmra.mxu0 %v1207
        %v9145 = vpop.f32.mrf.mxu0
        %v9146 = vadd.f32 0.0, %v9145
        %v9147 = vpop.f32.mrf.mxu0
        %v9148 = vpop.f32.mrf.mxu0
        %v9149 = vadd.f32 0.0, %v9148
        %v9150 = vpop.f32.mrf.mxu0
        %9151 = vmatprep.mubr.bf16.mxu0 0
        %9152 = vmatmul.mubr.bf16.gmra.mxu0 %v1210
        %v9153 = vpop.f32.mrf.mxu0
        %v9154 = vadd.f32 0.0, %v9153
        %v9155 = vpop.f32.mrf.mxu0
        %v9156 = vpop.f32.mrf.mxu0
        %v9157 = vadd.f32 0.0, %v9156
        %v9158 = vpop.f32.mrf.mxu0
        %9159 = vmatprep.mubr.bf16.mxu0 0
        %9160 = vmatmul.mubr.bf16.gmra.mxu0 %v1213
        %v9161 = vpop.f32.mrf.mxu0
        %v9162 = vpop.f32.mrf.mxu0
        %v9163 = vpop.f32.mrf.mxu0
        %v9164 = vadd.f32 0.0, %v9163
        %v9165 = vpop.f32.mrf.mxu0
        %9166 = vmatprep.mubr.bf16.mxu0 0
        %9167 = vmatmul.mubr.bf16.gmra.mxu0 %v1216
        %v9168 = vpop.f32.mrf.mxu0
        %v9169 = vadd.f32 0.0, %v9168
        %v9170 = vpop.f32.mrf.mxu0
        %v9171 = vpop.f32.mrf.mxu0
        %v9172 = vadd.f32 0.0, %v9171
        %v9173 = vpop.f32.mrf.mxu0
        %9174 = vmatprep.mubr.bf16.mxu0 0
        %9175 = vmatmul.mubr.bf16.gmra.mxu0 %v1219
        %v9176 = vpop.f32.mrf.mxu0
        %v9177 = vadd.f32 0.0, %v9176
        %v9178 = vpop.f32.mrf.mxu0
        %v9179 = vpop.f32.mrf.mxu0
        %v9180 = vpop.f32.mrf.mxu0
        %9181 = vmatprep.mubr.bf16.mxu0 0
        %9182 = vmatmul.mubr.bf16.gmra.mxu0 %v1222
        %v9183 = vpop.f32.mrf.mxu0
        %v9184 = vadd.f32 0.0, %v9183
        %v9185 = vpop.f32.mrf.mxu0
        %v9186 = vpop.f32.mrf.mxu0
        %v9187 = vadd.f32 0.0, %v9186
        %v9188 = vpop.f32.mrf.mxu0
        %9189 = vmatprep.mubr.bf16.mxu0 0
        %9190 = vmatmul.mubr.bf16.gmra.mxu0 %v1225
        %v9191 = vpop.f32.mrf.mxu0
        %v9192 = vadd.f32 0.0, %v9191
        %v9193 = vpop.f32.mrf.mxu0
        %v9194 = vpop.f32.mrf.mxu0
        %v9195 = vadd.f32 0.0, %v9194
        %v9196 = vpop.f32.mrf.mxu0
        %9197 = vmatprep.mubr.bf16.mxu0 0
        %9198 = vmatmul.mubr.bf16.gmra.mxu0 %v1228
        %v9199 = vpop.f32.mrf.mxu0
        %v9200 = vpop.f32.mrf.mxu0
        %v9201 = vpop.f32.mrf.mxu0
        %v9202 = vadd.f32 0.0, %v9201
        %v9203 = vpop.f32.mrf.mxu0
        %9204 = vmatprep.mubr.bf16.mxu0 0
        %9205 = vmatmul.mubr.bf16.gmra.mxu0 %v1231
        %v9206 = vpop.f32.mrf.mxu0
        %v9207 = vadd.f32 0.0, %v9206
        %v9208 = vpop.f32.mrf.mxu0
        %v9209 = vpop.f32.mrf.mxu0
        %v9210 = vadd.f32 0.0, %v9209
        %v9211 = vpop.f32.mrf.mxu0
        %9212 = vmatprep.mubr.bf16.mxu0 0
        %9213 = vmatmul.mubr.bf16.gmra.mxu0 %v1234
        %v9214 = vpop.f32.mrf.mxu0
        %v9215 = vadd.f32 0.0, %v9214
        %v9216 = vpop.f32.mrf.mxu0
        %v9217 = vpop.f32.mrf.mxu0
        %v9218 = vpop.f32.mrf.mxu0
        %9219 = vmatprep.mubr.bf16.mxu0 0
        %9220 = vmatmul.mubr.bf16.gmra.mxu0 %v1237
        %v9221 = vpop.f32.mrf.mxu0
        %v9222 = vadd.f32 0.0, %v9221
        %v9223 = vpop.f32.mrf.mxu0
        %v9224 = vpop.f32.mrf.mxu0
        %v9225 = vadd.f32 0.0, %v9224
        %v9226 = vpop.f32.mrf.mxu0
        %9227 = vmatprep.mubr.bf16.mxu0 0
        %9228 = vmatmul.mubr.bf16.gmra.mxu0 %v1240
        %v9229 = vpop.f32.mrf.mxu0
        %v9230 = vadd.f32 0.0, %v9229
        %v9231 = vpop.f32.mrf.mxu0
        %v9232 = vpop.f32.mrf.mxu0
        %v9233 = vadd.f32 0.0, %v9232
        %v9234 = vpop.f32.mrf.mxu0
        %9235 = vmatprep.mubr.bf16.mxu0 0
        %9236 = vmatmul.mubr.bf16.gmra.mxu0 %v1243
        %v9237 = vpop.f32.mrf.mxu0
        %v9238 = vpop.f32.mrf.mxu0
        %v9239 = vpop.f32.mrf.mxu0
        %v9240 = vadd.f32 0.0, %v9239
        %v9241 = vpop.f32.mrf.mxu0
        %9242 = vmatprep.mubr.bf16.mxu0 0
        %9243 = vmatmul.mubr.bf16.gmra.mxu0 %v1246
        %v9244 = vpop.f32.mrf.mxu0
        %v9245 = vadd.f32 0.0, %v9244
        %v9246 = vpop.f32.mrf.mxu0
        %v9247 = vpop.f32.mrf.mxu0
        %v9248 = vadd.f32 0.0, %v9247
        %v9249 = vpop.f32.mrf.mxu0
        %9250 = vmatprep.mubr.bf16.mxu0 0
        %9251 = vmatmul.mubr.bf16.gmra.mxu0 %v1249
        %v9252 = vpop.f32.mrf.mxu0
        %v9253 = vadd.f32 0.0, %v9252
        %v9254 = vpop.f32.mrf.mxu0
        %v9255 = vpop.f32.mrf.mxu0
        %v9256 = vpop.f32.mrf.mxu0
        %9257 = vmatprep.mubr.bf16.mxu0 0
        %9258 = vmatmul.mubr.bf16.gmra.mxu0 %v1252
        %v9259 = vpop.f32.mrf.mxu0
        %v9260 = vadd.f32 0.0, %v9259
        %v9261 = vpop.f32.mrf.mxu0
        %v9262 = vpop.f32.mrf.mxu0
        %v9263 = vadd.f32 0.0, %v9262
        %v9264 = vpop.f32.mrf.mxu0
        %9265 = vmatprep.mubr.bf16.mxu0 0
        %9266 = vmatmul.mubr.bf16.gmra.mxu0 %v1255
        %v9267 = vpop.f32.mrf.mxu0
        %v9268 = vadd.f32 0.0, %v9267
        %v9269 = vpop.f32.mrf.mxu0
        %v9270 = vpop.f32.mrf.mxu0
        %v9271 = vadd.f32 0.0, %v9270
        %v9272 = vpop.f32.mrf.mxu0
        %9273 = vmatprep.mubr.bf16.mxu0 0
        %9274 = vmatmul.mubr.bf16.gmra.mxu0 %v1258
        %v9275 = vpop.f32.mrf.mxu0
        %v9276 = vpop.f32.mrf.mxu0
        %v9277 = vpop.f32.mrf.mxu0
        %v9278 = vadd.f32 0.0, %v9277
        %v9279 = vpop.f32.mrf.mxu0
        %9280 = vmatprep.mubr.bf16.mxu0 0
        %9281 = vmatmul.mubr.bf16.gmra.mxu0 %v1261
        %v9282 = vpop.f32.mrf.mxu0
        %v9283 = vadd.f32 0.0, %v9282
        %v9284 = vpop.f32.mrf.mxu0
        %v9285 = vpop.f32.mrf.mxu0
        %v9286 = vadd.f32 0.0, %v9285
        %v9287 = vpop.f32.mrf.mxu0
        %9288 = vmatprep.mubr.bf16.mxu0 0
        %9289 = vmatmul.mubr.bf16.gmra.mxu0 %v1264
        %v9290 = vpop.f32.mrf.mxu0
        %v9291 = vadd.f32 0.0, %v9290
        %v9292 = vpop.f32.mrf.mxu0
        %v9293 = vpop.f32.mrf.mxu0
        %v9294 = vpop.f32.mrf.mxu0
        %9295 = vmatprep.mubr.bf16.mxu0 0
        %9296 = vmatmul.mubr.bf16.gmra.mxu0 %v1267
        %v9297 = vpop.f32.mrf.mxu0
        %v9298 = vadd.f32 0.0, %v9297
        %v9299 = vpop.f32.mrf.mxu0
        %v9300 = vpop.f32.mrf.mxu0
        %v9301 = vadd.f32 0.0, %v9300
        %v9302 = vpop.f32.mrf.mxu0
        %9303 = vmatprep.mubr.bf16.mxu0 0
        %9304 = vmatmul.mubr.bf16.gmra.mxu0 %v1270
        %v9305 = vpop.f32.mrf.mxu0
        %v9306 = vadd.f32 0.0, %v9305
        %v9307 = vpop.f32.mrf.mxu0
        %v9308 = vpop.f32.mrf.mxu0
        %v9309 = vadd.f32 0.0, %v9308
        %v9310 = vpop.f32.mrf.mxu0
        %9311 = vmatprep.mubr.bf16.mxu0 0
        %9312 = vmatmul.mubr.bf16.gmra.mxu0 %v1273
        %v9313 = vpop.f32.mrf.mxu0
        %v9314 = vpop.f32.mrf.mxu0
        %v9315 = vpop.f32.mrf.mxu0
        %v9316 = vadd.f32 0.0, %v9315
        %v9317 = vpop.f32.mrf.mxu0
        %9318 = vmatprep.mubr.bf16.mxu0 0
        %9319 = vmatmul.mubr.bf16.gmra.mxu0 %v1276
        %v9320 = vpop.f32.mrf.mxu0
        %v9321 = vadd.f32 0.0, %v9320
        %v9322 = vpop.f32.mrf.mxu0
        %v9323 = vpop.f32.mrf.mxu0
        %v9324 = vadd.f32 0.0, %v9323
        %v9325 = vpop.f32.mrf.mxu0
        %9326 = vmatprep.mubr.bf16.mxu0 0
        %9327 = vmatmul.mubr.bf16.gmra.mxu0 %v1279
        %v9328 = vpop.f32.mrf.mxu0
        %v9329 = vadd.f32 0.0, %v9328
        %v9330 = vpop.f32.mrf.mxu0
        %v9331 = vpop.f32.mrf.mxu0
        %v9332 = vpop.f32.mrf.mxu0
        %9333 = vmatprep.mubr.bf16.mxu0 0
        %9334 = vmatmul.mubr.bf16.gmra.mxu0 %v1282
        %v9335 = vpop.f32.mrf.mxu0
        %v9336 = vadd.f32 0.0, %v9335
        %v9337 = vpop.f32.mrf.mxu0
        %v9338 = vpop.f32.mrf.mxu0
        %v9339 = vadd.f32 0.0, %v9338
        %v9340 = vpop.f32.mrf.mxu0
        %9341 = vmatprep.mubr.bf16.mxu0 0
        %9342 = vmatmul.mubr.bf16.gmra.mxu0 %v1285
        %v9343 = vpop.f32.mrf.mxu0
        %v9344 = vadd.f32 0.0, %v9343
        %v9345 = vpop.f32.mrf.mxu0
        %v9346 = vpop.f32.mrf.mxu0
        %v9347 = vadd.f32 0.0, %v9346
        %v9348 = vpop.f32.mrf.mxu0
        %9349 = vmatprep.mubr.bf16.mxu0 0
        %9350 = vmatmul.mubr.bf16.gmra.mxu0 %v1288
        %v9351 = vpop.f32.mrf.mxu0
        %v9352 = vpop.f32.mrf.mxu0
        %v9353 = vpop.f32.mrf.mxu0
        %v9354 = vadd.f32 0.0, %v9353
        %v9355 = vpop.f32.mrf.mxu0
        %9356 = vmatprep.mubr.bf16.mxu0 0
        %9357 = vmatmul.mubr.bf16.gmra.mxu0 %v1291
        %v9358 = vpop.f32.mrf.mxu0
        %v9359 = vadd.f32 0.0, %v9358
        %v9360 = vpop.f32.mrf.mxu0
        %v9361 = vpop.f32.mrf.mxu0
        %v9362 = vadd.f32 0.0, %v9361
        %v9363 = vpop.f32.mrf.mxu0
        %9364 = vmatprep.mubr.bf16.mxu0 0
        %9365 = vmatmul.mubr.bf16.gmra.mxu0 %v1294
        %v9366 = vpop.f32.mrf.mxu0
        %v9367 = vadd.f32 0.0, %v9366
        %v9368 = vpop.f32.mrf.mxu0
        %v9369 = vpop.f32.mrf.mxu0
        %v9370 = vpop.f32.mrf.mxu0
        %9371 = vmatprep.mubr.bf16.mxu0 0
        %9372 = vmatmul.mubr.bf16.gmra.mxu0 %v1297
        %v9373 = vpop.f32.mrf.mxu0
        %v9374 = vadd.f32 0.0, %v9373
        %v9375 = vpop.f32.mrf.mxu0
        %v9376 = vpop.f32.mrf.mxu0
        %v9377 = vadd.f32 0.0, %v9376
        %v9378 = vpop.f32.mrf.mxu0
        %9379 = vmatprep.mubr.bf16.mxu0 0
        %9380 = vmatmul.mubr.bf16.gmra.mxu0 %v1300
        %v9381 = vpop.f32.mrf.mxu0
        %v9382 = vadd.f32 0.0, %v9381
        %v9383 = vpop.f32.mrf.mxu0
        %v9384 = vpop.f32.mrf.mxu0
        %v9385 = vadd.f32 0.0, %v9384
        %v9386 = vpop.f32.mrf.mxu0
        %9387 = vmatprep.mubr.bf16.mxu0 0
        %9388 = vmatmul.mubr.bf16.gmra.mxu0 %v1303
        %v9389 = vpop.f32.mrf.mxu0
        %v9390 = vpop.f32.mrf.mxu0
        %v9391 = vpop.f32.mrf.mxu0
        %v9392 = vadd.f32 0.0, %v9391
        %v9393 = vpop.f32.mrf.mxu0
        %9394 = vmatprep.mubr.bf16.mxu0 0
        %9395 = vmatmul.mubr.bf16.gmra.mxu0 %v1306
        %v9396 = vpop.f32.mrf.mxu0
        %v9397 = vadd.f32 0.0, %v9396
        %v9398 = vpop.f32.mrf.mxu0
        %v9399 = vpop.f32.mrf.mxu0
        %v9400 = vadd.f32 0.0, %v9399
        %v9401 = vpop.f32.mrf.mxu0
        %9402 = vmatprep.mubr.bf16.mxu0 0
        %9403 = vmatmul.mubr.bf16.gmra.mxu0 %v8787
        %v9404 = vpop.f32.mrf.mxu0
        %v9405 = vadd.f32 0.0, %v9404
        %v9406 = vpop.f32.mrf.mxu0
        %v9407 = vpop.f32.mrf.mxu0
        %v9408 = vpop.f32.mrf.mxu0
        %9409 = vmatprep.mubr.bf16.mxu0 0
        %9410 = vmatmul.mubr.bf16.gmra.mxu0 %v8790
        %v9411 = vpop.f32.mrf.mxu0
        %v9412 = vadd.f32 0.0, %v9411
        %v9413 = vpop.f32.mrf.mxu0
        %v9414 = vpop.f32.mrf.mxu0
        %v9415 = vadd.f32 0.0, %v9414
        %v9416 = vpop.f32.mrf.mxu0
        %9417 = vmatprep.mubr.bf16.mxu0 0
        %9418 = vmatmul.mubr.bf16.gmra.mxu0 %v8793
        %v9419 = vpop.f32.mrf.mxu0
        %v9420 = vadd.f32 0.0, %v9419
        %v9421 = vpop.f32.mrf.mxu0
        %v9422 = vpop.f32.mrf.mxu0
        %v9423 = vadd.f32 0.0, %v9422
        %v9424 = vpop.f32.mrf.mxu0
        %9425 = vmatprep.mubr.bf16.mxu0 0
        %9426 = vmatmul.mubr.bf16.gmra.mxu0 %v8796
        %v9427 = vpop.f32.mrf.mxu0
        %v9428 = vpop.f32.mrf.mxu0
        %v9429 = vpop.f32.mrf.mxu0
        %v9430 = vadd.f32 0.0, %v9429
        %v9431 = vpop.f32.mrf.mxu0
        %9432 = vmatprep.mubr.bf16.mxu0 0
        %9433 = vmatmul.mubr.bf16.gmra.mxu0 %v8799
        %v9434 = vpop.f32.mrf.mxu0
        %v9435 = vadd.f32 0.0, %v9434
        %v9436 = vpop.f32.mrf.mxu0
        %v9437 = vpop.f32.mrf.mxu0
        %v9438 = vadd.f32 0.0, %v9437
        %v9439 = vpop.f32.mrf.mxu0
        %9440 = vmatprep.mubr.bf16.mxu0 0
        %9441 = vmatmul.mubr.bf16.gmra.mxu0 %v8802
        %v9442 = vpop.f32.mrf.mxu0
        %v9443 = vadd.f32 0.0, %v9442
        %v9444 = vpop.f32.mrf.mxu0
        %v9445 = vpop.f32.mrf.mxu0
        %v9446 = vpop.f32.mrf.mxu0
        %9447 = vdwg.mxu0
        %v9448 = vadd.f32 %v8615, %v8842
        %v9449 = vadd.f32 %v8616, %v8845
        %v9450 = vadd.f32 %v8617, %v8850
        %v9451 = vadd.f32 %v8618, %v8853
        %v9452 = vadd.f32 %v8619, %v8860
        %v9453 = vadd.f32 %v8620, %v8865
        %v9454 = vadd.f32 %v8621, %v8868
        %v9455 = vadd.f32 %v8622, %v8873
        %v9456 = vadd.f32 %v8623, %v8880
        %v9457 = vadd.f32 %v8624, %v8883
        %v9458 = vadd.f32 %v8625, %v8888
        %v9459 = vadd.f32 %v8626, %v8891
        %v9460 = vadd.f32 %v8627, %v8898
        %v9461 = vadd.f32 %v8628, %v8903
        %v9462 = vadd.f32 %v8629, %v8906
        %v9463 = vadd.f32 %v8630, %v8911
        %v9464 = vadd.f32 %v8631, %v8918
        %v9465 = vadd.f32 %v8632, %v8921
        %v9466 = vadd.f32 %v8633, %v8926
        %v9467 = vadd.f32 %v8634, %v8929
        %v9468 = vadd.f32 %v8635, %v8936
        %v9469 = vadd.f32 %v8636, %v8941
        %v9470 = vadd.f32 %v8637, %v8944
        %v9471 = vadd.f32 %v8638, %v8949
        %v9472 = vadd.f32 %v8639, %v8956
        %v9473 = vadd.f32 %v8640, %v8959
        %v9474 = vadd.f32 %v8641, %v8964
        %v9475 = vadd.f32 %v8642, %v8967
        %v9476 = vadd.f32 %v8643, %v8974
        %v9477 = vadd.f32 %v8644, %v8979
        %v9478 = vadd.f32 %v8645, %v8982
        %v9479 = vadd.f32 %v8646, %v8987
        %v9480 = vadd.f32 %v8647, %v8994
        %v9481 = vadd.f32 %v8648, %v8997
        %v9482 = vadd.f32 %v8649, %v9002
        %v9483 = vadd.f32 %v8650, %v9005
        %v9484 = vadd.f32 %v8651, %v9012
        %v9485 = vadd.f32 %v8652, %v9017
        %v9486 = vadd.f32 %v8653, %v9020
        %v9487 = vadd.f32 %v8654, %v9025
        %v9488 = vadd.f32 %v8655, %v9032
        %v9489 = vadd.f32 %v8656, %v9035
        %v9490 = vadd.f32 %v8657, %v9040
        %v9491 = vadd.f32 %v8658, %v9043
        %v9492 = vadd.f32 %v8659, %v9050
        %v9493 = vadd.f32 %v8660, %v9055
        %v9494 = vadd.f32 %v8661, %v9058
        %v9495 = vadd.f32 %v8662, %v9063
        %v9496 = vadd.f32 %v8663, %v9070
        %v9497 = vadd.f32 %v8664, %v9073
        %v9498 = vadd.f32 %v8665, %v9078
        %v9499 = vadd.f32 %v8666, %v9081
        %v9500 = vadd.f32 %v8667, %v9088
        %v9501 = vadd.f32 %v8668, %v9093
        %v9502 = vadd.f32 %v8669, %v9096
        %v9503 = vadd.f32 %v8670, %v9101
        %v9504 = vadd.f32 %v8671, %v9108
        %v9505 = vadd.f32 %v8672, %v9111
        %v9506 = vadd.f32 %v8673, %v9116
        %v9507 = vadd.f32 %v8674, %v9119
        %v9508 = vadd.f32 %v8675, %v9126
        %v9509 = vadd.f32 %v8676, %v9131
        %v9510 = vadd.f32 %v8677, %v9134
        %v9511 = vadd.f32 %v8678, %v9139
        %v9512 = vadd.f32 %v8679, %v9146
        %v9513 = vadd.f32 %v8680, %v9149
        %v9514 = vadd.f32 %v8681, %v9154
        %v9515 = vadd.f32 %v8682, %v9157
        %v9516 = vadd.f32 %v8683, %v9164
        %v9517 = vadd.f32 %v8684, %v9169
        %v9518 = vadd.f32 %v8685, %v9172
        %v9519 = vadd.f32 %v8686, %v9177
        %v9520 = vadd.f32 %v8687, %v9184
        %v9521 = vadd.f32 %v8688, %v9187
        %v9522 = vadd.f32 %v8689, %v9192
        %v9523 = vadd.f32 %v8690, %v9195
        %v9524 = vadd.f32 %v8691, %v9202
        %v9525 = vadd.f32 %v8692, %v9207
        %v9526 = vadd.f32 %v8693, %v9210
        %v9527 = vadd.f32 %v8694, %v9215
        %v9528 = vadd.f32 %v8695, %v9222
        %v9529 = vadd.f32 %v8696, %v9225
        %v9530 = vadd.f32 %v8697, %v9230
        %v9531 = vadd.f32 %v8698, %v9233
        %v9532 = vadd.f32 %v8699, %v9240
        %v9533 = vadd.f32 %v8700, %v9245
        %v9534 = vadd.f32 %v8701, %v9248
        %v9535 = vadd.f32 %v8702, %v9253
        %v9536 = vadd.f32 %v8703, %v9260
        %v9537 = vadd.f32 %v8704, %v9263
        %v9538 = vadd.f32 %v8705, %v9268
        %v9539 = vadd.f32 %v8706, %v9271
        %v9540 = vadd.f32 %v8707, %v9278
        %v9541 = vadd.f32 %v8708, %v9283
        %v9542 = vadd.f32 %v8709, %v9286
        %v9543 = vadd.f32 %v8710, %v9291
        %v9544 = vadd.f32 %v8711, %v9298
        %v9545 = vadd.f32 %v8712, %v9301
        %v9546 = vadd.f32 %v8713, %v9306
        %v9547 = vadd.f32 %v8714, %v9309
        %v9548 = vadd.f32 %v8715, %v9316
        %v9549 = vadd.f32 %v8716, %v9321
        %v9550 = vadd.f32 %v8717, %v9324
        %v9551 = vadd.f32 %v8718, %v9329
        %v9552 = vadd.f32 %v8719, %v9336
        %v9553 = vadd.f32 %v8720, %v9339
        %v9554 = vadd.f32 %v8721, %v9344
        %v9555 = vadd.f32 %v8722, %v9347
        %v9556 = vadd.f32 %v8723, %v9354
        %v9557 = vadd.f32 %v8724, %v9359
        %v9558 = vadd.f32 %v8725, %v9362
        %v9559 = vadd.f32 %v8726, %v9367
        %v9560 = vadd.f32 %v8727, %v9374
        %v9561 = vadd.f32 %v8728, %v9377
        %v9562 = vadd.f32 %v8729, %v9382
        %v9563 = vadd.f32 %v8730, %v9385
        %v9564 = vadd.f32 %v8731, %v9392
        %v9565 = vadd.f32 %v8732, %v9397
        %v9566 = vadd.f32 %v8733, %v9400
        %v9567 = vadd.f32 %v8734, %v9405
        %v9568 = vadd.f32 %v8735, %v9412
        %v9569 = vadd.f32 %v8736, %v9415
        %v9570 = vadd.f32 %v8737, %v9420
        %v9571 = vadd.f32 %v8738, %v9423
        %v9572 = vadd.f32 %v8739, %v9430
        %v9573 = vadd.f32 %v8740, %v9435
        %v9574 = vadd.f32 %v8741, %v9438
        %v9575 = vadd.f32 %v8742, %v9443
        %s9576 = scalar_lea.vmem %s1, 16
        %v9577 = vld [vmem:[%s9576] sm:$0x3]
        %v9584 = vrot.slane %v7949, 1
        %v9585 = vsel %vm2846, %v3004, %v9584
        %v9586 = vrot.slane %v7950, 1
        %v9587 = vsel %vm2846, %v9584, %v9586
        %v9588 = vrot.slane %v7951, 1
        %v9589 = vsel %vm2846, %v9586, %v9588
        %v9590 = vrot.slane %v7952, 1
        %v9591 = vsel %vm2846, %v9588, %v9590
        %v9592 = vrot.slane %v7953, 1
        %v9593 = vsel %vm2846, %v9590, %v9592
        %v9594 = vrot.slane %v8743, 1
        %v9595 = vsel %vm2846, %v9592, %v9594
        %v9597 = vsel %vm1070, %v9585, 0
        %v9600 = vsel %vm1070, %v9587, 0
        %v9603 = vsel %vm1070, %v9589, 0
        %v9606 = vsel %vm1070, %v9591, 0
        %v9609 = vsel %vm1070, %v9593, 0
        %v9612 = vsel %vm1070, %v9595, 0
        %v9615 = vand.u32 %v9577, %v1314
        %9617 = vmatprep.subr.bf16.mxu0 0
        %9618 = vmatpush1.bf16.msra.mxu0 0
        %9619 = vmatprep.subr.bf16.mxu0 0
        %9620 = vmatpush1.bf16.msra.mxu0 0
        %9621 = vmatprep.subr.bf16.mxu0 0
        %9622 = vmatpush1.bf16.msra.mxu0 0
        %9623 = vmatprep.subr.bf16.mxu0 0
        %9624 = vmatpush1.bf16.msra.mxu0 0
        %9625 = vmatprep.subr.bf16.mxu0 0
        %9626 = vmatpush1.bf16.msra.mxu0 0
        %9627 = vmatprep.subr.bf16.mxu0 0
        %9628 = vmatpush1.bf16.msra.mxu0 0
        %9629 = vmatprep.subr.bf16.mxu0 0
        %9630 = vmatpush1.bf16.msra.mxu0 0
        %9631 = vmatprep.subr.bf16.mxu0 0
        %9632 = vmatpush1.bf16.msra.mxu0 %v9615
        %9633 = vmatprep.subr.bf16.mxu0 0
        %9634 = vmatpush2.bf16.msra.mxu0 0
        %9635 = vmatprep.subr.bf16.mxu0 0
        %9636 = vmatpush2.bf16.msra.mxu0 0
        %9637 = vmatprep.subr.bf16.mxu0 0
        %9638 = vmatpush2.bf16.msra.mxu0 0
        %9639 = vmatprep.subr.bf16.mxu0 0
        %9640 = vmatpush2.bf16.msra.mxu0 0
        %9641 = vmatprep.subr.bf16.mxu0 0
        %9642 = vmatpush2.bf16.msra.mxu0 0
        %9643 = vmatprep.subr.bf16.mxu0 0
        %9644 = vmatpush2.bf16.msra.mxu0 0
        %9645 = vmatprep.subr.bf16.mxu0 0
        %9646 = vmatpush2.bf16.msra.mxu0 0
        %9647 = vmatprep.subr.bf16.mxu0 0
        %9648 = vmatpush2.bf16.msra.mxu0 0
        %9649 = vmatprep.mubr.bf16.mxu0 0
        %9650 = vmatmul.mubr.bf16.gmra.mxu0 %v3024
        %v9651 = vpop.f32.mrf.mxu0
        %v9652 = vadd.f32 0.0, %v9651
        %v9653 = vpop.f32.mrf.mxu0
        %v9654 = vpop.f32.mrf.mxu0
        %v9655 = vadd.f32 0.0, %v9654
        %v9656 = vpop.f32.mrf.mxu0
        %9657 = vmatprep.mubr.bf16.mxu0 0
        %9658 = vmatmul.mubr.bf16.gmra.mxu0 %v3027
        %v9659 = vpop.f32.mrf.mxu0
        %v9660 = vadd.f32 0.0, %v9659
        %v9661 = vpop.f32.mrf.mxu0
        %v9662 = vpop.f32.mrf.mxu0
        %v9663 = vadd.f32 0.0, %v9662
        %v9664 = vpop.f32.mrf.mxu0
        %9665 = vmatprep.mubr.bf16.mxu0 0
        %9666 = vmatmul.mubr.bf16.gmra.mxu0 %v3030
        %v9667 = vpop.f32.mrf.mxu0
        %v9668 = vpop.f32.mrf.mxu0
        %v9669 = vpop.f32.mrf.mxu0
        %v9670 = vadd.f32 0.0, %v9669
        %v9671 = vpop.f32.mrf.mxu0
        %9672 = vmatprep.mubr.bf16.mxu0 0
        %9673 = vmatmul.mubr.bf16.gmra.mxu0 %v3033
        %v9674 = vpop.f32.mrf.mxu0
        %v9675 = vadd.f32 0.0, %v9674
        %v9676 = vpop.f32.mrf.mxu0
        %v9677 = vpop.f32.mrf.mxu0
        %v9678 = vadd.f32 0.0, %v9677
        %v9679 = vpop.f32.mrf.mxu0
        %9680 = vmatprep.mubr.bf16.mxu0 0
        %9681 = vmatmul.mubr.bf16.gmra.mxu0 %v3036
        %v9682 = vpop.f32.mrf.mxu0
        %v9683 = vadd.f32 0.0, %v9682
        %v9684 = vpop.f32.mrf.mxu0
        %v9685 = vpop.f32.mrf.mxu0
        %v9686 = vpop.f32.mrf.mxu0
        %9687 = vmatprep.mubr.bf16.mxu0 0
        %9688 = vmatmul.mubr.bf16.gmra.mxu0 %v3039
        %v9689 = vpop.f32.mrf.mxu0
        %v9690 = vadd.f32 0.0, %v9689
        %v9691 = vpop.f32.mrf.mxu0
        %v9692 = vpop.f32.mrf.mxu0
        %v9693 = vadd.f32 0.0, %v9692
        %v9694 = vpop.f32.mrf.mxu0
        %9695 = vmatprep.mubr.bf16.mxu0 0
        %9696 = vmatmul.mubr.bf16.gmra.mxu0 %v3042
        %v9697 = vpop.f32.mrf.mxu0
        %v9698 = vadd.f32 0.0, %v9697
        %v9699 = vpop.f32.mrf.mxu0
        %v9700 = vpop.f32.mrf.mxu0
        %v9701 = vadd.f32 0.0, %v9700
        %v9702 = vpop.f32.mrf.mxu0
        %9703 = vmatprep.mubr.bf16.mxu0 0
        %9704 = vmatmul.mubr.bf16.gmra.mxu0 %v3045
        %v9705 = vpop.f32.mrf.mxu0
        %v9706 = vpop.f32.mrf.mxu0
        %v9707 = vpop.f32.mrf.mxu0
        %v9708 = vadd.f32 0.0, %v9707
        %v9709 = vpop.f32.mrf.mxu0
        %9710 = vmatprep.mubr.bf16.mxu0 0
        %9711 = vmatmul.mubr.bf16.gmra.mxu0 %v3048
        %v9712 = vpop.f32.mrf.mxu0
        %v9713 = vadd.f32 0.0, %v9712
        %v9714 = vpop.f32.mrf.mxu0
        %v9715 = vpop.f32.mrf.mxu0
        %v9716 = vadd.f32 0.0, %v9715
        %v9717 = vpop.f32.mrf.mxu0
        %9718 = vmatprep.mubr.bf16.mxu0 0
        %9719 = vmatmul.mubr.bf16.gmra.mxu0 %v3051
        %v9720 = vpop.f32.mrf.mxu0
        %v9721 = vadd.f32 0.0, %v9720
        %v9722 = vpop.f32.mrf.mxu0
        %v9723 = vpop.f32.mrf.mxu0
        %v9724 = vpop.f32.mrf.mxu0
        %9725 = vmatprep.mubr.bf16.mxu0 0
        %9726 = vmatmul.mubr.bf16.gmra.mxu0 %v3054
        %v9727 = vpop.f32.mrf.mxu0
        %v9728 = vadd.f32 0.0, %v9727
        %v9729 = vpop.f32.mrf.mxu0
        %v9730 = vpop.f32.mrf.mxu0
        %v9731 = vadd.f32 0.0, %v9730
        %v9732 = vpop.f32.mrf.mxu0
        %9733 = vmatprep.mubr.bf16.mxu0 0
        %9734 = vmatmul.mubr.bf16.gmra.mxu0 %v3057
        %v9735 = vpop.f32.mrf.mxu0
        %v9736 = vadd.f32 0.0, %v9735
        %v9737 = vpop.f32.mrf.mxu0
        %v9738 = vpop.f32.mrf.mxu0
        %v9739 = vadd.f32 0.0, %v9738
        %v9740 = vpop.f32.mrf.mxu0
        %9741 = vmatprep.mubr.bf16.mxu0 0
        %9742 = vmatmul.mubr.bf16.gmra.mxu0 %v3060
        %v9743 = vpop.f32.mrf.mxu0
        %v9744 = vpop.f32.mrf.mxu0
        %v9745 = vpop.f32.mrf.mxu0
        %v9746 = vadd.f32 0.0, %v9745
        %v9747 = vpop.f32.mrf.mxu0
        %9748 = vmatprep.mubr.bf16.mxu0 0
        %9749 = vmatmul.mubr.bf16.gmra.mxu0 %v3063
        %v9750 = vpop.f32.mrf.mxu0
        %v9751 = vadd.f32 0.0, %v9750
        %v9752 = vpop.f32.mrf.mxu0
        %v9753 = vpop.f32.mrf.mxu0
        %v9754 = vadd.f32 0.0, %v9753
        %v9755 = vpop.f32.mrf.mxu0
        %9756 = vmatprep.mubr.bf16.mxu0 0
        %9757 = vmatmul.mubr.bf16.gmra.mxu0 %v3066
        %v9758 = vpop.f32.mrf.mxu0
        %v9759 = vadd.f32 0.0, %v9758
        %v9760 = vpop.f32.mrf.mxu0
        %v9761 = vpop.f32.mrf.mxu0
        %v9762 = vpop.f32.mrf.mxu0
        %9763 = vmatprep.mubr.bf16.mxu0 0
        %9764 = vmatmul.mubr.bf16.gmra.mxu0 %v3069
        %v9765 = vpop.f32.mrf.mxu0
        %v9766 = vadd.f32 0.0, %v9765
        %v9767 = vpop.f32.mrf.mxu0
        %v9768 = vpop.f32.mrf.mxu0
        %v9769 = vadd.f32 0.0, %v9768
        %v9770 = vpop.f32.mrf.mxu0
        %9771 = vmatprep.mubr.bf16.mxu0 0
        %9772 = vmatmul.mubr.bf16.gmra.mxu0 %v3072
        %v9773 = vpop.f32.mrf.mxu0
        %v9774 = vadd.f32 0.0, %v9773
        %v9775 = vpop.f32.mrf.mxu0
        %v9776 = vpop.f32.mrf.mxu0
        %v9777 = vadd.f32 0.0, %v9776
        %v9778 = vpop.f32.mrf.mxu0
        %9779 = vmatprep.mubr.bf16.mxu0 0
        %9780 = vmatmul.mubr.bf16.gmra.mxu0 %v3075
        %v9781 = vpop.f32.mrf.mxu0
        %v9782 = vpop.f32.mrf.mxu0
        %v9783 = vpop.f32.mrf.mxu0
        %v9784 = vadd.f32 0.0, %v9783
        %v9785 = vpop.f32.mrf.mxu0
        %9786 = vmatprep.mubr.bf16.mxu0 0
        %9787 = vmatmul.mubr.bf16.gmra.mxu0 %v3078
        %v9788 = vpop.f32.mrf.mxu0
        %v9789 = vadd.f32 0.0, %v9788
        %v9790 = vpop.f32.mrf.mxu0
        %v9791 = vpop.f32.mrf.mxu0
        %v9792 = vadd.f32 0.0, %v9791
        %v9793 = vpop.f32.mrf.mxu0
        %9794 = vmatprep.mubr.bf16.mxu0 0
        %9795 = vmatmul.mubr.bf16.gmra.mxu0 %v3081
        %v9796 = vpop.f32.mrf.mxu0
        %v9797 = vadd.f32 0.0, %v9796
        %v9798 = vpop.f32.mrf.mxu0
        %v9799 = vpop.f32.mrf.mxu0
        %v9800 = vpop.f32.mrf.mxu0
        %9801 = vmatprep.mubr.bf16.mxu0 0
        %9802 = vmatmul.mubr.bf16.gmra.mxu0 %v3084
        %v9803 = vpop.f32.mrf.mxu0
        %v9804 = vadd.f32 0.0, %v9803
        %v9805 = vpop.f32.mrf.mxu0
        %v9806 = vpop.f32.mrf.mxu0
        %v9807 = vadd.f32 0.0, %v9806
        %v9808 = vpop.f32.mrf.mxu0
        %9809 = vmatprep.mubr.bf16.mxu0 0
        %9810 = vmatmul.mubr.bf16.gmra.mxu0 %v3087
        %v9811 = vpop.f32.mrf.mxu0
        %v9812 = vadd.f32 0.0, %v9811
        %v9813 = vpop.f32.mrf.mxu0
        %v9814 = vpop.f32.mrf.mxu0
        %v9815 = vadd.f32 0.0, %v9814
        %v9816 = vpop.f32.mrf.mxu0
        %9817 = vmatprep.mubr.bf16.mxu0 0
        %9818 = vmatmul.mubr.bf16.gmra.mxu0 %v3090
        %v9819 = vpop.f32.mrf.mxu0
        %v9820 = vpop.f32.mrf.mxu0
        %v9821 = vpop.f32.mrf.mxu0
        %v9822 = vadd.f32 0.0, %v9821
        %v9823 = vpop.f32.mrf.mxu0
        %9824 = vmatprep.mubr.bf16.mxu0 0
        %9825 = vmatmul.mubr.bf16.gmra.mxu0 %v3093
        %v9826 = vpop.f32.mrf.mxu0
        %v9827 = vadd.f32 0.0, %v9826
        %v9828 = vpop.f32.mrf.mxu0
        %v9829 = vpop.f32.mrf.mxu0
        %v9830 = vadd.f32 0.0, %v9829
        %v9831 = vpop.f32.mrf.mxu0
        %9832 = vmatprep.mubr.bf16.mxu0 0
        %9833 = vmatmul.mubr.bf16.gmra.mxu0 %v3096
        %v9834 = vpop.f32.mrf.mxu0
        %v9835 = vadd.f32 0.0, %v9834
        %v9836 = vpop.f32.mrf.mxu0
        %v9837 = vpop.f32.mrf.mxu0
        %v9838 = vpop.f32.mrf.mxu0
        %9839 = vmatprep.mubr.bf16.mxu0 0
        %9840 = vmatmul.mubr.bf16.gmra.mxu0 %v3099
        %v9841 = vpop.f32.mrf.mxu0
        %v9842 = vadd.f32 0.0, %v9841
        %v9843 = vpop.f32.mrf.mxu0
        %v9844 = vpop.f32.mrf.mxu0
        %v9845 = vadd.f32 0.0, %v9844
        %v9846 = vpop.f32.mrf.mxu0
        %9847 = vmatprep.mubr.bf16.mxu0 0
        %9848 = vmatmul.mubr.bf16.gmra.mxu0 %v3102
        %v9849 = vpop.f32.mrf.mxu0
        %v9850 = vadd.f32 0.0, %v9849
        %v9851 = vpop.f32.mrf.mxu0
        %v9852 = vpop.f32.mrf.mxu0
        %v9853 = vadd.f32 0.0, %v9852
        %v9854 = vpop.f32.mrf.mxu0
        %9855 = vmatprep.mubr.bf16.mxu0 0
        %9856 = vmatmul.mubr.bf16.gmra.mxu0 %v3105
        %v9857 = vpop.f32.mrf.mxu0
        %v9858 = vpop.f32.mrf.mxu0
        %v9859 = vpop.f32.mrf.mxu0
        %v9860 = vadd.f32 0.0, %v9859
        %v9861 = vpop.f32.mrf.mxu0
        %9862 = vmatprep.mubr.bf16.mxu0 0
        %9863 = vmatmul.mubr.bf16.gmra.mxu0 %v3108
        %v9864 = vpop.f32.mrf.mxu0
        %v9865 = vadd.f32 0.0, %v9864
        %v9866 = vpop.f32.mrf.mxu0
        %v9867 = vpop.f32.mrf.mxu0
        %v9868 = vadd.f32 0.0, %v9867
        %v9869 = vpop.f32.mrf.mxu0
        %9870 = vmatprep.mubr.bf16.mxu0 0
        %9871 = vmatmul.mubr.bf16.gmra.mxu0 %v3111
        %v9872 = vpop.f32.mrf.mxu0
        %v9873 = vadd.f32 0.0, %v9872
        %v9874 = vpop.f32.mrf.mxu0
        %v9875 = vpop.f32.mrf.mxu0
        %v9876 = vpop.f32.mrf.mxu0
        %9877 = vmatprep.mubr.bf16.mxu0 0
        %9878 = vmatmul.mubr.bf16.gmra.mxu0 %v3114
        %v9879 = vpop.f32.mrf.mxu0
        %v9880 = vadd.f32 0.0, %v9879
        %v9881 = vpop.f32.mrf.mxu0
        %v9882 = vpop.f32.mrf.mxu0
        %v9883 = vadd.f32 0.0, %v9882
        %v9884 = vpop.f32.mrf.mxu0
        %9885 = vmatprep.mubr.bf16.mxu0 0
        %9886 = vmatmul.mubr.bf16.gmra.mxu0 %v3117
        %v9887 = vpop.f32.mrf.mxu0
        %v9888 = vadd.f32 0.0, %v9887
        %v9889 = vpop.f32.mrf.mxu0
        %v9890 = vpop.f32.mrf.mxu0
        %v9891 = vadd.f32 0.0, %v9890
        %v9892 = vpop.f32.mrf.mxu0
        %9893 = vmatprep.mubr.bf16.mxu0 0
        %9894 = vmatmul.mubr.bf16.gmra.mxu0 %v3120
        %v9895 = vpop.f32.mrf.mxu0
        %v9896 = vpop.f32.mrf.mxu0
        %v9897 = vpop.f32.mrf.mxu0
        %v9898 = vadd.f32 0.0, %v9897
        %v9899 = vpop.f32.mrf.mxu0
        %9900 = vmatprep.mubr.bf16.mxu0 0
        %9901 = vmatmul.mubr.bf16.gmra.mxu0 %v3123
        %v9902 = vpop.f32.mrf.mxu0
        %v9903 = vadd.f32 0.0, %v9902
        %v9904 = vpop.f32.mrf.mxu0
        %v9905 = vpop.f32.mrf.mxu0
        %v9906 = vadd.f32 0.0, %v9905
        %v9907 = vpop.f32.mrf.mxu0
        %9908 = vmatprep.mubr.bf16.mxu0 0
        %9909 = vmatmul.mubr.bf16.gmra.mxu0 %v3126
        %v9910 = vpop.f32.mrf.mxu0
        %v9911 = vadd.f32 0.0, %v9910
        %v9912 = vpop.f32.mrf.mxu0
        %v9913 = vpop.f32.mrf.mxu0
        %v9914 = vpop.f32.mrf.mxu0
        %9915 = vmatprep.mubr.bf16.mxu0 0
        %9916 = vmatmul.mubr.bf16.gmra.mxu0 %v3129
        %v9917 = vpop.f32.mrf.mxu0
        %v9918 = vadd.f32 0.0, %v9917
        %v9919 = vpop.f32.mrf.mxu0
        %v9920 = vpop.f32.mrf.mxu0
        %v9921 = vadd.f32 0.0, %v9920
        %v9922 = vpop.f32.mrf.mxu0
        %9923 = vmatprep.mubr.bf16.mxu0 0
        %9924 = vmatmul.mubr.bf16.gmra.mxu0 %v3132
        %v9925 = vpop.f32.mrf.mxu0
        %v9926 = vadd.f32 0.0, %v9925
        %v9927 = vpop.f32.mrf.mxu0
        %v9928 = vpop.f32.mrf.mxu0
        %v9929 = vadd.f32 0.0, %v9928
        %v9930 = vpop.f32.mrf.mxu0
        %9931 = vmatprep.mubr.bf16.mxu0 0
        %9932 = vmatmul.mubr.bf16.gmra.mxu0 %v3135
        %v9933 = vpop.f32.mrf.mxu0
        %v9934 = vpop.f32.mrf.mxu0
        %v9935 = vpop.f32.mrf.mxu0
        %v9936 = vadd.f32 0.0, %v9935
        %v9937 = vpop.f32.mrf.mxu0
        %9938 = vmatprep.mubr.bf16.mxu0 0
        %9939 = vmatmul.mubr.bf16.gmra.mxu0 %v3138
        %v9940 = vpop.f32.mrf.mxu0
        %v9941 = vadd.f32 0.0, %v9940
        %v9942 = vpop.f32.mrf.mxu0
        %v9943 = vpop.f32.mrf.mxu0
        %v9944 = vadd.f32 0.0, %v9943
        %v9945 = vpop.f32.mrf.mxu0
        %9946 = vmatprep.mubr.bf16.mxu0 0
        %9947 = vmatmul.mubr.bf16.gmra.mxu0 %v3141
        %v9948 = vpop.f32.mrf.mxu0
        %v9949 = vadd.f32 0.0, %v9948
        %v9950 = vpop.f32.mrf.mxu0
        %v9951 = vpop.f32.mrf.mxu0
        %v9952 = vpop.f32.mrf.mxu0
        %9953 = vmatprep.mubr.bf16.mxu0 0
        %9954 = vmatmul.mubr.bf16.gmra.mxu0 %v3144
        %v9955 = vpop.f32.mrf.mxu0
        %v9956 = vadd.f32 0.0, %v9955
        %v9957 = vpop.f32.mrf.mxu0
        %v9958 = vpop.f32.mrf.mxu0
        %v9959 = vadd.f32 0.0, %v9958
        %v9960 = vpop.f32.mrf.mxu0
        %9961 = vmatprep.mubr.bf16.mxu0 0
        %9962 = vmatmul.mubr.bf16.gmra.mxu0 %v3147
        %v9963 = vpop.f32.mrf.mxu0
        %v9964 = vadd.f32 0.0, %v9963
        %v9965 = vpop.f32.mrf.mxu0
        %v9966 = vpop.f32.mrf.mxu0
        %v9967 = vadd.f32 0.0, %v9966
        %v9968 = vpop.f32.mrf.mxu0
        %9969 = vmatprep.mubr.bf16.mxu0 0
        %9970 = vmatmul.mubr.bf16.gmra.mxu0 %v3150
        %v9971 = vpop.f32.mrf.mxu0
        %v9972 = vpop.f32.mrf.mxu0
        %v9973 = vpop.f32.mrf.mxu0
        %v9974 = vadd.f32 0.0, %v9973
        %v9975 = vpop.f32.mrf.mxu0
        %9976 = vmatprep.mubr.bf16.mxu0 0
        %9977 = vmatmul.mubr.bf16.gmra.mxu0 %v3153
        %v9978 = vpop.f32.mrf.mxu0
        %v9979 = vadd.f32 0.0, %v9978
        %v9980 = vpop.f32.mrf.mxu0
        %v9981 = vpop.f32.mrf.mxu0
        %v9982 = vadd.f32 0.0, %v9981
        %v9983 = vpop.f32.mrf.mxu0
        %9984 = vmatprep.mubr.bf16.mxu0 0
        %9985 = vmatmul.mubr.bf16.gmra.mxu0 %v3156
        %v9986 = vpop.f32.mrf.mxu0
        %v9987 = vadd.f32 0.0, %v9986
        %v9988 = vpop.f32.mrf.mxu0
        %v9989 = vpop.f32.mrf.mxu0
        %v9990 = vpop.f32.mrf.mxu0
        %9991 = vmatprep.mubr.bf16.mxu0 0
        %9992 = vmatmul.mubr.bf16.gmra.mxu0 %v3159
        %v9993 = vpop.f32.mrf.mxu0
        %v9994 = vadd.f32 0.0, %v9993
        %v9995 = vpop.f32.mrf.mxu0
        %v9996 = vpop.f32.mrf.mxu0
        %v9997 = vadd.f32 0.0, %v9996
        %v9998 = vpop.f32.mrf.mxu0
        %9999 = vmatprep.mubr.bf16.mxu0 0
        %10000 = vmatmul.mubr.bf16.gmra.mxu0 %v3162
        %v10001 = vpop.f32.mrf.mxu0
        %v10002 = vadd.f32 0.0, %v10001
        %v10003 = vpop.f32.mrf.mxu0
        %v10004 = vpop.f32.mrf.mxu0
        %v10005 = vadd.f32 0.0, %v10004
        %v10006 = vpop.f32.mrf.mxu0
        %10007 = vmatprep.mubr.bf16.mxu0 0
        %10008 = vmatmul.mubr.bf16.gmra.mxu0 %v3165
        %v10009 = vpop.f32.mrf.mxu0
        %v10010 = vpop.f32.mrf.mxu0
        %v10011 = vpop.f32.mrf.mxu0
        %v10012 = vadd.f32 0.0, %v10011
        %v10013 = vpop.f32.mrf.mxu0
        %10014 = vmatprep.mubr.bf16.mxu0 0
        %10015 = vmatmul.mubr.bf16.gmra.mxu0 %v3168
        %v10016 = vpop.f32.mrf.mxu0
        %v10017 = vadd.f32 0.0, %v10016
        %v10018 = vpop.f32.mrf.mxu0
        %v10019 = vpop.f32.mrf.mxu0
        %v10020 = vadd.f32 0.0, %v10019
        %v10021 = vpop.f32.mrf.mxu0
        %10022 = vmatprep.mubr.bf16.mxu0 0
        %10023 = vmatmul.mubr.bf16.gmra.mxu0 %v3171
        %v10024 = vpop.f32.mrf.mxu0
        %v10025 = vadd.f32 0.0, %v10024
        %v10026 = vpop.f32.mrf.mxu0
        %v10027 = vpop.f32.mrf.mxu0
        %v10028 = vpop.f32.mrf.mxu0
        %10029 = vmatprep.mubr.bf16.mxu0 0
        %10030 = vmatmul.mubr.bf16.gmra.mxu0 %v3174
        %v10031 = vpop.f32.mrf.mxu0
        %v10032 = vadd.f32 0.0, %v10031
        %v10033 = vpop.f32.mrf.mxu0
        %v10034 = vpop.f32.mrf.mxu0
        %v10035 = vadd.f32 0.0, %v10034
        %v10036 = vpop.f32.mrf.mxu0
        %10037 = vmatprep.mubr.bf16.mxu0 0
        %10038 = vmatmul.mubr.bf16.gmra.mxu0 %v3177
        %v10039 = vpop.f32.mrf.mxu0
        %v10040 = vadd.f32 0.0, %v10039
        %v10041 = vpop.f32.mrf.mxu0
        %v10042 = vpop.f32.mrf.mxu0
        %v10043 = vadd.f32 0.0, %v10042
        %v10044 = vpop.f32.mrf.mxu0
        %10045 = vmatprep.mubr.bf16.mxu0 0
        %10046 = vmatmul.mubr.bf16.gmra.mxu0 %v3180
        %v10047 = vpop.f32.mrf.mxu0
        %v10048 = vpop.f32.mrf.mxu0
        %v10049 = vpop.f32.mrf.mxu0
        %v10050 = vadd.f32 0.0, %v10049
        %v10051 = vpop.f32.mrf.mxu0
        %10052 = vmatprep.mubr.bf16.mxu0 0
        %10053 = vmatmul.mubr.bf16.gmra.mxu0 %v3183
        %v10054 = vpop.f32.mrf.mxu0
        %v10055 = vadd.f32 0.0, %v10054
        %v10056 = vpop.f32.mrf.mxu0
        %v10057 = vpop.f32.mrf.mxu0
        %v10058 = vadd.f32 0.0, %v10057
        %v10059 = vpop.f32.mrf.mxu0
        %10060 = vmatprep.mubr.bf16.mxu0 0
        %10061 = vmatmul.mubr.bf16.gmra.mxu0 %v3186
        %v10062 = vpop.f32.mrf.mxu0
        %v10063 = vadd.f32 0.0, %v10062
        %v10064 = vpop.f32.mrf.mxu0
        %v10065 = vpop.f32.mrf.mxu0
        %v10066 = vpop.f32.mrf.mxu0
        %10067 = vmatprep.mubr.bf16.mxu0 0
        %10068 = vmatmul.mubr.bf16.gmra.mxu0 %v3189
        %v10069 = vpop.f32.mrf.mxu0
        %v10070 = vadd.f32 0.0, %v10069
        %v10071 = vpop.f32.mrf.mxu0
        %v10072 = vpop.f32.mrf.mxu0
        %v10073 = vadd.f32 0.0, %v10072
        %v10074 = vpop.f32.mrf.mxu0
        %10075 = vmatprep.mubr.bf16.mxu0 0
        %10076 = vmatmul.mubr.bf16.gmra.mxu0 %v3192
        %v10077 = vpop.f32.mrf.mxu0
        %v10078 = vadd.f32 0.0, %v10077
        %v10079 = vpop.f32.mrf.mxu0
        %v10080 = vpop.f32.mrf.mxu0
        %v10081 = vadd.f32 0.0, %v10080
        %v10082 = vpop.f32.mrf.mxu0
        %10083 = vmatprep.mubr.bf16.mxu0 0
        %10084 = vmatmul.mubr.bf16.gmra.mxu0 %v3195
        %v10085 = vpop.f32.mrf.mxu0
        %v10086 = vpop.f32.mrf.mxu0
        %v10087 = vpop.f32.mrf.mxu0
        %v10088 = vadd.f32 0.0, %v10087
        %v10089 = vpop.f32.mrf.mxu0
        %10090 = vmatprep.mubr.bf16.mxu0 0
        %10091 = vmatmul.mubr.bf16.gmra.mxu0 %v3198
        %v10092 = vpop.f32.mrf.mxu0
        %v10093 = vadd.f32 0.0, %v10092
        %v10094 = vpop.f32.mrf.mxu0
        %v10095 = vpop.f32.mrf.mxu0
        %v10096 = vadd.f32 0.0, %v10095
        %v10097 = vpop.f32.mrf.mxu0
        %10098 = vmatprep.mubr.bf16.mxu0 0
        %10099 = vmatmul.mubr.bf16.gmra.mxu0 %v3201
        %v10100 = vpop.f32.mrf.mxu0
        %v10101 = vadd.f32 0.0, %v10100
        %v10102 = vpop.f32.mrf.mxu0
        %v10103 = vpop.f32.mrf.mxu0
        %v10104 = vpop.f32.mrf.mxu0
        %10105 = vmatprep.mubr.bf16.mxu0 0
        %10106 = vmatmul.mubr.bf16.gmra.mxu0 %v3204
        %v10107 = vpop.f32.mrf.mxu0
        %v10108 = vadd.f32 0.0, %v10107
        %v10109 = vpop.f32.mrf.mxu0
        %v10110 = vpop.f32.mrf.mxu0
        %v10111 = vadd.f32 0.0, %v10110
        %v10112 = vpop.f32.mrf.mxu0
        %10113 = vmatprep.mubr.bf16.mxu0 0
        %10114 = vmatmul.mubr.bf16.gmra.mxu0 %v3207
        %v10115 = vpop.f32.mrf.mxu0
        %v10116 = vadd.f32 0.0, %v10115
        %v10117 = vpop.f32.mrf.mxu0
        %v10118 = vpop.f32.mrf.mxu0
        %v10119 = vadd.f32 0.0, %v10118
        %v10120 = vpop.f32.mrf.mxu0
        %10121 = vmatprep.mubr.bf16.mxu0 0
        %10122 = vmatmul.mubr.bf16.gmra.mxu0 %v3210
        %v10123 = vpop.f32.mrf.mxu0
        %v10124 = vpop.f32.mrf.mxu0
        %v10125 = vpop.f32.mrf.mxu0
        %v10126 = vadd.f32 0.0, %v10125
        %v10127 = vpop.f32.mrf.mxu0
        %10128 = vmatprep.mubr.bf16.mxu0 0
        %10129 = vmatmul.mubr.bf16.gmra.mxu0 %v3213
        %v10130 = vpop.f32.mrf.mxu0
        %v10131 = vadd.f32 0.0, %v10130
        %v10132 = vpop.f32.mrf.mxu0
        %v10133 = vpop.f32.mrf.mxu0
        %v10134 = vadd.f32 0.0, %v10133
        %v10135 = vpop.f32.mrf.mxu0
        %10136 = vmatprep.mubr.bf16.mxu0 0
        %10137 = vmatmul.mubr.bf16.gmra.mxu0 %v3216
        %v10138 = vpop.f32.mrf.mxu0
        %v10139 = vadd.f32 0.0, %v10138
        %v10140 = vpop.f32.mrf.mxu0
        %v10141 = vpop.f32.mrf.mxu0
        %v10142 = vpop.f32.mrf.mxu0
        %10143 = vmatprep.mubr.bf16.mxu0 0
        %10144 = vmatmul.mubr.bf16.gmra.mxu0 %v3219
        %v10145 = vpop.f32.mrf.mxu0
        %v10146 = vadd.f32 0.0, %v10145
        %v10147 = vpop.f32.mrf.mxu0
        %v10148 = vpop.f32.mrf.mxu0
        %v10149 = vadd.f32 0.0, %v10148
        %v10150 = vpop.f32.mrf.mxu0
        %10151 = vmatprep.mubr.bf16.mxu0 0
        %10152 = vmatmul.mubr.bf16.gmra.mxu0 %v3222
        %v10153 = vpop.f32.mrf.mxu0
        %v10154 = vadd.f32 0.0, %v10153
        %v10155 = vpop.f32.mrf.mxu0
        %v10156 = vpop.f32.mrf.mxu0
        %v10157 = vadd.f32 0.0, %v10156
        %v10158 = vpop.f32.mrf.mxu0
        %10159 = vmatprep.mubr.bf16.mxu0 0
        %10160 = vmatmul.mubr.bf16.gmra.mxu0 %v3225
        %v10161 = vpop.f32.mrf.mxu0
        %v10162 = vpop.f32.mrf.mxu0
        %v10163 = vpop.f32.mrf.mxu0
        %v10164 = vadd.f32 0.0, %v10163
        %v10165 = vpop.f32.mrf.mxu0
        %10166 = vmatprep.mubr.bf16.mxu0 0
        %10167 = vmatmul.mubr.bf16.gmra.mxu0 %v3228
        %v10168 = vpop.f32.mrf.mxu0
        %v10169 = vadd.f32 0.0, %v10168
        %v10170 = vpop.f32.mrf.mxu0
        %v10171 = vpop.f32.mrf.mxu0
        %v10172 = vadd.f32 0.0, %v10171
        %v10173 = vpop.f32.mrf.mxu0
        %10174 = vmatprep.mubr.bf16.mxu0 0
        %10175 = vmatmul.mubr.bf16.gmra.mxu0 %v3231
        %v10176 = vpop.f32.mrf.mxu0
        %v10177 = vadd.f32 0.0, %v10176
        %v10178 = vpop.f32.mrf.mxu0
        %v10179 = vpop.f32.mrf.mxu0
        %v10180 = vpop.f32.mrf.mxu0
        %10181 = vmatprep.mubr.bf16.mxu0 0
        %10182 = vmatmul.mubr.bf16.gmra.mxu0 %v3234
        %v10183 = vpop.f32.mrf.mxu0
        %v10184 = vadd.f32 0.0, %v10183
        %v10185 = vpop.f32.mrf.mxu0
        %v10186 = vpop.f32.mrf.mxu0
        %v10187 = vadd.f32 0.0, %v10186
        %v10188 = vpop.f32.mrf.mxu0
        %10189 = vmatprep.mubr.bf16.mxu0 0
        %10190 = vmatmul.mubr.bf16.gmra.mxu0 %v3237
        %v10191 = vpop.f32.mrf.mxu0
        %v10192 = vadd.f32 0.0, %v10191
        %v10193 = vpop.f32.mrf.mxu0
        %v10194 = vpop.f32.mrf.mxu0
        %v10195 = vadd.f32 0.0, %v10194
        %v10196 = vpop.f32.mrf.mxu0
        %10197 = vmatprep.mubr.bf16.mxu0 0
        %10198 = vmatmul.mubr.bf16.gmra.mxu0 %v3240
        %v10199 = vpop.f32.mrf.mxu0
        %v10200 = vpop.f32.mrf.mxu0
        %v10201 = vpop.f32.mrf.mxu0
        %v10202 = vadd.f32 0.0, %v10201
        %v10203 = vpop.f32.mrf.mxu0
        %10204 = vmatprep.mubr.bf16.mxu0 0
        %10205 = vmatmul.mubr.bf16.gmra.mxu0 %v3243
        %v10206 = vpop.f32.mrf.mxu0
        %v10207 = vadd.f32 0.0, %v10206
        %v10208 = vpop.f32.mrf.mxu0
        %v10209 = vpop.f32.mrf.mxu0
        %v10210 = vadd.f32 0.0, %v10209
        %v10211 = vpop.f32.mrf.mxu0
        %10212 = vmatprep.mubr.bf16.mxu0 0
        %10213 = vmatmul.mubr.bf16.gmra.mxu0 %v9597
        %v10214 = vpop.f32.mrf.mxu0
        %v10215 = vadd.f32 0.0, %v10214
        %v10216 = vpop.f32.mrf.mxu0
        %v10217 = vpop.f32.mrf.mxu0
        %v10218 = vpop.f32.mrf.mxu0
        %10219 = vmatprep.mubr.bf16.mxu0 0
        %10220 = vmatmul.mubr.bf16.gmra.mxu0 %v9600
        %v10221 = vpop.f32.mrf.mxu0
        %v10222 = vadd.f32 0.0, %v10221
        %v10223 = vpop.f32.mrf.mxu0
        %v10224 = vpop.f32.mrf.mxu0
        %v10225 = vadd.f32 0.0, %v10224
        %v10226 = vpop.f32.mrf.mxu0
        %10227 = vmatprep.mubr.bf16.mxu0 0
        %10228 = vmatmul.mubr.bf16.gmra.mxu0 %v9603
        %v10229 = vpop.f32.mrf.mxu0
        %v10230 = vadd.f32 0.0, %v10229
        %v10231 = vpop.f32.mrf.mxu0
        %v10232 = vpop.f32.mrf.mxu0
        %v10233 = vadd.f32 0.0, %v10232
        %v10234 = vpop.f32.mrf.mxu0
        %10235 = vmatprep.mubr.bf16.mxu0 0
        %10236 = vmatmul.mubr.bf16.gmra.mxu0 %v9606
        %v10237 = vpop.f32.mrf.mxu0
        %v10238 = vpop.f32.mrf.mxu0
        %v10239 = vpop.f32.mrf.mxu0
        %v10240 = vadd.f32 0.0, %v10239
        %v10241 = vpop.f32.mrf.mxu0
        %10242 = vmatprep.mubr.bf16.mxu0 0
        %10243 = vmatmul.mubr.bf16.gmra.mxu0 %v9609
        %v10244 = vpop.f32.mrf.mxu0
        %v10245 = vadd.f32 0.0, %v10244
        %v10246 = vpop.f32.mrf.mxu0
        %v10247 = vpop.f32.mrf.mxu0
        %v10248 = vadd.f32 0.0, %v10247
        %v10249 = vpop.f32.mrf.mxu0
        %10250 = vmatprep.mubr.bf16.mxu0 0
        %10251 = vmatmul.mubr.bf16.gmra.mxu0 %v9612
        %v10252 = vpop.f32.mrf.mxu0
        %v10253 = vadd.f32 0.0, %v10252
        %v10254 = vpop.f32.mrf.mxu0
        %v10255 = vpop.f32.mrf.mxu0
        %v10256 = vpop.f32.mrf.mxu0
        %10257 = vdwg.mxu0
        %v10258 = vadd.f32 %v9448, %v9652
        %v10259 = vadd.f32 %v9449, %v9655
        %v10260 = vadd.f32 %v9450, %v9660
        %v10261 = vadd.f32 %v9451, %v9663
        %v10262 = vadd.f32 %v9452, %v9670
        %v10263 = vadd.f32 %v9453, %v9675
        %v10264 = vadd.f32 %v9454, %v9678
        %v10265 = vadd.f32 %v9455, %v9683
        %v10266 = vadd.f32 %v9456, %v9690
        %v10267 = vadd.f32 %v9457, %v9693
        %v10268 = vadd.f32 %v9458, %v9698
        %v10269 = vadd.f32 %v9459, %v9701
        %v10270 = vadd.f32 %v9460, %v9708
        %v10271 = vadd.f32 %v9461, %v9713
        %v10272 = vadd.f32 %v9462, %v9716
        %v10273 = vadd.f32 %v9463, %v9721
        %v10274 = vadd.f32 %v9464, %v9728
        %v10275 = vadd.f32 %v9465, %v9731
        %v10276 = vadd.f32 %v9466, %v9736
        %v10277 = vadd.f32 %v9467, %v9739
        %v10278 = vadd.f32 %v9468, %v9746
        %v10279 = vadd.f32 %v9469, %v9751
        %v10280 = vadd.f32 %v9470, %v9754
        %v10281 = vadd.f32 %v9471, %v9759
        %v10282 = vadd.f32 %v9472, %v9766
        %v10283 = vadd.f32 %v9473, %v9769
        %v10284 = vadd.f32 %v9474, %v9774
        %v10285 = vadd.f32 %v9475, %v9777
        %v10286 = vadd.f32 %v9476, %v9784
        %v10287 = vadd.f32 %v9477, %v9789
        %v10288 = vadd.f32 %v9478, %v9792
        %v10289 = vadd.f32 %v9479, %v9797
        %v10290 = vadd.f32 %v9480, %v9804
        %v10291 = vadd.f32 %v9481, %v9807
        %v10292 = vadd.f32 %v9482, %v9812
        %v10293 = vadd.f32 %v9483, %v9815
        %v10294 = vadd.f32 %v9484, %v9822
        %v10295 = vadd.f32 %v9485, %v9827
        %v10296 = vadd.f32 %v9486, %v9830
        %v10297 = vadd.f32 %v9487, %v9835
        %v10298 = vadd.f32 %v9488, %v9842
        %v10299 = vadd.f32 %v9489, %v9845
        %v10300 = vadd.f32 %v9490, %v9850
        %v10301 = vadd.f32 %v9491, %v9853
        %v10302 = vadd.f32 %v9492, %v9860
        %v10303 = vadd.f32 %v9493, %v9865
        %v10304 = vadd.f32 %v9494, %v9868
        %v10305 = vadd.f32 %v9495, %v9873
        %v10306 = vadd.f32 %v9496, %v9880
        %v10307 = vadd.f32 %v9497, %v9883
        %v10308 = vadd.f32 %v9498, %v9888
        %v10309 = vadd.f32 %v9499, %v9891
        %v10310 = vadd.f32 %v9500, %v9898
        %v10311 = vadd.f32 %v9501, %v9903
        %v10312 = vadd.f32 %v9502, %v9906
        %v10313 = vadd.f32 %v9503, %v9911
        %v10314 = vadd.f32 %v9504, %v9918
        %v10315 = vadd.f32 %v9505, %v9921
        %v10316 = vadd.f32 %v9506, %v9926
        %v10317 = vadd.f32 %v9507, %v9929
        %v10318 = vadd.f32 %v9508, %v9936
        %v10319 = vadd.f32 %v9509, %v9941
        %v10320 = vadd.f32 %v9510, %v9944
        %v10321 = vadd.f32 %v9511, %v9949
        %v10322 = vadd.f32 %v9512, %v9956
        %v10323 = vadd.f32 %v9513, %v9959
        %v10324 = vadd.f32 %v9514, %v9964
        %v10325 = vadd.f32 %v9515, %v9967
        %v10326 = vadd.f32 %v9516, %v9974
        %v10327 = vadd.f32 %v9517, %v9979
        %v10328 = vadd.f32 %v9518, %v9982
        %v10329 = vadd.f32 %v9519, %v9987
        %v10330 = vadd.f32 %v9520, %v9994
        %v10331 = vadd.f32 %v9521, %v9997
        %v10332 = vadd.f32 %v9522, %v10002
        %v10333 = vadd.f32 %v9523, %v10005
        %v10334 = vadd.f32 %v9524, %v10012
        %v10335 = vadd.f32 %v9525, %v10017
        %v10336 = vadd.f32 %v9526, %v10020
        %v10337 = vadd.f32 %v9527, %v10025
        %v10338 = vadd.f32 %v9528, %v10032
        %v10339 = vadd.f32 %v9529, %v10035
        %v10340 = vadd.f32 %v9530, %v10040
        %v10341 = vadd.f32 %v9531, %v10043
        %v10342 = vadd.f32 %v9532, %v10050
        %v10343 = vadd.f32 %v9533, %v10055
        %v10344 = vadd.f32 %v9534, %v10058
        %v10345 = vadd.f32 %v9535, %v10063
        %v10346 = vadd.f32 %v9536, %v10070
        %v10347 = vadd.f32 %v9537, %v10073
        %v10348 = vadd.f32 %v9538, %v10078
        %v10349 = vadd.f32 %v9539, %v10081
        %v10350 = vadd.f32 %v9540, %v10088
        %v10351 = vadd.f32 %v9541, %v10093
        %v10352 = vadd.f32 %v9542, %v10096
        %v10353 = vadd.f32 %v9543, %v10101
        %v10354 = vadd.f32 %v9544, %v10108
        %v10355 = vadd.f32 %v9545, %v10111
        %v10356 = vadd.f32 %v9546, %v10116
        %v10357 = vadd.f32 %v9547, %v10119
        %v10358 = vadd.f32 %v9548, %v10126
        %v10359 = vadd.f32 %v9549, %v10131
        %v10360 = vadd.f32 %v9550, %v10134
        %v10361 = vadd.f32 %v9551, %v10139
        %v10362 = vadd.f32 %v9552, %v10146
        %v10363 = vadd.f32 %v9553, %v10149
        %v10364 = vadd.f32 %v9554, %v10154
        %v10365 = vadd.f32 %v9555, %v10157
        %v10366 = vadd.f32 %v9556, %v10164
        %v10367 = vadd.f32 %v9557, %v10169
        %v10368 = vadd.f32 %v9558, %v10172
        %v10369 = vadd.f32 %v9559, %v10177
        %v10370 = vadd.f32 %v9560, %v10184
        %v10371 = vadd.f32 %v9561, %v10187
        %v10372 = vadd.f32 %v9562, %v10192
        %v10373 = vadd.f32 %v9563, %v10195
        %v10374 = vadd.f32 %v9564, %v10202
        %v10375 = vadd.f32 %v9565, %v10207
        %v10376 = vadd.f32 %v9566, %v10210
        %v10377 = vadd.f32 %v9567, %v10215
        %v10378 = vadd.f32 %v9568, %v10222
        %v10379 = vadd.f32 %v9569, %v10225
        %v10380 = vadd.f32 %v9570, %v10230
        %v10381 = vadd.f32 %v9571, %v10233
        %v10382 = vadd.f32 %v9572, %v10240
        %v10383 = vadd.f32 %v9573, %v10245
        %v10384 = vadd.f32 %v9574, %v10248
        %v10385 = vadd.f32 %v9575, %v10253
        %v10386 = vld [vmem:[%s2] sm:$0x1]
        %v10388 = vlaneseq
        %v10389 = vshrl.u32 %v10388, 7
        %v10390 = vsub.s32 0, %v10389
        %v10391 = vrot.slane %v10386, %v10390
        %v10393 = vadd.f32 %v10258, %v10391
        %v10394 = vadd.f32 %v10259, %v10391
        %v10395 = vadd.f32 %v10260, %v10391
        %v10396 = vadd.f32 %v10261, %v10391
        %v10397 = vadd.f32 %v10262, %v10391
        %v10398 = vadd.f32 %v10263, %v10391
        %v10399 = vadd.f32 %v10264, %v10391
        %v10400 = vadd.f32 %v10265, %v10391
        %v10401 = vadd.f32 %v10266, %v10391
        %v10402 = vadd.f32 %v10267, %v10391
        %v10403 = vadd.f32 %v10268, %v10391
        %v10404 = vadd.f32 %v10269, %v10391
        %v10405 = vadd.f32 %v10270, %v10391
        %v10406 = vadd.f32 %v10271, %v10391
        %v10407 = vadd.f32 %v10272, %v10391
        %v10408 = vadd.f32 %v10273, %v10391
        %v10409 = vadd.f32 %v10274, %v10391
        %v10410 = vadd.f32 %v10275, %v10391
        %v10411 = vadd.f32 %v10276, %v10391
        %v10412 = vadd.f32 %v10277, %v10391
        %v10413 = vadd.f32 %v10278, %v10391
        %v10414 = vadd.f32 %v10279, %v10391
        %v10415 = vadd.f32 %v10280, %v10391
        %v10416 = vadd.f32 %v10281, %v10391
        %v10417 = vadd.f32 %v10282, %v10391
        %v10418 = vadd.f32 %v10283, %v10391
        %v10419 = vadd.f32 %v10284, %v10391
        %v10420 = vadd.f32 %v10285, %v10391
        %v10421 = vadd.f32 %v10286, %v10391
        %v10422 = vadd.f32 %v10287, %v10391
        %v10423 = vadd.f32 %v10288, %v10391
        %v10424 = vadd.f32 %v10289, %v10391
        %v10425 = vadd.f32 %v10290, %v10391
        %v10426 = vadd.f32 %v10291, %v10391
        %v10427 = vadd.f32 %v10292, %v10391
        %v10428 = vadd.f32 %v10293, %v10391
        %v10429 = vadd.f32 %v10294, %v10391
        %v10430 = vadd.f32 %v10295, %v10391
        %v10431 = vadd.f32 %v10296, %v10391
        %v10432 = vadd.f32 %v10297, %v10391
        %v10433 = vadd.f32 %v10298, %v10391
        %v10434 = vadd.f32 %v10299, %v10391
        %v10435 = vadd.f32 %v10300, %v10391
        %v10436 = vadd.f32 %v10301, %v10391
        %v10437 = vadd.f32 %v10302, %v10391
        %v10438 = vadd.f32 %v10303, %v10391
        %v10439 = vadd.f32 %v10304, %v10391
        %v10440 = vadd.f32 %v10305, %v10391
        %v10441 = vadd.f32 %v10306, %v10391
        %v10442 = vadd.f32 %v10307, %v10391
        %v10443 = vadd.f32 %v10308, %v10391
        %v10444 = vadd.f32 %v10309, %v10391
        %v10445 = vadd.f32 %v10310, %v10391
        %v10446 = vadd.f32 %v10311, %v10391
        %v10447 = vadd.f32 %v10312, %v10391
        %v10448 = vadd.f32 %v10313, %v10391
        %v10449 = vadd.f32 %v10314, %v10391
        %v10450 = vadd.f32 %v10315, %v10391
        %v10451 = vadd.f32 %v10316, %v10391
        %v10452 = vadd.f32 %v10317, %v10391
        %v10453 = vadd.f32 %v10318, %v10391
        %v10454 = vadd.f32 %v10319, %v10391
        %v10455 = vadd.f32 %v10320, %v10391
        %v10456 = vadd.f32 %v10321, %v10391
        %v10457 = vadd.f32 %v10322, %v10391
        %v10458 = vadd.f32 %v10323, %v10391
        %v10459 = vadd.f32 %v10324, %v10391
        %v10460 = vadd.f32 %v10325, %v10391
        %v10461 = vadd.f32 %v10326, %v10391
        %v10462 = vadd.f32 %v10327, %v10391
        %v10463 = vadd.f32 %v10328, %v10391
        %v10464 = vadd.f32 %v10329, %v10391
        %v10465 = vadd.f32 %v10330, %v10391
        %v10466 = vadd.f32 %v10331, %v10391
        %v10467 = vadd.f32 %v10332, %v10391
        %v10468 = vadd.f32 %v10333, %v10391
        %v10469 = vadd.f32 %v10334, %v10391
        %v10470 = vadd.f32 %v10335, %v10391
        %v10471 = vadd.f32 %v10336, %v10391
        %v10472 = vadd.f32 %v10337, %v10391
        %v10473 = vadd.f32 %v10338, %v10391
        %v10474 = vadd.f32 %v10339, %v10391
        %v10475 = vadd.f32 %v10340, %v10391
        %v10476 = vadd.f32 %v10341, %v10391
        %v10477 = vadd.f32 %v10342, %v10391
        %v10478 = vadd.f32 %v10343, %v10391
        %v10479 = vadd.f32 %v10344, %v10391
        %v10480 = vadd.f32 %v10345, %v10391
        %v10481 = vadd.f32 %v10346, %v10391
        %v10482 = vadd.f32 %v10347, %v10391
        %v10483 = vadd.f32 %v10348, %v10391
        %v10484 = vadd.f32 %v10349, %v10391
        %v10485 = vadd.f32 %v10350, %v10391
        %v10486 = vadd.f32 %v10351, %v10391
        %v10487 = vadd.f32 %v10352, %v10391
        %v10488 = vadd.f32 %v10353, %v10391
        %v10489 = vadd.f32 %v10354, %v10391
        %v10490 = vadd.f32 %v10355, %v10391
        %v10491 = vadd.f32 %v10356, %v10391
        %v10492 = vadd.f32 %v10357, %v10391
        %v10493 = vadd.f32 %v10358, %v10391
        %v10494 = vadd.f32 %v10359, %v10391
        %v10495 = vadd.f32 %v10360, %v10391
        %v10496 = vadd.f32 %v10361, %v10391
        %v10497 = vadd.f32 %v10362, %v10391
        %v10498 = vadd.f32 %v10363, %v10391
        %v10499 = vadd.f32 %v10364, %v10391
        %v10500 = vadd.f32 %v10365, %v10391
        %v10501 = vadd.f32 %v10366, %v10391
        %v10502 = vadd.f32 %v10367, %v10391
        %v10503 = vadd.f32 %v10368, %v10391
        %v10504 = vadd.f32 %v10369, %v10391
        %v10505 = vadd.f32 %v10370, %v10391
        %v10506 = vadd.f32 %v10371, %v10391
        %v10507 = vadd.f32 %v10372, %v10391
        %v10508 = vadd.f32 %v10373, %v10391
        %v10509 = vadd.f32 %v10374, %v10391
        %v10510 = vadd.f32 %v10375, %v10391
        %v10511 = vadd.f32 %v10376, %v10391
        %v10512 = vadd.f32 %v10377, %v10391
        %v10513 = vadd.f32 %v10378, %v10391
        %v10514 = vadd.f32 %v10379, %v10391
        %v10515 = vadd.f32 %v10380, %v10391
        %v10516 = vadd.f32 %v10381, %v10391
        %v10517 = vadd.f32 %v10382, %v10391
        %v10518 = vadd.f32 %v10383, %v10391
        %v10519 = vadd.f32 %v10384, %v10391
        %v10520 = vadd.f32 %v10385, %v10391
        %v10521 = vmax.f32 %v10393, 0.0
        %v10522 = vmax.f32 %v10394, 0.0
        %v10523 = vmax.f32 %v10395, 0.0
        %v10524 = vmax.f32 %v10396, 0.0
        %v10525 = vmax.f32 %v10397, 0.0
        %v10526 = vmax.f32 %v10398, 0.0
        %v10527 = vmax.f32 %v10399, 0.0
        %v10528 = vmax.f32 %v10400, 0.0
        %v10529 = vmax.f32 %v10401, 0.0
        %v10530 = vmax.f32 %v10402, 0.0
        %v10531 = vmax.f32 %v10403, 0.0
        %v10532 = vmax.f32 %v10404, 0.0
        %v10533 = vmax.f32 %v10405, 0.0
        %v10534 = vmax.f32 %v10406, 0.0
        %v10535 = vmax.f32 %v10407, 0.0
        %v10536 = vmax.f32 %v10408, 0.0
        %v10537 = vmax.f32 %v10409, 0.0
        %v10538 = vmax.f32 %v10410, 0.0
        %v10539 = vmax.f32 %v10411, 0.0
        %v10540 = vmax.f32 %v10412, 0.0
        %v10541 = vmax.f32 %v10413, 0.0
        %v10542 = vmax.f32 %v10414, 0.0
        %v10543 = vmax.f32 %v10415, 0.0
        %v10544 = vmax.f32 %v10416, 0.0
        %v10545 = vmax.f32 %v10417, 0.0
        %v10546 = vmax.f32 %v10418, 0.0
        %v10547 = vmax.f32 %v10419, 0.0
        %v10548 = vmax.f32 %v10420, 0.0
        %v10549 = vmax.f32 %v10421, 0.0
        %v10550 = vmax.f32 %v10422, 0.0
        %v10551 = vmax.f32 %v10423, 0.0
        %v10552 = vmax.f32 %v10424, 0.0
        %v10553 = vmax.f32 %v10425, 0.0
        %v10554 = vmax.f32 %v10426, 0.0
        %v10555 = vmax.f32 %v10427, 0.0
        %v10556 = vmax.f32 %v10428, 0.0
        %v10557 = vmax.f32 %v10429, 0.0
        %v10558 = vmax.f32 %v10430, 0.0
        %v10559 = vmax.f32 %v10431, 0.0
        %v10560 = vmax.f32 %v10432, 0.0
        %v10561 = vmax.f32 %v10433, 0.0
        %v10562 = vmax.f32 %v10434, 0.0
        %v10563 = vmax.f32 %v10435, 0.0
        %v10564 = vmax.f32 %v10436, 0.0
        %v10565 = vmax.f32 %v10437, 0.0
        %v10566 = vmax.f32 %v10438, 0.0
        %v10567 = vmax.f32 %v10439, 0.0
        %v10568 = vmax.f32 %v10440, 0.0
        %v10569 = vmax.f32 %v10441, 0.0
        %v10570 = vmax.f32 %v10442, 0.0
        %v10571 = vmax.f32 %v10443, 0.0
        %v10572 = vmax.f32 %v10444, 0.0
        %v10573 = vmax.f32 %v10445, 0.0
        %v10574 = vmax.f32 %v10446, 0.0
        %v10575 = vmax.f32 %v10447, 0.0
        %v10576 = vmax.f32 %v10448, 0.0
        %v10577 = vmax.f32 %v10449, 0.0
        %v10578 = vmax.f32 %v10450, 0.0
        %v10579 = vmax.f32 %v10451, 0.0
        %v10580 = vmax.f32 %v10452, 0.0
        %v10581 = vmax.f32 %v10453, 0.0
        %v10582 = vmax.f32 %v10454, 0.0
        %v10583 = vmax.f32 %v10455, 0.0
        %v10584 = vmax.f32 %v10456, 0.0
        %v10585 = vmax.f32 %v10457, 0.0
        %v10586 = vmax.f32 %v10458, 0.0
        %v10587 = vmax.f32 %v10459, 0.0
        %v10588 = vmax.f32 %v10460, 0.0
        %v10589 = vmax.f32 %v10461, 0.0
        %v10590 = vmax.f32 %v10462, 0.0
        %v10591 = vmax.f32 %v10463, 0.0
        %v10592 = vmax.f32 %v10464, 0.0
        %v10593 = vmax.f32 %v10465, 0.0
        %v10594 = vmax.f32 %v10466, 0.0
        %v10595 = vmax.f32 %v10467, 0.0
        %v10596 = vmax.f32 %v10468, 0.0
        %v10597 = vmax.f32 %v10469, 0.0
        %v10598 = vmax.f32 %v10470, 0.0
        %v10599 = vmax.f32 %v10471, 0.0
        %v10600 = vmax.f32 %v10472, 0.0
        %v10601 = vmax.f32 %v10473, 0.0
        %v10602 = vmax.f32 %v10474, 0.0
        %v10603 = vmax.f32 %v10475, 0.0
        %v10604 = vmax.f32 %v10476, 0.0
        %v10605 = vmax.f32 %v10477, 0.0
        %v10606 = vmax.f32 %v10478, 0.0
        %v10607 = vmax.f32 %v10479, 0.0
        %v10608 = vmax.f32 %v10480, 0.0
        %v10609 = vmax.f32 %v10481, 0.0
        %v10610 = vmax.f32 %v10482, 0.0
        %v10611 = vmax.f32 %v10483, 0.0
        %v10612 = vmax.f32 %v10484, 0.0
        %v10613 = vmax.f32 %v10485, 0.0
        %v10614 = vmax.f32 %v10486, 0.0
        %v10615 = vmax.f32 %v10487, 0.0
        %v10616 = vmax.f32 %v10488, 0.0
        %v10617 = vmax.f32 %v10489, 0.0
        %v10618 = vmax.f32 %v10490, 0.0
        %v10619 = vmax.f32 %v10491, 0.0
        %v10620 = vmax.f32 %v10492, 0.0
        %v10621 = vmax.f32 %v10493, 0.0
        %v10622 = vmax.f32 %v10494, 0.0
        %v10623 = vmax.f32 %v10495, 0.0
        %v10624 = vmax.f32 %v10496, 0.0
        %v10625 = vmax.f32 %v10497, 0.0
        %v10626 = vmax.f32 %v10498, 0.0
        %v10627 = vmax.f32 %v10499, 0.0
        %v10628 = vmax.f32 %v10500, 0.0
        %v10629 = vmax.f32 %v10501, 0.0
        %v10630 = vmax.f32 %v10502, 0.0
        %v10631 = vmax.f32 %v10503, 0.0
        %v10632 = vmax.f32 %v10504, 0.0
        %v10633 = vmax.f32 %v10505, 0.0
        %v10634 = vmax.f32 %v10506, 0.0
        %v10635 = vmax.f32 %v10507, 0.0
        %v10636 = vmax.f32 %v10508, 0.0
        %v10637 = vmax.f32 %v10509, 0.0
        %v10638 = vmax.f32 %v10510, 0.0
        %v10639 = vmax.f32 %v10511, 0.0
        %v10640 = vmax.f32 %v10512, 0.0
        %v10641 = vmax.f32 %v10513, 0.0
        %v10642 = vmax.f32 %v10514, 0.0
        %v10643 = vmax.f32 %v10515, 0.0
        %v10644 = vmax.f32 %v10516, 0.0
        %v10645 = vmax.f32 %v10517, 0.0
        %v10646 = vmax.f32 %v10518, 0.0
        %v10647 = vmax.f32 %v10519, 0.0
        %v10648 = vmax.f32 %v10520, 0.0
        %vm10649 = vcmask 523264
        %10650 = vst.msk [vmem:[%s163] sm:$0xff] %vm10649, %v10521
        %10651 = vst.msk [vmem:[%s163 + $0x8] sm:$0xff] %vm10649, %v10522
        %10652 = vst.msk [vmem:[%s163 + $0x10] sm:$0xff] %vm10649, %v10523
        %10653 = vst.msk [vmem:[%s163 + $0x18] sm:$0xff] %vm10649, %v10524
        %10654 = vst.msk [vmem:[%s163 + $0x20] sm:$0xff] %vm10649, %v10525
        %10655 = vst.msk [vmem:[%s163 + $0x28] sm:$0xff] %vm10649, %v10526
        %10656 = vst.msk [vmem:[%s163 + $0x30] sm:$0xff] %vm10649, %v10527
        %10657 = vst.msk [vmem:[%s163 + $0x38] sm:$0xff] %vm10649, %v10528
        %10658 = vst.msk [vmem:[%s163 + $0x40] sm:$0xff] %vm10649, %v10529
        %10659 = vst.msk [vmem:[%s163 + $0x48] sm:$0xff] %vm10649, %v10530
        %10660 = vst.msk [vmem:[%s163 + $0x50] sm:$0xff] %vm10649, %v10531
        %10661 = vst.msk [vmem:[%s163 + $0x58] sm:$0xff] %vm10649, %v10532
        %10662 = vst.msk [vmem:[%s163 + $0x60] sm:$0xff] %vm10649, %v10533
        %10663 = vst.msk [vmem:[%s163 + $0x68] sm:$0xff] %vm10649, %v10534
        %10664 = vst.msk [vmem:[%s163 + $0x70] sm:$0xff] %vm10649, %v10535
        %10665 = vst.msk [vmem:[%s163 + $0x78] sm:$0xff] %vm10649, %v10536
        %10666 = vst.msk [vmem:[%s163 + $0x80] sm:$0xff] %vm10649, %v10537
        %10667 = vst.msk [vmem:[%s163 + $0x88] sm:$0xff] %vm10649, %v10538
        %10668 = vst.msk [vmem:[%s163 + $0x90] sm:$0xff] %vm10649, %v10539
        %10669 = vst.msk [vmem:[%s163 + $0x98] sm:$0xff] %vm10649, %v10540
        %10670 = vst.msk [vmem:[%s163 + $0xa0] sm:$0xff] %vm10649, %v10541
        %10671 = vst.msk [vmem:[%s163 + $0xa8] sm:$0xff] %vm10649, %v10542
        %10672 = vst.msk [vmem:[%s163 + $0xb0] sm:$0xff] %vm10649, %v10543
        %10673 = vst.msk [vmem:[%s163 + $0xb8] sm:$0xff] %vm10649, %v10544
        %10674 = vst.msk [vmem:[%s163 + $0xc0] sm:$0xff] %vm10649, %v10545
        %10675 = vst.msk [vmem:[%s163 + $0xc8] sm:$0xff] %vm10649, %v10546
        %10676 = vst.msk [vmem:[%s163 + $0xd0] sm:$0xff] %vm10649, %v10547
        %10677 = vst.msk [vmem:[%s163 + $0xd8] sm:$0xff] %vm10649, %v10548
        %10678 = vst.msk [vmem:[%s163 + $0xe0] sm:$0xff] %vm10649, %v10549
        %10679 = vst.msk [vmem:[%s163 + $0xe8] sm:$0xff] %vm10649, %v10550
        %10680 = vst.msk [vmem:[%s163 + $0xf0] sm:$0xff] %vm10649, %v10551
        %10681 = vst.msk [vmem:[%s163 + $0xf8] sm:$0xff] %vm10649, %v10552
        %10682 = vst.msk [vmem:[%s163 + $0x100] sm:$0xff] %vm10649, %v10553
        %10683 = vst.msk [vmem:[%s163 + $0x108] sm:$0xff] %vm10649, %v10554
        %10684 = vst.msk [vmem:[%s163 + $0x110] sm:$0xff] %vm10649, %v10555
        %10685 = vst.msk [vmem:[%s163 + $0x118] sm:$0xff] %vm10649, %v10556
        %10686 = vst.msk [vmem:[%s163 + $0x120] sm:$0xff] %vm10649, %v10557
        %10687 = vst.msk [vmem:[%s163 + $0x128] sm:$0xff] %vm10649, %v10558
        %10688 = vst.msk [vmem:[%s163 + $0x130] sm:$0xff] %vm10649, %v10559
        %10689 = vst.msk [vmem:[%s163 + $0x138] sm:$0xff] %vm10649, %v10560
        %10690 = vst.msk [vmem:[%s163 + $0x140] sm:$0xff] %vm10649, %v10561
        %10691 = vst.msk [vmem:[%s163 + $0x148] sm:$0xff] %vm10649, %v10562
        %10692 = vst.msk [vmem:[%s163 + $0x150] sm:$0xff] %vm10649, %v10563
        %10693 = vst.msk [vmem:[%s163 + $0x158] sm:$0xff] %vm10649, %v10564
        %10694 = vst.msk [vmem:[%s163 + $0x160] sm:$0xff] %vm10649, %v10565
        %10695 = vst.msk [vmem:[%s163 + $0x168] sm:$0xff] %vm10649, %v10566
        %10696 = vst.msk [vmem:[%s163 + $0x170] sm:$0xff] %vm10649, %v10567
        %10697 = vst.msk [vmem:[%s163 + $0x178] sm:$0xff] %vm10649, %v10568
        %10698 = vst.msk [vmem:[%s163 + $0x180] sm:$0xff] %vm10649, %v10569
        %10699 = vst.msk [vmem:[%s163 + $0x188] sm:$0xff] %vm10649, %v10570
        %10700 = vst.msk [vmem:[%s163 + $0x190] sm:$0xff] %vm10649, %v10571
        %10701 = vst.msk [vmem:[%s163 + $0x198] sm:$0xff] %vm10649, %v10572
        %10702 = vst.msk [vmem:[%s163 + $0x1a0] sm:$0xff] %vm10649, %v10573
        %10703 = vst.msk [vmem:[%s163 + $0x1a8] sm:$0xff] %vm10649, %v10574
        %10704 = vst.msk [vmem:[%s163 + $0x1b0] sm:$0xff] %vm10649, %v10575
        %10705 = vst.msk [vmem:[%s163 + $0x1b8] sm:$0xff] %vm10649, %v10576
        %10706 = vst.msk [vmem:[%s163 + $0x1c0] sm:$0xff] %vm10649, %v10577
        %10707 = vst.msk [vmem:[%s163 + $0x1c8] sm:$0xff] %vm10649, %v10578
        %10708 = vst.msk [vmem:[%s163 + $0x1d0] sm:$0xff] %vm10649, %v10579
        %10709 = vst.msk [vmem:[%s163 + $0x1d8] sm:$0xff] %vm10649, %v10580
        %10710 = vst.msk [vmem:[%s163 + $0x1e0] sm:$0xff] %vm10649, %v10581
        %10711 = vst.msk [vmem:[%s163 + $0x1e8] sm:$0xff] %vm10649, %v10582
        %10712 = vst.msk [vmem:[%s163 + $0x1f0] sm:$0xff] %vm10649, %v10583
        %10713 = vst.msk [vmem:[%s163 + $0x1f8] sm:$0xff] %vm10649, %v10584
        %10714 = vst.msk [vmem:[%s163 + $0x200] sm:$0xff] %vm10649, %v10585
        %10715 = vst.msk [vmem:[%s163 + $0x208] sm:$0xff] %vm10649, %v10586
        %10716 = vst.msk [vmem:[%s163 + $0x210] sm:$0xff] %vm10649, %v10587
        %10717 = vst.msk [vmem:[%s163 + $0x218] sm:$0xff] %vm10649, %v10588
        %10718 = vst.msk [vmem:[%s163 + $0x220] sm:$0xff] %vm10649, %v10589
        %10719 = vst.msk [vmem:[%s163 + $0x228] sm:$0xff] %vm10649, %v10590
        %10720 = vst.msk [vmem:[%s163 + $0x230] sm:$0xff] %vm10649, %v10591
        %10721 = vst.msk [vmem:[%s163 + $0x238] sm:$0xff] %vm10649, %v10592
        %10722 = vst.msk [vmem:[%s163 + $0x240] sm:$0xff] %vm10649, %v10593
        %10723 = vst.msk [vmem:[%s163 + $0x248] sm:$0xff] %vm10649, %v10594
        %10724 = vst.msk [vmem:[%s163 + $0x250] sm:$0xff] %vm10649, %v10595
        %10725 = vst.msk [vmem:[%s163 + $0x258] sm:$0xff] %vm10649, %v10596
        %10726 = vst.msk [vmem:[%s163 + $0x260] sm:$0xff] %vm10649, %v10597
        %10727 = vst.msk [vmem:[%s163 + $0x268] sm:$0xff] %vm10649, %v10598
        %10728 = vst.msk [vmem:[%s163 + $0x270] sm:$0xff] %vm10649, %v10599
        %10729 = vst.msk [vmem:[%s163 + $0x278] sm:$0xff] %vm10649, %v10600
        %10730 = vst.msk [vmem:[%s163 + $0x280] sm:$0xff] %vm10649, %v10601
        %10731 = vst.msk [vmem:[%s163 + $0x288] sm:$0xff] %vm10649, %v10602
        %10732 = vst.msk [vmem:[%s163 + $0x290] sm:$0xff] %vm10649, %v10603
        %10733 = vst.msk [vmem:[%s163 + $0x298] sm:$0xff] %vm10649, %v10604
        %10734 = vst.msk [vmem:[%s163 + $0x2a0] sm:$0xff] %vm10649, %v10605
        %10735 = vst.msk [vmem:[%s163 + $0x2a8] sm:$0xff] %vm10649, %v10606
        %10736 = vst.msk [vmem:[%s163 + $0x2b0] sm:$0xff] %vm10649, %v10607
        %10737 = vst.msk [vmem:[%s163 + $0x2b8] sm:$0xff] %vm10649, %v10608
        %10738 = vst.msk [vmem:[%s163 + $0x2c0] sm:$0xff] %vm10649, %v10609
        %10739 = vst.msk [vmem:[%s163 + $0x2c8] sm:$0xff] %vm10649, %v10610
        %10740 = vst.msk [vmem:[%s163 + $0x2d0] sm:$0xff] %vm10649, %v10611
        %10741 = vst.msk [vmem:[%s163 + $0x2d8] sm:$0xff] %vm10649, %v10612
        %10742 = vst.msk [vmem:[%s163 + $0x2e0] sm:$0xff] %vm10649, %v10613
        %10743 = vst.msk [vmem:[%s163 + $0x2e8] sm:$0xff] %vm10649, %v10614
        %10744 = vst.msk [vmem:[%s163 + $0x2f0] sm:$0xff] %vm10649, %v10615
        %10745 = vst.msk [vmem:[%s163 + $0x2f8] sm:$0xff] %vm10649, %v10616
        %10746 = vst.msk [vmem:[%s163 + $0x300] sm:$0xff] %vm10649, %v10617
        %10747 = vst.msk [vmem:[%s163 + $0x308] sm:$0xff] %vm10649, %v10618
        %10748 = vst.msk [vmem:[%s163 + $0x310] sm:$0xff] %vm10649, %v10619
        %10749 = vst.msk [vmem:[%s163 + $0x318] sm:$0xff] %vm10649, %v10620
        %10750 = vst.msk [vmem:[%s163 + $0x320] sm:$0xff] %vm10649, %v10621
        %10751 = vst.msk [vmem:[%s163 + $0x328] sm:$0xff] %vm10649, %v10622
        %10752 = vst.msk [vmem:[%s163 + $0x330] sm:$0xff] %vm10649, %v10623
        %10753 = vst.msk [vmem:[%s163 + $0x338] sm:$0xff] %vm10649, %v10624
        %10754 = vst.msk [vmem:[%s163 + $0x340] sm:$0xff] %vm10649, %v10625
        %10755 = vst.msk [vmem:[%s163 + $0x348] sm:$0xff] %vm10649, %v10626
        %10756 = vst.msk [vmem:[%s163 + $0x350] sm:$0xff] %vm10649, %v10627
        %10757 = vst.msk [vmem:[%s163 + $0x358] sm:$0xff] %vm10649, %v10628
        %10758 = vst.msk [vmem:[%s163 + $0x360] sm:$0xff] %vm10649, %v10629
        %10759 = vst.msk [vmem:[%s163 + $0x368] sm:$0xff] %vm10649, %v10630
        %10760 = vst.msk [vmem:[%s163 + $0x370] sm:$0xff] %vm10649, %v10631
        %10761 = vst.msk [vmem:[%s163 + $0x378] sm:$0xff] %vm10649, %v10632
        %10762 = vst.msk [vmem:[%s163 + $0x380] sm:$0xff] %vm10649, %v10633
        %10763 = vst.msk [vmem:[%s163 + $0x388] sm:$0xff] %vm10649, %v10634
        %10764 = vst.msk [vmem:[%s163 + $0x390] sm:$0xff] %vm10649, %v10635
        %10765 = vst.msk [vmem:[%s163 + $0x398] sm:$0xff] %vm10649, %v10636
        %10766 = vst.msk [vmem:[%s163 + $0x3a0] sm:$0xff] %vm10649, %v10637
        %10767 = vst.msk [vmem:[%s163 + $0x3a8] sm:$0xff] %vm10649, %v10638
        %10768 = vst.msk [vmem:[%s163 + $0x3b0] sm:$0xff] %vm10649, %v10639
        %10769 = vst.msk [vmem:[%s163 + $0x3b8] sm:$0xff] %vm10649, %v10640
        %10770 = vst.msk [vmem:[%s163 + $0x3c0] sm:$0xff] %vm10649, %v10641
        %10771 = vst.msk [vmem:[%s163 + $0x3c8] sm:$0xff] %vm10649, %v10642
        %10772 = vst.msk [vmem:[%s163 + $0x3d0] sm:$0xff] %vm10649, %v10643
        %10773 = vst.msk [vmem:[%s163 + $0x3d8] sm:$0xff] %vm10649, %v10644
        %10774 = vst.msk [vmem:[%s163 + $0x3e0] sm:$0xff] %vm10649, %v10645
        %10775 = vst.msk [vmem:[%s163 + $0x3e8] sm:$0xff] %vm10649, %v10646
        %10776 = vst.msk [vmem:[%s163 + $0x3f0] sm:$0xff] %vm10649, %v10647
        %10777 = vst.msk [vmem:[%s163 + $0x3f8] sm:$0xff] %vm10649, %v10648
        %s10778 = sand.u32 %s93, 1
        %s10779 = scalar_lea.sflag [#allocation3], %s10778
        %s10780 = sand.u32 %s93, 1
        %s10781 = smul.addr %s10780, 1024
        %s10782 = scalar_lea.vmem [#allocation2], %s10781
        // Predicated region
        $region33: #{tpu_custom_call.1} parent=31 // pred_check
          %p10783 = pneg %p103
        $region34: #{tpu_custom_call.1} parent=31 // pred_check_branch
          %10785 = sbr.rel (%p10783) target = $region36
        $region35: #{tpu_custom_call.1} parent=31 // pred_region
          %s10787 = ssub.s32 16384, 16384
          %10788 = vsyncadd %s10779, %s10787
          %s10789 = smul.addr %s17, 128
          %s10790 = smul.addr %s10789, 128
          %s10791 = scalar_lea.hbm %s3, %s10790
          %s10792 = sshll.u32 %s10782, 4
          %s10793 = int_to_ptr.vmem [resolvable:$true] %s10792
          %10798 = dma.vmem_to_hbm [thread:$0]  %s10793, 16384, %s10791, %s10779, 128, 128, 8
        $region36: #{tpu_custom_call.1} parent=31 // pred_fallthru
          _
      $region32: #{tpu_custom_call.1} parent=5 // pred_fallthru
        _
      %p10799 = scmp.le.s32.totalorder 2, %s12
      // Predicated region
      $region37: #{tpu_custom_call.1} parent=5 // pred_check
        %p10800 = pneg %p10799
      $region38: #{tpu_custom_call.1} parent=5 // pred_check_branch
        %10802 = sbr.rel (%p10800) target = $region40
      $region39: #{tpu_custom_call.1} parent=5 // pred_region
        %s10803 = ssub.s32 %s12, 2
        // Predicated region
        $region41: #{tpu_custom_call.1} parent=39 // pred_check
          %p10804 = pneg %p109
        $region42: #{tpu_custom_call.1} parent=39 // pred_check_branch
          %10806 = sbr.rel (%p10804) target = $region44
        $region43: #{tpu_custom_call.1} parent=39 // pred_region
          %s10807 = sand.u32 %s94, 1
          %s10808 = scalar_lea.sflag [#allocation3], %s10807
          %s10809 = sand.u32 %s94, 1
          %s10810 = smul.addr %s10809, 1024
          %s10811 = scalar_lea.vmem [#allocation2], %s10810
          %10812 = dma.done %s10808, 16384
        $region44: #{tpu_custom_call.1} parent=39 // pred_fallthru
          _
      $region40: #{tpu_custom_call.1} parent=5 // pred_fallthru
        _
    $region6: #{tpu_custom_call.1} parent=1 // loop_footer
      %s16 = sadd.s32 1, %s12
    $region7: #{tpu_custom_call.1} parent=1 // loop_footer_branch
      %11 = sbr.rel target = $region3
    $region8: #{tpu_custom_call.1} parent=1 // loop_exit
      _
    %10813 = vsyncpa [#allocation3], 1
    %s10814 = scalar_lea.sflag [#allocation3], 1
    %10815 = vsyncpa %s10814, 1

</llo_original>
